<compile_context>
chip_gen: v7x
topology: tpu7x:2x2x1
jax: 0.10.0
libtpu: 0.0.40
codegen_flags: <defaults>
</compile_context>

<pallas_src>
import numpy as np
import jax
import jax.numpy as jnp
from jax.experimental import pallas as pl
from jax.experimental.pallas import tpu as pltpu  # noqa: F401  (no TPU-specific params needed at these sizes)

# ---------------- config (small shapes consistent with the module) -----------
BS = 2
STATE_DIM = 8          # qpos / action dim
NUM_QUERIES = 8        # action chunk length
HIDDEN = 32            # transformer.d_model
LATENT = 8             # z_dimension
FFN = 64
NUM_CAM = 1
CAM_NAMES = ["top"]    # cam_backbone_mapping: all cams -> backbone 0
BB_CHANNELS = 16       # backbones[0].num_channels
IMG_C, IMG_H, IMG_W = 3, 8, 8

NUM_IMG_TOK = NUM_CAM * IMG_H * IMG_W        # 64 image tokens
L_CVAE = 16                                  # 1 cls + 1 qpos + NUM_QUERIES = 10 -> pad to 16
L_ENC = 128                                  # 2 + NUM_IMG_TOK = 66 -> pad to 128 (full lane tile)
ENC_VALID = 2 + NUM_IMG_TOK
ATTN_SCALE = 1.0 / float(np.sqrt(HIDDEN))
NEG_INF = -1e9

assert L_CVAE >= 2 + NUM_QUERIES
assert L_ENC >= ENC_VALID


# ---------------- sinusoid table (same as the torch helper) ------------------
def get_sinusoid_encoding_table(n_position, d_hid):
    def angle(pos):
        return [pos / np.power(10000, 2 * (j // 2) / d_hid) for j in range(d_hid)]
    tab = np.array([angle(i) for i in range(n_position)], dtype=np.float64)
    tab[:, 0::2] = np.sin(tab[:, 0::2])
    tab[:, 1::2] = np.cos(tab[:, 1::2])
    return jnp.asarray(tab[None], dtype=jnp.float32)  # (1, n_position, d_hid)


# ---------------- in-kernel building blocks ----------------------------------
def _ln(x, g, b, eps=1e-5):
    m = jnp.mean(x, axis=-1, keepdims=True)
    v = jnp.mean(jnp.square(x - m), axis=-1, keepdims=True)
    return (x - m) * jax.lax.rsqrt(v + eps) * g + b


def _mha(q_in, k_in, v_in, aw_ref, ab_ref, base, mask):
    """Single-head attention on 2D tiles.

    aw_ref: (16, H, H) packed [q,k,v,o] blocks; ab_ref: (16, 1, H); `base`
    is the static offset of this attention block in the packed slabs.
    """
    q = jnp.dot(q_in, aw_ref[base + 0], preferred_element_type=jnp.float32) + ab_ref[base + 0]
    k = jnp.dot(k_in, aw_ref[base + 1], preferred_element_type=jnp.float32) + ab_ref[base + 1]
    v = jnp.dot(v_in, aw_ref[base + 2], preferred_element_type=jnp.float32) + ab_ref[base + 2]
    # contract last dims of q and k (no transpose of K inside the kernel)
    s = jax.lax.dot_general(q, k, (((1,), (1,)), ((), ())),
                            preferred_element_type=jnp.float32)
    s = s * ATTN_SCALE + mask
    s = s - jnp.max(s, axis=-1, keepdims=True)
    p = jnp.exp(s)
    p = p / jnp.sum(p, axis=-1, keepdims=True)
    o = jnp.dot(p, v, preferred_element_type=jnp.float32)
    return jnp.dot(o, aw_ref[base + 3], preferred_element_type=jnp.float32) + ab_ref[base + 3]


def _ffn(x, f1w_ref, f1b_ref, f2w_ref, f2b_ref, idx):
    h = jnp.maximum(
        jnp.dot(x, f1w_ref[idx], preferred_element_type=jnp.float32) + f1b_ref[idx], 0.0)
    return jnp.dot(h, f2w_ref[idx], preferred_element_type=jnp.float32) + f2b_ref[idx]


def _encoder_layer(src, pos, mask, aw_ref, ab_ref, a_base, ln_ref, ln_base,
                   f1w_ref, f1b_ref, f2w_ref, f2b_ref, f_idx):
    sp = src + pos
    x = _ln(src + _mha(sp, sp, src, aw_ref, ab_ref, a_base, mask),
            ln_ref[ln_base + 0], ln_ref[ln_base + 1])
    x = _ln(x + _ffn(x, f1w_ref, f1b_ref, f2w_ref, f2b_ref, f_idx),
            ln_ref[ln_base + 2], ln_ref[ln_base + 3])
    return x


def _decoder_layer(tgt, memory, mem_pos, q_pos, mem_mask,
                   aw_ref, ab_ref, ln_ref, f1w_ref, f1b_ref, f2w_ref, f2b_ref):
    nq = tgt.shape[0]
    zero_mask = jnp.zeros((1, nq), jnp.float32)
    tq = tgt + q_pos
    x = _ln(tgt + _mha(tq, tq, tgt, aw_ref, ab_ref, 8, zero_mask),
            ln_ref[8], ln_ref[9])
    x = _ln(x + _mha(x + q_pos, memory + mem_pos, memory, aw_ref, ab_ref, 12, mem_mask),
            ln_ref[10], ln_ref[11])
    x = _ln(x + _ffn(x, f1w_ref, f1b_ref, f2w_ref, f2b_ref, 2),
            ln_ref[12], ln_ref[13])
    return x


def _enc_dec_one(latent_input, srcin, enc_mask, src_w, src_static, enc_pos, q_pos,
                 aw_ref, ab_ref, ln_ref, f1w_ref, f1b_ref, f2w_ref, f2b_ref,
                 w_head, b_head):
    """Transformer encoder layer + decoder layer + fused heads for ONE batch row.

    srcin: (L_ENC, IMG_C+STATE_DIM) raw image/qpos features (backbone 1x1 conv
    and input_proj pre-folded into src_w); latent_input: (1, H)."""
    src = jnp.dot(srcin, src_w, preferred_element_type=jnp.float32) + src_static
    # add the latent token at sequence position 0 (row 0 of src is zeros)
    row = jax.lax.broadcasted_iota(jnp.int32, (L_ENC, 1), 0)
    src = src + jnp.where(row == 0, latent_input, 0.0)
    memory = _encoder_layer(src, enc_pos, enc_mask, aw_ref, ab_ref, 4, ln_ref, 4,
                            f1w_ref, f1b_ref, f2w_ref, f2b_ref, 1)
    tgt0 = jnp.zeros((NUM_QUERIES, HIDDEN), jnp.float32)
    hs = _decoder_layer(tgt0, memory, enc_pos, q_pos, enc_mask,
                        aw_ref, ab_ref, ln_ref, f1w_ref, f1b_ref, f2w_ref, f2b_ref)
    return jnp.dot(hs, w_head, preferred_element_type=jnp.float32) + b_head


# ---------------- Pallas kernels ---------------------------------------------
def _detrvae_train_kernel(
        # per-batch inputs
        xin_ref, cmask_ref, eps_ref, srcin_ref, encmask_ref,
        # CVAE branch weights
        cvae_win_ref, cvae_static_ref, cvae_pos_ref,
        wlat_ref, blat_ref, wlo_ref, blo_ref,
        # encoder / decoder weights
        src_w_ref, src_static_ref, enc_pos_ref, qe_ref,
        attn_w_ref, attn_b_ref, ln_ref,
        f1w_ref, f1b_ref, f2w_ref, f2b_ref,
        wh_ref, bh_ref,
        # outputs
        latinfo_ref, heads_ref):
    """Whole DETRVAE training forward in a single launch: CVAE encoder branch,
    reparametrize, transformer encoder + decoder, fused action/is_pad heads."""
    del blo_ref  # latent bias already applied through latent_out_proj matmul
    B = xin_ref.shape[0]
    for bb in range(B):
        # ---- CVAE encoder branch: one matmul builds [cls | qpos | actions] --
        tokens = (jnp.dot(xin_ref[bb], cvae_win_ref[...],
                          preferred_element_type=jnp.float32) + cvae_static_ref[...])
        x = _encoder_layer(tokens, cvae_pos_ref[...], cmask_ref[bb],
                           attn_w_ref, attn_b_ref, 0, ln_ref, 0,
                           f1w_ref, f1b_ref, f2w_ref, f2b_ref, 0)
        cls_tok = x[0:1, :]                                           # (1, H)
        lat_info = (jnp.dot(cls_tok, wlat_ref[...],
                            preferred_element_type=jnp.float32) + blat_ref[...])  # (1, 2L)
        mu = lat_info[:, :LATENT]
        logvar = lat_info[:, LATENT:]
        z = mu + jnp.exp(0.5 * logvar) * eps_ref[bb]                  # reparametrize
        latent_input = (jnp.dot(z, wlo_ref[...],
                                preferred_element_type=jnp.float32) + _lo_bias(wlo_ref, None))
        latinfo_ref[bb] = lat_info

        # ---- transformer encoder + decoder + heads (memory never leaves VMEM)
        heads_ref[bb] = _enc_dec_one(
            latent_input, srcin_ref[bb], encmask_ref[...],
            src_w_ref[...], src_static_ref[...], enc_pos_ref[...], qe_ref[...],
            attn_w_ref, attn_b_ref, ln_ref, f1w_ref, f1b_ref, f2w_ref, f2b_ref,
            wh_ref[...], bh_ref[...])


def _lo_bias(wlo_ref, blo_val):
    # placeholder replaced below; defined to keep the kernel body readable
    raise NotImplementedError


# latent_out_proj bias is tiny; fold it directly by closing over the ref value.
# Re-define the training kernel cleanly (the helper above was a stub).
def _detrvae_train_kernel(  # noqa: F811  (intentional clean redefinition)
        xin_ref, cmask_ref, eps_ref, srcin_ref, encmask_ref,
        cvae_win_ref, cvae_static_ref, cvae_pos_ref,
        wlat_ref, blat_ref, wlo_ref, blo_ref,
        src_w_ref, src_static_ref, enc_pos_ref, qe_ref,
        attn_w_ref, attn_b_ref, ln_ref,
        f1w_ref, f1b_ref, f2w_ref, f2b_ref,
        wh_ref, bh_ref,
        latinfo_ref, heads_ref):
    B = xin_ref.shape[0]
    for bb in range(B):
        # ---- CVAE encoder branch ----
        tokens = (jnp.dot(xin_ref[bb], cvae_win_ref[...],
                          preferred_element_type=jnp.float32) + cvae_static_ref[...])
        x = _encoder_layer(tokens, cvae_pos_ref[...], cmask_ref[bb],
                           attn_w_ref, attn_b_ref, 0, ln_ref, 0,
                           f1w_ref, f1b_ref, f2w_ref, f2b_ref, 0)
        cls_tok = x[0:1, :]                                           # (1, H)
        lat_info = (jnp.dot(cls_tok, wlat_ref[...],
                            preferred_element_type=jnp.float32) + blat_ref[...])  # (1, 2L)
        mu = lat_info[:, :LATENT]
        logvar = lat_info[:, LATENT:]
        z = mu + jnp.exp(0.5 * logvar) * eps_ref[bb]                  # reparametrize
        latent_input = (jnp.dot(z, wlo_ref[...],
                                preferred_element_type=jnp.float32) + blo_ref[...])  # (1, H)
        latinfo_ref[bb] = lat_info

        # ---- transformer encoder + decoder + fused heads ----
        heads_ref[bb] = _enc_dec_one(
            latent_input, srcin_ref[bb], encmask_ref[...],
            src_w_ref[...], src_static_ref[...], enc_pos_ref[...], qe_ref[...],
            attn_w_ref, attn_b_ref, ln_ref, f1w_ref, f1b_ref, f2w_ref, f2b_ref,
            wh_ref[...], bh_ref[...])


def _detrvae_infer_kernel(
        srcin_ref, encmask_ref, blo_ref,
        src_w_ref, src_static_ref, enc_pos_ref, qe_ref,
        attn_w_ref, attn_b_ref, ln_ref,
        f1w_ref, f1b_ref, f2w_ref, f2b_ref,
        wh_ref, bh_ref,
        heads_ref):
    """Inference forward: latent_sample = 0 => latent_input = latent_out_proj bias."""
    B = srcin_ref.shape[0]
    for bb in range(B):
        heads_ref[bb] = _enc_dec_one(
            blo_ref[...], srcin_ref[bb], encmask_ref[...],
            src_w_ref[...], src_static_ref[...], enc_pos_ref[...], qe_ref[...],
            attn_w_ref, attn_b_ref, ln_ref, f1w_ref, f1b_ref, f2w_ref, f2b_ref,
            wh_ref[...], bh_ref[...])


# ---------------- parameter init (deterministic, same structure as before) ----
def init_params(seed=42):
    key = jax.random.PRNGKey(seed)
    keys = iter(jax.random.split(key, 128))

    def dense(din, dout):
        k = next(keys)
        return {"w": jax.random.normal(k, (din, dout), jnp.float32) / np.sqrt(din),
                "b": jnp.zeros((dout,), jnp.float32)}

    def ln():
        return {"g": jnp.ones((HIDDEN,), jnp.float32),
                "b": jnp.zeros((HIDDEN,), jnp.float32)}

    def attn():
        return {"q": dense(HIDDEN, HIDDEN), "k": dense(HIDDEN, HIDDEN),
                "v": dense(HIDDEN, HIDDEN), "o": dense(HIDDEN, HIDDEN)}

    def enc_layer():
        return {"attn": attn(), "ln1": ln(),
                "ff1": dense(HIDDEN, FFN), "ff2": dense(FFN, HIDDEN), "ln2": ln()}

    def dec_layer():
        return {"sa": attn(), "ln1": ln(), "ca": attn(), "ln2": ln(),
                "ff1": dense(HIDDEN, FFN), "ff2": dense(FFN, HIDDEN), "ln3": ln()}

    return {
        "action_head": dense(HIDDEN, STATE_DIM),
        "is_pad_head": dense(HIDDEN, 1),
        "query_embed": jax.random.normal(next(keys), (NUM_QUERIES, HIDDEN),
                                         jnp.float32) * 0.02,
        "input_proj": dense(BB_CHANNELS, HIDDEN),            # 1x1 conv as matmul
        "input_proj_robot_state": dense(STATE_DIM, HIDDEN),
        "cls_embed": jax.random.normal(next(keys), (1, HIDDEN), jnp.float32) * 0.02,
        "encoder_action_proj": dense(STATE_DIM, HIDDEN),
        "encoder_joint_proj": dense(STATE_DIM, HIDDEN),
        "latent_proj": dense(HIDDEN, 2 * LATENT),
        "latent_out_proj": dense(LATENT, HIDDEN),
        "additional_pos_embed": jax.random.normal(next(keys), (2, HIDDEN),
                                                  jnp.float32) * 0.02,
        "pos_table": get_sinusoid_encoding_table(1 + 1 + NUM_QUERIES, HIDDEN),
        "backbone": {"conv": dense(IMG_C, BB_CHANNELS),       # synthetic 1x1-conv backbone
                     "pos": get_sinusoid_encoding_table(IMG_H * IMG_W, HIDDEN)},
        "cvae_encoder": enc_layer(),
        "tr_encoder": enc_layer(),
        "tr_decoder": dec_layer(),
    }


# ---------------- one-time weight packing / fusion ----------------------------
def _pack_attn(ap):
    w = jnp.stack([ap["q"]["w"], ap["k"]["w"], ap["v"]["w"], ap["o"]["w"]])            # (4,H,H)
    b = jnp.stack([ap["q"]["b"], ap["k"]["b"], ap["v"]["b"], ap["o"]["b"]])[:, None, :]  # (4,1,H)
    return w, b


def pack_params(p):
    """Pre-fuse / pre-place weights so each forward needs a single pallas_call."""
    pk = {}
    # ----- CVAE branch -----
    pk["cvae_w_in"] = jnp.concatenate(
        [p["encoder_action_proj"]["w"], p["encoder_joint_proj"]["w"]], axis=0)  # (16, H)
    stat = jnp.zeros((L_CVAE, HIDDEN), jnp.float32)
    stat = stat.at[0].set(p["cls_embed"][0])
    stat = stat.at[1].set(p["encoder_joint_proj"]["b"])
    stat = stat.at[2:2 + NUM_QUERIES].set(p["encoder_action_proj"]["b"])
    pk["cvae_static"] = stat
    cpos = jnp.zeros((L_CVAE, HIDDEN), jnp.float32)
    cpos = cpos.at[:2 + NUM_QUERIES].set(p["pos_table"][0])
    pk["cvae_pos"] = cpos
    pk["w_lat"] = p["latent_proj"]["w"]                                  # (H, 2*LATENT)
    pk["b_lat"] = p["latent_proj"]["b"][None, :]                         # (1, 2*LATENT)
    pk["w_lo"] = p["latent_out_proj"]["w"]                               # (LATENT, H)
    pk["b_lo"] = p["latent_out_proj"]["b"][None, :]                      # (1, H)
    # ----- transformer encoder: backbone 1x1 conv folded into input_proj -----
    w_img = jnp.dot(p["backbone"]["conv"]["w"], p["input_proj"]["w"])    # (IMG_C, H)
    b_img = (jnp.dot(p["backbone"]["conv"]["b"][None, :], p["input_proj"]["w"])[0]
             + p["input_proj"]["b"])
    pk["src_w"] = jnp.concatenate(
        [w_img, p["input_proj_robot_state"]["w"]], axis=0)               # (IMG_C+STATE_DIM, H)
    sstat = jnp.zeros((L_ENC, HIDDEN), jnp.float32)
    sstat = sstat.at[1].set(p["input_proj_robot_state"]["b"])
    sstat = sstat.at[2:2 + NUM_IMG_TOK].set(b_img)
    pk["src_static"] = sstat
    epos = jnp.zeros((L_ENC, HIDDEN), jnp.float32)
    epos = epos.at[0:2].set(p["additional_pos_embed"])
    epos = epos.at[2:2 + NUM_IMG_TOK].set(
        jnp.tile(p["backbone"]["pos"][0], (NUM_CAM, 1)))
    pk["enc_pos"] = epos
    pk["enc_mask"] = jnp.where(jnp.arange(L_ENC) < ENC_VALID,
                               0.0, NEG_INF).astype(jnp.float32)[None, :]  # (1, L_ENC)
    # ----- decoder + fused heads -----
    pk["query_embed"] = p["query_embed"]
    pk["w_head"] = jnp.concatenate(
        [p["action_head"]["w"], p["is_pad_head"]["w"]], axis=1)          # (H, STATE_DIM+1)
    pk["b_head"] = jnp.concatenate(
        [p["action_head"]["b"], p["is_pad_head"]["b"]])[None, :]
    # ----- packed slabs shared by all attention / LN / FFN blocks -----
    aw_c, ab_c = _pack_attn(p["cvae_encoder"]["attn"])
    aw_e, ab_e = _pack_attn(p["tr_encoder"]["attn"])
    aw_s, ab_s = _pack_attn(p["tr_decoder"]["sa"])
    aw_x, ab_x = _pack_attn(p["tr_decoder"]["ca"])
    pk["attn_w"] = jnp.concatenate([aw_c, aw_e, aw_s, aw_x], axis=0)     # (16, H, H)
    pk["attn_b"] = jnp.concatenate([ab_c, ab_e, ab_s, ab_x], axis=0)     # (16, 1, H)
    ce, te, td = p["cvae_encoder"], p["tr_encoder"], p["tr_decoder"]
    pk["ln"] = jnp.stack([
        ce["ln1"]["g"], ce["ln1"]["b"], ce["ln2"]["g"], ce["ln2"]["b"],
        te["ln1"]["g"], te["ln1"]["b"], te["ln2"]["g"], te["ln2"]["b"],
        td["ln1"]["g"], td["ln1"]["b"], td["ln2"]["g"], td["ln2"]["b"],
        td["ln3"]["g"], td["ln3"]["b"]])[:, None, :]                     # (14, 1, H)
    pk["f1w"] = jnp.stack([ce["ff1"]["w"], te["ff1"]["w"], td["ff1"]["w"]])           # (3, H, FFN)
    pk["f1b"] = jnp.stack([ce["ff1"]["b"], te["ff1"]["b"], td["ff1"]["b"]])[:, None]  # (3, 1, FFN)
    pk["f2w"] = jnp.stack([ce["ff2"]["w"], te["ff2"]["w"], td["ff2"]["w"]])           # (3, FFN, H)
    pk["f2b"] = jnp.stack([ce["ff2"]["b"], te["ff2"]["b"], td["ff2"]["b"]])[:, None]  # (3, 1, H)
    return pk


# ---------------- DETRVAE forward ---------------------------------------------
def detrvae_forward(pk, qpos, images, env_state=None, actions=None, is_pad=None,
                    eps=None):
    """qpos: (bs, state_dim); images: (num_cam, bs, 3, H, W);
    actions: (bs, num_queries, state_dim); is_pad: (bs, num_queries) bool;
    eps: (bs, latent) normal sample for reparametrize."""
    del env_state
    bs = qpos.shape[0]
    is_training = actions is not None

    # image tokens, channels-last end-to-end (conv/proj fused inside the kernel)
    cam_tok = [jnp.transpose(images[c], (0, 2, 3, 1)).reshape(bs, IMG_H * IMG_W, IMG_C)
               for c in range(len(CAM_NAMES))]
    img_tok = jnp.concatenate(cam_tok, axis=1)                            # (bs, NUM_IMG_TOK, 3)
    img_pl = jnp.pad(img_tok.astype(jnp.float32),
                     ((0, 0), (2, L_ENC - 2 - NUM_IMG_TOK), (0, 0)))
    qp_pl2 = jnp.pad(qpos.astype(jnp.float32)[:, None, :],
                     ((0, 0), (1, L_ENC - 2), (0, 0)))
    src_in = jnp.concatenate([img_pl, qp_pl2], axis=-1)                   # (bs, L_ENC, 11)

    common_w = (pk["src_w"], pk["src_static"], pk["enc_pos"], pk["query_embed"],
                pk["attn_w"], pk["attn_b"], pk["ln"],
                pk["f1w"], pk["f1b"], pk["f2w"], pk["f2b"],
                pk["w_head"], pk["b_head"])

    if is_training:
        # place raw inputs into the padded (L_CVAE, 2*STATE_DIM) token-feature slab
        act_pl = jnp.pad(actions.astype(jnp.float32),
                         ((0, 0), (2, L_CVAE - 2 - NUM_QUERIES), (0, 0)))
        qp_pl = jnp.pad(qpos.astype(jnp.float32)[:, None, :],
                        ((0, 0), (1, L_CVAE - 2), (0, 0)))
        xin = jnp.concatenate([act_pl, qp_pl], axis=-1)                   # (bs, L_CVAE, 16)
        pad_full = jnp.concatenate(
            [jnp.zeros((bs, 2), dtype=bool), is_pad,
             jnp.ones((bs, L_CVAE - 2 - NUM_QUERIES), dtype=bool)], axis=1)
        cmask = jnp.where(pad_full, NEG_INF, 0.0).astype(jnp.float32)[:, None, :]

        lat_info, heads = pl.pallas_call(
            _detrvae_train_kernel,
            out_shape=(jax.ShapeDtypeStruct((bs, 1, 2 * LATENT), jnp.float32),
                       jax.ShapeDtypeStruct((bs, NUM_QUERIES, STATE_DIM + 1), jnp.float32)),
        )(xin, cmask, eps.astype(jnp.float32)[:, None, :], src_in, pk["enc_mask"],
          pk["cvae_w_in"], pk["cvae_static"], pk["cvae_pos"],
          pk["w_lat"], pk["b_lat"], pk["w_lo"], pk["b_lo"],
          *common_w)
        mu = lat_info[:, 0, :LATENT]
        logvar = lat_info[:, 0, LATENT:]
    else:
        heads = pl.pallas_call(
            _detrvae_infer_kernel,
            out_shape=jax.ShapeDtypeStruct((bs, NUM_QUERIES, STATE_DIM + 1), jnp.float32),
        )(src_in, pk["enc_mask"], pk["b_lo"], *common_w)
        mu = logvar = None

    a_hat = heads[..., :STATE_DIM]                                        # (bs, nq, state_dim)
    is_pad_hat = heads[..., STATE_DIM:]                                   # (bs, nq, 1)
    return a_hat, is_pad_hat, (mu, logvar)


# ---------------- main ----------------------------------------------------------
if __name__ == "__main__":
    key = jax.random.PRNGKey(0)
    k1, k2, k3, k4 = jax.random.split(key, 4)
    qpos = jax.random.normal(k1, (BS, STATE_DIM), jnp.float32)
    images = jax.random.normal(k2, (NUM_CAM, BS, IMG_C, IMG_H, IMG_W), jnp.float32)
    actions = jax.random.normal(k3, (BS, NUM_QUERIES, STATE_DIM), jnp.float32)
    is_pad = jnp.zeros((BS, NUM_QUERIES), dtype=bool).at[:, -2:].set(True)
    eps = jax.random.normal(k4, (BS, LATENT), jnp.float32)

    params = init_params(seed=42)
    pk = pack_params(params)

    fwd = jax.jit(detrvae_forward)
    a_hat, is_pad_hat, (mu, logvar) = fwd(pk, qpos, images, None, actions, is_pad, eps)
    jax.block_until_ready((a_hat, is_pad_hat, mu, logvar))

    assert a_hat.shape == (BS, NUM_QUERIES, STATE_DIM)
    assert is_pad_hat.shape == (BS, NUM_QUERIES, 1)
    assert mu.shape == (BS, LATENT) and logvar.shape == (BS, LATENT)
    assert bool(jnp.all(jnp.isfinite(a_hat)))
    assert bool(jnp.all(jnp.isfinite(is_pad_hat)))
    assert bool(jnp.all(jnp.isfinite(mu))) and bool(jnp.all(jnp.isfinite(logvar)))

    # also exercise the inference path (single fused enc+dec kernel)
    a_inf, p_inf, (mu_i, lv_i) = jax.jit(
        lambda pk_, q_, im_: detrvae_forward(pk_, q_, im_))(pk, qpos, images)
    jax.block_until_ready((a_inf, p_inf))
    assert a_inf.shape == (BS, NUM_QUERIES, STATE_DIM)
    assert mu_i is None and lv_i is None
    assert bool(jnp.all(jnp.isfinite(a_inf))) and bool(jnp.all(jnp.isfinite(p_inf)))

    print("KERNEL_OK")
</pallas_src>

<mosaic_0001>
module attributes {stable_mosaic.version = 11 : i64} {
  func.func @_detrvae_train_kernel(%arg0: memref<2x16x16xf32, #tpu.memory_space<vmem>>, %arg1: memref<2x1x16xf32, #tpu.memory_space<vmem>>, %arg2: memref<2x1x8xf32, #tpu.memory_space<vmem>>, %arg3: memref<2x128x11xf32, #tpu.memory_space<vmem>>, %arg4: memref<1x128xf32, #tpu.memory_space<vmem>>, %arg5: memref<16x32xf32, #tpu.memory_space<vmem>>, %arg6: memref<16x32xf32, #tpu.memory_space<vmem>>, %arg7: memref<16x32xf32, #tpu.memory_space<vmem>>, %arg8: memref<32x16xf32, #tpu.memory_space<vmem>>, %arg9: memref<1x16xf32, #tpu.memory_space<vmem>>, %arg10: memref<8x32xf32, #tpu.memory_space<vmem>>, %arg11: memref<1x32xf32, #tpu.memory_space<vmem>>, %arg12: memref<11x32xf32, #tpu.memory_space<vmem>>, %arg13: memref<128x32xf32, #tpu.memory_space<vmem>>, %arg14: memref<128x32xf32, #tpu.memory_space<vmem>>, %arg15: memref<8x32xf32, #tpu.memory_space<vmem>>, %arg16: memref<16x32x32xf32, #tpu.memory_space<vmem>>, %arg17: memref<16x1x32xf32, #tpu.memory_space<vmem>>, %arg18: memref<14x1x32xf32, #tpu.memory_space<vmem>>, %arg19: memref<3x32x64xf32, #tpu.memory_space<vmem>>, %arg20: memref<3x1x64xf32, #tpu.memory_space<vmem>>, %arg21: memref<3x64x32xf32, #tpu.memory_space<vmem>>, %arg22: memref<3x1x32xf32, #tpu.memory_space<vmem>>, %arg23: memref<32x9xf32, #tpu.memory_space<vmem>>, %arg24: memref<1x9xf32, #tpu.memory_space<vmem>>, %arg25: memref<2x1x16xf32, #tpu.memory_space<vmem>>, %arg26: memref<2x8x9xf32, #tpu.memory_space<vmem>>) attributes {dimension_semantics = [], scalar_prefetch = 0 : i64, scratch_operands = 0 : i64, tpu.core_type = #tpu.core_type<tc>} {
    %c0 = arith.constant 0 : index
    %c0_0 = arith.constant 0 : index
    %c0_1 = arith.constant 0 : index
    %0 = vector.load %arg0[%c0, %c0_0, %c0_1] : memref<2x16x16xf32, #tpu.memory_space<vmem>>, vector<1x16x16xf32>
    %1 = vector.shape_cast %0 : vector<1x16x16xf32> to vector<16x16xf32>
    %c0_2 = arith.constant 0 : index
    %c0_3 = arith.constant 0 : index
    %2 = vector.load %arg5[%c0_2, %c0_3] : memref<16x32xf32, #tpu.memory_space<vmem>>, vector<16x32xf32>
    %cst = arith.constant dense<0.000000e+00> : vector<16x32xf32>
    %3 = tpu.matmul %1, %2, %cst {dimension_numbers = #tpu.dot_dimension_numbers<[1], [0], [0], [1], [0, 0, 1, 1], [], []>} : vector<16x16xf32>, vector<16x32xf32>, vector<16x32xf32> -> vector<16x32xf32>
    %c0_4 = arith.constant 0 : index
    %c0_5 = arith.constant 0 : index
    %4 = vector.load %arg6[%c0_4, %c0_5] : memref<16x32xf32, #tpu.memory_space<vmem>>, vector<16x32xf32>
    %5 = arith.addf %3, %4 : vector<16x32xf32>
    %c0_6 = arith.constant 0 : index
    %c0_7 = arith.constant 0 : index
    %6 = vector.load %arg7[%c0_6, %c0_7] : memref<16x32xf32, #tpu.memory_space<vmem>>, vector<16x32xf32>
    %c0_8 = arith.constant 0 : index
    %c0_9 = arith.constant 0 : index
    %c0_10 = arith.constant 0 : index
    %7 = vector.load %arg1[%c0_8, %c0_9, %c0_10] : memref<2x1x16xf32, #tpu.memory_space<vmem>>, vector<1x1x16xf32>
    %8 = vector.shape_cast %7 : vector<1x1x16xf32> to vector<1x16xf32>
    %9 = arith.addf %5, %6 : vector<16x32xf32>
    %c0_11 = arith.constant 0 : index
    %c0_12 = arith.constant 0 : index
    %c0_13 = arith.constant 0 : index
    %10 = vector.load %arg16[%c0_11, %c0_12, %c0_13] : memref<16x32x32xf32, #tpu.memory_space<vmem>>, vector<1x32x32xf32>
    %11 = vector.shape_cast %10 : vector<1x32x32xf32> to vector<32x32xf32>
    %cst_14 = arith.constant dense<0.000000e+00> : vector<16x32xf32>
    %12 = tpu.matmul %9, %11, %cst_14 {dimension_numbers = #tpu.dot_dimension_numbers<[1], [0], [0], [1], [0, 0, 1, 1], [], []>} : vector<16x32xf32>, vector<32x32xf32>, vector<16x32xf32> -> vector<16x32xf32>
    %c0_15 = arith.constant 0 : index
    %c0_16 = arith.constant 0 : index
    %c0_17 = arith.constant 0 : index
    %13 = vector.load %arg17[%c0_15, %c0_16, %c0_17] : memref<16x1x32xf32, #tpu.memory_space<vmem>>, vector<1x1x32xf32>
    %14 = vector.shape_cast %13 : vector<1x1x32xf32> to vector<1x32xf32>
    %15 = vector.broadcast %14 : vector<1x32xf32> to vector<16x32xf32>
    %16 = arith.addf %12, %15 : vector<16x32xf32>
    %c1 = arith.constant 1 : index
    %c0_18 = arith.constant 0 : index
    %c0_19 = arith.constant 0 : index
    %17 = vector.load %arg16[%c1, %c0_18, %c0_19] : memref<16x32x32xf32, #tpu.memory_space<vmem>>, vector<1x32x32xf32>
    %18 = vector.shape_cast %17 : vector<1x32x32xf32> to vector<32x32xf32>
    %cst_20 = arith.constant dense<0.000000e+00> : vector<16x32xf32>
    %19 = tpu.matmul %9, %18, %cst_20 {dimension_numbers = #tpu.dot_dimension_numbers<[1], [0], [0], [1], [0, 0, 1, 1], [], []>} : vector<16x32xf32>, vector<32x32xf32>, vector<16x32xf32> -> vector<16x32xf32>
    %c1_21 = arith.constant 1 : index
    %c0_22 = arith.constant 0 : index
    %c0_23 = arith.constant 0 : index
    %20 = vector.load %arg17[%c1_21, %c0_22, %c0_23] : memref<16x1x32xf32, #tpu.memory_space<vmem>>, vector<1x1x32xf32>
    %21 = vector.shape_cast %20 : vector<1x1x32xf32> to vector<1x32xf32>
    %22 = vector.broadcast %21 : vector<1x32xf32> to vector<16x32xf32>
    %23 = arith.addf %19, %22 : vector<16x32xf32>
    %c2 = arith.constant 2 : index
    %c0_24 = arith.constant 0 : index
    %c0_25 = arith.constant 0 : index
    %24 = vector.load %arg16[%c2, %c0_24, %c0_25] : memref<16x32x32xf32, #tpu.memory_space<vmem>>, vector<1x32x32xf32>
    %25 = vector.shape_cast %24 : vector<1x32x32xf32> to vector<32x32xf32>
    %cst_26 = arith.constant dense<0.000000e+00> : vector<16x32xf32>
    %26 = tpu.matmul %5, %25, %cst_26 {dimension_numbers = #tpu.dot_dimension_numbers<[1], [0], [0], [1], [0, 0, 1, 1], [], []>} : vector<16x32xf32>, vector<32x32xf32>, vector<16x32xf32> -> vector<16x32xf32>
    %c2_27 = arith.constant 2 : index
    %c0_28 = arith.constant 0 : index
    %c0_29 = arith.constant 0 : index
    %27 = vector.load %arg17[%c2_27, %c0_28, %c0_29] : memref<16x1x32xf32, #tpu.memory_space<vmem>>, vector<1x1x32xf32>
    %28 = vector.shape_cast %27 : vector<1x1x32xf32> to vector<1x32xf32>
    %29 = vector.broadcast %28 : vector<1x32xf32> to vector<16x32xf32>
    %30 = arith.addf %26, %29 : vector<16x32xf32>
    %cst_30 = arith.constant dense<0.000000e+00> : vector<16x16xf32>
    %31 = tpu.matmul %16, %23, %cst_30 {dimension_numbers = #tpu.dot_dimension_numbers<[1], [1], [0], [0], [0, 0, 1, 0], [], []>} : vector<16x32xf32>, vector<16x32xf32>, vector<16x16xf32> -> vector<16x16xf32>
    %cst_31 = arith.constant 0.176776692 : f32
    %32 = vector.broadcast %cst_31 : f32 to vector<16x16xf32>
    %33 = arith.mulf %31, %32 : vector<16x16xf32>
    %34 = vector.broadcast %8 : vector<1x16xf32> to vector<16x16xf32>
    %35 = arith.addf %33, %34 : vector<16x16xf32>
    %cst_32 = arith.constant dense<0xFF800000> : vector<16xf32>
    %36 = vector.multi_reduction <maximumf>, %35, %cst_32 [1] : vector<16x16xf32> to vector<16xf32>
    %37 = vector.shape_cast %36 : vector<16xf32> to vector<16x1xf32>
    %38 = vector.broadcast %37 : vector<16x1xf32> to vector<16x16xf32>
    %39 = arith.subf %35, %38 : vector<16x16xf32>
    %40 = math.exp %39 : vector<16x16xf32>
    %cst_33 = arith.constant dense<0.000000e+00> : vector<16xf32>
    %41 = vector.multi_reduction <add>, %40, %cst_33 [1] : vector<16x16xf32> to vector<16xf32>
    %42 = vector.shape_cast %41 : vector<16xf32> to vector<16x1xf32>
    %43 = vector.broadcast %42 : vector<16x1xf32> to vector<16x16xf32>
    %44 = arith.divf %40, %43 : vector<16x16xf32>
    %cst_34 = arith.constant dense<0.000000e+00> : vector<16x32xf32>
    %45 = tpu.matmul %44, %30, %cst_34 {dimension_numbers = #tpu.dot_dimension_numbers<[1], [0], [0], [1], [0, 0, 1, 1], [], []>} : vector<16x16xf32>, vector<16x32xf32>, vector<16x32xf32> -> vector<16x32xf32>
    %c3 = arith.constant 3 : index
    %c0_35 = arith.constant 0 : index
    %c0_36 = arith.constant 0 : index
    %46 = vector.load %arg16[%c3, %c0_35, %c0_36] : memref<16x32x32xf32, #tpu.memory_space<vmem>>, vector<1x32x32xf32>
    %47 = vector.shape_cast %46 : vector<1x32x32xf32> to vector<32x32xf32>
    %cst_37 = arith.constant dense<0.000000e+00> : vector<16x32xf32>
    %48 = tpu.matmul %45, %47, %cst_37 {dimension_numbers = #tpu.dot_dimension_numbers<[1], [0], [0], [1], [0, 0, 1, 1], [], []>} : vector<16x32xf32>, vector<32x32xf32>, vector<16x32xf32> -> vector<16x32xf32>
    %c3_38 = arith.constant 3 : index
    %c0_39 = arith.constant 0 : index
    %c0_40 = arith.constant 0 : index
    %49 = vector.load %arg17[%c3_38, %c0_39, %c0_40] : memref<16x1x32xf32, #tpu.memory_space<vmem>>, vector<1x1x32xf32>
    %50 = vector.shape_cast %49 : vector<1x1x32xf32> to vector<1x32xf32>
    %51 = vector.broadcast %50 : vector<1x32xf32> to vector<16x32xf32>
    %52 = arith.addf %48, %51 : vector<16x32xf32>
    %53 = arith.addf %5, %52 : vector<16x32xf32>
    %c0_41 = arith.constant 0 : index
    %c0_42 = arith.constant 0 : index
    %c0_43 = arith.constant 0 : index
    %54 = vector.load %arg18[%c0_41, %c0_42, %c0_43] : memref<14x1x32xf32, #tpu.memory_space<vmem>>, vector<1x1x32xf32>
    %55 = vector.shape_cast %54 : vector<1x1x32xf32> to vector<1x32xf32>
    %c1_44 = arith.constant 1 : index
    %c0_45 = arith.constant 0 : index
    %c0_46 = arith.constant 0 : index
    %56 = vector.load %arg18[%c1_44, %c0_45, %c0_46] : memref<14x1x32xf32, #tpu.memory_space<vmem>>, vector<1x1x32xf32>
    %57 = vector.shape_cast %56 : vector<1x1x32xf32> to vector<1x32xf32>
    %cst_47 = arith.constant dense<0.000000e+00> : vector<16xf32>
    %58 = vector.multi_reduction <add>, %53, %cst_47 [1] : vector<16x32xf32> to vector<16xf32>
    %59 = vector.shape_cast %58 : vector<16xf32> to vector<16x1xf32>
    %cst_48 = arith.constant 3.200000e+01 : f32
    %60 = vector.broadcast %cst_48 : f32 to vector<16x1xf32>
    %61 = arith.divf %59, %60 : vector<16x1xf32>
    %62 = vector.broadcast %61 : vector<16x1xf32> to vector<16x32xf32>
    %63 = arith.subf %53, %62 : vector<16x32xf32>
    %64 = arith.mulf %63, %63 : vector<16x32xf32>
    %cst_49 = arith.constant dense<0.000000e+00> : vector<16xf32>
    %65 = vector.multi_reduction <add>, %64, %cst_49 [1] : vector<16x32xf32> to vector<16xf32>
    %66 = vector.shape_cast %65 : vector<16xf32> to vector<16x1xf32>
    %cst_50 = arith.constant 3.200000e+01 : f32
    %67 = vector.broadcast %cst_50 : f32 to vector<16x1xf32>
    %68 = arith.divf %66, %67 : vector<16x1xf32>
    %69 = vector.broadcast %61 : vector<16x1xf32> to vector<16x32xf32>
    %70 = arith.subf %53, %69 : vector<16x32xf32>
    %cst_51 = arith.constant 9.99999974E-6 : f32
    %71 = vector.broadcast %cst_51 : f32 to vector<16x1xf32>
    %72 = arith.addf %68, %71 : vector<16x1xf32>
    %73 = math.rsqrt %72 : vector<16x1xf32>
    %74 = vector.broadcast %73 : vector<16x1xf32> to vector<16x32xf32>
    %75 = arith.mulf %70, %74 : vector<16x32xf32>
    %76 = vector.broadcast %55 : vector<1x32xf32> to vector<16x32xf32>
    %77 = arith.mulf %75, %76 : vector<16x32xf32>
    %78 = vector.broadcast %57 : vector<1x32xf32> to vector<16x32xf32>
    %79 = arith.addf %77, %78 : vector<16x32xf32>
    %c0_52 = arith.constant 0 : index
    %c0_53 = arith.constant 0 : index
    %c0_54 = arith.constant 0 : index
    %80 = vector.load %arg19[%c0_52, %c0_53, %c0_54] : memref<3x32x64xf32, #tpu.memory_space<vmem>>, vector<1x32x64xf32>
    %81 = vector.shape_cast %80 : vector<1x32x64xf32> to vector<32x64xf32>
    %cst_55 = arith.constant dense<0.000000e+00> : vector<16x64xf32>
    %82 = tpu.matmul %79, %81, %cst_55 {dimension_numbers = #tpu.dot_dimension_numbers<[1], [0], [0], [1], [0, 0, 1, 1], [], []>} : vector<16x32xf32>, vector<32x64xf32>, vector<16x64xf32> -> vector<16x64xf32>
    %c0_56 = arith.constant 0 : index
    %c0_57 = arith.constant 0 : index
    %c0_58 = arith.constant 0 : index
    %83 = vector.load %arg20[%c0_56, %c0_57, %c0_58] : memref<3x1x64xf32, #tpu.memory_space<vmem>>, vector<1x1x64xf32>
    %84 = vector.shape_cast %83 : vector<1x1x64xf32> to vector<1x64xf32>
    %85 = vector.broadcast %84 : vector<1x64xf32> to vector<16x64xf32>
    %86 = arith.addf %82, %85 : vector<16x64xf32>
    %cst_59 = arith.constant 0.000000e+00 : f32
    %87 = vector.broadcast %cst_59 : f32 to vector<16x64xf32>
    %88 = arith.maximumf %86, %87 : vector<16x64xf32>
    %c0_60 = arith.constant 0 : index
    %c0_61 = arith.constant 0 : index
    %c0_62 = arith.constant 0 : index
    %89 = vector.load %arg21[%c0_60, %c0_61, %c0_62] : memref<3x64x32xf32, #tpu.memory_space<vmem>>, vector<1x64x32xf32>
    %90 = vector.shape_cast %89 : vector<1x64x32xf32> to vector<64x32xf32>
    %cst_63 = arith.constant dense<0.000000e+00> : vector<16x32xf32>
    %91 = tpu.matmul %88, %90, %cst_63 {dimension_numbers = #tpu.dot_dimension_numbers<[1], [0], [0], [1], [0, 0, 1, 1], [], []>} : vector<16x64xf32>, vector<64x32xf32>, vector<16x32xf32> -> vector<16x32xf32>
    %c0_64 = arith.constant 0 : index
    %c0_65 = arith.constant 0 : index
    %c0_66 = arith.constant 0 : index
    %92 = vector.load %arg22[%c0_64, %c0_65, %c0_66] : memref<3x1x32xf32, #tpu.memory_space<vmem>>, vector<1x1x32xf32>
    %93 = vector.shape_cast %92 : vector<1x1x32xf32> to vector<1x32xf32>
    %94 = vector.broadcast %93 : vector<1x32xf32> to vector<16x32xf32>
    %95 = arith.addf %91, %94 : vector<16x32xf32>
    %96 = arith.addf %79, %95 : vector<16x32xf32>
    %c2_67 = arith.constant 2 : index
    %c0_68 = arith.constant 0 : index
    %c0_69 = arith.constant 0 : index
    %97 = vector.load %arg18[%c2_67, %c0_68, %c0_69] : memref<14x1x32xf32, #tpu.memory_space<vmem>>, vector<1x1x32xf32>
    %98 = vector.shape_cast %97 : vector<1x1x32xf32> to vector<1x32xf32>
    %c3_70 = arith.constant 3 : index
    %c0_71 = arith.constant 0 : index
    %c0_72 = arith.constant 0 : index
    %99 = vector.load %arg18[%c3_70, %c0_71, %c0_72] : memref<14x1x32xf32, #tpu.memory_space<vmem>>, vector<1x1x32xf32>
    %100 = vector.shape_cast %99 : vector<1x1x32xf32> to vector<1x32xf32>
    %cst_73 = arith.constant dense<0.000000e+00> : vector<16xf32>
    %101 = vector.multi_reduction <add>, %96, %cst_73 [1] : vector<16x32xf32> to vector<16xf32>
    %102 = vector.shape_cast %101 : vector<16xf32> to vector<16x1xf32>
    %cst_74 = arith.constant 3.200000e+01 : f32
    %103 = vector.broadcast %cst_74 : f32 to vector<16x1xf32>
    %104 = arith.divf %102, %103 : vector<16x1xf32>
    %105 = vector.broadcast %104 : vector<16x1xf32> to vector<16x32xf32>
    %106 = arith.subf %96, %105 : vector<16x32xf32>
    %107 = arith.mulf %106, %106 : vector<16x32xf32>
    %cst_75 = arith.constant dense<0.000000e+00> : vector<16xf32>
    %108 = vector.multi_reduction <add>, %107, %cst_75 [1] : vector<16x32xf32> to vector<16xf32>
    %109 = vector.shape_cast %108 : vector<16xf32> to vector<16x1xf32>
    %cst_76 = arith.constant 3.200000e+01 : f32
    %110 = vector.broadcast %cst_76 : f32 to vector<16x1xf32>
    %111 = arith.divf %109, %110 : vector<16x1xf32>
    %112 = vector.broadcast %104 : vector<16x1xf32> to vector<16x32xf32>
    %113 = arith.subf %96, %112 : vector<16x32xf32>
    %cst_77 = arith.constant 9.99999974E-6 : f32
    %114 = vector.broadcast %cst_77 : f32 to vector<16x1xf32>
    %115 = arith.addf %111, %114 : vector<16x1xf32>
    %116 = math.rsqrt %115 : vector<16x1xf32>
    %117 = vector.broadcast %116 : vector<16x1xf32> to vector<16x32xf32>
    %118 = arith.mulf %113, %117 : vector<16x32xf32>
    %119 = vector.broadcast %98 : vector<1x32xf32> to vector<16x32xf32>
    %120 = arith.mulf %118, %119 : vector<16x32xf32>
    %121 = vector.broadcast %100 : vector<1x32xf32> to vector<16x32xf32>
    %122 = arith.addf %120, %121 : vector<16x32xf32>
    %123 = vector.extract_strided_slice %122 {offsets = [0, 0], sizes = [1, 32], strides = [1, 1]} : vector<16x32xf32> to vector<1x32xf32>
    %c0_78 = arith.constant 0 : index
    %c0_79 = arith.constant 0 : index
    %124 = vector.load %arg8[%c0_78, %c0_79] : memref<32x16xf32, #tpu.memory_space<vmem>>, vector<32x16xf32>
    %cst_80 = arith.constant dense<0.000000e+00> : vector<1x16xf32>
    %125 = tpu.matmul %123, %124, %cst_80 {dimension_numbers = #tpu.dot_dimension_numbers<[1], [0], [0], [1], [0, 0, 1, 1], [], []>} : vector<1x32xf32>, vector<32x16xf32>, vector<1x16xf32> -> vector<1x16xf32>
    %c0_81 = arith.constant 0 : index
    %c0_82 = arith.constant 0 : index
    %126 = vector.load %arg9[%c0_81, %c0_82] : memref<1x16xf32, #tpu.memory_space<vmem>>, vector<1x16xf32>
    %127 = arith.addf %125, %126 : vector<1x16xf32>
    %128 = vector.extract_strided_slice %127 {offsets = [0, 0], sizes = [1, 8], strides = [1, 1]} : vector<1x16xf32> to vector<1x8xf32>
    %129 = vector.extract_strided_slice %127 {offsets = [0, 8], sizes = [1, 8], strides = [1, 1]} : vector<1x16xf32> to vector<1x8xf32>
    %cst_83 = arith.constant 5.000000e-01 : f32
    %130 = vector.broadcast %cst_83 : f32 to vector<1x8xf32>
    %131 = arith.mulf %130, %129 : vector<1x8xf32>
    %132 = math.exp %131 : vector<1x8xf32>
    %c0_84 = arith.constant 0 : index
    %c0_85 = arith.constant 0 : index
    %c0_86 = arith.constant 0 : index
    %133 = vector.load %arg2[%c0_84, %c0_85, %c0_86] : memref<2x1x8xf32, #tpu.memory_space<vmem>>, vector<1x1x8xf32>
    %134 = vector.shape_cast %133 : vector<1x1x8xf32> to vector<1x8xf32>
    %135 = arith.mulf %132, %134 : vector<1x8xf32>
    %136 = arith.addf %128, %135 : vector<1x8xf32>
    %c0_87 = arith.constant 0 : index
    %c0_88 = arith.constant 0 : index
    %137 = vector.load %arg10[%c0_87, %c0_88] : memref<8x32xf32, #tpu.memory_space<vmem>>, vector<8x32xf32>
    %cst_89 = arith.constant dense<0.000000e+00> : vector<1x32xf32>
    %138 = tpu.matmul %136, %137, %cst_89 {dimension_numbers = #tpu.dot_dimension_numbers<[1], [0], [0], [1], [0, 0, 1, 1], [], []>} : vector<1x8xf32>, vector<8x32xf32>, vector<1x32xf32> -> vector<1x32xf32>
    %c0_90 = arith.constant 0 : index
    %c0_91 = arith.constant 0 : index
    %139 = vector.load %arg11[%c0_90, %c0_91] : memref<1x32xf32, #tpu.memory_space<vmem>>, vector<1x32xf32>
    %140 = arith.addf %138, %139 : vector<1x32xf32>
    %c0_92 = arith.constant 0 : index
    %c0_93 = arith.constant 0 : index
    %c0_94 = arith.constant 0 : index
    %141 = vector.load %arg25[%c0_92, %c0_93, %c0_94] : memref<2x1x16xf32, #tpu.memory_space<vmem>>, vector<1x1x16xf32>
    %142 = vector.shape_cast %141 : vector<1x1x16xf32> to vector<1x16xf32>
    %143 = vector.shape_cast %127 : vector<1x16xf32> to vector<1x1x16xf32>
    tpu.vector_store %arg25[%c0_92, %c0_93, %c0_94], %143 {strides = array<i32>} : memref<2x1x16xf32, #tpu.memory_space<vmem>>, vector<1x1x16xf32>,
    %c0_95 = arith.constant 0 : index
    %c0_96 = arith.constant 0 : index
    %c0_97 = arith.constant 0 : index
    %144 = vector.load %arg3[%c0_95, %c0_96, %c0_97] : memref<2x128x11xf32, #tpu.memory_space<vmem>>, vector<1x128x11xf32>
    %145 = vector.shape_cast %144 : vector<1x128x11xf32> to vector<128x11xf32>
    %c0_98 = arith.constant 0 : index
    %c0_99 = arith.constant 0 : index
    %146 = vector.load %arg4[%c0_98, %c0_99] : memref<1x128xf32, #tpu.memory_space<vmem>>, vector<1x128xf32>
    %c0_100 = arith.constant 0 : index
    %c0_101 = arith.constant 0 : index
    %147 = vector.load %arg12[%c0_100, %c0_101] : memref<11x32xf32, #tpu.memory_space<vmem>>, vector<11x32xf32>
    %c0_102 = arith.constant 0 : index
    %c0_103 = arith.constant 0 : index
    %148 = vector.load %arg13[%c0_102, %c0_103] : memref<128x32xf32, #tpu.memory_space<vmem>>, vector<128x32xf32>
    %c0_104 = arith.constant 0 : index
    %c0_105 = arith.constant 0 : index
    %149 = vector.load %arg14[%c0_104, %c0_105] : memref<128x32xf32, #tpu.memory_space<vmem>>, vector<128x32xf32>
    %c0_106 = arith.constant 0 : index
    %c0_107 = arith.constant 0 : index
    %150 = vector.load %arg15[%c0_106, %c0_107] : memref<8x32xf32, #tpu.memory_space<vmem>>, vector<8x32xf32>
    %c0_108 = arith.constant 0 : index
    %c0_109 = arith.constant 0 : index
    %151 = vector.load %arg23[%c0_108, %c0_109] : memref<32x9xf32, #tpu.memory_space<vmem>>, vector<32x9xf32>
    %c0_110 = arith.constant 0 : index
    %c0_111 = arith.constant 0 : index
    %152 = vector.load %arg24[%c0_110, %c0_111] : memref<1x9xf32, #tpu.memory_space<vmem>>, vector<1x9xf32>
    %cst_112 = arith.constant dense<0.000000e+00> : vector<128x32xf32>
    %153 = tpu.matmul %145, %147, %cst_112 {dimension_numbers = #tpu.dot_dimension_numbers<[1], [0], [0], [1], [0, 0, 1, 1], [], []>} : vector<128x11xf32>, vector<11x32xf32>, vector<128x32xf32> -> vector<128x32xf32>
    %154 = arith.addf %153, %148 : vector<128x32xf32>
    %155 = tpu.iota {dimensions = array<i32: 0>} : vector<128x1xi32>
    %c0_i32 = arith.constant 0 : i32
    %156 = vector.broadcast %c0_i32 : i32 to vector<128x1xi32>
    %157 = arith.cmpi eq, %155, %156 : vector<128x1xi32>
    %cst_113 = arith.constant 0.000000e+00 : f32
    %158 = vector.shape_cast %157 : vector<128x1xi1> to vector<128x1xi1>
    %159 = vector.broadcast %158 : vector<128x1xi1> to vector<128x32xi1>
    %160 = vector.shape_cast %140 : vector<1x32xf32> to vector<1x32xf32>
    %161 = vector.broadcast %160 : vector<1x32xf32> to vector<128x32xf32>
    %162 = vector.broadcast %cst_113 : f32 to vector<128x32xf32>
    %163 = arith.select %159, %161, %162 : vector<128x32xi1>, vector<128x32xf32>
    %164 = arith.addf %154, %163 : vector<128x32xf32>
    %165 = arith.addf %164, %149 : vector<128x32xf32>
    %c4 = arith.constant 4 : index
    %c0_114 = arith.constant 0 : index
    %c0_115 = arith.constant 0 : index
    %166 = vector.load %arg16[%c4, %c0_114, %c0_115] : memref<16x32x32xf32, #tpu.memory_space<vmem>>, vector<1x32x32xf32>
    %167 = vector.shape_cast %166 : vector<1x32x32xf32> to vector<32x32xf32>
    %cst_116 = arith.constant dense<0.000000e+00> : vector<128x32xf32>
    %168 = tpu.matmul %165, %167, %cst_116 {dimension_numbers = #tpu.dot_dimension_numbers<[1], [0], [0], [1], [0, 0, 1, 1], [], []>} : vector<128x32xf32>, vector<32x32xf32>, vector<128x32xf32> -> vector<128x32xf32>
    %c4_117 = arith.constant 4 : index
    %c0_118 = arith.constant 0 : index
    %c0_119 = arith.constant 0 : index
    %169 = vector.load %arg17[%c4_117, %c0_118, %c0_119] : memref<16x1x32xf32, #tpu.memory_space<vmem>>, vector<1x1x32xf32>
    %170 = vector.shape_cast %169 : vector<1x1x32xf32> to vector<1x32xf32>
    %171 = vector.broadcast %170 : vector<1x32xf32> to vector<128x32xf32>
    %172 = arith.addf %168, %171 : vector<128x32xf32>
    %c5 = arith.constant 5 : index
    %c0_120 = arith.constant 0 : index
    %c0_121 = arith.constant 0 : index
    %173 = vector.load %arg16[%c5, %c0_120, %c0_121] : memref<16x32x32xf32, #tpu.memory_space<vmem>>, vector<1x32x32xf32>
    %174 = vector.shape_cast %173 : vector<1x32x32xf32> to vector<32x32xf32>
    %cst_122 = arith.constant dense<0.000000e+00> : vector<128x32xf32>
    %175 = tpu.matmul %165, %174, %cst_122 {dimension_numbers = #tpu.dot_dimension_numbers<[1], [0], [0], [1], [0, 0, 1, 1], [], []>} : vector<128x32xf32>, vector<32x32xf32>, vector<128x32xf32> -> vector<128x32xf32>
    %c5_123 = arith.constant 5 : index
    %c0_124 = arith.constant 0 : index
    %c0_125 = arith.constant 0 : index
    %176 = vector.load %arg17[%c5_123, %c0_124, %c0_125] : memref<16x1x32xf32, #tpu.memory_space<vmem>>, vector<1x1x32xf32>
    %177 = vector.shape_cast %176 : vector<1x1x32xf32> to vector<1x32xf32>
    %178 = vector.broadcast %177 : vector<1x32xf32> to vector<128x32xf32>
    %179 = arith.addf %175, %178 : vector<128x32xf32>
    %c6 = arith.constant 6 : index
    %c0_126 = arith.constant 0 : index
    %c0_127 = arith.constant 0 : index
    %180 = vector.load %arg16[%c6, %c0_126, %c0_127] : memref<16x32x32xf32, #tpu.memory_space<vmem>>, vector<1x32x32xf32>
    %181 = vector.shape_cast %180 : vector<1x32x32xf32> to vector<32x32xf32>
    %cst_128 = arith.constant dense<0.000000e+00> : vector<128x32xf32>
    %182 = tpu.matmul %164, %181, %cst_128 {dimension_numbers = #tpu.dot_dimension_numbers<[1], [0], [0], [1], [0, 0, 1, 1], [], []>} : vector<128x32xf32>, vector<32x32xf32>, vector<128x32xf32> -> vector<128x32xf32>
    %c6_129 = arith.constant 6 : index
    %c0_130 = arith.constant 0 : index
    %c0_131 = arith.constant 0 : index
    %183 = vector.load %arg17[%c6_129, %c0_130, %c0_131] : memref<16x1x32xf32, #tpu.memory_space<vmem>>, vector<1x1x32xf32>
    %184 = vector.shape_cast %183 : vector<1x1x32xf32> to vector<1x32xf32>
    %185 = vector.broadcast %184 : vector<1x32xf32> to vector<128x32xf32>
    %186 = arith.addf %182, %185 : vector<128x32xf32>
    %cst_132 = arith.constant dense<0.000000e+00> : vector<128x128xf32>
    %187 = tpu.matmul %172, %179, %cst_132 {dimension_numbers = #tpu.dot_dimension_numbers<[1], [1], [0], [0], [0, 0, 1, 0], [], []>} : vector<128x32xf32>, vector<128x32xf32>, vector<128x128xf32> -> vector<128x128xf32>
    %cst_133 = arith.constant 0.176776692 : f32
    %188 = vector.broadcast %cst_133 : f32 to vector<128x128xf32>
    %189 = arith.mulf %187, %188 : vector<128x128xf32>
    %190 = vector.broadcast %146 : vector<1x128xf32> to vector<128x128xf32>
    %191 = arith.addf %189, %190 : vector<128x128xf32>
    %cst_134 = arith.constant dense<0xFF800000> : vector<128xf32>
    %192 = vector.multi_reduction <maximumf>, %191, %cst_134 [1] : vector<128x128xf32> to vector<128xf32>
    %193 = vector.shape_cast %192 : vector<128xf32> to vector<128x1xf32>
    %194 = vector.broadcast %193 : vector<128x1xf32> to vector<128x128xf32>
    %195 = arith.subf %191, %194 : vector<128x128xf32>
    %196 = math.exp %195 : vector<128x128xf32>
    %cst_135 = arith.constant dense<0.000000e+00> : vector<128xf32>
    %197 = vector.multi_reduction <add>, %196, %cst_135 [1] : vector<128x128xf32> to vector<128xf32>
    %198 = vector.shape_cast %197 : vector<128xf32> to vector<128x1xf32>
    %199 = vector.broadcast %198 : vector<128x1xf32> to vector<128x128xf32>
    %200 = arith.divf %196, %199 : vector<128x128xf32>
    %cst_136 = arith.constant dense<0.000000e+00> : vector<128x32xf32>
    %201 = tpu.matmul %200, %186, %cst_136 {dimension_numbers = #tpu.dot_dimension_numbers<[1], [0], [0], [1], [0, 0, 1, 1], [], []>} : vector<128x128xf32>, vector<128x32xf32>, vector<128x32xf32> -> vector<128x32xf32>
    %c7 = arith.constant 7 : index
    %c0_137 = arith.constant 0 : index
    %c0_138 = arith.constant 0 : index
    %202 = vector.load %arg16[%c7, %c0_137, %c0_138] : memref<16x32x32xf32, #tpu.memory_space<vmem>>, vector<1x32x32xf32>
    %203 = vector.shape_cast %202 : vector<1x32x32xf32> to vector<32x32xf32>
    %cst_139 = arith.constant dense<0.000000e+00> : vector<128x32xf32>
    %204 = tpu.matmul %201, %203, %cst_139 {dimension_numbers = #tpu.dot_dimension_numbers<[1], [0], [0], [1], [0, 0, 1, 1], [], []>} : vector<128x32xf32>, vector<32x32xf32>, vector<128x32xf32> -> vector<128x32xf32>
    %c7_140 = arith.constant 7 : index
    %c0_141 = arith.constant 0 : index
    %c0_142 = arith.constant 0 : index
    %205 = vector.load %arg17[%c7_140, %c0_141, %c0_142] : memref<16x1x32xf32, #tpu.memory_space<vmem>>, vector<1x1x32xf32>
    %206 = vector.shape_cast %205 : vector<1x1x32xf32> to vector<1x32xf32>
    %207 = vector.broadcast %206 : vector<1x32xf32> to vector<128x32xf32>
    %208 = arith.addf %204, %207 : vector<128x32xf32>
    %209 = arith.addf %164, %208 : vector<128x32xf32>
    %c4_143 = arith.constant 4 : index
    %c0_144 = arith.constant 0 : index
    %c0_145 = arith.constant 0 : index
    %210 = vector.load %arg18[%c4_143, %c0_144, %c0_145] : memref<14x1x32xf32, #tpu.memory_space<vmem>>, vector<1x1x32xf32>
    %211 = vector.shape_cast %210 : vector<1x1x32xf32> to vector<1x32xf32>
    %c5_146 = arith.constant 5 : index
    %c0_147 = arith.constant 0 : index
    %c0_148 = arith.constant 0 : index
    %212 = vector.load %arg18[%c5_146, %c0_147, %c0_148] : memref<14x1x32xf32, #tpu.memory_space<vmem>>, vector<1x1x32xf32>
    %213 = vector.shape_cast %212 : vector<1x1x32xf32> to vector<1x32xf32>
    %cst_149 = arith.constant dense<0.000000e+00> : vector<128xf32>
    %214 = vector.multi_reduction <add>, %209, %cst_149 [1] : vector<128x32xf32> to vector<128xf32>
    %215 = vector.shape_cast %214 : vector<128xf32> to vector<128x1xf32>
    %cst_150 = arith.constant 3.200000e+01 : f32
    %216 = vector.broadcast %cst_150 : f32 to vector<128x1xf32>
    %217 = arith.divf %215, %216 : vector<128x1xf32>
    %218 = vector.broadcast %217 : vector<128x1xf32> to vector<128x32xf32>
    %219 = arith.subf %209, %218 : vector<128x32xf32>
    %220 = arith.mulf %219, %219 : vector<128x32xf32>
    %cst_151 = arith.constant dense<0.000000e+00> : vector<128xf32>
    %221 = vector.multi_reduction <add>, %220, %cst_151 [1] : vector<128x32xf32> to vector<128xf32>
    %222 = vector.shape_cast %221 : vector<128xf32> to vector<128x1xf32>
    %cst_152 = arith.constant 3.200000e+01 : f32
    %223 = vector.broadcast %cst_152 : f32 to vector<128x1xf32>
    %224 = arith.divf %222, %223 : vector<128x1xf32>
    %225 = vector.broadcast %217 : vector<128x1xf32> to vector<128x32xf32>
    %226 = arith.subf %209, %225 : vector<128x32xf32>
    %cst_153 = arith.constant 9.99999974E-6 : f32
    %227 = vector.broadcast %cst_153 : f32 to vector<128x1xf32>
    %228 = arith.addf %224, %227 : vector<128x1xf32>
    %229 = math.rsqrt %228 : vector<128x1xf32>
    %230 = vector.broadcast %229 : vector<128x1xf32> to vector<128x32xf32>
    %231 = arith.mulf %226, %230 : vector<128x32xf32>
    %232 = vector.broadcast %211 : vector<1x32xf32> to vector<128x32xf32>
    %233 = arith.mulf %231, %232 : vector<128x32xf32>
    %234 = vector.broadcast %213 : vector<1x32xf32> to vector<128x32xf32>
    %235 = arith.addf %233, %234 : vector<128x32xf32>
    %c1_154 = arith.constant 1 : index
    %c0_155 = arith.constant 0 : index
    %c0_156 = arith.constant 0 : index
    %236 = vector.load %arg19[%c1_154, %c0_155, %c0_156] : memref<3x32x64xf32, #tpu.memory_space<vmem>>, vector<1x32x64xf32>
    %237 = vector.shape_cast %236 : vector<1x32x64xf32> to vector<32x64xf32>
    %cst_157 = arith.constant dense<0.000000e+00> : vector<128x64xf32>
    %238 = tpu.matmul %235, %237, %cst_157 {dimension_numbers = #tpu.dot_dimension_numbers<[1], [0], [0], [1], [0, 0, 1, 1], [], []>} : vector<128x32xf32>, vector<32x64xf32>, vector<128x64xf32> -> vector<128x64xf32>
    %c1_158 = arith.constant 1 : index
    %c0_159 = arith.constant 0 : index
    %c0_160 = arith.constant 0 : index
    %239 = vector.load %arg20[%c1_158, %c0_159, %c0_160] : memref<3x1x64xf32, #tpu.memory_space<vmem>>, vector<1x1x64xf32>
    %240 = vector.shape_cast %239 : vector<1x1x64xf32> to vector<1x64xf32>
    %241 = vector.broadcast %240 : vector<1x64xf32> to vector<128x64xf32>
    %242 = arith.addf %238, %241 : vector<128x64xf32>
    %cst_161 = arith.constant 0.000000e+00 : f32
    %243 = vector.broadcast %cst_161 : f32 to vector<128x64xf32>
    %244 = arith.maximumf %242, %243 : vector<128x64xf32>
    %c1_162 = arith.constant 1 : index
    %c0_163 = arith.constant 0 : index
    %c0_164 = arith.constant 0 : index
    %245 = vector.load %arg21[%c1_162, %c0_163, %c0_164] : memref<3x64x32xf32, #tpu.memory_space<vmem>>, vector<1x64x32xf32>
    %246 = vector.shape_cast %245 : vector<1x64x32xf32> to vector<64x32xf32>
    %cst_165 = arith.constant dense<0.000000e+00> : vector<128x32xf32>
    %247 = tpu.matmul %244, %246, %cst_165 {dimension_numbers = #tpu.dot_dimension_numbers<[1], [0], [0], [1], [0, 0, 1, 1], [], []>} : vector<128x64xf32>, vector<64x32xf32>, vector<128x32xf32> -> vector<128x32xf32>
    %c1_166 = arith.constant 1 : index
    %c0_167 = arith.constant 0 : index
    %c0_168 = arith.constant 0 : index
    %248 = vector.load %arg22[%c1_166, %c0_167, %c0_168] : memref<3x1x32xf32, #tpu.memory_space<vmem>>, vector<1x1x32xf32>
    %249 = vector.shape_cast %248 : vector<1x1x32xf32> to vector<1x32xf32>
    %250 = vector.broadcast %249 : vector<1x32xf32> to vector<128x32xf32>
    %251 = arith.addf %247, %250 : vector<128x32xf32>
    %252 = arith.addf %235, %251 : vector<128x32xf32>
    %c6_169 = arith.constant 6 : index
    %c0_170 = arith.constant 0 : index
    %c0_171 = arith.constant 0 : index
    %253 = vector.load %arg18[%c6_169, %c0_170, %c0_171] : memref<14x1x32xf32, #tpu.memory_space<vmem>>, vector<1x1x32xf32>
    %254 = vector.shape_cast %253 : vector<1x1x32xf32> to vector<1x32xf32>
    %c7_172 = arith.constant 7 : index
    %c0_173 = arith.constant 0 : index
    %c0_174 = arith.constant 0 : index
    %255 = vector.load %arg18[%c7_172, %c0_173, %c0_174] : memref<14x1x32xf32, #tpu.memory_space<vmem>>, vector<1x1x32xf32>
    %256 = vector.shape_cast %255 : vector<1x1x32xf32> to vector<1x32xf32>
    %cst_175 = arith.constant dense<0.000000e+00> : vector<128xf32>
    %257 = vector.multi_reduction <add>, %252, %cst_175 [1] : vector<128x32xf32> to vector<128xf32>
    %258 = vector.shape_cast %257 : vector<128xf32> to vector<128x1xf32>
    %cst_176 = arith.constant 3.200000e+01 : f32
    %259 = vector.broadcast %cst_176 : f32 to vector<128x1xf32>
    %260 = arith.divf %258, %259 : vector<128x1xf32>
    %261 = vector.broadcast %260 : vector<128x1xf32> to vector<128x32xf32>
    %262 = arith.subf %252, %261 : vector<128x32xf32>
    %263 = arith.mulf %262, %262 : vector<128x32xf32>
    %cst_177 = arith.constant dense<0.000000e+00> : vector<128xf32>
    %264 = vector.multi_reduction <add>, %263, %cst_177 [1] : vector<128x32xf32> to vector<128xf32>
    %265 = vector.shape_cast %264 : vector<128xf32> to vector<128x1xf32>
    %cst_178 = arith.constant 3.200000e+01 : f32
    %266 = vector.broadcast %cst_178 : f32 to vector<128x1xf32>
    %267 = arith.divf %265, %266 : vector<128x1xf32>
    %268 = vector.broadcast %260 : vector<128x1xf32> to vector<128x32xf32>
    %269 = arith.subf %252, %268 : vector<128x32xf32>
    %cst_179 = arith.constant 9.99999974E-6 : f32
    %270 = vector.broadcast %cst_179 : f32 to vector<128x1xf32>
    %271 = arith.addf %267, %270 : vector<128x1xf32>
    %272 = math.rsqrt %271 : vector<128x1xf32>
    %273 = vector.broadcast %272 : vector<128x1xf32> to vector<128x32xf32>
    %274 = arith.mulf %269, %273 : vector<128x32xf32>
    %275 = vector.broadcast %254 : vector<1x32xf32> to vector<128x32xf32>
    %276 = arith.mulf %274, %275 : vector<128x32xf32>
    %277 = vector.broadcast %256 : vector<1x32xf32> to vector<128x32xf32>
    %278 = arith.addf %276, %277 : vector<128x32xf32>
    %cst_180 = arith.constant 0.000000e+00 : f32
    %279 = vector.broadcast %cst_180 : f32 to vector<8x32xf32>
    %cst_181 = arith.constant 0.000000e+00 : f32
    %280 = vector.broadcast %cst_181 : f32 to vector<1x8xf32>
    %281 = arith.addf %279, %150 : vector<8x32xf32>
    %c8 = arith.constant 8 : index
    %c0_182 = arith.constant 0 : index
    %c0_183 = arith.constant 0 : index
    %282 = vector.load %arg16[%c8, %c0_182, %c0_183] : memref<16x32x32xf32, #tpu.memory_space<vmem>>, vector<1x32x32xf32>
    %283 = vector.shape_cast %282 : vector<1x32x32xf32> to vector<32x32xf32>
    %cst_184 = arith.constant dense<0.000000e+00> : vector<8x32xf32>
    %284 = tpu.matmul %281, %283, %cst_184 {dimension_numbers = #tpu.dot_dimension_numbers<[1], [0], [0], [1], [0, 0, 1, 1], [], []>} : vector<8x32xf32>, vector<32x32xf32>, vector<8x32xf32> -> vector<8x32xf32>
    %c8_185 = arith.constant 8 : index
    %c0_186 = arith.constant 0 : index
    %c0_187 = arith.constant 0 : index
    %285 = vector.load %arg17[%c8_185, %c0_186, %c0_187] : memref<16x1x32xf32, #tpu.memory_space<vmem>>, vector<1x1x32xf32>
    %286 = vector.shape_cast %285 : vector<1x1x32xf32> to vector<1x32xf32>
    %287 = vector.broadcast %286 : vector<1x32xf32> to vector<8x32xf32>
    %288 = arith.addf %284, %287 : vector<8x32xf32>
    %c9 = arith.constant 9 : index
    %c0_188 = arith.constant 0 : index
    %c0_189 = arith.constant 0 : index
    %289 = vector.load %arg16[%c9, %c0_188, %c0_189] : memref<16x32x32xf32, #tpu.memory_space<vmem>>, vector<1x32x32xf32>
    %290 = vector.shape_cast %289 : vector<1x32x32xf32> to vector<32x32xf32>
    %cst_190 = arith.constant dense<0.000000e+00> : vector<8x32xf32>
    %291 = tpu.matmul %281, %290, %cst_190 {dimension_numbers = #tpu.dot_dimension_numbers<[1], [0], [0], [1], [0, 0, 1, 1], [], []>} : vector<8x32xf32>, vector<32x32xf32>, vector<8x32xf32> -> vector<8x32xf32>
    %c9_191 = arith.constant 9 : index
    %c0_192 = arith.constant 0 : index
    %c0_193 = arith.constant 0 : index
    %292 = vector.load %arg17[%c9_191, %c0_192, %c0_193] : memref<16x1x32xf32, #tpu.memory_space<vmem>>, vector<1x1x32xf32>
    %293 = vector.shape_cast %292 : vector<1x1x32xf32> to vector<1x32xf32>
    %294 = vector.broadcast %293 : vector<1x32xf32> to vector<8x32xf32>
    %295 = arith.addf %291, %294 : vector<8x32xf32>
    %c10 = arith.constant 10 : index
    %c0_194 = arith.constant 0 : index
    %c0_195 = arith.constant 0 : index
    %296 = vector.load %arg16[%c10, %c0_194, %c0_195] : memref<16x32x32xf32, #tpu.memory_space<vmem>>, vector<1x32x32xf32>
    %297 = vector.shape_cast %296 : vector<1x32x32xf32> to vector<32x32xf32>
    %cst_196 = arith.constant dense<0.000000e+00> : vector<8x32xf32>
    %298 = tpu.matmul %279, %297, %cst_196 {dimension_numbers = #tpu.dot_dimension_numbers<[1], [0], [0], [1], [0, 0, 1, 1], [], []>} : vector<8x32xf32>, vector<32x32xf32>, vector<8x32xf32> -> vector<8x32xf32>
    %c10_197 = arith.constant 10 : index
    %c0_198 = arith.constant 0 : index
    %c0_199 = arith.constant 0 : index
    %299 = vector.load %arg17[%c10_197, %c0_198, %c0_199] : memref<16x1x32xf32, #tpu.memory_space<vmem>>, vector<1x1x32xf32>
    %300 = vector.shape_cast %299 : vector<1x1x32xf32> to vector<1x32xf32>
    %301 = vector.broadcast %300 : vector<1x32xf32> to vector<8x32xf32>
    %302 = arith.addf %298, %301 : vector<8x32xf32>
    %cst_200 = arith.constant dense<0.000000e+00> : vector<8x8xf32>
    %303 = tpu.matmul %288, %295, %cst_200 {dimension_numbers = #tpu.dot_dimension_numbers<[1], [1], [0], [0], [0, 0, 1, 0], [], []>} : vector<8x32xf32>, vector<8x32xf32>, vector<8x8xf32> -> vector<8x8xf32>
    %cst_201 = arith.constant 0.176776692 : f32
    %304 = vector.broadcast %cst_201 : f32 to vector<8x8xf32>
    %305 = arith.mulf %303, %304 : vector<8x8xf32>
    %306 = vector.broadcast %280 : vector<1x8xf32> to vector<8x8xf32>
    %307 = arith.addf %305, %306 : vector<8x8xf32>
    %cst_202 = arith.constant dense<0xFF800000> : vector<8xf32>
    %308 = vector.multi_reduction <maximumf>, %307, %cst_202 [1] : vector<8x8xf32> to vector<8xf32>
    %309 = vector.shape_cast %308 : vector<8xf32> to vector<8x1xf32>
    %310 = vector.broadcast %309 : vector<8x1xf32> to vector<8x8xf32>
    %311 = arith.subf %307, %310 : vector<8x8xf32>
    %312 = math.exp %311 : vector<8x8xf32>
    %cst_203 = arith.constant dense<0.000000e+00> : vector<8xf32>
    %313 = vector.multi_reduction <add>, %312, %cst_203 [1] : vector<8x8xf32> to vector<8xf32>
    %314 = vector.shape_cast %313 : vector<8xf32> to vector<8x1xf32>
    %315 = vector.broadcast %314 : vector<8x1xf32> to vector<8x8xf32>
    %316 = arith.divf %312, %315 : vector<8x8xf32>
    %cst_204 = arith.constant dense<0.000000e+00> : vector<8x32xf32>
    %317 = tpu.matmul %316, %302, %cst_204 {dimension_numbers = #tpu.dot_dimension_numbers<[1], [0], [0], [1], [0, 0, 1, 1], [], []>} : vector<8x8xf32>, vector<8x32xf32>, vector<8x32xf32> -> vector<8x32xf32>
    %c11 = arith.constant 11 : index
    %c0_205 = arith.constant 0 : index
    %c0_206 = arith.constant 0 : index
    %318 = vector.load %arg16[%c11, %c0_205, %c0_206] : memref<16x32x32xf32, #tpu.memory_space<vmem>>, vector<1x32x32xf32>
    %319 = vector.shape_cast %318 : vector<1x32x32xf32> to vector<32x32xf32>
    %cst_207 = arith.constant dense<0.000000e+00> : vector<8x32xf32>
    %320 = tpu.matmul %317, %319, %cst_207 {dimension_numbers = #tpu.dot_dimension_numbers<[1], [0], [0], [1], [0, 0, 1, 1], [], []>} : vector<8x32xf32>, vector<32x32xf32>, vector<8x32xf32> -> vector<8x32xf32>
    %c11_208 = arith.constant 11 : index
    %c0_209 = arith.constant 0 : index
    %c0_210 = arith.constant 0 : index
    %321 = vector.load %arg17[%c11_208, %c0_209, %c0_210] : memref<16x1x32xf32, #tpu.memory_space<vmem>>, vector<1x1x32xf32>
    %322 = vector.shape_cast %321 : vector<1x1x32xf32> to vector<1x32xf32>
    %323 = vector.broadcast %322 : vector<1x32xf32> to vector<8x32xf32>
    %324 = arith.addf %320, %323 : vector<8x32xf32>
    %325 = arith.addf %279, %324 : vector<8x32xf32>
    %c8_211 = arith.constant 8 : index
    %c0_212 = arith.constant 0 : index
    %c0_213 = arith.constant 0 : index
    %326 = vector.load %arg18[%c8_211, %c0_212, %c0_213] : memref<14x1x32xf32, #tpu.memory_space<vmem>>, vector<1x1x32xf32>
    %327 = vector.shape_cast %326 : vector<1x1x32xf32> to vector<1x32xf32>
    %c9_214 = arith.constant 9 : index
    %c0_215 = arith.constant 0 : index
    %c0_216 = arith.constant 0 : index
    %328 = vector.load %arg18[%c9_214, %c0_215, %c0_216] : memref<14x1x32xf32, #tpu.memory_space<vmem>>, vector<1x1x32xf32>
    %329 = vector.shape_cast %328 : vector<1x1x32xf32> to vector<1x32xf32>
    %cst_217 = arith.constant dense<0.000000e+00> : vector<8xf32>
    %330 = vector.multi_reduction <add>, %325, %cst_217 [1] : vector<8x32xf32> to vector<8xf32>
    %331 = vector.shape_cast %330 : vector<8xf32> to vector<8x1xf32>
    %cst_218 = arith.constant 3.200000e+01 : f32
    %332 = vector.broadcast %cst_218 : f32 to vector<8x1xf32>
    %333 = arith.divf %331, %332 : vector<8x1xf32>
    %334 = vector.broadcast %333 : vector<8x1xf32> to vector<8x32xf32>
    %335 = arith.subf %325, %334 : vector<8x32xf32>
    %336 = arith.mulf %335, %335 : vector<8x32xf32>
    %cst_219 = arith.constant dense<0.000000e+00> : vector<8xf32>
    %337 = vector.multi_reduction <add>, %336, %cst_219 [1] : vector<8x32xf32> to vector<8xf32>
    %338 = vector.shape_cast %337 : vector<8xf32> to vector<8x1xf32>
    %cst_220 = arith.constant 3.200000e+01 : f32
    %339 = vector.broadcast %cst_220 : f32 to vector<8x1xf32>
    %340 = arith.divf %338, %339 : vector<8x1xf32>
    %341 = vector.broadcast %333 : vector<8x1xf32> to vector<8x32xf32>
    %342 = arith.subf %325, %341 : vector<8x32xf32>
    %cst_221 = arith.constant 9.99999974E-6 : f32
    %343 = vector.broadcast %cst_221 : f32 to vector<8x1xf32>
    %344 = arith.addf %340, %343 : vector<8x1xf32>
    %345 = math.rsqrt %344 : vector<8x1xf32>
    %346 = vector.broadcast %345 : vector<8x1xf32> to vector<8x32xf32>
    %347 = arith.mulf %342, %346 : vector<8x32xf32>
    %348 = vector.broadcast %327 : vector<1x32xf32> to vector<8x32xf32>
    %349 = arith.mulf %347, %348 : vector<8x32xf32>
    %350 = vector.broadcast %329 : vector<1x32xf32> to vector<8x32xf32>
    %351 = arith.addf %349, %350 : vector<8x32xf32>
    %352 = arith.addf %351, %150 : vector<8x32xf32>
    %353 = arith.addf %278, %149 : vector<128x32xf32>
    %c12 = arith.constant 12 : index
    %c0_222 = arith.constant 0 : index
    %c0_223 = arith.constant 0 : index
    %354 = vector.load %arg16[%c12, %c0_222, %c0_223] : memref<16x32x32xf32, #tpu.memory_space<vmem>>, vector<1x32x32xf32>
    %355 = vector.shape_cast %354 : vector<1x32x32xf32> to vector<32x32xf32>
    %cst_224 = arith.constant dense<0.000000e+00> : vector<8x32xf32>
    %356 = tpu.matmul %352, %355, %cst_224 {dimension_numbers = #tpu.dot_dimension_numbers<[1], [0], [0], [1], [0, 0, 1, 1], [], []>} : vector<8x32xf32>, vector<32x32xf32>, vector<8x32xf32> -> vector<8x32xf32>
    %c12_225 = arith.constant 12 : index
    %c0_226 = arith.constant 0 : index
    %c0_227 = arith.constant 0 : index
    %357 = vector.load %arg17[%c12_225, %c0_226, %c0_227] : memref<16x1x32xf32, #tpu.memory_space<vmem>>, vector<1x1x32xf32>
    %358 = vector.shape_cast %357 : vector<1x1x32xf32> to vector<1x32xf32>
    %359 = vector.broadcast %358 : vector<1x32xf32> to vector<8x32xf32>
    %360 = arith.addf %356, %359 : vector<8x32xf32>
    %c13 = arith.constant 13 : index
    %c0_228 = arith.constant 0 : index
    %c0_229 = arith.constant 0 : index
    %361 = vector.load %arg16[%c13, %c0_228, %c0_229] : memref<16x32x32xf32, #tpu.memory_space<vmem>>, vector<1x32x32xf32>
    %362 = vector.shape_cast %361 : vector<1x32x32xf32> to vector<32x32xf32>
    %cst_230 = arith.constant dense<0.000000e+00> : vector<128x32xf32>
    %363 = tpu.matmul %353, %362, %cst_230 {dimension_numbers = #tpu.dot_dimension_numbers<[1], [0], [0], [1], [0, 0, 1, 1], [], []>} : vector<128x32xf32>, vector<32x32xf32>, vector<128x32xf32> -> vector<128x32xf32>
    %c13_231 = arith.constant 13 : index
    %c0_232 = arith.constant 0 : index
    %c0_233 = arith.constant 0 : index
    %364 = vector.load %arg17[%c13_231, %c0_232, %c0_233] : memref<16x1x32xf32, #tpu.memory_space<vmem>>, vector<1x1x32xf32>
    %365 = vector.shape_cast %364 : vector<1x1x32xf32> to vector<1x32xf32>
    %366 = vector.broadcast %365 : vector<1x32xf32> to vector<128x32xf32>
    %367 = arith.addf %363, %366 : vector<128x32xf32>
    %c14 = arith.constant 14 : index
    %c0_234 = arith.constant 0 : index
    %c0_235 = arith.constant 0 : index
    %368 = vector.load %arg16[%c14, %c0_234, %c0_235] : memref<16x32x32xf32, #tpu.memory_space<vmem>>, vector<1x32x32xf32>
    %369 = vector.shape_cast %368 : vector<1x32x32xf32> to vector<32x32xf32>
    %cst_236 = arith.constant dense<0.000000e+00> : vector<128x32xf32>
    %370 = tpu.matmul %278, %369, %cst_236 {dimension_numbers = #tpu.dot_dimension_numbers<[1], [0], [0], [1], [0, 0, 1, 1], [], []>} : vector<128x32xf32>, vector<32x32xf32>, vector<128x32xf32> -> vector<128x32xf32>
    %c14_237 = arith.constant 14 : index
    %c0_238 = arith.constant 0 : index
    %c0_239 = arith.constant 0 : index
    %371 = vector.load %arg17[%c14_237, %c0_238, %c0_239] : memref<16x1x32xf32, #tpu.memory_space<vmem>>, vector<1x1x32xf32>
    %372 = vector.shape_cast %371 : vector<1x1x32xf32> to vector<1x32xf32>
    %373 = vector.broadcast %372 : vector<1x32xf32> to vector<128x32xf32>
    %374 = arith.addf %370, %373 : vector<128x32xf32>
    %cst_240 = arith.constant dense<0.000000e+00> : vector<8x128xf32>
    %375 = tpu.matmul %360, %367, %cst_240 {dimension_numbers = #tpu.dot_dimension_numbers<[1], [1], [0], [0], [0, 0, 1, 0], [], []>} : vector<8x32xf32>, vector<128x32xf32>, vector<8x128xf32> -> vector<8x128xf32>
    %cst_241 = arith.constant 0.176776692 : f32
    %376 = vector.broadcast %cst_241 : f32 to vector<8x128xf32>
    %377 = arith.mulf %375, %376 : vector<8x128xf32>
    %378 = vector.broadcast %146 : vector<1x128xf32> to vector<8x128xf32>
    %379 = arith.addf %377, %378 : vector<8x128xf32>
    %cst_242 = arith.constant dense<0xFF800000> : vector<8xf32>
    %380 = vector.multi_reduction <maximumf>, %379, %cst_242 [1] : vector<8x128xf32> to vector<8xf32>
    %381 = vector.shape_cast %380 : vector<8xf32> to vector<8x1xf32>
    %382 = vector.broadcast %381 : vector<8x1xf32> to vector<8x128xf32>
    %383 = arith.subf %379, %382 : vector<8x128xf32>
    %384 = math.exp %383 : vector<8x128xf32>
    %cst_243 = arith.constant dense<0.000000e+00> : vector<8xf32>
    %385 = vector.multi_reduction <add>, %384, %cst_243 [1] : vector<8x128xf32> to vector<8xf32>
    %386 = vector.shape_cast %385 : vector<8xf32> to vector<8x1xf32>
    %387 = vector.broadcast %386 : vector<8x1xf32> to vector<8x128xf32>
    %388 = arith.divf %384, %387 : vector<8x128xf32>
    %cst_244 = arith.constant dense<0.000000e+00> : vector<8x32xf32>
    %389 = tpu.matmul %388, %374, %cst_244 {dimension_numbers = #tpu.dot_dimension_numbers<[1], [0], [0], [1], [0, 0, 1, 1], [], []>} : vector<8x128xf32>, vector<128x32xf32>, vector<8x32xf32> -> vector<8x32xf32>
    %c15 = arith.constant 15 : index
    %c0_245 = arith.constant 0 : index
    %c0_246 = arith.constant 0 : index
    %390 = vector.load %arg16[%c15, %c0_245, %c0_246] : memref<16x32x32xf32, #tpu.memory_space<vmem>>, vector<1x32x32xf32>
    %391 = vector.shape_cast %390 : vector<1x32x32xf32> to vector<32x32xf32>
    %cst_247 = arith.constant dense<0.000000e+00> : vector<8x32xf32>
    %392 = tpu.matmul %389, %391, %cst_247 {dimension_numbers = #tpu.dot_dimension_numbers<[1], [0], [0], [1], [0, 0, 1, 1], [], []>} : vector<8x32xf32>, vector<32x32xf32>, vector<8x32xf32> -> vector<8x32xf32>
    %c15_248 = arith.constant 15 : index
    %c0_249 = arith.constant 0 : index
    %c0_250 = arith.constant 0 : index
    %393 = vector.load %arg17[%c15_248, %c0_249, %c0_250] : memref<16x1x32xf32, #tpu.memory_space<vmem>>, vector<1x1x32xf32>
    %394 = vector.shape_cast %393 : vector<1x1x32xf32> to vector<1x32xf32>
    %395 = vector.broadcast %394 : vector<1x32xf32> to vector<8x32xf32>
    %396 = arith.addf %392, %395 : vector<8x32xf32>
    %397 = arith.addf %351, %396 : vector<8x32xf32>
    %c10_251 = arith.constant 10 : index
    %c0_252 = arith.constant 0 : index
    %c0_253 = arith.constant 0 : index
    %398 = vector.load %arg18[%c10_251, %c0_252, %c0_253] : memref<14x1x32xf32, #tpu.memory_space<vmem>>, vector<1x1x32xf32>
    %399 = vector.shape_cast %398 : vector<1x1x32xf32> to vector<1x32xf32>
    %c11_254 = arith.constant 11 : index
    %c0_255 = arith.constant 0 : index
    %c0_256 = arith.constant 0 : index
    %400 = vector.load %arg18[%c11_254, %c0_255, %c0_256] : memref<14x1x32xf32, #tpu.memory_space<vmem>>, vector<1x1x32xf32>
    %401 = vector.shape_cast %400 : vector<1x1x32xf32> to vector<1x32xf32>
    %cst_257 = arith.constant dense<0.000000e+00> : vector<8xf32>
    %402 = vector.multi_reduction <add>, %397, %cst_257 [1] : vector<8x32xf32> to vector<8xf32>
    %403 = vector.shape_cast %402 : vector<8xf32> to vector<8x1xf32>
    %cst_258 = arith.constant 3.200000e+01 : f32
    %404 = vector.broadcast %cst_258 : f32 to vector<8x1xf32>
    %405 = arith.divf %403, %404 : vector<8x1xf32>
    %406 = vector.broadcast %405 : vector<8x1xf32> to vector<8x32xf32>
    %407 = arith.subf %397, %406 : vector<8x32xf32>
    %408 = arith.mulf %407, %407 : vector<8x32xf32>
    %cst_259 = arith.constant dense<0.000000e+00> : vector<8xf32>
    %409 = vector.multi_reduction <add>, %408, %cst_259 [1] : vector<8x32xf32> to vector<8xf32>
    %410 = vector.shape_cast %409 : vector<8xf32> to vector<8x1xf32>
    %cst_260 = arith.constant 3.200000e+01 : f32
    %411 = vector.broadcast %cst_260 : f32 to vector<8x1xf32>
    %412 = arith.divf %410, %411 : vector<8x1xf32>
    %413 = vector.broadcast %405 : vector<8x1xf32> to vector<8x32xf32>
    %414 = arith.subf %397, %413 : vector<8x32xf32>
    %cst_261 = arith.constant 9.99999974E-6 : f32
    %415 = vector.broadcast %cst_261 : f32 to vector<8x1xf32>
    %416 = arith.addf %412, %415 : vector<8x1xf32>
    %417 = math.rsqrt %416 : vector<8x1xf32>
    %418 = vector.broadcast %417 : vector<8x1xf32> to vector<8x32xf32>
    %419 = arith.mulf %414, %418 : vector<8x32xf32>
    %420 = vector.broadcast %399 : vector<1x32xf32> to vector<8x32xf32>
    %421 = arith.mulf %419, %420 : vector<8x32xf32>
    %422 = vector.broadcast %401 : vector<1x32xf32> to vector<8x32xf32>
    %423 = arith.addf %421, %422 : vector<8x32xf32>
    %c2_262 = arith.constant 2 : index
    %c0_263 = arith.constant 0 : index
    %c0_264 = arith.constant 0 : index
    %424 = vector.load %arg19[%c2_262, %c0_263, %c0_264] : memref<3x32x64xf32, #tpu.memory_space<vmem>>, vector<1x32x64xf32>
    %425 = vector.shape_cast %424 : vector<1x32x64xf32> to vector<32x64xf32>
    %cst_265 = arith.constant dense<0.000000e+00> : vector<8x64xf32>
    %426 = tpu.matmul %423, %425, %cst_265 {dimension_numbers = #tpu.dot_dimension_numbers<[1], [0], [0], [1], [0, 0, 1, 1], [], []>} : vector<8x32xf32>, vector<32x64xf32>, vector<8x64xf32> -> vector<8x64xf32>
    %c2_266 = arith.constant 2 : index
    %c0_267 = arith.constant 0 : index
    %c0_268 = arith.constant 0 : index
    %427 = vector.load %arg20[%c2_266, %c0_267, %c0_268] : memref<3x1x64xf32, #tpu.memory_space<vmem>>, vector<1x1x64xf32>
    %428 = vector.shape_cast %427 : vector<1x1x64xf32> to vector<1x64xf32>
    %429 = vector.broadcast %428 : vector<1x64xf32> to vector<8x64xf32>
    %430 = arith.addf %426, %429 : vector<8x64xf32>
    %cst_269 = arith.constant 0.000000e+00 : f32
    %431 = vector.broadcast %cst_269 : f32 to vector<8x64xf32>
    %432 = arith.maximumf %430, %431 : vector<8x64xf32>
    %c2_270 = arith.constant 2 : index
    %c0_271 = arith.constant 0 : index
    %c0_272 = arith.constant 0 : index
    %433 = vector.load %arg21[%c2_270, %c0_271, %c0_272] : memref<3x64x32xf32, #tpu.memory_space<vmem>>, vector<1x64x32xf32>
    %434 = vector.shape_cast %433 : vector<1x64x32xf32> to vector<64x32xf32>
    %cst_273 = arith.constant dense<0.000000e+00> : vector<8x32xf32>
    %435 = tpu.matmul %432, %434, %cst_273 {dimension_numbers = #tpu.dot_dimension_numbers<[1], [0], [0], [1], [0, 0, 1, 1], [], []>} : vector<8x64xf32>, vector<64x32xf32>, vector<8x32xf32> -> vector<8x32xf32>
    %c2_274 = arith.constant 2 : index
    %c0_275 = arith.constant 0 : index
    %c0_276 = arith.constant 0 : index
    %436 = vector.load %arg22[%c2_274, %c0_275, %c0_276] : memref<3x1x32xf32, #tpu.memory_space<vmem>>, vector<1x1x32xf32>
    %437 = vector.shape_cast %436 : vector<1x1x32xf32> to vector<1x32xf32>
    %438 = vector.broadcast %437 : vector<1x32xf32> to vector<8x32xf32>
    %439 = arith.addf %435, %438 : vector<8x32xf32>
    %440 = arith.addf %423, %439 : vector<8x32xf32>
    %c12_277 = arith.constant 12 : index
    %c0_278 = arith.constant 0 : index
    %c0_279 = arith.constant 0 : index
    %441 = vector.load %arg18[%c12_277, %c0_278, %c0_279] : memref<14x1x32xf32, #tpu.memory_space<vmem>>, vector<1x1x32xf32>
    %442 = vector.shape_cast %441 : vector<1x1x32xf32> to vector<1x32xf32>
    %c13_280 = arith.constant 13 : index
    %c0_281 = arith.constant 0 : index
    %c0_282 = arith.constant 0 : index
    %443 = vector.load %arg18[%c13_280, %c0_281, %c0_282] : memref<14x1x32xf32, #tpu.memory_space<vmem>>, vector<1x1x32xf32>
    %444 = vector.shape_cast %443 : vector<1x1x32xf32> to vector<1x32xf32>
    %cst_283 = arith.constant dense<0.000000e+00> : vector<8xf32>
    %445 = vector.multi_reduction <add>, %440, %cst_283 [1] : vector<8x32xf32> to vector<8xf32>
    %446 = vector.shape_cast %445 : vector<8xf32> to vector<8x1xf32>
    %cst_284 = arith.constant 3.200000e+01 : f32
    %447 = vector.broadcast %cst_284 : f32 to vector<8x1xf32>
    %448 = arith.divf %446, %447 : vector<8x1xf32>
    %449 = vector.broadcast %448 : vector<8x1xf32> to vector<8x32xf32>
    %450 = arith.subf %440, %449 : vector<8x32xf32>
    %451 = arith.mulf %450, %450 : vector<8x32xf32>
    %cst_285 = arith.constant dense<0.000000e+00> : vector<8xf32>
    %452 = vector.multi_reduction <add>, %451, %cst_285 [1] : vector<8x32xf32> to vector<8xf32>
    %453 = vector.shape_cast %452 : vector<8xf32> to vector<8x1xf32>
    %cst_286 = arith.constant 3.200000e+01 : f32
    %454 = vector.broadcast %cst_286 : f32 to vector<8x1xf32>
    %455 = arith.divf %453, %454 : vector<8x1xf32>
    %456 = vector.broadcast %448 : vector<8x1xf32> to vector<8x32xf32>
    %457 = arith.subf %440, %456 : vector<8x32xf32>
    %cst_287 = arith.constant 9.99999974E-6 : f32
    %458 = vector.broadcast %cst_287 : f32 to vector<8x1xf32>
    %459 = arith.addf %455, %458 : vector<8x1xf32>
    %460 = math.rsqrt %459 : vector<8x1xf32>
    %461 = vector.broadcast %460 : vector<8x1xf32> to vector<8x32xf32>
    %462 = arith.mulf %457, %461 : vector<8x32xf32>
    %463 = vector.broadcast %442 : vector<1x32xf32> to vector<8x32xf32>
    %464 = arith.mulf %462, %463 : vector<8x32xf32>
    %465 = vector.broadcast %444 : vector<1x32xf32> to vector<8x32xf32>
    %466 = arith.addf %464, %465 : vector<8x32xf32>
    %cst_288 = arith.constant dense<0.000000e+00> : vector<8x9xf32>
    %467 = tpu.matmul %466, %151, %cst_288 {dimension_numbers = #tpu.dot_dimension_numbers<[1], [0], [0], [1], [0, 0, 1, 1], [], []>} : vector<8x32xf32>, vector<32x9xf32>, vector<8x9xf32> -> vector<8x9xf32>
    %468 = vector.broadcast %152 : vector<1x9xf32> to vector<8x9xf32>
    %469 = arith.addf %467, %468 : vector<8x9xf32>
    %c0_289 = arith.constant 0 : index
    %c0_290 = arith.constant 0 : index
    %c0_291 = arith.constant 0 : index
    %470 = vector.load %arg26[%c0_289, %c0_290, %c0_291] : memref<2x8x9xf32, #tpu.memory_space<vmem>>, vector<1x8x9xf32>
    %471 = vector.shape_cast %470 : vector<1x8x9xf32> to vector<8x9xf32>
    %472 = vector.shape_cast %469 : vector<8x9xf32> to vector<1x8x9xf32>
    tpu.vector_store %arg26[%c0_289, %c0_290, %c0_291], %472 {strides = array<i32>} : memref<2x8x9xf32, #tpu.memory_space<vmem>>, vector<1x8x9xf32>,
    %c1_292 = arith.constant 1 : index
    %c0_293 = arith.constant 0 : index
    %c0_294 = arith.constant 0 : index
    %473 = vector.load %arg0[%c1_292, %c0_293, %c0_294] : memref<2x16x16xf32, #tpu.memory_space<vmem>>, vector<1x16x16xf32>
    %474 = vector.shape_cast %473 : vector<1x16x16xf32> to vector<16x16xf32>
    %c0_295 = arith.constant 0 : index
    %c0_296 = arith.constant 0 : index
    %475 = vector.load %arg5[%c0_295, %c0_296] : memref<16x32xf32, #tpu.memory_space<vmem>>, vector<16x32xf32>
    %cst_297 = arith.constant dense<0.000000e+00> : vector<16x32xf32>
    %476 = tpu.matmul %474, %475, %cst_297 {dimension_numbers = #tpu.dot_dimension_numbers<[1], [0], [0], [1], [0, 0, 1, 1], [], []>} : vector<16x16xf32>, vector<16x32xf32>, vector<16x32xf32> -> vector<16x32xf32>
    %c0_298 = arith.constant 0 : index
    %c0_299 = arith.constant 0 : index
    %477 = vector.load %arg6[%c0_298, %c0_299] : memref<16x32xf32, #tpu.memory_space<vmem>>, vector<16x32xf32>
    %478 = arith.addf %476, %477 : vector<16x32xf32>
    %c0_300 = arith.constant 0 : index
    %c0_301 = arith.constant 0 : index
    %479 = vector.load %arg7[%c0_300, %c0_301] : memref<16x32xf32, #tpu.memory_space<vmem>>, vector<16x32xf32>
    %c1_302 = arith.constant 1 : index
    %c0_303 = arith.constant 0 : index
    %c0_304 = arith.constant 0 : index
    %480 = vector.load %arg1[%c1_302, %c0_303, %c0_304] : memref<2x1x16xf32, #tpu.memory_space<vmem>>, vector<1x1x16xf32>
    %481 = vector.shape_cast %480 : vector<1x1x16xf32> to vector<1x16xf32>
    %482 = arith.addf %478, %479 : vector<16x32xf32>
    %c0_305 = arith.constant 0 : index
    %c0_306 = arith.constant 0 : index
    %c0_307 = arith.constant 0 : index
    %483 = vector.load %arg16[%c0_305, %c0_306, %c0_307] : memref<16x32x32xf32, #tpu.memory_space<vmem>>, vector<1x32x32xf32>
    %484 = vector.shape_cast %483 : vector<1x32x32xf32> to vector<32x32xf32>
    %cst_308 = arith.constant dense<0.000000e+00> : vector<16x32xf32>
    %485 = tpu.matmul %482, %484, %cst_308 {dimension_numbers = #tpu.dot_dimension_numbers<[1], [0], [0], [1], [0, 0, 1, 1], [], []>} : vector<16x32xf32>, vector<32x32xf32>, vector<16x32xf32> -> vector<16x32xf32>
    %c0_309 = arith.constant 0 : index
    %c0_310 = arith.constant 0 : index
    %c0_311 = arith.constant 0 : index
    %486 = vector.load %arg17[%c0_309, %c0_310, %c0_311] : memref<16x1x32xf32, #tpu.memory_space<vmem>>, vector<1x1x32xf32>
    %487 = vector.shape_cast %486 : vector<1x1x32xf32> to vector<1x32xf32>
    %488 = vector.broadcast %487 : vector<1x32xf32> to vector<16x32xf32>
    %489 = arith.addf %485, %488 : vector<16x32xf32>
    %c1_312 = arith.constant 1 : index
    %c0_313 = arith.constant 0 : index
    %c0_314 = arith.constant 0 : index
    %490 = vector.load %arg16[%c1_312, %c0_313, %c0_314] : memref<16x32x32xf32, #tpu.memory_space<vmem>>, vector<1x32x32xf32>
    %491 = vector.shape_cast %490 : vector<1x32x32xf32> to vector<32x32xf32>
    %cst_315 = arith.constant dense<0.000000e+00> : vector<16x32xf32>
    %492 = tpu.matmul %482, %491, %cst_315 {dimension_numbers = #tpu.dot_dimension_numbers<[1], [0], [0], [1], [0, 0, 1, 1], [], []>} : vector<16x32xf32>, vector<32x32xf32>, vector<16x32xf32> -> vector<16x32xf32>
    %c1_316 = arith.constant 1 : index
    %c0_317 = arith.constant 0 : index
    %c0_318 = arith.constant 0 : index
    %493 = vector.load %arg17[%c1_316, %c0_317, %c0_318] : memref<16x1x32xf32, #tpu.memory_space<vmem>>, vector<1x1x32xf32>
    %494 = vector.shape_cast %493 : vector<1x1x32xf32> to vector<1x32xf32>
    %495 = vector.broadcast %494 : vector<1x32xf32> to vector<16x32xf32>
    %496 = arith.addf %492, %495 : vector<16x32xf32>
    %c2_319 = arith.constant 2 : index
    %c0_320 = arith.constant 0 : index
    %c0_321 = arith.constant 0 : index
    %497 = vector.load %arg16[%c2_319, %c0_320, %c0_321] : memref<16x32x32xf32, #tpu.memory_space<vmem>>, vector<1x32x32xf32>
    %498 = vector.shape_cast %497 : vector<1x32x32xf32> to vector<32x32xf32>
    %cst_322 = arith.constant dense<0.000000e+00> : vector<16x32xf32>
    %499 = tpu.matmul %478, %498, %cst_322 {dimension_numbers = #tpu.dot_dimension_numbers<[1], [0], [0], [1], [0, 0, 1, 1], [], []>} : vector<16x32xf32>, vector<32x32xf32>, vector<16x32xf32> -> vector<16x32xf32>
    %c2_323 = arith.constant 2 : index
    %c0_324 = arith.constant 0 : index
    %c0_325 = arith.constant 0 : index
    %500 = vector.load %arg17[%c2_323, %c0_324, %c0_325] : memref<16x1x32xf32, #tpu.memory_space<vmem>>, vector<1x1x32xf32>
    %501 = vector.shape_cast %500 : vector<1x1x32xf32> to vector<1x32xf32>
    %502 = vector.broadcast %501 : vector<1x32xf32> to vector<16x32xf32>
    %503 = arith.addf %499, %502 : vector<16x32xf32>
    %cst_326 = arith.constant dense<0.000000e+00> : vector<16x16xf32>
    %504 = tpu.matmul %489, %496, %cst_326 {dimension_numbers = #tpu.dot_dimension_numbers<[1], [1], [0], [0], [0, 0, 1, 0], [], []>} : vector<16x32xf32>, vector<16x32xf32>, vector<16x16xf32> -> vector<16x16xf32>
    %cst_327 = arith.constant 0.176776692 : f32
    %505 = vector.broadcast %cst_327 : f32 to vector<16x16xf32>
    %506 = arith.mulf %504, %505 : vector<16x16xf32>
    %507 = vector.broadcast %481 : vector<1x16xf32> to vector<16x16xf32>
    %508 = arith.addf %506, %507 : vector<16x16xf32>
    %cst_328 = arith.constant dense<0xFF800000> : vector<16xf32>
    %509 = vector.multi_reduction <maximumf>, %508, %cst_328 [1] : vector<16x16xf32> to vector<16xf32>
    %510 = vector.shape_cast %509 : vector<16xf32> to vector<16x1xf32>
    %511 = vector.broadcast %510 : vector<16x1xf32> to vector<16x16xf32>
    %512 = arith.subf %508, %511 : vector<16x16xf32>
    %513 = math.exp %512 : vector<16x16xf32>
    %cst_329 = arith.constant dense<0.000000e+00> : vector<16xf32>
    %514 = vector.multi_reduction <add>, %513, %cst_329 [1] : vector<16x16xf32> to vector<16xf32>
    %515 = vector.shape_cast %514 : vector<16xf32> to vector<16x1xf32>
    %516 = vector.broadcast %515 : vector<16x1xf32> to vector<16x16xf32>
    %517 = arith.divf %513, %516 : vector<16x16xf32>
    %cst_330 = arith.constant dense<0.000000e+00> : vector<16x32xf32>
    %518 = tpu.matmul %517, %503, %cst_330 {dimension_numbers = #tpu.dot_dimension_numbers<[1], [0], [0], [1], [0, 0, 1, 1], [], []>} : vector<16x16xf32>, vector<16x32xf32>, vector<16x32xf32> -> vector<16x32xf32>
    %c3_331 = arith.constant 3 : index
    %c0_332 = arith.constant 0 : index
    %c0_333 = arith.constant 0 : index
    %519 = vector.load %arg16[%c3_331, %c0_332, %c0_333] : memref<16x32x32xf32, #tpu.memory_space<vmem>>, vector<1x32x32xf32>
    %520 = vector.shape_cast %519 : vector<1x32x32xf32> to vector<32x32xf32>
    %cst_334 = arith.constant dense<0.000000e+00> : vector<16x32xf32>
    %521 = tpu.matmul %518, %520, %cst_334 {dimension_numbers = #tpu.dot_dimension_numbers<[1], [0], [0], [1], [0, 0, 1, 1], [], []>} : vector<16x32xf32>, vector<32x32xf32>, vector<16x32xf32> -> vector<16x32xf32>
    %c3_335 = arith.constant 3 : index
    %c0_336 = arith.constant 0 : index
    %c0_337 = arith.constant 0 : index
    %522 = vector.load %arg17[%c3_335, %c0_336, %c0_337] : memref<16x1x32xf32, #tpu.memory_space<vmem>>, vector<1x1x32xf32>
    %523 = vector.shape_cast %522 : vector<1x1x32xf32> to vector<1x32xf32>
    %524 = vector.broadcast %523 : vector<1x32xf32> to vector<16x32xf32>
    %525 = arith.addf %521, %524 : vector<16x32xf32>
    %526 = arith.addf %478, %525 : vector<16x32xf32>
    %c0_338 = arith.constant 0 : index
    %c0_339 = arith.constant 0 : index
    %c0_340 = arith.constant 0 : index
    %527 = vector.load %arg18[%c0_338, %c0_339, %c0_340] : memref<14x1x32xf32, #tpu.memory_space<vmem>>, vector<1x1x32xf32>
    %528 = vector.shape_cast %527 : vector<1x1x32xf32> to vector<1x32xf32>
    %c1_341 = arith.constant 1 : index
    %c0_342 = arith.constant 0 : index
    %c0_343 = arith.constant 0 : index
    %529 = vector.load %arg18[%c1_341, %c0_342, %c0_343] : memref<14x1x32xf32, #tpu.memory_space<vmem>>, vector<1x1x32xf32>
    %530 = vector.shape_cast %529 : vector<1x1x32xf32> to vector<1x32xf32>
    %cst_344 = arith.constant dense<0.000000e+00> : vector<16xf32>
    %531 = vector.multi_reduction <add>, %526, %cst_344 [1] : vector<16x32xf32> to vector<16xf32>
    %532 = vector.shape_cast %531 : vector<16xf32> to vector<16x1xf32>
    %cst_345 = arith.constant 3.200000e+01 : f32
    %533 = vector.broadcast %cst_345 : f32 to vector<16x1xf32>
    %534 = arith.divf %532, %533 : vector<16x1xf32>
    %535 = vector.broadcast %534 : vector<16x1xf32> to vector<16x32xf32>
    %536 = arith.subf %526, %535 : vector<16x32xf32>
    %537 = arith.mulf %536, %536 : vector<16x32xf32>
    %cst_346 = arith.constant dense<0.000000e+00> : vector<16xf32>
    %538 = vector.multi_reduction <add>, %537, %cst_346 [1] : vector<16x32xf32> to vector<16xf32>
    %539 = vector.shape_cast %538 : vector<16xf32> to vector<16x1xf32>
    %cst_347 = arith.constant 3.200000e+01 : f32
    %540 = vector.broadcast %cst_347 : f32 to vector<16x1xf32>
    %541 = arith.divf %539, %540 : vector<16x1xf32>
    %542 = vector.broadcast %534 : vector<16x1xf32> to vector<16x32xf32>
    %543 = arith.subf %526, %542 : vector<16x32xf32>
    %cst_348 = arith.constant 9.99999974E-6 : f32
    %544 = vector.broadcast %cst_348 : f32 to vector<16x1xf32>
    %545 = arith.addf %541, %544 : vector<16x1xf32>
    %546 = math.rsqrt %545 : vector<16x1xf32>
    %547 = vector.broadcast %546 : vector<16x1xf32> to vector<16x32xf32>
    %548 = arith.mulf %543, %547 : vector<16x32xf32>
    %549 = vector.broadcast %528 : vector<1x32xf32> to vector<16x32xf32>
    %550 = arith.mulf %548, %549 : vector<16x32xf32>
    %551 = vector.broadcast %530 : vector<1x32xf32> to vector<16x32xf32>
    %552 = arith.addf %550, %551 : vector<16x32xf32>
    %c0_349 = arith.constant 0 : index
    %c0_350 = arith.constant 0 : index
    %c0_351 = arith.constant 0 : index
    %553 = vector.load %arg19[%c0_349, %c0_350, %c0_351] : memref<3x32x64xf32, #tpu.memory_space<vmem>>, vector<1x32x64xf32>
    %554 = vector.shape_cast %553 : vector<1x32x64xf32> to vector<32x64xf32>
    %cst_352 = arith.constant dense<0.000000e+00> : vector<16x64xf32>
    %555 = tpu.matmul %552, %554, %cst_352 {dimension_numbers = #tpu.dot_dimension_numbers<[1], [0], [0], [1], [0, 0, 1, 1], [], []>} : vector<16x32xf32>, vector<32x64xf32>, vector<16x64xf32> -> vector<16x64xf32>
    %c0_353 = arith.constant 0 : index
    %c0_354 = arith.constant 0 : index
    %c0_355 = arith.constant 0 : index
    %556 = vector.load %arg20[%c0_353, %c0_354, %c0_355] : memref<3x1x64xf32, #tpu.memory_space<vmem>>, vector<1x1x64xf32>
    %557 = vector.shape_cast %556 : vector<1x1x64xf32> to vector<1x64xf32>
    %558 = vector.broadcast %557 : vector<1x64xf32> to vector<16x64xf32>
    %559 = arith.addf %555, %558 : vector<16x64xf32>
    %cst_356 = arith.constant 0.000000e+00 : f32
    %560 = vector.broadcast %cst_356 : f32 to vector<16x64xf32>
    %561 = arith.maximumf %559, %560 : vector<16x64xf32>
    %c0_357 = arith.constant 0 : index
    %c0_358 = arith.constant 0 : index
    %c0_359 = arith.constant 0 : index
    %562 = vector.load %arg21[%c0_357, %c0_358, %c0_359] : memref<3x64x32xf32, #tpu.memory_space<vmem>>, vector<1x64x32xf32>
    %563 = vector.shape_cast %562 : vector<1x64x32xf32> to vector<64x32xf32>
    %cst_360 = arith.constant dense<0.000000e+00> : vector<16x32xf32>
    %564 = tpu.matmul %561, %563, %cst_360 {dimension_numbers = #tpu.dot_dimension_numbers<[1], [0], [0], [1], [0, 0, 1, 1], [], []>} : vector<16x64xf32>, vector<64x32xf32>, vector<16x32xf32> -> vector<16x32xf32>
    %c0_361 = arith.constant 0 : index
    %c0_362 = arith.constant 0 : index
    %c0_363 = arith.constant 0 : index
    %565 = vector.load %arg22[%c0_361, %c0_362, %c0_363] : memref<3x1x32xf32, #tpu.memory_space<vmem>>, vector<1x1x32xf32>
    %566 = vector.shape_cast %565 : vector<1x1x32xf32> to vector<1x32xf32>
    %567 = vector.broadcast %566 : vector<1x32xf32> to vector<16x32xf32>
    %568 = arith.addf %564, %567 : vector<16x32xf32>
    %569 = arith.addf %552, %568 : vector<16x32xf32>
    %c2_364 = arith.constant 2 : index
    %c0_365 = arith.constant 0 : index
    %c0_366 = arith.constant 0 : index
    %570 = vector.load %arg18[%c2_364, %c0_365, %c0_366] : memref<14x1x32xf32, #tpu.memory_space<vmem>>, vector<1x1x32xf32>
    %571 = vector.shape_cast %570 : vector<1x1x32xf32> to vector<1x32xf32>
    %c3_367 = arith.constant 3 : index
    %c0_368 = arith.constant 0 : index
    %c0_369 = arith.constant 0 : index
    %572 = vector.load %arg18[%c3_367, %c0_368, %c0_369] : memref<14x1x32xf32, #tpu.memory_space<vmem>>, vector<1x1x32xf32>
    %573 = vector.shape_cast %572 : vector<1x1x32xf32> to vector<1x32xf32>
    %cst_370 = arith.constant dense<0.000000e+00> : vector<16xf32>
    %574 = vector.multi_reduction <add>, %569, %cst_370 [1] : vector<16x32xf32> to vector<16xf32>
    %575 = vector.shape_cast %574 : vector<16xf32> to vector<16x1xf32>
    %cst_371 = arith.constant 3.200000e+01 : f32
    %576 = vector.broadcast %cst_371 : f32 to vector<16x1xf32>
    %577 = arith.divf %575, %576 : vector<16x1xf32>
    %578 = vector.broadcast %577 : vector<16x1xf32> to vector<16x32xf32>
    %579 = arith.subf %569, %578 : vector<16x32xf32>
    %580 = arith.mulf %579, %579 : vector<16x32xf32>
    %cst_372 = arith.constant dense<0.000000e+00> : vector<16xf32>
    %581 = vector.multi_reduction <add>, %580, %cst_372 [1] : vector<16x32xf32> to vector<16xf32>
    %582 = vector.shape_cast %581 : vector<16xf32> to vector<16x1xf32>
    %cst_373 = arith.constant 3.200000e+01 : f32
    %583 = vector.broadcast %cst_373 : f32 to vector<16x1xf32>
    %584 = arith.divf %582, %583 : vector<16x1xf32>
    %585 = vector.broadcast %577 : vector<16x1xf32> to vector<16x32xf32>
    %586 = arith.subf %569, %585 : vector<16x32xf32>
    %cst_374 = arith.constant 9.99999974E-6 : f32
    %587 = vector.broadcast %cst_374 : f32 to vector<16x1xf32>
    %588 = arith.addf %584, %587 : vector<16x1xf32>
    %589 = math.rsqrt %588 : vector<16x1xf32>
    %590 = vector.broadcast %589 : vector<16x1xf32> to vector<16x32xf32>
    %591 = arith.mulf %586, %590 : vector<16x32xf32>
    %592 = vector.broadcast %571 : vector<1x32xf32> to vector<16x32xf32>
    %593 = arith.mulf %591, %592 : vector<16x32xf32>
    %594 = vector.broadcast %573 : vector<1x32xf32> to vector<16x32xf32>
    %595 = arith.addf %593, %594 : vector<16x32xf32>
    %596 = vector.extract_strided_slice %595 {offsets = [0, 0], sizes = [1, 32], strides = [1, 1]} : vector<16x32xf32> to vector<1x32xf32>
    %c0_375 = arith.constant 0 : index
    %c0_376 = arith.constant 0 : index
    %597 = vector.load %arg8[%c0_375, %c0_376] : memref<32x16xf32, #tpu.memory_space<vmem>>, vector<32x16xf32>
    %cst_377 = arith.constant dense<0.000000e+00> : vector<1x16xf32>
    %598 = tpu.matmul %596, %597, %cst_377 {dimension_numbers = #tpu.dot_dimension_numbers<[1], [0], [0], [1], [0, 0, 1, 1], [], []>} : vector<1x32xf32>, vector<32x16xf32>, vector<1x16xf32> -> vector<1x16xf32>
    %c0_378 = arith.constant 0 : index
    %c0_379 = arith.constant 0 : index
    %599 = vector.load %arg9[%c0_378, %c0_379] : memref<1x16xf32, #tpu.memory_space<vmem>>, vector<1x16xf32>
    %600 = arith.addf %598, %599 : vector<1x16xf32>
    %601 = vector.extract_strided_slice %600 {offsets = [0, 0], sizes = [1, 8], strides = [1, 1]} : vector<1x16xf32> to vector<1x8xf32>
    %602 = vector.extract_strided_slice %600 {offsets = [0, 8], sizes = [1, 8], strides = [1, 1]} : vector<1x16xf32> to vector<1x8xf32>
    %cst_380 = arith.constant 5.000000e-01 : f32
    %603 = vector.broadcast %cst_380 : f32 to vector<1x8xf32>
    %604 = arith.mulf %603, %602 : vector<1x8xf32>
    %605 = math.exp %604 : vector<1x8xf32>
    %c1_381 = arith.constant 1 : index
    %c0_382 = arith.constant 0 : index
    %c0_383 = arith.constant 0 : index
    %606 = vector.load %arg2[%c1_381, %c0_382, %c0_383] : memref<2x1x8xf32, #tpu.memory_space<vmem>>, vector<1x1x8xf32>
    %607 = vector.shape_cast %606 : vector<1x1x8xf32> to vector<1x8xf32>
    %608 = arith.mulf %605, %607 : vector<1x8xf32>
    %609 = arith.addf %601, %608 : vector<1x8xf32>
    %c0_384 = arith.constant 0 : index
    %c0_385 = arith.constant 0 : index
    %610 = vector.load %arg10[%c0_384, %c0_385] : memref<8x32xf32, #tpu.memory_space<vmem>>, vector<8x32xf32>
    %cst_386 = arith.constant dense<0.000000e+00> : vector<1x32xf32>
    %611 = tpu.matmul %609, %610, %cst_386 {dimension_numbers = #tpu.dot_dimension_numbers<[1], [0], [0], [1], [0, 0, 1, 1], [], []>} : vector<1x8xf32>, vector<8x32xf32>, vector<1x32xf32> -> vector<1x32xf32>
    %c0_387 = arith.constant 0 : index
    %c0_388 = arith.constant 0 : index
    %612 = vector.load %arg11[%c0_387, %c0_388] : memref<1x32xf32, #tpu.memory_space<vmem>>, vector<1x32xf32>
    %613 = arith.addf %611, %612 : vector<1x32xf32>
    %c1_389 = arith.constant 1 : index
    %c0_390 = arith.constant 0 : index
    %c0_391 = arith.constant 0 : index
    %614 = vector.load %arg25[%c1_389, %c0_390, %c0_391] : memref<2x1x16xf32, #tpu.memory_space<vmem>>, vector<1x1x16xf32>
    %615 = vector.shape_cast %614 : vector<1x1x16xf32> to vector<1x16xf32>
    %616 = vector.shape_cast %600 : vector<1x16xf32> to vector<1x1x16xf32>
    tpu.vector_store %arg25[%c1_389, %c0_390, %c0_391], %616 {strides = array<i32>} : memref<2x1x16xf32, #tpu.memory_space<vmem>>, vector<1x1x16xf32>,
    %c1_392 = arith.constant 1 : index
    %c0_393 = arith.constant 0 : index
    %c0_394 = arith.constant 0 : index
    %617 = vector.load %arg3[%c1_392, %c0_393, %c0_394] : memref<2x128x11xf32, #tpu.memory_space<vmem>>, vector<1x128x11xf32>
    %618 = vector.shape_cast %617 : vector<1x128x11xf32> to vector<128x11xf32>
    %c0_395 = arith.constant 0 : index
    %c0_396 = arith.constant 0 : index
    %619 = vector.load %arg4[%c0_395, %c0_396] : memref<1x128xf32, #tpu.memory_space<vmem>>, vector<1x128xf32>
    %c0_397 = arith.constant 0 : index
    %c0_398 = arith.constant 0 : index
    %620 = vector.load %arg12[%c0_397, %c0_398] : memref<11x32xf32, #tpu.memory_space<vmem>>, vector<11x32xf32>
    %c0_399 = arith.constant 0 : index
    %c0_400 = arith.constant 0 : index
    %621 = vector.load %arg13[%c0_399, %c0_400] : memref<128x32xf32, #tpu.memory_space<vmem>>, vector<128x32xf32>
    %c0_401 = arith.constant 0 : index
    %c0_402 = arith.constant 0 : index
    %622 = vector.load %arg14[%c0_401, %c0_402] : memref<128x32xf32, #tpu.memory_space<vmem>>, vector<128x32xf32>
    %c0_403 = arith.constant 0 : index
    %c0_404 = arith.constant 0 : index
    %623 = vector.load %arg15[%c0_403, %c0_404] : memref<8x32xf32, #tpu.memory_space<vmem>>, vector<8x32xf32>
    %c0_405 = arith.constant 0 : index
    %c0_406 = arith.constant 0 : index
    %624 = vector.load %arg23[%c0_405, %c0_406] : memref<32x9xf32, #tpu.memory_space<vmem>>, vector<32x9xf32>
    %c0_407 = arith.constant 0 : index
    %c0_408 = arith.constant 0 : index
    %625 = vector.load %arg24[%c0_407, %c0_408] : memref<1x9xf32, #tpu.memory_space<vmem>>, vector<1x9xf32>
    %cst_409 = arith.constant dense<0.000000e+00> : vector<128x32xf32>
    %626 = tpu.matmul %618, %620, %cst_409 {dimension_numbers = #tpu.dot_dimension_numbers<[1], [0], [0], [1], [0, 0, 1, 1], [], []>} : vector<128x11xf32>, vector<11x32xf32>, vector<128x32xf32> -> vector<128x32xf32>
    %627 = arith.addf %626, %621 : vector<128x32xf32>
    %628 = tpu.iota {dimensions = array<i32: 0>} : vector<128x1xi32>
    %c0_i32_410 = arith.constant 0 : i32
    %629 = vector.broadcast %c0_i32_410 : i32 to vector<128x1xi32>
    %630 = arith.cmpi eq, %628, %629 : vector<128x1xi32>
    %cst_411 = arith.constant 0.000000e+00 : f32
    %631 = vector.shape_cast %630 : vector<128x1xi1> to vector<128x1xi1>
    %632 = vector.broadcast %631 : vector<128x1xi1> to vector<128x32xi1>
    %633 = vector.shape_cast %613 : vector<1x32xf32> to vector<1x32xf32>
    %634 = vector.broadcast %633 : vector<1x32xf32> to vector<128x32xf32>
    %635 = vector.broadcast %cst_411 : f32 to vector<128x32xf32>
    %636 = arith.select %632, %634, %635 : vector<128x32xi1>, vector<128x32xf32>
    %637 = arith.addf %627, %636 : vector<128x32xf32>
    %638 = arith.addf %637, %622 : vector<128x32xf32>
    %c4_412 = arith.constant 4 : index
    %c0_413 = arith.constant 0 : index
    %c0_414 = arith.constant 0 : index
    %639 = vector.load %arg16[%c4_412, %c0_413, %c0_414] : memref<16x32x32xf32, #tpu.memory_space<vmem>>, vector<1x32x32xf32>
    %640 = vector.shape_cast %639 : vector<1x32x32xf32> to vector<32x32xf32>
    %cst_415 = arith.constant dense<0.000000e+00> : vector<128x32xf32>
    %641 = tpu.matmul %638, %640, %cst_415 {dimension_numbers = #tpu.dot_dimension_numbers<[1], [0], [0], [1], [0, 0, 1, 1], [], []>} : vector<128x32xf32>, vector<32x32xf32>, vector<128x32xf32> -> vector<128x32xf32>
    %c4_416 = arith.constant 4 : index
    %c0_417 = arith.constant 0 : index
    %c0_418 = arith.constant 0 : index
    %642 = vector.load %arg17[%c4_416, %c0_417, %c0_418] : memref<16x1x32xf32, #tpu.memory_space<vmem>>, vector<1x1x32xf32>
    %643 = vector.shape_cast %642 : vector<1x1x32xf32> to vector<1x32xf32>
    %644 = vector.broadcast %643 : vector<1x32xf32> to vector<128x32xf32>
    %645 = arith.addf %641, %644 : vector<128x32xf32>
    %c5_419 = arith.constant 5 : index
    %c0_420 = arith.constant 0 : index
    %c0_421 = arith.constant 0 : index
    %646 = vector.load %arg16[%c5_419, %c0_420, %c0_421] : memref<16x32x32xf32, #tpu.memory_space<vmem>>, vector<1x32x32xf32>
    %647 = vector.shape_cast %646 : vector<1x32x32xf32> to vector<32x32xf32>
    %cst_422 = arith.constant dense<0.000000e+00> : vector<128x32xf32>
    %648 = tpu.matmul %638, %647, %cst_422 {dimension_numbers = #tpu.dot_dimension_numbers<[1], [0], [0], [1], [0, 0, 1, 1], [], []>} : vector<128x32xf32>, vector<32x32xf32>, vector<128x32xf32> -> vector<128x32xf32>
    %c5_423 = arith.constant 5 : index
    %c0_424 = arith.constant 0 : index
    %c0_425 = arith.constant 0 : index
    %649 = vector.load %arg17[%c5_423, %c0_424, %c0_425] : memref<16x1x32xf32, #tpu.memory_space<vmem>>, vector<1x1x32xf32>
    %650 = vector.shape_cast %649 : vector<1x1x32xf32> to vector<1x32xf32>
    %651 = vector.broadcast %650 : vector<1x32xf32> to vector<128x32xf32>
    %652 = arith.addf %648, %651 : vector<128x32xf32>
    %c6_426 = arith.constant 6 : index
    %c0_427 = arith.constant 0 : index
    %c0_428 = arith.constant 0 : index
    %653 = vector.load %arg16[%c6_426, %c0_427, %c0_428] : memref<16x32x32xf32, #tpu.memory_space<vmem>>, vector<1x32x32xf32>
    %654 = vector.shape_cast %653 : vector<1x32x32xf32> to vector<32x32xf32>
    %cst_429 = arith.constant dense<0.000000e+00> : vector<128x32xf32>
    %655 = tpu.matmul %637, %654, %cst_429 {dimension_numbers = #tpu.dot_dimension_numbers<[1], [0], [0], [1], [0, 0, 1, 1], [], []>} : vector<128x32xf32>, vector<32x32xf32>, vector<128x32xf32> -> vector<128x32xf32>
    %c6_430 = arith.constant 6 : index
    %c0_431 = arith.constant 0 : index
    %c0_432 = arith.constant 0 : index
    %656 = vector.load %arg17[%c6_430, %c0_431, %c0_432] : memref<16x1x32xf32, #tpu.memory_space<vmem>>, vector<1x1x32xf32>
    %657 = vector.shape_cast %656 : vector<1x1x32xf32> to vector<1x32xf32>
    %658 = vector.broadcast %657 : vector<1x32xf32> to vector<128x32xf32>
    %659 = arith.addf %655, %658 : vector<128x32xf32>
    %cst_433 = arith.constant dense<0.000000e+00> : vector<128x128xf32>
    %660 = tpu.matmul %645, %652, %cst_433 {dimension_numbers = #tpu.dot_dimension_numbers<[1], [1], [0], [0], [0, 0, 1, 0], [], []>} : vector<128x32xf32>, vector<128x32xf32>, vector<128x128xf32> -> vector<128x128xf32>
    %cst_434 = arith.constant 0.176776692 : f32
    %661 = vector.broadcast %cst_434 : f32 to vector<128x128xf32>
    %662 = arith.mulf %660, %661 : vector<128x128xf32>
    %663 = vector.broadcast %619 : vector<1x128xf32> to vector<128x128xf32>
    %664 = arith.addf %662, %663 : vector<128x128xf32>
    %cst_435 = arith.constant dense<0xFF800000> : vector<128xf32>
    %665 = vector.multi_reduction <maximumf>, %664, %cst_435 [1] : vector<128x128xf32> to vector<128xf32>
    %666 = vector.shape_cast %665 : vector<128xf32> to vector<128x1xf32>
    %667 = vector.broadcast %666 : vector<128x1xf32> to vector<128x128xf32>
    %668 = arith.subf %664, %667 : vector<128x128xf32>
    %669 = math.exp %668 : vector<128x128xf32>
    %cst_436 = arith.constant dense<0.000000e+00> : vector<128xf32>
    %670 = vector.multi_reduction <add>, %669, %cst_436 [1] : vector<128x128xf32> to vector<128xf32>
    %671 = vector.shape_cast %670 : vector<128xf32> to vector<128x1xf32>
    %672 = vector.broadcast %671 : vector<128x1xf32> to vector<128x128xf32>
    %673 = arith.divf %669, %672 : vector<128x128xf32>
    %cst_437 = arith.constant dense<0.000000e+00> : vector<128x32xf32>
    %674 = tpu.matmul %673, %659, %cst_437 {dimension_numbers = #tpu.dot_dimension_numbers<[1], [0], [0], [1], [0, 0, 1, 1], [], []>} : vector<128x128xf32>, vector<128x32xf32>, vector<128x32xf32> -> vector<128x32xf32>
    %c7_438 = arith.constant 7 : index
    %c0_439 = arith.constant 0 : index
    %c0_440 = arith.constant 0 : index
    %675 = vector.load %arg16[%c7_438, %c0_439, %c0_440] : memref<16x32x32xf32, #tpu.memory_space<vmem>>, vector<1x32x32xf32>
    %676 = vector.shape_cast %675 : vector<1x32x32xf32> to vector<32x32xf32>
    %cst_441 = arith.constant dense<0.000000e+00> : vector<128x32xf32>
    %677 = tpu.matmul %674, %676, %cst_441 {dimension_numbers = #tpu.dot_dimension_numbers<[1], [0], [0], [1], [0, 0, 1, 1], [], []>} : vector<128x32xf32>, vector<32x32xf32>, vector<128x32xf32> -> vector<128x32xf32>
    %c7_442 = arith.constant 7 : index
    %c0_443 = arith.constant 0 : index
    %c0_444 = arith.constant 0 : index
    %678 = vector.load %arg17[%c7_442, %c0_443, %c0_444] : memref<16x1x32xf32, #tpu.memory_space<vmem>>, vector<1x1x32xf32>
    %679 = vector.shape_cast %678 : vector<1x1x32xf32> to vector<1x32xf32>
    %680 = vector.broadcast %679 : vector<1x32xf32> to vector<128x32xf32>
    %681 = arith.addf %677, %680 : vector<128x32xf32>
    %682 = arith.addf %637, %681 : vector<128x32xf32>
    %c4_445 = arith.constant 4 : index
    %c0_446 = arith.constant 0 : index
    %c0_447 = arith.constant 0 : index
    %683 = vector.load %arg18[%c4_445, %c0_446, %c0_447] : memref<14x1x32xf32, #tpu.memory_space<vmem>>, vector<1x1x32xf32>
    %684 = vector.shape_cast %683 : vector<1x1x32xf32> to vector<1x32xf32>
    %c5_448 = arith.constant 5 : index
    %c0_449 = arith.constant 0 : index
    %c0_450 = arith.constant 0 : index
    %685 = vector.load %arg18[%c5_448, %c0_449, %c0_450] : memref<14x1x32xf32, #tpu.memory_space<vmem>>, vector<1x1x32xf32>
    %686 = vector.shape_cast %685 : vector<1x1x32xf32> to vector<1x32xf32>
    %cst_451 = arith.constant dense<0.000000e+00> : vector<128xf32>
    %687 = vector.multi_reduction <add>, %682, %cst_451 [1] : vector<128x32xf32> to vector<128xf32>
    %688 = vector.shape_cast %687 : vector<128xf32> to vector<128x1xf32>
    %cst_452 = arith.constant 3.200000e+01 : f32
    %689 = vector.broadcast %cst_452 : f32 to vector<128x1xf32>
    %690 = arith.divf %688, %689 : vector<128x1xf32>
    %691 = vector.broadcast %690 : vector<128x1xf32> to vector<128x32xf32>
    %692 = arith.subf %682, %691 : vector<128x32xf32>
    %693 = arith.mulf %692, %692 : vector<128x32xf32>
    %cst_453 = arith.constant dense<0.000000e+00> : vector<128xf32>
    %694 = vector.multi_reduction <add>, %693, %cst_453 [1] : vector<128x32xf32> to vector<128xf32>
    %695 = vector.shape_cast %694 : vector<128xf32> to vector<128x1xf32>
    %cst_454 = arith.constant 3.200000e+01 : f32
    %696 = vector.broadcast %cst_454 : f32 to vector<128x1xf32>
    %697 = arith.divf %695, %696 : vector<128x1xf32>
    %698 = vector.broadcast %690 : vector<128x1xf32> to vector<128x32xf32>
    %699 = arith.subf %682, %698 : vector<128x32xf32>
    %cst_455 = arith.constant 9.99999974E-6 : f32
    %700 = vector.broadcast %cst_455 : f32 to vector<128x1xf32>
    %701 = arith.addf %697, %700 : vector<128x1xf32>
    %702 = math.rsqrt %701 : vector<128x1xf32>
    %703 = vector.broadcast %702 : vector<128x1xf32> to vector<128x32xf32>
    %704 = arith.mulf %699, %703 : vector<128x32xf32>
    %705 = vector.broadcast %684 : vector<1x32xf32> to vector<128x32xf32>
    %706 = arith.mulf %704, %705 : vector<128x32xf32>
    %707 = vector.broadcast %686 : vector<1x32xf32> to vector<128x32xf32>
    %708 = arith.addf %706, %707 : vector<128x32xf32>
    %c1_456 = arith.constant 1 : index
    %c0_457 = arith.constant 0 : index
    %c0_458 = arith.constant 0 : index
    %709 = vector.load %arg19[%c1_456, %c0_457, %c0_458] : memref<3x32x64xf32, #tpu.memory_space<vmem>>, vector<1x32x64xf32>
    %710 = vector.shape_cast %709 : vector<1x32x64xf32> to vector<32x64xf32>
    %cst_459 = arith.constant dense<0.000000e+00> : vector<128x64xf32>
    %711 = tpu.matmul %708, %710, %cst_459 {dimension_numbers = #tpu.dot_dimension_numbers<[1], [0], [0], [1], [0, 0, 1, 1], [], []>} : vector<128x32xf32>, vector<32x64xf32>, vector<128x64xf32> -> vector<128x64xf32>
    %c1_460 = arith.constant 1 : index
    %c0_461 = arith.constant 0 : index
    %c0_462 = arith.constant 0 : index
    %712 = vector.load %arg20[%c1_460, %c0_461, %c0_462] : memref<3x1x64xf32, #tpu.memory_space<vmem>>, vector<1x1x64xf32>
    %713 = vector.shape_cast %712 : vector<1x1x64xf32> to vector<1x64xf32>
    %714 = vector.broadcast %713 : vector<1x64xf32> to vector<128x64xf32>
    %715 = arith.addf %711, %714 : vector<128x64xf32>
    %cst_463 = arith.constant 0.000000e+00 : f32
    %716 = vector.broadcast %cst_463 : f32 to vector<128x64xf32>
    %717 = arith.maximumf %715, %716 : vector<128x64xf32>
    %c1_464 = arith.constant 1 : index
    %c0_465 = arith.constant 0 : index
    %c0_466 = arith.constant 0 : index
    %718 = vector.load %arg21[%c1_464, %c0_465, %c0_466] : memref<3x64x32xf32, #tpu.memory_space<vmem>>, vector<1x64x32xf32>
    %719 = vector.shape_cast %718 : vector<1x64x32xf32> to vector<64x32xf32>
    %cst_467 = arith.constant dense<0.000000e+00> : vector<128x32xf32>
    %720 = tpu.matmul %717, %719, %cst_467 {dimension_numbers = #tpu.dot_dimension_numbers<[1], [0], [0], [1], [0, 0, 1, 1], [], []>} : vector<128x64xf32>, vector<64x32xf32>, vector<128x32xf32> -> vector<128x32xf32>
    %c1_468 = arith.constant 1 : index
    %c0_469 = arith.constant 0 : index
    %c0_470 = arith.constant 0 : index
    %721 = vector.load %arg22[%c1_468, %c0_469, %c0_470] : memref<3x1x32xf32, #tpu.memory_space<vmem>>, vector<1x1x32xf32>
    %722 = vector.shape_cast %721 : vector<1x1x32xf32> to vector<1x32xf32>
    %723 = vector.broadcast %722 : vector<1x32xf32> to vector<128x32xf32>
    %724 = arith.addf %720, %723 : vector<128x32xf32>
    %725 = arith.addf %708, %724 : vector<128x32xf32>
    %c6_471 = arith.constant 6 : index
    %c0_472 = arith.constant 0 : index
    %c0_473 = arith.constant 0 : index
    %726 = vector.load %arg18[%c6_471, %c0_472, %c0_473] : memref<14x1x32xf32, #tpu.memory_space<vmem>>, vector<1x1x32xf32>
    %727 = vector.shape_cast %726 : vector<1x1x32xf32> to vector<1x32xf32>
    %c7_474 = arith.constant 7 : index
    %c0_475 = arith.constant 0 : index
    %c0_476 = arith.constant 0 : index
    %728 = vector.load %arg18[%c7_474, %c0_475, %c0_476] : memref<14x1x32xf32, #tpu.memory_space<vmem>>, vector<1x1x32xf32>
    %729 = vector.shape_cast %728 : vector<1x1x32xf32> to vector<1x32xf32>
    %cst_477 = arith.constant dense<0.000000e+00> : vector<128xf32>
    %730 = vector.multi_reduction <add>, %725, %cst_477 [1] : vector<128x32xf32> to vector<128xf32>
    %731 = vector.shape_cast %730 : vector<128xf32> to vector<128x1xf32>
    %cst_478 = arith.constant 3.200000e+01 : f32
    %732 = vector.broadcast %cst_478 : f32 to vector<128x1xf32>
    %733 = arith.divf %731, %732 : vector<128x1xf32>
    %734 = vector.broadcast %733 : vector<128x1xf32> to vector<128x32xf32>
    %735 = arith.subf %725, %734 : vector<128x32xf32>
    %736 = arith.mulf %735, %735 : vector<128x32xf32>
    %cst_479 = arith.constant dense<0.000000e+00> : vector<128xf32>
    %737 = vector.multi_reduction <add>, %736, %cst_479 [1] : vector<128x32xf32> to vector<128xf32>
    %738 = vector.shape_cast %737 : vector<128xf32> to vector<128x1xf32>
    %cst_480 = arith.constant 3.200000e+01 : f32
    %739 = vector.broadcast %cst_480 : f32 to vector<128x1xf32>
    %740 = arith.divf %738, %739 : vector<128x1xf32>
    %741 = vector.broadcast %733 : vector<128x1xf32> to vector<128x32xf32>
    %742 = arith.subf %725, %741 : vector<128x32xf32>
    %cst_481 = arith.constant 9.99999974E-6 : f32
    %743 = vector.broadcast %cst_481 : f32 to vector<128x1xf32>
    %744 = arith.addf %740, %743 : vector<128x1xf32>
    %745 = math.rsqrt %744 : vector<128x1xf32>
    %746 = vector.broadcast %745 : vector<128x1xf32> to vector<128x32xf32>
    %747 = arith.mulf %742, %746 : vector<128x32xf32>
    %748 = vector.broadcast %727 : vector<1x32xf32> to vector<128x32xf32>
    %749 = arith.mulf %747, %748 : vector<128x32xf32>
    %750 = vector.broadcast %729 : vector<1x32xf32> to vector<128x32xf32>
    %751 = arith.addf %749, %750 : vector<128x32xf32>
    %cst_482 = arith.constant 0.000000e+00 : f32
    %752 = vector.broadcast %cst_482 : f32 to vector<8x32xf32>
    %cst_483 = arith.constant 0.000000e+00 : f32
    %753 = vector.broadcast %cst_483 : f32 to vector<1x8xf32>
    %754 = arith.addf %752, %623 : vector<8x32xf32>
    %c8_484 = arith.constant 8 : index
    %c0_485 = arith.constant 0 : index
    %c0_486 = arith.constant 0 : index
    %755 = vector.load %arg16[%c8_484, %c0_485, %c0_486] : memref<16x32x32xf32, #tpu.memory_space<vmem>>, vector<1x32x32xf32>
    %756 = vector.shape_cast %755 : vector<1x32x32xf32> to vector<32x32xf32>
    %cst_487 = arith.constant dense<0.000000e+00> : vector<8x32xf32>
    %757 = tpu.matmul %754, %756, %cst_487 {dimension_numbers = #tpu.dot_dimension_numbers<[1], [0], [0], [1], [0, 0, 1, 1], [], []>} : vector<8x32xf32>, vector<32x32xf32>, vector<8x32xf32> -> vector<8x32xf32>
    %c8_488 = arith.constant 8 : index
    %c0_489 = arith.constant 0 : index
    %c0_490 = arith.constant 0 : index
    %758 = vector.load %arg17[%c8_488, %c0_489, %c0_490] : memref<16x1x32xf32, #tpu.memory_space<vmem>>, vector<1x1x32xf32>
    %759 = vector.shape_cast %758 : vector<1x1x32xf32> to vector<1x32xf32>
    %760 = vector.broadcast %759 : vector<1x32xf32> to vector<8x32xf32>
    %761 = arith.addf %757, %760 : vector<8x32xf32>
    %c9_491 = arith.constant 9 : index
    %c0_492 = arith.constant 0 : index
    %c0_493 = arith.constant 0 : index
    %762 = vector.load %arg16[%c9_491, %c0_492, %c0_493] : memref<16x32x32xf32, #tpu.memory_space<vmem>>, vector<1x32x32xf32>
    %763 = vector.shape_cast %762 : vector<1x32x32xf32> to vector<32x32xf32>
    %cst_494 = arith.constant dense<0.000000e+00> : vector<8x32xf32>
    %764 = tpu.matmul %754, %763, %cst_494 {dimension_numbers = #tpu.dot_dimension_numbers<[1], [0], [0], [1], [0, 0, 1, 1], [], []>} : vector<8x32xf32>, vector<32x32xf32>, vector<8x32xf32> -> vector<8x32xf32>
    %c9_495 = arith.constant 9 : index
    %c0_496 = arith.constant 0 : index
    %c0_497 = arith.constant 0 : index
    %765 = vector.load %arg17[%c9_495, %c0_496, %c0_497] : memref<16x1x32xf32, #tpu.memory_space<vmem>>, vector<1x1x32xf32>
    %766 = vector.shape_cast %765 : vector<1x1x32xf32> to vector<1x32xf32>
    %767 = vector.broadcast %766 : vector<1x32xf32> to vector<8x32xf32>
    %768 = arith.addf %764, %767 : vector<8x32xf32>
    %c10_498 = arith.constant 10 : index
    %c0_499 = arith.constant 0 : index
    %c0_500 = arith.constant 0 : index
    %769 = vector.load %arg16[%c10_498, %c0_499, %c0_500] : memref<16x32x32xf32, #tpu.memory_space<vmem>>, vector<1x32x32xf32>
    %770 = vector.shape_cast %769 : vector<1x32x32xf32> to vector<32x32xf32>
    %cst_501 = arith.constant dense<0.000000e+00> : vector<8x32xf32>
    %771 = tpu.matmul %752, %770, %cst_501 {dimension_numbers = #tpu.dot_dimension_numbers<[1], [0], [0], [1], [0, 0, 1, 1], [], []>} : vector<8x32xf32>, vector<32x32xf32>, vector<8x32xf32> -> vector<8x32xf32>
    %c10_502 = arith.constant 10 : index
    %c0_503 = arith.constant 0 : index
    %c0_504 = arith.constant 0 : index
    %772 = vector.load %arg17[%c10_502, %c0_503, %c0_504] : memref<16x1x32xf32, #tpu.memory_space<vmem>>, vector<1x1x32xf32>
    %773 = vector.shape_cast %772 : vector<1x1x32xf32> to vector<1x32xf32>
    %774 = vector.broadcast %773 : vector<1x32xf32> to vector<8x32xf32>
    %775 = arith.addf %771, %774 : vector<8x32xf32>
    %cst_505 = arith.constant dense<0.000000e+00> : vector<8x8xf32>
    %776 = tpu.matmul %761, %768, %cst_505 {dimension_numbers = #tpu.dot_dimension_numbers<[1], [1], [0], [0], [0, 0, 1, 0], [], []>} : vector<8x32xf32>, vector<8x32xf32>, vector<8x8xf32> -> vector<8x8xf32>
    %cst_506 = arith.constant 0.176776692 : f32
    %777 = vector.broadcast %cst_506 : f32 to vector<8x8xf32>
    %778 = arith.mulf %776, %777 : vector<8x8xf32>
    %779 = vector.broadcast %753 : vector<1x8xf32> to vector<8x8xf32>
    %780 = arith.addf %778, %779 : vector<8x8xf32>
    %cst_507 = arith.constant dense<0xFF800000> : vector<8xf32>
    %781 = vector.multi_reduction <maximumf>, %780, %cst_507 [1] : vector<8x8xf32> to vector<8xf32>
    %782 = vector.shape_cast %781 : vector<8xf32> to vector<8x1xf32>
    %783 = vector.broadcast %782 : vector<8x1xf32> to vector<8x8xf32>
    %784 = arith.subf %780, %783 : vector<8x8xf32>
    %785 = math.exp %784 : vector<8x8xf32>
    %cst_508 = arith.constant dense<0.000000e+00> : vector<8xf32>
    %786 = vector.multi_reduction <add>, %785, %cst_508 [1] : vector<8x8xf32> to vector<8xf32>
    %787 = vector.shape_cast %786 : vector<8xf32> to vector<8x1xf32>
    %788 = vector.broadcast %787 : vector<8x1xf32> to vector<8x8xf32>
    %789 = arith.divf %785, %788 : vector<8x8xf32>
    %cst_509 = arith.constant dense<0.000000e+00> : vector<8x32xf32>
    %790 = tpu.matmul %789, %775, %cst_509 {dimension_numbers = #tpu.dot_dimension_numbers<[1], [0], [0], [1], [0, 0, 1, 1], [], []>} : vector<8x8xf32>, vector<8x32xf32>, vector<8x32xf32> -> vector<8x32xf32>
    %c11_510 = arith.constant 11 : index
    %c0_511 = arith.constant 0 : index
    %c0_512 = arith.constant 0 : index
    %791 = vector.load %arg16[%c11_510, %c0_511, %c0_512] : memref<16x32x32xf32, #tpu.memory_space<vmem>>, vector<1x32x32xf32>
    %792 = vector.shape_cast %791 : vector<1x32x32xf32> to vector<32x32xf32>
    %cst_513 = arith.constant dense<0.000000e+00> : vector<8x32xf32>
    %793 = tpu.matmul %790, %792, %cst_513 {dimension_numbers = #tpu.dot_dimension_numbers<[1], [0], [0], [1], [0, 0, 1, 1], [], []>} : vector<8x32xf32>, vector<32x32xf32>, vector<8x32xf32> -> vector<8x32xf32>
    %c11_514 = arith.constant 11 : index
    %c0_515 = arith.constant 0 : index
    %c0_516 = arith.constant 0 : index
    %794 = vector.load %arg17[%c11_514, %c0_515, %c0_516] : memref<16x1x32xf32, #tpu.memory_space<vmem>>, vector<1x1x32xf32>
    %795 = vector.shape_cast %794 : vector<1x1x32xf32> to vector<1x32xf32>
    %796 = vector.broadcast %795 : vector<1x32xf32> to vector<8x32xf32>
    %797 = arith.addf %793, %796 : vector<8x32xf32>
    %798 = arith.addf %752, %797 : vector<8x32xf32>
    %c8_517 = arith.constant 8 : index
    %c0_518 = arith.constant 0 : index
    %c0_519 = arith.constant 0 : index
    %799 = vector.load %arg18[%c8_517, %c0_518, %c0_519] : memref<14x1x32xf32, #tpu.memory_space<vmem>>, vector<1x1x32xf32>
    %800 = vector.shape_cast %799 : vector<1x1x32xf32> to vector<1x32xf32>
    %c9_520 = arith.constant 9 : index
    %c0_521 = arith.constant 0 : index
    %c0_522 = arith.constant 0 : index
    %801 = vector.load %arg18[%c9_520, %c0_521, %c0_522] : memref<14x1x32xf32, #tpu.memory_space<vmem>>, vector<1x1x32xf32>
    %802 = vector.shape_cast %801 : vector<1x1x32xf32> to vector<1x32xf32>
    %cst_523 = arith.constant dense<0.000000e+00> : vector<8xf32>
    %803 = vector.multi_reduction <add>, %798, %cst_523 [1] : vector<8x32xf32> to vector<8xf32>
    %804 = vector.shape_cast %803 : vector<8xf32> to vector<8x1xf32>
    %cst_524 = arith.constant 3.200000e+01 : f32
    %805 = vector.broadcast %cst_524 : f32 to vector<8x1xf32>
    %806 = arith.divf %804, %805 : vector<8x1xf32>
    %807 = vector.broadcast %806 : vector<8x1xf32> to vector<8x32xf32>
    %808 = arith.subf %798, %807 : vector<8x32xf32>
    %809 = arith.mulf %808, %808 : vector<8x32xf32>
    %cst_525 = arith.constant dense<0.000000e+00> : vector<8xf32>
    %810 = vector.multi_reduction <add>, %809, %cst_525 [1] : vector<8x32xf32> to vector<8xf32>
    %811 = vector.shape_cast %810 : vector<8xf32> to vector<8x1xf32>
    %cst_526 = arith.constant 3.200000e+01 : f32
    %812 = vector.broadcast %cst_526 : f32 to vector<8x1xf32>
    %813 = arith.divf %811, %812 : vector<8x1xf32>
    %814 = vector.broadcast %806 : vector<8x1xf32> to vector<8x32xf32>
    %815 = arith.subf %798, %814 : vector<8x32xf32>
    %cst_527 = arith.constant 9.99999974E-6 : f32
    %816 = vector.broadcast %cst_527 : f32 to vector<8x1xf32>
    %817 = arith.addf %813, %816 : vector<8x1xf32>
    %818 = math.rsqrt %817 : vector<8x1xf32>
    %819 = vector.broadcast %818 : vector<8x1xf32> to vector<8x32xf32>
    %820 = arith.mulf %815, %819 : vector<8x32xf32>
    %821 = vector.broadcast %800 : vector<1x32xf32> to vector<8x32xf32>
    %822 = arith.mulf %820, %821 : vector<8x32xf32>
    %823 = vector.broadcast %802 : vector<1x32xf32> to vector<8x32xf32>
    %824 = arith.addf %822, %823 : vector<8x32xf32>
    %825 = arith.addf %824, %623 : vector<8x32xf32>
    %826 = arith.addf %751, %622 : vector<128x32xf32>
    %c12_528 = arith.constant 12 : index
    %c0_529 = arith.constant 0 : index
    %c0_530 = arith.constant 0 : index
    %827 = vector.load %arg16[%c12_528, %c0_529, %c0_530] : memref<16x32x32xf32, #tpu.memory_space<vmem>>, vector<1x32x32xf32>
    %828 = vector.shape_cast %827 : vector<1x32x32xf32> to vector<32x32xf32>
    %cst_531 = arith.constant dense<0.000000e+00> : vector<8x32xf32>
    %829 = tpu.matmul %825, %828, %cst_531 {dimension_numbers = #tpu.dot_dimension_numbers<[1], [0], [0], [1], [0, 0, 1, 1], [], []>} : vector<8x32xf32>, vector<32x32xf32>, vector<8x32xf32> -> vector<8x32xf32>
    %c12_532 = arith.constant 12 : index
    %c0_533 = arith.constant 0 : index
    %c0_534 = arith.constant 0 : index
    %830 = vector.load %arg17[%c12_532, %c0_533, %c0_534] : memref<16x1x32xf32, #tpu.memory_space<vmem>>, vector<1x1x32xf32>
    %831 = vector.shape_cast %830 : vector<1x1x32xf32> to vector<1x32xf32>
    %832 = vector.broadcast %831 : vector<1x32xf32> to vector<8x32xf32>
    %833 = arith.addf %829, %832 : vector<8x32xf32>
    %c13_535 = arith.constant 13 : index
    %c0_536 = arith.constant 0 : index
    %c0_537 = arith.constant 0 : index
    %834 = vector.load %arg16[%c13_535, %c0_536, %c0_537] : memref<16x32x32xf32, #tpu.memory_space<vmem>>, vector<1x32x32xf32>
    %835 = vector.shape_cast %834 : vector<1x32x32xf32> to vector<32x32xf32>
    %cst_538 = arith.constant dense<0.000000e+00> : vector<128x32xf32>
    %836 = tpu.matmul %826, %835, %cst_538 {dimension_numbers = #tpu.dot_dimension_numbers<[1], [0], [0], [1], [0, 0, 1, 1], [], []>} : vector<128x32xf32>, vector<32x32xf32>, vector<128x32xf32> -> vector<128x32xf32>
    %c13_539 = arith.constant 13 : index
    %c0_540 = arith.constant 0 : index
    %c0_541 = arith.constant 0 : index
    %837 = vector.load %arg17[%c13_539, %c0_540, %c0_541] : memref<16x1x32xf32, #tpu.memory_space<vmem>>, vector<1x1x32xf32>
    %838 = vector.shape_cast %837 : vector<1x1x32xf32> to vector<1x32xf32>
    %839 = vector.broadcast %838 : vector<1x32xf32> to vector<128x32xf32>
    %840 = arith.addf %836, %839 : vector<128x32xf32>
    %c14_542 = arith.constant 14 : index
    %c0_543 = arith.constant 0 : index
    %c0_544 = arith.constant 0 : index
    %841 = vector.load %arg16[%c14_542, %c0_543, %c0_544] : memref<16x32x32xf32, #tpu.memory_space<vmem>>, vector<1x32x32xf32>
    %842 = vector.shape_cast %841 : vector<1x32x32xf32> to vector<32x32xf32>
    %cst_545 = arith.constant dense<0.000000e+00> : vector<128x32xf32>
    %843 = tpu.matmul %751, %842, %cst_545 {dimension_numbers = #tpu.dot_dimension_numbers<[1], [0], [0], [1], [0, 0, 1, 1], [], []>} : vector<128x32xf32>, vector<32x32xf32>, vector<128x32xf32> -> vector<128x32xf32>
    %c14_546 = arith.constant 14 : index
    %c0_547 = arith.constant 0 : index
    %c0_548 = arith.constant 0 : index
    %844 = vector.load %arg17[%c14_546, %c0_547, %c0_548] : memref<16x1x32xf32, #tpu.memory_space<vmem>>, vector<1x1x32xf32>
    %845 = vector.shape_cast %844 : vector<1x1x32xf32> to vector<1x32xf32>
    %846 = vector.broadcast %845 : vector<1x32xf32> to vector<128x32xf32>
    %847 = arith.addf %843, %846 : vector<128x32xf32>
    %cst_549 = arith.constant dense<0.000000e+00> : vector<8x128xf32>
    %848 = tpu.matmul %833, %840, %cst_549 {dimension_numbers = #tpu.dot_dimension_numbers<[1], [1], [0], [0], [0, 0, 1, 0], [], []>} : vector<8x32xf32>, vector<128x32xf32>, vector<8x128xf32> -> vector<8x128xf32>
    %cst_550 = arith.constant 0.176776692 : f32
    %849 = vector.broadcast %cst_550 : f32 to vector<8x128xf32>
    %850 = arith.mulf %848, %849 : vector<8x128xf32>
    %851 = vector.broadcast %619 : vector<1x128xf32> to vector<8x128xf32>
    %852 = arith.addf %850, %851 : vector<8x128xf32>
    %cst_551 = arith.constant dense<0xFF800000> : vector<8xf32>
    %853 = vector.multi_reduction <maximumf>, %852, %cst_551 [1] : vector<8x128xf32> to vector<8xf32>
    %854 = vector.shape_cast %853 : vector<8xf32> to vector<8x1xf32>
    %855 = vector.broadcast %854 : vector<8x1xf32> to vector<8x128xf32>
    %856 = arith.subf %852, %855 : vector<8x128xf32>
    %857 = math.exp %856 : vector<8x128xf32>
    %cst_552 = arith.constant dense<0.000000e+00> : vector<8xf32>
    %858 = vector.multi_reduction <add>, %857, %cst_552 [1] : vector<8x128xf32> to vector<8xf32>
    %859 = vector.shape_cast %858 : vector<8xf32> to vector<8x1xf32>
    %860 = vector.broadcast %859 : vector<8x1xf32> to vector<8x128xf32>
    %861 = arith.divf %857, %860 : vector<8x128xf32>
    %cst_553 = arith.constant dense<0.000000e+00> : vector<8x32xf32>
    %862 = tpu.matmul %861, %847, %cst_553 {dimension_numbers = #tpu.dot_dimension_numbers<[1], [0], [0], [1], [0, 0, 1, 1], [], []>} : vector<8x128xf32>, vector<128x32xf32>, vector<8x32xf32> -> vector<8x32xf32>
    %c15_554 = arith.constant 15 : index
    %c0_555 = arith.constant 0 : index
    %c0_556 = arith.constant 0 : index
    %863 = vector.load %arg16[%c15_554, %c0_555, %c0_556] : memref<16x32x32xf32, #tpu.memory_space<vmem>>, vector<1x32x32xf32>
    %864 = vector.shape_cast %863 : vector<1x32x32xf32> to vector<32x32xf32>
    %cst_557 = arith.constant dense<0.000000e+00> : vector<8x32xf32>
    %865 = tpu.matmul %862, %864, %cst_557 {dimension_numbers = #tpu.dot_dimension_numbers<[1], [0], [0], [1], [0, 0, 1, 1], [], []>} : vector<8x32xf32>, vector<32x32xf32>, vector<8x32xf32> -> vector<8x32xf32>
    %c15_558 = arith.constant 15 : index
    %c0_559 = arith.constant 0 : index
    %c0_560 = arith.constant 0 : index
    %866 = vector.load %arg17[%c15_558, %c0_559, %c0_560] : memref<16x1x32xf32, #tpu.memory_space<vmem>>, vector<1x1x32xf32>
    %867 = vector.shape_cast %866 : vector<1x1x32xf32> to vector<1x32xf32>
    %868 = vector.broadcast %867 : vector<1x32xf32> to vector<8x32xf32>
    %869 = arith.addf %865, %868 : vector<8x32xf32>
    %870 = arith.addf %824, %869 : vector<8x32xf32>
    %c10_561 = arith.constant 10 : index
    %c0_562 = arith.constant 0 : index
    %c0_563 = arith.constant 0 : index
    %871 = vector.load %arg18[%c10_561, %c0_562, %c0_563] : memref<14x1x32xf32, #tpu.memory_space<vmem>>, vector<1x1x32xf32>
    %872 = vector.shape_cast %871 : vector<1x1x32xf32> to vector<1x32xf32>
    %c11_564 = arith.constant 11 : index
    %c0_565 = arith.constant 0 : index
    %c0_566 = arith.constant 0 : index
    %873 = vector.load %arg18[%c11_564, %c0_565, %c0_566] : memref<14x1x32xf32, #tpu.memory_space<vmem>>, vector<1x1x32xf32>
    %874 = vector.shape_cast %873 : vector<1x1x32xf32> to vector<1x32xf32>
    %cst_567 = arith.constant dense<0.000000e+00> : vector<8xf32>
    %875 = vector.multi_reduction <add>, %870, %cst_567 [1] : vector<8x32xf32> to vector<8xf32>
    %876 = vector.shape_cast %875 : vector<8xf32> to vector<8x1xf32>
    %cst_568 = arith.constant 3.200000e+01 : f32
    %877 = vector.broadcast %cst_568 : f32 to vector<8x1xf32>
    %878 = arith.divf %876, %877 : vector<8x1xf32>
    %879 = vector.broadcast %878 : vector<8x1xf32> to vector<8x32xf32>
    %880 = arith.subf %870, %879 : vector<8x32xf32>
    %881 = arith.mulf %880, %880 : vector<8x32xf32>
    %cst_569 = arith.constant dense<0.000000e+00> : vector<8xf32>
    %882 = vector.multi_reduction <add>, %881, %cst_569 [1] : vector<8x32xf32> to vector<8xf32>
    %883 = vector.shape_cast %882 : vector<8xf32> to vector<8x1xf32>
    %cst_570 = arith.constant 3.200000e+01 : f32
    %884 = vector.broadcast %cst_570 : f32 to vector<8x1xf32>
    %885 = arith.divf %883, %884 : vector<8x1xf32>
    %886 = vector.broadcast %878 : vector<8x1xf32> to vector<8x32xf32>
    %887 = arith.subf %870, %886 : vector<8x32xf32>
    %cst_571 = arith.constant 9.99999974E-6 : f32
    %888 = vector.broadcast %cst_571 : f32 to vector<8x1xf32>
    %889 = arith.addf %885, %888 : vector<8x1xf32>
    %890 = math.rsqrt %889 : vector<8x1xf32>
    %891 = vector.broadcast %890 : vector<8x1xf32> to vector<8x32xf32>
    %892 = arith.mulf %887, %891 : vector<8x32xf32>
    %893 = vector.broadcast %872 : vector<1x32xf32> to vector<8x32xf32>
    %894 = arith.mulf %892, %893 : vector<8x32xf32>
    %895 = vector.broadcast %874 : vector<1x32xf32> to vector<8x32xf32>
    %896 = arith.addf %894, %895 : vector<8x32xf32>
    %c2_572 = arith.constant 2 : index
    %c0_573 = arith.constant 0 : index
    %c0_574 = arith.constant 0 : index
    %897 = vector.load %arg19[%c2_572, %c0_573, %c0_574] : memref<3x32x64xf32, #tpu.memory_space<vmem>>, vector<1x32x64xf32>
    %898 = vector.shape_cast %897 : vector<1x32x64xf32> to vector<32x64xf32>
    %cst_575 = arith.constant dense<0.000000e+00> : vector<8x64xf32>
    %899 = tpu.matmul %896, %898, %cst_575 {dimension_numbers = #tpu.dot_dimension_numbers<[1], [0], [0], [1], [0, 0, 1, 1], [], []>} : vector<8x32xf32>, vector<32x64xf32>, vector<8x64xf32> -> vector<8x64xf32>
    %c2_576 = arith.constant 2 : index
    %c0_577 = arith.constant 0 : index
    %c0_578 = arith.constant 0 : index
    %900 = vector.load %arg20[%c2_576, %c0_577, %c0_578] : memref<3x1x64xf32, #tpu.memory_space<vmem>>, vector<1x1x64xf32>
    %901 = vector.shape_cast %900 : vector<1x1x64xf32> to vector<1x64xf32>
    %902 = vector.broadcast %901 : vector<1x64xf32> to vector<8x64xf32>
    %903 = arith.addf %899, %902 : vector<8x64xf32>
    %cst_579 = arith.constant 0.000000e+00 : f32
    %904 = vector.broadcast %cst_579 : f32 to vector<8x64xf32>
    %905 = arith.maximumf %903, %904 : vector<8x64xf32>
    %c2_580 = arith.constant 2 : index
    %c0_581 = arith.constant 0 : index
    %c0_582 = arith.constant 0 : index
    %906 = vector.load %arg21[%c2_580, %c0_581, %c0_582] : memref<3x64x32xf32, #tpu.memory_space<vmem>>, vector<1x64x32xf32>
    %907 = vector.shape_cast %906 : vector<1x64x32xf32> to vector<64x32xf32>
    %cst_583 = arith.constant dense<0.000000e+00> : vector<8x32xf32>
    %908 = tpu.matmul %905, %907, %cst_583 {dimension_numbers = #tpu.dot_dimension_numbers<[1], [0], [0], [1], [0, 0, 1, 1], [], []>} : vector<8x64xf32>, vector<64x32xf32>, vector<8x32xf32> -> vector<8x32xf32>
    %c2_584 = arith.constant 2 : index
    %c0_585 = arith.constant 0 : index
    %c0_586 = arith.constant 0 : index
    %909 = vector.load %arg22[%c2_584, %c0_585, %c0_586] : memref<3x1x32xf32, #tpu.memory_space<vmem>>, vector<1x1x32xf32>
    %910 = vector.shape_cast %909 : vector<1x1x32xf32> to vector<1x32xf32>
    %911 = vector.broadcast %910 : vector<1x32xf32> to vector<8x32xf32>
    %912 = arith.addf %908, %911 : vector<8x32xf32>
    %913 = arith.addf %896, %912 : vector<8x32xf32>
    %c12_587 = arith.constant 12 : index
    %c0_588 = arith.constant 0 : index
    %c0_589 = arith.constant 0 : index
    %914 = vector.load %arg18[%c12_587, %c0_588, %c0_589] : memref<14x1x32xf32, #tpu.memory_space<vmem>>, vector<1x1x32xf32>
    %915 = vector.shape_cast %914 : vector<1x1x32xf32> to vector<1x32xf32>
    %c13_590 = arith.constant 13 : index
    %c0_591 = arith.constant 0 : index
    %c0_592 = arith.constant 0 : index
    %916 = vector.load %arg18[%c13_590, %c0_591, %c0_592] : memref<14x1x32xf32, #tpu.memory_space<vmem>>, vector<1x1x32xf32>
    %917 = vector.shape_cast %916 : vector<1x1x32xf32> to vector<1x32xf32>
    %cst_593 = arith.constant dense<0.000000e+00> : vector<8xf32>
    %918 = vector.multi_reduction <add>, %913, %cst_593 [1] : vector<8x32xf32> to vector<8xf32>
    %919 = vector.shape_cast %918 : vector<8xf32> to vector<8x1xf32>
    %cst_594 = arith.constant 3.200000e+01 : f32
    %920 = vector.broadcast %cst_594 : f32 to vector<8x1xf32>
    %921 = arith.divf %919, %920 : vector<8x1xf32>
    %922 = vector.broadcast %921 : vector<8x1xf32> to vector<8x32xf32>
    %923 = arith.subf %913, %922 : vector<8x32xf32>
    %924 = arith.mulf %923, %923 : vector<8x32xf32>
    %cst_595 = arith.constant dense<0.000000e+00> : vector<8xf32>
    %925 = vector.multi_reduction <add>, %924, %cst_595 [1] : vector<8x32xf32> to vector<8xf32>
    %926 = vector.shape_cast %925 : vector<8xf32> to vector<8x1xf32>
    %cst_596 = arith.constant 3.200000e+01 : f32
    %927 = vector.broadcast %cst_596 : f32 to vector<8x1xf32>
    %928 = arith.divf %926, %927 : vector<8x1xf32>
    %929 = vector.broadcast %921 : vector<8x1xf32> to vector<8x32xf32>
    %930 = arith.subf %913, %929 : vector<8x32xf32>
    %cst_597 = arith.constant 9.99999974E-6 : f32
    %931 = vector.broadcast %cst_597 : f32 to vector<8x1xf32>
    %932 = arith.addf %928, %931 : vector<8x1xf32>
    %933 = math.rsqrt %932 : vector<8x1xf32>
    %934 = vector.broadcast %933 : vector<8x1xf32> to vector<8x32xf32>
    %935 = arith.mulf %930, %934 : vector<8x32xf32>
    %936 = vector.broadcast %915 : vector<1x32xf32> to vector<8x32xf32>
    %937 = arith.mulf %935, %936 : vector<8x32xf32>
    %938 = vector.broadcast %917 : vector<1x32xf32> to vector<8x32xf32>
    %939 = arith.addf %937, %938 : vector<8x32xf32>
    %cst_598 = arith.constant dense<0.000000e+00> : vector<8x9xf32>
    %940 = tpu.matmul %939, %624, %cst_598 {dimension_numbers = #tpu.dot_dimension_numbers<[1], [0], [0], [1], [0, 0, 1, 1], [], []>} : vector<8x32xf32>, vector<32x9xf32>, vector<8x9xf32> -> vector<8x9xf32>
    %941 = vector.broadcast %625 : vector<1x9xf32> to vector<8x9xf32>
    %942 = arith.addf %940, %941 : vector<8x9xf32>
    %c1_599 = arith.constant 1 : index
    %c0_600 = arith.constant 0 : index
    %c0_601 = arith.constant 0 : index
    %943 = vector.load %arg26[%c1_599, %c0_600, %c0_601] : memref<2x8x9xf32, #tpu.memory_space<vmem>>, vector<1x8x9xf32>
    %944 = vector.shape_cast %943 : vector<1x8x9xf32> to vector<8x9xf32>
    %945 = vector.shape_cast %942 : vector<8x9xf32> to vector<1x8x9xf32>
    tpu.vector_store %arg26[%c1_599, %c0_600, %c0_601], %945 {strides = array<i32>} : memref<2x8x9xf32, #tpu.memory_space<vmem>>, vector<1x8x9xf32>,
    return
  }
}

</mosaic_0001>

<llo_original>
// kernel: detrvae_forward.1
$region0: #{detrvae_forward.1}
  #allocation0 [shape = 'u32[]', space=smem, size = 0x4, offset = 0x4, fixed_abs, tag = 'smem constant byte address 0x4 - core index']
  #allocation1 [shape = 'u32[144,128]{1,0:T(1,128)}', space=vmem, size = 0x12000, scoped, tag = 'internal scratch']
  %s0 = inlined_call_operand.vmem [shape: f32[2,16,16], index: 0, kind: input, shape index: {}]
  %s1 = inlined_call_operand.vmem [shape: f32[2,1,16], index: 1, kind: input, shape index: {}]
  %s2 = inlined_call_operand.vmem [shape: f32[2,1,8], index: 2, kind: input, shape index: {}]
  %s3 = inlined_call_operand.vmem [shape: f32[2,128,11], index: 3, kind: input, shape index: {}]
  %s4 = inlined_call_operand.vmem [shape: f32[1,128], index: 4, kind: input, shape index: {}]
  %s5 = inlined_call_operand.vmem [shape: f32[16,32], index: 5, kind: input, shape index: {}]
  %s6 = inlined_call_operand.vmem [shape: f32[16,32], index: 6, kind: input, shape index: {}]
  %s7 = inlined_call_operand.vmem [shape: f32[16,32], index: 7, kind: input, shape index: {}]
  %s8 = inlined_call_operand.vmem [shape: f32[32,16], index: 8, kind: input, shape index: {}]
  %s9 = inlined_call_operand.vmem [shape: f32[1,16], index: 9, kind: input, shape index: {}]
  %s10 = inlined_call_operand.vmem [shape: f32[8,32], index: 10, kind: input, shape index: {}]
  %s11 = inlined_call_operand.vmem [shape: f32[1,32], index: 11, kind: input, shape index: {}]
  %s12 = inlined_call_operand.vmem [shape: f32[11,32], index: 12, kind: input, shape index: {}]
  %s13 = inlined_call_operand.vmem [shape: f32[128,32], index: 13, kind: input, shape index: {}]
  %s14 = inlined_call_operand.vmem [shape: f32[128,32], index: 14, kind: input, shape index: {}]
  %s15 = inlined_call_operand.vmem [shape: f32[8,32], index: 15, kind: input, shape index: {}]
  %s16 = inlined_call_operand.vmem [shape: f32[16,32,32], index: 16, kind: input, shape index: {}]
  %s17 = inlined_call_operand.vmem [shape: f32[16,1,32], index: 17, kind: input, shape index: {}]
  %s18 = inlined_call_operand.vmem [shape: f32[14,1,32], index: 18, kind: input, shape index: {}]
  %s19 = inlined_call_operand.vmem [shape: f32[3,32,64], index: 19, kind: input, shape index: {}]
  %s20 = inlined_call_operand.vmem [shape: f32[3,1,64], index: 20, kind: input, shape index: {}]
  %s21 = inlined_call_operand.vmem [shape: f32[3,64,32], index: 21, kind: input, shape index: {}]
  %s22 = inlined_call_operand.vmem [shape: f32[3,1,32], index: 22, kind: input, shape index: {}]
  %s23 = inlined_call_operand.vmem [shape: f32[32,9], index: 23, kind: input, shape index: {}]
  %s24 = inlined_call_operand.vmem [shape: f32[1,9], index: 24, kind: input, shape index: {}]
  %s25 = inlined_call_operand.vmem [shape: f32[2,1,16], index: 25, kind: output, shape index: {0}]
  %s26 = inlined_call_operand.vmem [shape: f32[2,8,9], index: 26, kind: output, shape index: {1}]
  %27 = xla_tuple %s25, %s26
  %s28 = sld [smem:[#allocation0]]
  $region118: #{detrvae_forward.1} parent=0
    _
  %s30 = ssub.s32 1, %s28
  %s31 = scalar_select 0, %s30, %s28
  // Predicated region
  $region2: #{detrvae_forward.1} parent=0 // pred_check
    _
  $region3: #{detrvae_forward.1} parent=0 // pred_check_branch
    %33 = sbr.rel (0) target = $region5
  $region4: #{detrvae_forward.1} parent=0 // pred_region
    _
  $region5: #{detrvae_forward.1} parent=0 // pred_fallthru
    _
  // Predicated region
  $region6: #{detrvae_forward.1} parent=0 // pred_check
    _
  $region7: #{detrvae_forward.1} parent=0 // pred_check_branch
    %35 = sbr.rel (0) target = $region9
  $region8: #{detrvae_forward.1} parent=0 // pred_region
    _
  $region9: #{detrvae_forward.1} parent=0 // pred_fallthru
    _
  // Predicated region
  $region10: #{detrvae_forward.1} parent=0 // pred_check
    _
  $region11: #{detrvae_forward.1} parent=0 // pred_check_branch
    %37 = sbr.rel (0) target = $region13
  $region12: #{detrvae_forward.1} parent=0 // pred_region
    _
  $region13: #{detrvae_forward.1} parent=0 // pred_fallthru
    _
  // Predicated region
  $region14: #{detrvae_forward.1} parent=0 // pred_check
    _
  $region15: #{detrvae_forward.1} parent=0 // pred_check_branch
    %39 = sbr.rel (0) target = $region17
  $region16: #{detrvae_forward.1} parent=0 // pred_region
    _
  $region17: #{detrvae_forward.1} parent=0 // pred_fallthru
    _
  // Predicated region
  $region18: #{detrvae_forward.1} parent=0 // pred_check
    _
  $region19: #{detrvae_forward.1} parent=0 // pred_check_branch
    %41 = sbr.rel (0) target = $region21
  $region20: #{detrvae_forward.1} parent=0 // pred_region
    _
  $region21: #{detrvae_forward.1} parent=0 // pred_fallthru
    _
  // Predicated region
  $region22: #{detrvae_forward.1} parent=0 // pred_check
    _
  $region23: #{detrvae_forward.1} parent=0 // pred_check_branch
    %43 = sbr.rel (0) target = $region25
  $region24: #{detrvae_forward.1} parent=0 // pred_region
    _
  $region25: #{detrvae_forward.1} parent=0 // pred_fallthru
    _
  // Predicated region
  $region26: #{detrvae_forward.1} parent=0 // pred_check
    _
  $region27: #{detrvae_forward.1} parent=0 // pred_check_branch
    %45 = sbr.rel (0) target = $region29
  $region28: #{detrvae_forward.1} parent=0 // pred_region
    _
  $region29: #{detrvae_forward.1} parent=0 // pred_fallthru
    _
  // Predicated region
  $region30: #{detrvae_forward.1} parent=0 // pred_check
    _
  $region31: #{detrvae_forward.1} parent=0 // pred_check_branch
    %47 = sbr.rel (0) target = $region33
  $region32: #{detrvae_forward.1} parent=0 // pred_region
    _
  $region33: #{detrvae_forward.1} parent=0 // pred_fallthru
    _
  // Predicated region
  $region34: #{detrvae_forward.1} parent=0 // pred_check
    _
  $region35: #{detrvae_forward.1} parent=0 // pred_check_branch
    %49 = sbr.rel (0) target = $region37
  $region36: #{detrvae_forward.1} parent=0 // pred_region
    _
  $region37: #{detrvae_forward.1} parent=0 // pred_fallthru
    _
  // Predicated region
  $region38: #{detrvae_forward.1} parent=0 // pred_check
    _
  $region39: #{detrvae_forward.1} parent=0 // pred_check_branch
    %51 = sbr.rel (0) target = $region41
  $region40: #{detrvae_forward.1} parent=0 // pred_region
    _
  $region41: #{detrvae_forward.1} parent=0 // pred_fallthru
    _
  // Predicated region
  $region42: #{detrvae_forward.1} parent=0 // pred_check
    _
  $region43: #{detrvae_forward.1} parent=0 // pred_check_branch
    %53 = sbr.rel (0) target = $region45
  $region44: #{detrvae_forward.1} parent=0 // pred_region
    _
  $region45: #{detrvae_forward.1} parent=0 // pred_fallthru
    _
  // Predicated region
  $region46: #{detrvae_forward.1} parent=0 // pred_check
    _
  $region47: #{detrvae_forward.1} parent=0 // pred_check_branch
    %55 = sbr.rel (0) target = $region49
  $region48: #{detrvae_forward.1} parent=0 // pred_region
    _
  $region49: #{detrvae_forward.1} parent=0 // pred_fallthru
    _
  // Predicated region
  $region50: #{detrvae_forward.1} parent=0 // pred_check
    _
  $region51: #{detrvae_forward.1} parent=0 // pred_check_branch
    %57 = sbr.rel (0) target = $region53
  $region52: #{detrvae_forward.1} parent=0 // pred_region
    _
  $region53: #{detrvae_forward.1} parent=0 // pred_fallthru
    _
  // Predicated region
  $region54: #{detrvae_forward.1} parent=0 // pred_check
    _
  $region55: #{detrvae_forward.1} parent=0 // pred_check_branch
    %59 = sbr.rel (0) target = $region57
  $region56: #{detrvae_forward.1} parent=0 // pred_region
    _
  $region57: #{detrvae_forward.1} parent=0 // pred_fallthru
    _
  // Predicated region
  $region58: #{detrvae_forward.1} parent=0 // pred_check
    _
  $region59: #{detrvae_forward.1} parent=0 // pred_check_branch
    %61 = sbr.rel (0) target = $region61
  $region60: #{detrvae_forward.1} parent=0 // pred_region
    _
  $region61: #{detrvae_forward.1} parent=0 // pred_fallthru
    _
  // Predicated region
  $region62: #{detrvae_forward.1} parent=0 // pred_check
    _
  $region63: #{detrvae_forward.1} parent=0 // pred_check_branch
    %63 = sbr.rel (0) target = $region65
  $region64: #{detrvae_forward.1} parent=0 // pred_region
    _
  $region65: #{detrvae_forward.1} parent=0 // pred_fallthru
    _
  // Predicated region
  $region66: #{detrvae_forward.1} parent=0 // pred_check
    _
  $region67: #{detrvae_forward.1} parent=0 // pred_check_branch
    %65 = sbr.rel (0) target = $region69
  $region68: #{detrvae_forward.1} parent=0 // pred_region
    _
  $region69: #{detrvae_forward.1} parent=0 // pred_fallthru
    _
  // Predicated region
  $region70: #{detrvae_forward.1} parent=0 // pred_check
    _
  $region71: #{detrvae_forward.1} parent=0 // pred_check_branch
    %67 = sbr.rel (0) target = $region73
  $region72: #{detrvae_forward.1} parent=0 // pred_region
    _
  $region73: #{detrvae_forward.1} parent=0 // pred_fallthru
    _
  // Predicated region
  $region74: #{detrvae_forward.1} parent=0 // pred_check
    _
  $region75: #{detrvae_forward.1} parent=0 // pred_check_branch
    %69 = sbr.rel (0) target = $region77
  $region76: #{detrvae_forward.1} parent=0 // pred_region
    _
  $region77: #{detrvae_forward.1} parent=0 // pred_fallthru
    _
  // Predicated region
  $region78: #{detrvae_forward.1} parent=0 // pred_check
    _
  $region79: #{detrvae_forward.1} parent=0 // pred_check_branch
    %71 = sbr.rel (0) target = $region81
  $region80: #{detrvae_forward.1} parent=0 // pred_region
    _
  $region81: #{detrvae_forward.1} parent=0 // pred_fallthru
    _
  // Predicated region
  $region82: #{detrvae_forward.1} parent=0 // pred_check
    _
  $region83: #{detrvae_forward.1} parent=0 // pred_check_branch
    %73 = sbr.rel (0) target = $region85
  $region84: #{detrvae_forward.1} parent=0 // pred_region
    _
  $region85: #{detrvae_forward.1} parent=0 // pred_fallthru
    _
  // Predicated region
  $region86: #{detrvae_forward.1} parent=0 // pred_check
    _
  $region87: #{detrvae_forward.1} parent=0 // pred_check_branch
    %75 = sbr.rel (0) target = $region89
  $region88: #{detrvae_forward.1} parent=0 // pred_region
    _
  $region89: #{detrvae_forward.1} parent=0 // pred_fallthru
    _
  // Predicated region
  $region90: #{detrvae_forward.1} parent=0 // pred_check
    _
  $region91: #{detrvae_forward.1} parent=0 // pred_check_branch
    %77 = sbr.rel (0) target = $region93
  $region92: #{detrvae_forward.1} parent=0 // pred_region
    _
  $region93: #{detrvae_forward.1} parent=0 // pred_fallthru
    _
  // Predicated region
  $region94: #{detrvae_forward.1} parent=0 // pred_check
    _
  $region95: #{detrvae_forward.1} parent=0 // pred_check_branch
    %79 = sbr.rel (0) target = $region97
  $region96: #{detrvae_forward.1} parent=0 // pred_region
    _
  $region97: #{detrvae_forward.1} parent=0 // pred_fallthru
    _
  // Predicated region
  $region98: #{detrvae_forward.1} parent=0 // pred_check
    _
  $region99: #{detrvae_forward.1} parent=0 // pred_check_branch
    %81 = sbr.rel (0) target = $region101
  $region100: #{detrvae_forward.1} parent=0 // pred_region
    _
  $region101: #{detrvae_forward.1} parent=0 // pred_fallthru
    _
  %v82 = vld [vmem:[%s0] sm:$0xff]
  %v83 = vld [vmem:[%s0 + $0x8] sm:$0xff]
  %v84 = vld [vmem:[%s5] sm:$0xff]
  %v85 = vld [vmem:[%s5 + $0x8] sm:$0xff]
  %v86 = vld [vmem:[%s6] sm:$0xff]
  %v87 = vld [vmem:[%s6 + $0x8] sm:$0xff]
  %vm88 = vcmask 130048
  %v90 = vsel %vm88, %v82, 0
  %v93 = vsel %vm88, %v83, 0
  %95 = vmatprep.subr.mxu0 0.0
  %96 = vmatpush1.msra.mxu0 %v84
  %97 = vmatprep.subr.mxu0 0.0
  %98 = vmatpush1.msra.mxu0 %v85
  %99 = vmatprep.subr.mxu0 0.0
  %100 = vmatpush1.msra.mxu0 0.0
  %101 = vmatprep.subr.mxu0 0.0
  %102 = vmatpush1.msra.mxu0 0.0
  %103 = vmatprep.subr.mxu0 0.0
  %104 = vmatpush1.msra.mxu0 0.0
  %105 = vmatprep.subr.mxu0 0.0
  %106 = vmatpush1.msra.mxu0 0.0
  %107 = vmatprep.subr.mxu0 0.0
  %108 = vmatpush1.msra.mxu0 0.0
  %109 = vmatprep.subr.mxu0 0.0
  %110 = vmatpush1.msra.mxu0 0.0
  %111 = vmatprep.subr.mxu0 0.0
  %112 = vmatpush1.msra.mxu0 0.0
  %113 = vmatprep.subr.mxu0 0.0
  %114 = vmatpush1.msra.mxu0 0.0
  %115 = vmatprep.subr.mxu0 0.0
  %116 = vmatpush1.msra.mxu0 0.0
  %117 = vmatprep.subr.mxu0 0.0
  %118 = vmatpush1.msra.mxu0 0.0
  %119 = vmatprep.subr.mxu0 0.0
  %120 = vmatpush1.msra.mxu0 0.0
  %121 = vmatprep.subr.mxu0 0.0
  %122 = vmatpush1.msra.mxu0 0.0
  %123 = vmatprep.subr.mxu0 0.0
  %124 = vmatpush1.msra.mxu0 0.0
  %125 = vmatprep.subr.mxu0 0.0
  %126 = vmatpush1.msra.mxu0 0.0
  %127 = vmatprep.subr.mxu0 0.0
  %128 = vmatpush1.msra.mxu0 0.0
  %129 = vmatprep.subr.mxu0 0.0
  %130 = vmatpush1.msra.mxu0 0.0
  %131 = vmatprep.subr.mxu0 0.0
  %132 = vmatpush1.msra.mxu0 0.0
  %133 = vmatprep.subr.mxu0 0.0
  %134 = vmatpush1.msra.mxu0 0.0
  %135 = vmatprep.subr.mxu0 0.0
  %136 = vmatpush1.msra.mxu0 0.0
  %137 = vmatprep.subr.mxu0 0.0
  %138 = vmatpush1.msra.mxu0 0.0
  %139 = vmatprep.subr.mxu0 0.0
  %140 = vmatpush1.msra.mxu0 0.0
  %141 = vmatprep.subr.mxu0 0.0
  %142 = vmatpush1.msra.mxu0 0.0
  %143 = vmatprep.subr.mxu0 0.0
  %144 = vmatpush1.msra.mxu0 0.0
  %145 = vmatprep.subr.mxu0 0.0
  %146 = vmatpush1.msra.mxu0 0.0
  %147 = vmatprep.subr.mxu0 0.0
  %148 = vmatpush1.msra.mxu0 0.0
  %149 = vmatprep.subr.mxu0 0.0
  %150 = vmatpush1.msra.mxu0 0.0
  %151 = vmatprep.subr.mxu0 0.0
  %152 = vmatpush1.msra.mxu0 0.0
  %153 = vmatprep.subr.mxu0 0.0
  %154 = vmatpush1.msra.mxu0 0.0
  %155 = vmatprep.subr.mxu0 0.0
  %156 = vmatpush1.msra.mxu0 0.0
  %157 = vmatprep.subr.mxu0 0.0
  %158 = vmatpush1.msra.mxu0 0.0
  %159 = vmatprep.mubr.f32.mxu0 0.0
  %160 = vmatmul.mubr.f32.gmra.mrb[0].mxu0 %v90
  %v161 = vpop.f32.mrb[0].mxu0
  %v162 = vadd.f32 %v86, %v161
  %v163 = vpop.f32.mrb[0].mxu0
  %164 = vmatprep.mubr.f32.mxu0 0.0
  %165 = vmatmul.mubr.f32.gmra.mrb[0].mxu0 %v93
  %v166 = vpop.f32.mrb[0].mxu0
  %v167 = vadd.f32 %v87, %v166
  %v168 = vpop.f32.mrb[0].mxu0
  %169 = vdwg.mxu0
  %v170 = vld [vmem:[%s7] sm:$0xff]
  %v171 = vld [vmem:[%s7 + $0x8] sm:$0xff]
  %v172 = vld [vmem:[%s1] sm:$0x1]
  %v173 = vadd.f32 %v162, %v170
  %v174 = vadd.f32 %v167, %v171
  %v175 = vld [vmem:[%s16] sm:$0xff]
  %v176 = vld [vmem:[%s16 + $0x8] sm:$0xff]
  %v177 = vld [vmem:[%s16 + $0x10] sm:$0xff]
  %v178 = vld [vmem:[%s16 + $0x18] sm:$0xff]
  %v179 = vld [vmem:[%s17] sm:$0x1]
  %v181 = vlaneseq
  %v182 = vshrl.u32 %v181, 7
  %v183 = vsub.s32 0, %v182
  %v184 = vrot.slane %v179, %v183
  %vm186 = vcmask 261120
  %v188 = vsel %vm186, %v173, 0
  %v191 = vsel %vm186, %v174, 0
  %193 = vmatprep.subr.mxu0 0.0
  %194 = vmatpush1.msra.mxu0 %v175
  %195 = vmatprep.subr.mxu0 0.0
  %196 = vmatpush1.msra.mxu0 %v176
  %197 = vmatprep.subr.mxu0 0.0
  %198 = vmatpush1.msra.mxu0 %v177
  %199 = vmatprep.subr.mxu0 0.0
  %200 = vmatpush1.msra.mxu0 %v178
  %201 = vmatprep.subr.mxu0 0.0
  %202 = vmatpush1.msra.mxu0 0.0
  %203 = vmatprep.subr.mxu0 0.0
  %204 = vmatpush1.msra.mxu0 0.0
  %205 = vmatprep.subr.mxu0 0.0
  %206 = vmatpush1.msra.mxu0 0.0
  %207 = vmatprep.subr.mxu0 0.0
  %208 = vmatpush1.msra.mxu0 0.0
  %209 = vmatprep.subr.mxu0 0.0
  %210 = vmatpush1.msra.mxu0 0.0
  %211 = vmatprep.subr.mxu0 0.0
  %212 = vmatpush1.msra.mxu0 0.0
  %213 = vmatprep.subr.mxu0 0.0
  %214 = vmatpush1.msra.mxu0 0.0
  %215 = vmatprep.subr.mxu0 0.0
  %216 = vmatpush1.msra.mxu0 0.0
  %217 = vmatprep.subr.mxu0 0.0
  %218 = vmatpush1.msra.mxu0 0.0
  %219 = vmatprep.subr.mxu0 0.0
  %220 = vmatpush1.msra.mxu0 0.0
  %221 = vmatprep.subr.mxu0 0.0
  %222 = vmatpush1.msra.mxu0 0.0
  %223 = vmatprep.subr.mxu0 0.0
  %224 = vmatpush1.msra.mxu0 0.0
  %225 = vmatprep.subr.mxu0 0.0
  %226 = vmatpush1.msra.mxu0 0.0
  %227 = vmatprep.subr.mxu0 0.0
  %228 = vmatpush1.msra.mxu0 0.0
  %229 = vmatprep.subr.mxu0 0.0
  %230 = vmatpush1.msra.mxu0 0.0
  %231 = vmatprep.subr.mxu0 0.0
  %232 = vmatpush1.msra.mxu0 0.0
  %233 = vmatprep.subr.mxu0 0.0
  %234 = vmatpush1.msra.mxu0 0.0
  %235 = vmatprep.subr.mxu0 0.0
  %236 = vmatpush1.msra.mxu0 0.0
  %237 = vmatprep.subr.mxu0 0.0
  %238 = vmatpush1.msra.mxu0 0.0
  %239 = vmatprep.subr.mxu0 0.0
  %240 = vmatpush1.msra.mxu0 0.0
  %241 = vmatprep.subr.mxu0 0.0
  %242 = vmatpush1.msra.mxu0 0.0
  %243 = vmatprep.subr.mxu0 0.0
  %244 = vmatpush1.msra.mxu0 0.0
  %245 = vmatprep.subr.mxu0 0.0
  %246 = vmatpush1.msra.mxu0 0.0
  %247 = vmatprep.subr.mxu0 0.0
  %248 = vmatpush1.msra.mxu0 0.0
  %249 = vmatprep.subr.mxu0 0.0
  %250 = vmatpush1.msra.mxu0 0.0
  %251 = vmatprep.subr.mxu0 0.0
  %252 = vmatpush1.msra.mxu0 0.0
  %253 = vmatprep.subr.mxu0 0.0
  %254 = vmatpush1.msra.mxu0 0.0
  %255 = vmatprep.subr.mxu0 0.0
  %256 = vmatpush1.msra.mxu0 0.0
  %257 = vmatprep.mubr.f32.mxu0 0.0
  %258 = vmatmul.mubr.f32.gmra.mrb[0].mxu0 %v188
  %v259 = vpop.f32.mrb[0].mxu0
  %v260 = vadd.f32 %v184, %v259
  %v261 = vpop.f32.mrb[0].mxu0
  %262 = vmatprep.mubr.f32.mxu0 0.0
  %263 = vmatmul.mubr.f32.gmra.mrb[0].mxu0 %v191
  %v264 = vpop.f32.mrb[0].mxu0
  %v265 = vadd.f32 %v184, %v264
  %v266 = vpop.f32.mrb[0].mxu0
  %267 = vdwg.mxu0
  %s268 = scalar_lea.vmem %s16, 32
  %v269 = vld [vmem:[%s268] sm:$0xff]
  %v270 = vld [vmem:[%s268 + $0x8] sm:$0xff]
  %v271 = vld [vmem:[%s268 + $0x10] sm:$0xff]
  %v272 = vld [vmem:[%s268 + $0x18] sm:$0xff]
  %s273 = scalar_lea.vmem %s17, 1
  %v274 = vld [vmem:[%s273] sm:$0x1]
  %v276 = vlaneseq
  %v277 = vshrl.u32 %v276, 7
  %v278 = vsub.s32 0, %v277
  %v279 = vrot.slane %v274, %v278
  %281 = vmatprep.subr.mxu0 0.0
  %282 = vmatpush1.msra.mxu0 %v269
  %283 = vmatprep.subr.mxu0 0.0
  %284 = vmatpush1.msra.mxu0 %v270
  %285 = vmatprep.subr.mxu0 0.0
  %286 = vmatpush1.msra.mxu0 %v271
  %287 = vmatprep.subr.mxu0 0.0
  %288 = vmatpush1.msra.mxu0 %v272
  %289 = vmatprep.subr.mxu0 0.0
  %290 = vmatpush1.msra.mxu0 0.0
  %291 = vmatprep.subr.mxu0 0.0
  %292 = vmatpush1.msra.mxu0 0.0
  %293 = vmatprep.subr.mxu0 0.0
  %294 = vmatpush1.msra.mxu0 0.0
  %295 = vmatprep.subr.mxu0 0.0
  %296 = vmatpush1.msra.mxu0 0.0
  %297 = vmatprep.subr.mxu0 0.0
  %298 = vmatpush1.msra.mxu0 0.0
  %299 = vmatprep.subr.mxu0 0.0
  %300 = vmatpush1.msra.mxu0 0.0
  %301 = vmatprep.subr.mxu0 0.0
  %302 = vmatpush1.msra.mxu0 0.0
  %303 = vmatprep.subr.mxu0 0.0
  %304 = vmatpush1.msra.mxu0 0.0
  %305 = vmatprep.subr.mxu0 0.0
  %306 = vmatpush1.msra.mxu0 0.0
  %307 = vmatprep.subr.mxu0 0.0
  %308 = vmatpush1.msra.mxu0 0.0
  %309 = vmatprep.subr.mxu0 0.0
  %310 = vmatpush1.msra.mxu0 0.0
  %311 = vmatprep.subr.mxu0 0.0
  %312 = vmatpush1.msra.mxu0 0.0
  %313 = vmatprep.subr.mxu0 0.0
  %314 = vmatpush1.msra.mxu0 0.0
  %315 = vmatprep.subr.mxu0 0.0
  %316 = vmatpush1.msra.mxu0 0.0
  %317 = vmatprep.subr.mxu0 0.0
  %318 = vmatpush1.msra.mxu0 0.0
  %319 = vmatprep.subr.mxu0 0.0
  %320 = vmatpush1.msra.mxu0 0.0
  %321 = vmatprep.subr.mxu0 0.0
  %322 = vmatpush1.msra.mxu0 0.0
  %323 = vmatprep.subr.mxu0 0.0
  %324 = vmatpush1.msra.mxu0 0.0
  %325 = vmatprep.subr.mxu0 0.0
  %326 = vmatpush1.msra.mxu0 0.0
  %327 = vmatprep.subr.mxu0 0.0
  %328 = vmatpush1.msra.mxu0 0.0
  %329 = vmatprep.subr.mxu0 0.0
  %330 = vmatpush1.msra.mxu0 0.0
  %331 = vmatprep.subr.mxu0 0.0
  %332 = vmatpush1.msra.mxu0 0.0
  %333 = vmatprep.subr.mxu0 0.0
  %334 = vmatpush1.msra.mxu0 0.0
  %335 = vmatprep.subr.mxu0 0.0
  %336 = vmatpush1.msra.mxu0 0.0
  %337 = vmatprep.subr.mxu0 0.0
  %338 = vmatpush1.msra.mxu0 0.0
  %339 = vmatprep.subr.mxu0 0.0
  %340 = vmatpush1.msra.mxu0 0.0
  %341 = vmatprep.subr.mxu0 0.0
  %342 = vmatpush1.msra.mxu0 0.0
  %343 = vmatprep.subr.mxu0 0.0
  %344 = vmatpush1.msra.mxu0 0.0
  %345 = vmatprep.mubr.f32.mxu0 0.0
  %346 = vmatmul.mubr.f32.gmra.mrb[0].mxu0 %v188
  %v347 = vpop.f32.mrb[0].mxu0
  %v348 = vadd.f32 %v279, %v347
  %v349 = vpop.f32.mrb[0].mxu0
  %350 = vmatprep.mubr.f32.mxu0 0.0
  %351 = vmatmul.mubr.f32.gmra.mrb[0].mxu0 %v191
  %v352 = vpop.f32.mrb[0].mxu0
  %v353 = vadd.f32 %v279, %v352
  %v354 = vpop.f32.mrb[0].mxu0
  %355 = vdwg.mxu0
  %s356 = scalar_lea.vmem %s16, 64
  %v357 = vld [vmem:[%s356] sm:$0xff]
  %v358 = vld [vmem:[%s356 + $0x8] sm:$0xff]
  %v359 = vld [vmem:[%s356 + $0x10] sm:$0xff]
  %v360 = vld [vmem:[%s356 + $0x18] sm:$0xff]
  %s361 = scalar_lea.vmem %s17, 2
  %v362 = vld [vmem:[%s361] sm:$0x1]
  %v364 = vlaneseq
  %v365 = vshrl.u32 %v364, 7
  %v366 = vsub.s32 0, %v365
  %v367 = vrot.slane %v362, %v366
  %v370 = vsel %vm186, %v162, 0
  %v373 = vsel %vm186, %v167, 0
  %375 = vmatprep.subr.mxu0 0.0
  %376 = vmatpush1.msra.mxu0 %v357
  %377 = vmatprep.subr.mxu0 0.0
  %378 = vmatpush1.msra.mxu0 %v358
  %379 = vmatprep.subr.mxu0 0.0
  %380 = vmatpush1.msra.mxu0 %v359
  %381 = vmatprep.subr.mxu0 0.0
  %382 = vmatpush1.msra.mxu0 %v360
  %383 = vmatprep.subr.mxu0 0.0
  %384 = vmatpush1.msra.mxu0 0.0
  %385 = vmatprep.subr.mxu0 0.0
  %386 = vmatpush1.msra.mxu0 0.0
  %387 = vmatprep.subr.mxu0 0.0
  %388 = vmatpush1.msra.mxu0 0.0
  %389 = vmatprep.subr.mxu0 0.0
  %390 = vmatpush1.msra.mxu0 0.0
  %391 = vmatprep.subr.mxu0 0.0
  %392 = vmatpush1.msra.mxu0 0.0
  %393 = vmatprep.subr.mxu0 0.0
  %394 = vmatpush1.msra.mxu0 0.0
  %395 = vmatprep.subr.mxu0 0.0
  %396 = vmatpush1.msra.mxu0 0.0
  %397 = vmatprep.subr.mxu0 0.0
  %398 = vmatpush1.msra.mxu0 0.0
  %399 = vmatprep.subr.mxu0 0.0
  %400 = vmatpush1.msra.mxu0 0.0
  %401 = vmatprep.subr.mxu0 0.0
  %402 = vmatpush1.msra.mxu0 0.0
  %403 = vmatprep.subr.mxu0 0.0
  %404 = vmatpush1.msra.mxu0 0.0
  %405 = vmatprep.subr.mxu0 0.0
  %406 = vmatpush1.msra.mxu0 0.0
  %407 = vmatprep.subr.mxu0 0.0
  %408 = vmatpush1.msra.mxu0 0.0
  %409 = vmatprep.subr.mxu0 0.0
  %410 = vmatpush1.msra.mxu0 0.0
  %411 = vmatprep.subr.mxu0 0.0
  %412 = vmatpush1.msra.mxu0 0.0
  %413 = vmatprep.subr.mxu0 0.0
  %414 = vmatpush1.msra.mxu0 0.0
  %415 = vmatprep.subr.mxu0 0.0
  %416 = vmatpush1.msra.mxu0 0.0
  %417 = vmatprep.subr.mxu0 0.0
  %418 = vmatpush1.msra.mxu0 0.0
  %419 = vmatprep.subr.mxu0 0.0
  %420 = vmatpush1.msra.mxu0 0.0
  %421 = vmatprep.subr.mxu0 0.0
  %422 = vmatpush1.msra.mxu0 0.0
  %423 = vmatprep.subr.mxu0 0.0
  %424 = vmatpush1.msra.mxu0 0.0
  %425 = vmatprep.subr.mxu0 0.0
  %426 = vmatpush1.msra.mxu0 0.0
  %427 = vmatprep.subr.mxu0 0.0
  %428 = vmatpush1.msra.mxu0 0.0
  %429 = vmatprep.subr.mxu0 0.0
  %430 = vmatpush1.msra.mxu0 0.0
  %431 = vmatprep.subr.mxu0 0.0
  %432 = vmatpush1.msra.mxu0 0.0
  %433 = vmatprep.subr.mxu0 0.0
  %434 = vmatpush1.msra.mxu0 0.0
  %435 = vmatprep.subr.mxu0 0.0
  %436 = vmatpush1.msra.mxu0 0.0
  %437 = vmatprep.subr.mxu0 0.0
  %438 = vmatpush1.msra.mxu0 0.0
  %439 = vmatprep.mubr.f32.mxu0 0.0
  %440 = vmatmul.mubr.f32.gmra.mrb[0].mxu0 %v370
  %v441 = vpop.f32.mrb[0].mxu0
  %v442 = vadd.f32 %v367, %v441
  %v443 = vpop.f32.mrb[0].mxu0
  %444 = vmatprep.mubr.f32.mxu0 0.0
  %445 = vmatmul.mubr.f32.gmra.mrb[0].mxu0 %v373
  %v446 = vpop.f32.mrb[0].mxu0
  %v447 = vadd.f32 %v367, %v446
  %v448 = vpop.f32.mrb[0].mxu0
  %449 = vdwg.mxu0
  %v451 = vsel %vm186, %v260, 0
  %v454 = vsel %vm186, %v265, 0
  %v457 = vsel %vm186, %v348, 0
  %v460 = vsel %vm186, %v353, 0
  %462 = vmatprep.subr.mxu0 0.0
  %463 = vmatpush1.xpose.msra.mxu0 %v457
  %464 = vmatprep.subr.mxu0 0.0
  %465 = vmatpush1.xpose.msra.mxu0 %v460
  %466 = vmatprep.subr.mxu0 0.0
  %467 = vmatpush1.xpose.msra.mxu0 0.0
  %468 = vmatprep.subr.mxu0 0.0
  %469 = vmatpush1.xpose.msra.mxu0 0.0
  %470 = vmatprep.subr.mxu0 0.0
  %471 = vmatpush1.xpose.msra.mxu0 0.0
  %472 = vmatprep.subr.mxu0 0.0
  %473 = vmatpush1.xpose.msra.mxu0 0.0
  %474 = vmatprep.subr.mxu0 0.0
  %475 = vmatpush1.xpose.msra.mxu0 0.0
  %476 = vmatprep.subr.mxu0 0.0
  %477 = vmatpush1.xpose.msra.mxu0 0.0
  %478 = vmatprep.subr.mxu0 0.0
  %479 = vmatpush1.xpose.msra.mxu0 0.0
  %480 = vmatprep.subr.mxu0 0.0
  %481 = vmatpush1.xpose.msra.mxu0 0.0
  %482 = vmatprep.subr.mxu0 0.0
  %483 = vmatpush1.xpose.msra.mxu0 0.0
  %484 = vmatprep.subr.mxu0 0.0
  %485 = vmatpush1.xpose.msra.mxu0 0.0
  %486 = vmatprep.subr.mxu0 0.0
  %487 = vmatpush1.xpose.msra.mxu0 0.0
  %488 = vmatprep.subr.mxu0 0.0
  %489 = vmatpush1.xpose.msra.mxu0 0.0
  %490 = vmatprep.subr.mxu0 0.0
  %491 = vmatpush1.xpose.msra.mxu0 0.0
  %492 = vmatprep.subr.mxu0 0.0
  %493 = vmatpush1.xpose.msra.mxu0 0.0
  %494 = vmatprep.subr.mxu0 0.0
  %495 = vmatpush1.xpose.msra.mxu0 0.0
  %496 = vmatprep.subr.mxu0 0.0
  %497 = vmatpush1.xpose.msra.mxu0 0.0
  %498 = vmatprep.subr.mxu0 0.0
  %499 = vmatpush1.xpose.msra.mxu0 0.0
  %500 = vmatprep.subr.mxu0 0.0
  %501 = vmatpush1.xpose.msra.mxu0 0.0
  %502 = vmatprep.subr.mxu0 0.0
  %503 = vmatpush1.xpose.msra.mxu0 0.0
  %504 = vmatprep.subr.mxu0 0.0
  %505 = vmatpush1.xpose.msra.mxu0 0.0
  %506 = vmatprep.subr.mxu0 0.0
  %507 = vmatpush1.xpose.msra.mxu0 0.0
  %508 = vmatprep.subr.mxu0 0.0
  %509 = vmatpush1.xpose.msra.mxu0 0.0
  %510 = vmatprep.subr.mxu0 0.0
  %511 = vmatpush1.xpose.msra.mxu0 0.0
  %512 = vmatprep.subr.mxu0 0.0
  %513 = vmatpush1.xpose.msra.mxu0 0.0
  %514 = vmatprep.subr.mxu0 0.0
  %515 = vmatpush1.xpose.msra.mxu0 0.0
  %516 = vmatprep.subr.mxu0 0.0
  %517 = vmatpush1.xpose.msra.mxu0 0.0
  %518 = vmatprep.subr.mxu0 0.0
  %519 = vmatpush1.xpose.msra.mxu0 0.0
  %520 = vmatprep.subr.mxu0 0.0
  %521 = vmatpush1.xpose.msra.mxu0 0.0
  %522 = vmatprep.subr.mxu0 0.0
  %523 = vmatpush1.xpose.msra.mxu0 0.0
  %524 = vmatprep.subr.mxu0 0.0
  %525 = vmatpush1.xpose.msra.mxu0 0.0
  %526 = vmatprep.mubr.f32.mxu0 0.0
  %527 = vmatmul.mubr.f32.gmra.mrb[0].mxu0 %v451
  %v528 = vpop.f32.mrb[0].mxu0
  %v529 = vadd.f32 0.0, %v528
  %v530 = vpop.f32.mrb[0].mxu0
  %531 = vmatprep.mubr.f32.mxu0 0.0
  %532 = vmatmul.mubr.f32.gmra.mrb[0].mxu0 %v454
  %v533 = vpop.f32.mrb[0].mxu0
  %v534 = vadd.f32 0.0, %v533
  %v535 = vpop.f32.mrb[0].mxu0
  %536 = vdwg.mxu0
  %v537 = vmul.f32 %v529, 0.17677669
  %v538 = vmul.f32 %v534, 0.17677669
  %v540 = vlaneseq
  %v541 = vshrl.u32 %v540, 7
  %v542 = vsub.s32 0, %v541
  %v543 = vrot.slane %v172, %v542
  %v545 = vadd.f32 %v537, %v543
  %v546 = vadd.f32 %v538, %v543
  %v547 = vsel %vm88, %v545, -inf
  %548 = vmax.xlane.f32.xlu0 %v547
  %v549 = vpop.xlane.xlu0 %548
  %v550 = vsel %vm88, %v546, -inf
  %551 = vmax.xlane.f32.xlu0 %v550
  %v552 = vpop.xlane.xlu0 %551
  %v553 = vsub.f32 %v545, %v549
  %v554 = vsub.f32 %v546, %v552
  %v555 = vmul.f32 %v553, 1.442695
  %v556 = vpow.pop %v555
  %v557 = vmul.f32 %v554, 1.442695
  %v558 = vpow.pop %v557
  %v559 = vsel %vm88, %v556, 0.0
  %560 = vadd.xlane.f32.xlu0 %v559
  %v561 = vpop.xlane.xlu0 %560
  %v562 = vsel %vm88, %v558, 0.0
  %563 = vadd.xlane.f32.xlu0 %v562
  %v564 = vpop.xlane.xlu0 %563
  %v565 = vrcp.pop %v561
  %v566 = vmul.f32 %v556, %v565
  %v567 = vrcp.pop %v564
  %v568 = vmul.f32 %v558, %v567
  %v570 = vsel %vm88, %v566, 0
  %v573 = vsel %vm88, %v568, 0
  %575 = vmatprep.subr.mxu0 0.0
  %576 = vmatpush1.msra.mxu0 %v442
  %577 = vmatprep.subr.mxu0 0.0
  %578 = vmatpush1.msra.mxu0 %v447
  %579 = vmatprep.subr.mxu0 0.0
  %580 = vmatpush1.msra.mxu0 0.0
  %581 = vmatprep.subr.mxu0 0.0
  %582 = vmatpush1.msra.mxu0 0.0
  %583 = vmatprep.subr.mxu0 0.0
  %584 = vmatpush1.msra.mxu0 0.0
  %585 = vmatprep.subr.mxu0 0.0
  %586 = vmatpush1.msra.mxu0 0.0
  %587 = vmatprep.subr.mxu0 0.0
  %588 = vmatpush1.msra.mxu0 0.0
  %589 = vmatprep.subr.mxu0 0.0
  %590 = vmatpush1.msra.mxu0 0.0
  %591 = vmatprep.subr.mxu0 0.0
  %592 = vmatpush1.msra.mxu0 0.0
  %593 = vmatprep.subr.mxu0 0.0
  %594 = vmatpush1.msra.mxu0 0.0
  %595 = vmatprep.subr.mxu0 0.0
  %596 = vmatpush1.msra.mxu0 0.0
  %597 = vmatprep.subr.mxu0 0.0
  %598 = vmatpush1.msra.mxu0 0.0
  %599 = vmatprep.subr.mxu0 0.0
  %600 = vmatpush1.msra.mxu0 0.0
  %601 = vmatprep.subr.mxu0 0.0
  %602 = vmatpush1.msra.mxu0 0.0
  %603 = vmatprep.subr.mxu0 0.0
  %604 = vmatpush1.msra.mxu0 0.0
  %605 = vmatprep.subr.mxu0 0.0
  %606 = vmatpush1.msra.mxu0 0.0
  %607 = vmatprep.subr.mxu0 0.0
  %608 = vmatpush1.msra.mxu0 0.0
  %609 = vmatprep.subr.mxu0 0.0
  %610 = vmatpush1.msra.mxu0 0.0
  %611 = vmatprep.subr.mxu0 0.0
  %612 = vmatpush1.msra.mxu0 0.0
  %613 = vmatprep.subr.mxu0 0.0
  %614 = vmatpush1.msra.mxu0 0.0
  %615 = vmatprep.subr.mxu0 0.0
  %616 = vmatpush1.msra.mxu0 0.0
  %617 = vmatprep.subr.mxu0 0.0
  %618 = vmatpush1.msra.mxu0 0.0
  %619 = vmatprep.subr.mxu0 0.0
  %620 = vmatpush1.msra.mxu0 0.0
  %621 = vmatprep.subr.mxu0 0.0
  %622 = vmatpush1.msra.mxu0 0.0
  %623 = vmatprep.subr.mxu0 0.0
  %624 = vmatpush1.msra.mxu0 0.0
  %625 = vmatprep.subr.mxu0 0.0
  %626 = vmatpush1.msra.mxu0 0.0
  %627 = vmatprep.subr.mxu0 0.0
  %628 = vmatpush1.msra.mxu0 0.0
  %629 = vmatprep.subr.mxu0 0.0
  %630 = vmatpush1.msra.mxu0 0.0
  %631 = vmatprep.subr.mxu0 0.0
  %632 = vmatpush1.msra.mxu0 0.0
  %633 = vmatprep.subr.mxu0 0.0
  %634 = vmatpush1.msra.mxu0 0.0
  %635 = vmatprep.subr.mxu0 0.0
  %636 = vmatpush1.msra.mxu0 0.0
  %637 = vmatprep.subr.mxu0 0.0
  %638 = vmatpush1.msra.mxu0 0.0
  %639 = vmatprep.mubr.f32.mxu0 0.0
  %640 = vmatmul.mubr.f32.gmra.mrb[0].mxu0 %v570
  %v641 = vpop.f32.mrb[0].mxu0
  %v642 = vadd.f32 0.0, %v641
  %v643 = vpop.f32.mrb[0].mxu0
  %644 = vmatprep.mubr.f32.mxu0 0.0
  %645 = vmatmul.mubr.f32.gmra.mrb[0].mxu0 %v573
  %v646 = vpop.f32.mrb[0].mxu0
  %v647 = vadd.f32 0.0, %v646
  %v648 = vpop.f32.mrb[0].mxu0
  %649 = vdwg.mxu0
  %s650 = scalar_lea.vmem %s16, 96
  %v651 = vld [vmem:[%s650] sm:$0xff]
  %v652 = vld [vmem:[%s650 + $0x8] sm:$0xff]
  %v653 = vld [vmem:[%s650 + $0x10] sm:$0xff]
  %v654 = vld [vmem:[%s650 + $0x18] sm:$0xff]
  %s655 = scalar_lea.vmem %s17, 3
  %v656 = vld [vmem:[%s655] sm:$0x1]
  %v658 = vlaneseq
  %v659 = vshrl.u32 %v658, 7
  %v660 = vsub.s32 0, %v659
  %v661 = vrot.slane %v656, %v660
  %v664 = vsel %vm186, %v642, 0
  %v667 = vsel %vm186, %v647, 0
  %669 = vmatprep.subr.mxu0 0.0
  %670 = vmatpush1.msra.mxu0 %v651
  %671 = vmatprep.subr.mxu0 0.0
  %672 = vmatpush1.msra.mxu0 %v652
  %673 = vmatprep.subr.mxu0 0.0
  %674 = vmatpush1.msra.mxu0 %v653
  %675 = vmatprep.subr.mxu0 0.0
  %676 = vmatpush1.msra.mxu0 %v654
  %677 = vmatprep.subr.mxu0 0.0
  %678 = vmatpush1.msra.mxu0 0.0
  %679 = vmatprep.subr.mxu0 0.0
  %680 = vmatpush1.msra.mxu0 0.0
  %681 = vmatprep.subr.mxu0 0.0
  %682 = vmatpush1.msra.mxu0 0.0
  %683 = vmatprep.subr.mxu0 0.0
  %684 = vmatpush1.msra.mxu0 0.0
  %685 = vmatprep.subr.mxu0 0.0
  %686 = vmatpush1.msra.mxu0 0.0
  %687 = vmatprep.subr.mxu0 0.0
  %688 = vmatpush1.msra.mxu0 0.0
  %689 = vmatprep.subr.mxu0 0.0
  %690 = vmatpush1.msra.mxu0 0.0
  %691 = vmatprep.subr.mxu0 0.0
  %692 = vmatpush1.msra.mxu0 0.0
  %693 = vmatprep.subr.mxu0 0.0
  %694 = vmatpush1.msra.mxu0 0.0
  %695 = vmatprep.subr.mxu0 0.0
  %696 = vmatpush1.msra.mxu0 0.0
  %697 = vmatprep.subr.mxu0 0.0
  %698 = vmatpush1.msra.mxu0 0.0
  %699 = vmatprep.subr.mxu0 0.0
  %700 = vmatpush1.msra.mxu0 0.0
  %701 = vmatprep.subr.mxu0 0.0
  %702 = vmatpush1.msra.mxu0 0.0
  %703 = vmatprep.subr.mxu0 0.0
  %704 = vmatpush1.msra.mxu0 0.0
  %705 = vmatprep.subr.mxu0 0.0
  %706 = vmatpush1.msra.mxu0 0.0
  %707 = vmatprep.subr.mxu0 0.0
  %708 = vmatpush1.msra.mxu0 0.0
  %709 = vmatprep.subr.mxu0 0.0
  %710 = vmatpush1.msra.mxu0 0.0
  %711 = vmatprep.subr.mxu0 0.0
  %712 = vmatpush1.msra.mxu0 0.0
  %713 = vmatprep.subr.mxu0 0.0
  %714 = vmatpush1.msra.mxu0 0.0
  %715 = vmatprep.subr.mxu0 0.0
  %716 = vmatpush1.msra.mxu0 0.0
  %717 = vmatprep.subr.mxu0 0.0
  %718 = vmatpush1.msra.mxu0 0.0
  %719 = vmatprep.subr.mxu0 0.0
  %720 = vmatpush1.msra.mxu0 0.0
  %721 = vmatprep.subr.mxu0 0.0
  %722 = vmatpush1.msra.mxu0 0.0
  %723 = vmatprep.subr.mxu0 0.0
  %724 = vmatpush1.msra.mxu0 0.0
  %725 = vmatprep.subr.mxu0 0.0
  %726 = vmatpush1.msra.mxu0 0.0
  %727 = vmatprep.subr.mxu0 0.0
  %728 = vmatpush1.msra.mxu0 0.0
  %729 = vmatprep.subr.mxu0 0.0
  %730 = vmatpush1.msra.mxu0 0.0
  %731 = vmatprep.subr.mxu0 0.0
  %732 = vmatpush1.msra.mxu0 0.0
  %733 = vmatprep.mubr.f32.mxu0 0.0
  %734 = vmatmul.mubr.f32.gmra.mrb[0].mxu0 %v664
  %v735 = vpop.f32.mrb[0].mxu0
  %v736 = vadd.f32 %v661, %v735
  %v737 = vpop.f32.mrb[0].mxu0
  %738 = vmatprep.mubr.f32.mxu0 0.0
  %739 = vmatmul.mubr.f32.gmra.mrb[0].mxu0 %v667
  %v740 = vpop.f32.mrb[0].mxu0
  %v741 = vadd.f32 %v661, %v740
  %v742 = vpop.f32.mrb[0].mxu0
  %743 = vdwg.mxu0
  %v744 = vadd.f32 %v162, %v736
  %v745 = vadd.f32 %v167, %v741
  %v746 = vld [vmem:[%s18] sm:$0x1]
  %s747 = scalar_lea.vmem %s18, 1
  %v748 = vld [vmem:[%s747] sm:$0x1]
  %v749 = vsel %vm186, %v744, 0.0
  %750 = vadd.xlane.f32.xlu0 %v749
  %v751 = vpop.xlane.xlu0 %750
  %v752 = vsel %vm186, %v745, 0.0
  %753 = vadd.xlane.f32.xlu0 %v752
  %v754 = vpop.xlane.xlu0 %753
  %v755 = vrcp.pop 32.0
  %v756 = vmul.f32 %v751, %v755
  %v757 = vmul.f32 %v754, %v755
  %v758 = vsub.f32 %v744, %v756
  %v759 = vsub.f32 %v745, %v757
  %v760 = vmul.f32 %v758, %v758
  %v761 = vmul.f32 %v759, %v759
  %v762 = vsel %vm186, %v760, 0.0
  %763 = vadd.xlane.f32.xlu0 %v762
  %v764 = vpop.xlane.xlu0 %763
  %v765 = vsel %vm186, %v761, 0.0
  %766 = vadd.xlane.f32.xlu0 %v765
  %v767 = vpop.xlane.xlu0 %766
  %v768 = vmul.f32 %v764, %v755
  %v769 = vmul.f32 %v767, %v755
  %v770 = vadd.f32 %v768, 1e-05
  %v771 = vadd.f32 %v769, 1e-05
  %v772 = vrsqrt.pop %v770
  %v773 = vrsqrt.pop %v771
  %v774 = vmul.f32 %v758, %v772
  %v775 = vmul.f32 %v759, %v773
  %v777 = vlaneseq
  %v778 = vshrl.u32 %v777, 7
  %v779 = vsub.s32 0, %v778
  %v780 = vrot.slane %v746, %v779
  %v782 = vmul.f32 %v774, %v780
  %v783 = vmul.f32 %v775, %v780
  %v785 = vlaneseq
  %v786 = vshrl.u32 %v785, 7
  %v787 = vsub.s32 0, %v786
  %v788 = vrot.slane %v748, %v787
  %v790 = vadd.f32 %v782, %v788
  %v791 = vadd.f32 %v783, %v788
  %v792 = vld [vmem:[%s19] sm:$0xff]
  %v793 = vld [vmem:[%s19 + $0x8] sm:$0xff]
  %v794 = vld [vmem:[%s19 + $0x10] sm:$0xff]
  %v795 = vld [vmem:[%s19 + $0x18] sm:$0xff]
  %v796 = vld [vmem:[%s20] sm:$0x1]
  %v798 = vlaneseq
  %v799 = vshrl.u32 %v798, 7
  %v800 = vsub.s32 0, %v799
  %v801 = vrot.slane %v796, %v800
  %v804 = vsel %vm186, %v790, 0
  %v807 = vsel %vm186, %v791, 0
  %809 = vmatprep.subr.mxu0 0.0
  %810 = vmatpush1.msra.mxu0 %v792
  %811 = vmatprep.subr.mxu0 0.0
  %812 = vmatpush1.msra.mxu0 %v793
  %813 = vmatprep.subr.mxu0 0.0
  %814 = vmatpush1.msra.mxu0 %v794
  %815 = vmatprep.subr.mxu0 0.0
  %816 = vmatpush1.msra.mxu0 %v795
  %817 = vmatprep.subr.mxu0 0.0
  %818 = vmatpush1.msra.mxu0 0.0
  %819 = vmatprep.subr.mxu0 0.0
  %820 = vmatpush1.msra.mxu0 0.0
  %821 = vmatprep.subr.mxu0 0.0
  %822 = vmatpush1.msra.mxu0 0.0
  %823 = vmatprep.subr.mxu0 0.0
  %824 = vmatpush1.msra.mxu0 0.0
  %825 = vmatprep.subr.mxu0 0.0
  %826 = vmatpush1.msra.mxu0 0.0
  %827 = vmatprep.subr.mxu0 0.0
  %828 = vmatpush1.msra.mxu0 0.0
  %829 = vmatprep.subr.mxu0 0.0
  %830 = vmatpush1.msra.mxu0 0.0
  %831 = vmatprep.subr.mxu0 0.0
  %832 = vmatpush1.msra.mxu0 0.0
  %833 = vmatprep.subr.mxu0 0.0
  %834 = vmatpush1.msra.mxu0 0.0
  %835 = vmatprep.subr.mxu0 0.0
  %836 = vmatpush1.msra.mxu0 0.0
  %837 = vmatprep.subr.mxu0 0.0
  %838 = vmatpush1.msra.mxu0 0.0
  %839 = vmatprep.subr.mxu0 0.0
  %840 = vmatpush1.msra.mxu0 0.0
  %841 = vmatprep.subr.mxu0 0.0
  %842 = vmatpush1.msra.mxu0 0.0
  %843 = vmatprep.subr.mxu0 0.0
  %844 = vmatpush1.msra.mxu0 0.0
  %845 = vmatprep.subr.mxu0 0.0
  %846 = vmatpush1.msra.mxu0 0.0
  %847 = vmatprep.subr.mxu0 0.0
  %848 = vmatpush1.msra.mxu0 0.0
  %849 = vmatprep.subr.mxu0 0.0
  %850 = vmatpush1.msra.mxu0 0.0
  %851 = vmatprep.subr.mxu0 0.0
  %852 = vmatpush1.msra.mxu0 0.0
  %853 = vmatprep.subr.mxu0 0.0
  %854 = vmatpush1.msra.mxu0 0.0
  %855 = vmatprep.subr.mxu0 0.0
  %856 = vmatpush1.msra.mxu0 0.0
  %857 = vmatprep.subr.mxu0 0.0
  %858 = vmatpush1.msra.mxu0 0.0
  %859 = vmatprep.subr.mxu0 0.0
  %860 = vmatpush1.msra.mxu0 0.0
  %861 = vmatprep.subr.mxu0 0.0
  %862 = vmatpush1.msra.mxu0 0.0
  %863 = vmatprep.subr.mxu0 0.0
  %864 = vmatpush1.msra.mxu0 0.0
  %865 = vmatprep.subr.mxu0 0.0
  %866 = vmatpush1.msra.mxu0 0.0
  %867 = vmatprep.subr.mxu0 0.0
  %868 = vmatpush1.msra.mxu0 0.0
  %869 = vmatprep.subr.mxu0 0.0
  %870 = vmatpush1.msra.mxu0 0.0
  %871 = vmatprep.subr.mxu0 0.0
  %872 = vmatpush1.msra.mxu0 0.0
  %873 = vmatprep.mubr.f32.mxu0 0.0
  %874 = vmatmul.mubr.f32.gmra.mrb[0].mxu0 %v804
  %v875 = vpop.f32.mrb[0].mxu0
  %v876 = vadd.f32 %v801, %v875
  %v877 = vpop.f32.mrb[0].mxu0
  %878 = vmatprep.mubr.f32.mxu0 0.0
  %879 = vmatmul.mubr.f32.gmra.mrb[0].mxu0 %v807
  %v880 = vpop.f32.mrb[0].mxu0
  %v881 = vadd.f32 %v801, %v880
  %v882 = vpop.f32.mrb[0].mxu0
  %883 = vdwg.mxu0
  %v884 = vmax.f32 %v876, 0.0
  %v885 = vmax.f32 %v881, 0.0
  %v886 = vld [vmem:[%s21] sm:$0xff]
  %v887 = vld [vmem:[%s21 + $0x8] sm:$0xff]
  %v888 = vld [vmem:[%s21 + $0x10] sm:$0xff]
  %v889 = vld [vmem:[%s21 + $0x18] sm:$0xff]
  %v890 = vld [vmem:[%s21 + $0x20] sm:$0xff]
  %v891 = vld [vmem:[%s21 + $0x28] sm:$0xff]
  %v892 = vld [vmem:[%s21 + $0x30] sm:$0xff]
  %v893 = vld [vmem:[%s21 + $0x38] sm:$0xff]
  %v894 = vld [vmem:[%s22] sm:$0x1]
  %v896 = vlaneseq
  %v897 = vshrl.u32 %v896, 7
  %v898 = vsub.s32 0, %v897
  %v899 = vrot.slane %v894, %v898
  %vm901 = vcmask 523264
  %v903 = vsel %vm901, %v884, 0
  %v906 = vsel %vm901, %v885, 0
  %908 = vmatprep.subr.mxu0 0.0
  %909 = vmatpush1.msra.mxu0 %v886
  %910 = vmatprep.subr.mxu0 0.0
  %911 = vmatpush1.msra.mxu0 %v887
  %912 = vmatprep.subr.mxu0 0.0
  %913 = vmatpush1.msra.mxu0 %v888
  %914 = vmatprep.subr.mxu0 0.0
  %915 = vmatpush1.msra.mxu0 %v889
  %916 = vmatprep.subr.mxu0 0.0
  %917 = vmatpush1.msra.mxu0 %v890
  %918 = vmatprep.subr.mxu0 0.0
  %919 = vmatpush1.msra.mxu0 %v891
  %920 = vmatprep.subr.mxu0 0.0
  %921 = vmatpush1.msra.mxu0 %v892
  %922 = vmatprep.subr.mxu0 0.0
  %923 = vmatpush1.msra.mxu0 %v893
  %924 = vmatprep.subr.mxu0 0.0
  %925 = vmatpush1.msra.mxu0 0.0
  %926 = vmatprep.subr.mxu0 0.0
  %927 = vmatpush1.msra.mxu0 0.0
  %928 = vmatprep.subr.mxu0 0.0
  %929 = vmatpush1.msra.mxu0 0.0
  %930 = vmatprep.subr.mxu0 0.0
  %931 = vmatpush1.msra.mxu0 0.0
  %932 = vmatprep.subr.mxu0 0.0
  %933 = vmatpush1.msra.mxu0 0.0
  %934 = vmatprep.subr.mxu0 0.0
  %935 = vmatpush1.msra.mxu0 0.0
  %936 = vmatprep.subr.mxu0 0.0
  %937 = vmatpush1.msra.mxu0 0.0
  %938 = vmatprep.subr.mxu0 0.0
  %939 = vmatpush1.msra.mxu0 0.0
  %940 = vmatprep.subr.mxu0 0.0
  %941 = vmatpush1.msra.mxu0 0.0
  %942 = vmatprep.subr.mxu0 0.0
  %943 = vmatpush1.msra.mxu0 0.0
  %944 = vmatprep.subr.mxu0 0.0
  %945 = vmatpush1.msra.mxu0 0.0
  %946 = vmatprep.subr.mxu0 0.0
  %947 = vmatpush1.msra.mxu0 0.0
  %948 = vmatprep.subr.mxu0 0.0
  %949 = vmatpush1.msra.mxu0 0.0
  %950 = vmatprep.subr.mxu0 0.0
  %951 = vmatpush1.msra.mxu0 0.0
  %952 = vmatprep.subr.mxu0 0.0
  %953 = vmatpush1.msra.mxu0 0.0
  %954 = vmatprep.subr.mxu0 0.0
  %955 = vmatpush1.msra.mxu0 0.0
  %956 = vmatprep.subr.mxu0 0.0
  %957 = vmatpush1.msra.mxu0 0.0
  %958 = vmatprep.subr.mxu0 0.0
  %959 = vmatpush1.msra.mxu0 0.0
  %960 = vmatprep.subr.mxu0 0.0
  %961 = vmatpush1.msra.mxu0 0.0
  %962 = vmatprep.subr.mxu0 0.0
  %963 = vmatpush1.msra.mxu0 0.0
  %964 = vmatprep.subr.mxu0 0.0
  %965 = vmatpush1.msra.mxu0 0.0
  %966 = vmatprep.subr.mxu0 0.0
  %967 = vmatpush1.msra.mxu0 0.0
  %968 = vmatprep.subr.mxu0 0.0
  %969 = vmatpush1.msra.mxu0 0.0
  %970 = vmatprep.subr.mxu0 0.0
  %971 = vmatpush1.msra.mxu0 0.0
  %972 = vmatprep.mubr.f32.mxu0 0.0
  %973 = vmatmul.mubr.f32.gmra.mrb[0].mxu0 %v903
  %v974 = vpop.f32.mrb[0].mxu0
  %v975 = vadd.f32 %v899, %v974
  %v976 = vpop.f32.mrb[0].mxu0
  %977 = vmatprep.mubr.f32.mxu0 0.0
  %978 = vmatmul.mubr.f32.gmra.mrb[0].mxu0 %v906
  %v979 = vpop.f32.mrb[0].mxu0
  %v980 = vpop.f32.mrb[0].mxu0
  %981 = vdwg.mxu0
  %v982 = vadd.f32 %v790, %v975
  %s983 = scalar_lea.vmem %s18, 2
  %v984 = vld [vmem:[%s983] sm:$0x1]
  %s985 = scalar_lea.vmem %s18, 3
  %v986 = vld [vmem:[%s985] sm:$0x1]
  %v987 = vsel %vm186, %v982, 0.0
  %988 = vadd.xlane.f32.xlu0 %v987
  %v989 = vpop.xlane.xlu0 %988
  %v990 = vmul.f32 %v989, %v755
  %v991 = vsub.f32 %v982, %v990
  %v992 = vmul.f32 %v991, %v991
  %v993 = vsel %vm186, %v992, 0.0
  %994 = vadd.xlane.f32.xlu0 %v993
  %v995 = vpop.xlane.xlu0 %994
  %v996 = vmul.f32 %v995, %v755
  %v997 = vadd.f32 %v996, 1e-05
  %v998 = vrsqrt.pop %v997
  %v999 = vmul.f32 %v991, %v998
  %v1001 = vlaneseq
  %v1002 = vshrl.u32 %v1001, 7
  %v1003 = vsub.s32 0, %v1002
  %v1004 = vrot.slane %v984, %v1003
  %v1006 = vmul.f32 %v999, %v1004
  %v1008 = vlaneseq
  %v1009 = vshrl.u32 %v1008, 7
  %v1010 = vsub.s32 0, %v1009
  %v1011 = vrot.slane %v986, %v1010
  %v1013 = vadd.f32 %v1006, %v1011
  %v1014 = vld [vmem:[%s8] sm:$0xff]
  %v1015 = vld [vmem:[%s8 + $0x8] sm:$0xff]
  %v1016 = vld [vmem:[%s8 + $0x10] sm:$0xff]
  %v1017 = vld [vmem:[%s8 + $0x18] sm:$0xff]
  %v1018 = vld [vmem:[%s9] sm:$0x1]
  %v1020 = vsel %vm186, %v1013, 0
  %1022 = vmatprep.subr.mxu0 0.0
  %1023 = vmatpush1.msra.mxu0 %v1014
  %1024 = vmatprep.subr.mxu0 0.0
  %1025 = vmatpush1.msra.mxu0 %v1015
  %1026 = vmatprep.subr.mxu0 0.0
  %1027 = vmatpush1.msra.mxu0 %v1016
  %1028 = vmatprep.subr.mxu0 0.0
  %1029 = vmatpush1.msra.mxu0 %v1017
  %1030 = vmatprep.subr.mxu0 0.0
  %1031 = vmatpush1.msra.mxu0 0.0
  %1032 = vmatprep.subr.mxu0 0.0
  %1033 = vmatpush1.msra.mxu0 0.0
  %1034 = vmatprep.subr.mxu0 0.0
  %1035 = vmatpush1.msra.mxu0 0.0
  %1036 = vmatprep.subr.mxu0 0.0
  %1037 = vmatpush1.msra.mxu0 0.0
  %1038 = vmatprep.subr.mxu0 0.0
  %1039 = vmatpush1.msra.mxu0 0.0
  %1040 = vmatprep.subr.mxu0 0.0
  %1041 = vmatpush1.msra.mxu0 0.0
  %1042 = vmatprep.subr.mxu0 0.0
  %1043 = vmatpush1.msra.mxu0 0.0
  %1044 = vmatprep.subr.mxu0 0.0
  %1045 = vmatpush1.msra.mxu0 0.0
  %1046 = vmatprep.subr.mxu0 0.0
  %1047 = vmatpush1.msra.mxu0 0.0
  %1048 = vmatprep.subr.mxu0 0.0
  %1049 = vmatpush1.msra.mxu0 0.0
  %1050 = vmatprep.subr.mxu0 0.0
  %1051 = vmatpush1.msra.mxu0 0.0
  %1052 = vmatprep.subr.mxu0 0.0
  %1053 = vmatpush1.msra.mxu0 0.0
  %1054 = vmatprep.subr.mxu0 0.0
  %1055 = vmatpush1.msra.mxu0 0.0
  %1056 = vmatprep.subr.mxu0 0.0
  %1057 = vmatpush1.msra.mxu0 0.0
  %1058 = vmatprep.subr.mxu0 0.0
  %1059 = vmatpush1.msra.mxu0 0.0
  %1060 = vmatprep.subr.mxu0 0.0
  %1061 = vmatpush1.msra.mxu0 0.0
  %1062 = vmatprep.subr.mxu0 0.0
  %1063 = vmatpush1.msra.mxu0 0.0
  %1064 = vmatprep.subr.mxu0 0.0
  %1065 = vmatpush1.msra.mxu0 0.0
  %1066 = vmatprep.subr.mxu0 0.0
  %1067 = vmatpush1.msra.mxu0 0.0
  %1068 = vmatprep.subr.mxu0 0.0
  %1069 = vmatpush1.msra.mxu0 0.0
  %1070 = vmatprep.subr.mxu0 0.0
  %1071 = vmatpush1.msra.mxu0 0.0
  %1072 = vmatprep.subr.mxu0 0.0
  %1073 = vmatpush1.msra.mxu0 0.0
  %1074 = vmatprep.subr.mxu0 0.0
  %1075 = vmatpush1.msra.mxu0 0.0
  %1076 = vmatprep.subr.mxu0 0.0
  %1077 = vmatpush1.msra.mxu0 0.0
  %1078 = vmatprep.subr.mxu0 0.0
  %1079 = vmatpush1.msra.mxu0 0.0
  %1080 = vmatprep.subr.mxu0 0.0
  %1081 = vmatpush1.msra.mxu0 0.0
  %1082 = vmatprep.subr.mxu0 0.0
  %1083 = vmatpush1.msra.mxu0 0.0
  %1084 = vmatprep.subr.mxu0 0.0
  %1085 = vmatpush1.msra.mxu0 0.0
  %1086 = vmatprep.mubr.f32.mxu0 0.0
  %1087 = vmatmul.mubr.f32.gmra.mrb[0].mxu0 %v1020
  %v1088 = vpop.f32.mrb[0].mxu0
  %v1089 = vadd.f32 %v1018, %v1088
  %v1090 = vpop.f32.mrb[0].mxu0
  %1091 = vdwg.mxu0
  %v1092 = vmul.f32 %v1089, 0.5
  %v1093 = vmul.f32 %v1092, 1.442695
  %v1094 = vpow.pop %v1093
  %v1095 = vld [vmem:[%s2] sm:$0x1]
  %v1097 = vlaneseq
  %v1098 = vshrl.u32 %v1097, 7
  %v1099 = vsub.s32 0, %v1098
  %v1100 = vrot.slane %v1095, %v1099
  %1101 = vrot.lane.b32.xlu0 %v1100, 8
  %v1102 = vpop.permute.xlu0 %1101
  %v1104 = vmul.f32 %v1094, %v1102
  %1106 = vrot.lane.b32.xlu0 %v1104, 120
  %v1107 = vpop.permute.xlu0 %1106
  %v1109 = vadd.f32 %v1089, %v1107
  %v1110 = vld [vmem:[%s10] sm:$0xff]
  %v1111 = vld [vmem:[%s11] sm:$0x1]
  %vm1112 = vcmask 64512
  %v1114 = vsel %vm1112, %v1109, 0
  %1116 = vmatprep.subr.mxu0 0.0
  %1117 = vmatpush1.msra.mxu0 %v1110
  %1118 = vmatprep.subr.mxu0 0.0
  %1119 = vmatpush1.msra.mxu0 0.0
  %1120 = vmatprep.subr.mxu0 0.0
  %1121 = vmatpush1.msra.mxu0 0.0
  %1122 = vmatprep.subr.mxu0 0.0
  %1123 = vmatpush1.msra.mxu0 0.0
  %1124 = vmatprep.subr.mxu0 0.0
  %1125 = vmatpush1.msra.mxu0 0.0
  %1126 = vmatprep.subr.mxu0 0.0
  %1127 = vmatpush1.msra.mxu0 0.0
  %1128 = vmatprep.subr.mxu0 0.0
  %1129 = vmatpush1.msra.mxu0 0.0
  %1130 = vmatprep.subr.mxu0 0.0
  %1131 = vmatpush1.msra.mxu0 0.0
  %1132 = vmatprep.subr.mxu0 0.0
  %1133 = vmatpush1.msra.mxu0 0.0
  %1134 = vmatprep.subr.mxu0 0.0
  %1135 = vmatpush1.msra.mxu0 0.0
  %1136 = vmatprep.subr.mxu0 0.0
  %1137 = vmatpush1.msra.mxu0 0.0
  %1138 = vmatprep.subr.mxu0 0.0
  %1139 = vmatpush1.msra.mxu0 0.0
  %1140 = vmatprep.subr.mxu0 0.0
  %1141 = vmatpush1.msra.mxu0 0.0
  %1142 = vmatprep.subr.mxu0 0.0
  %1143 = vmatpush1.msra.mxu0 0.0
  %1144 = vmatprep.subr.mxu0 0.0
  %1145 = vmatpush1.msra.mxu0 0.0
  %1146 = vmatprep.subr.mxu0 0.0
  %1147 = vmatpush1.msra.mxu0 0.0
  %1148 = vmatprep.subr.mxu0 0.0
  %1149 = vmatpush1.msra.mxu0 0.0
  %1150 = vmatprep.subr.mxu0 0.0
  %1151 = vmatpush1.msra.mxu0 0.0
  %1152 = vmatprep.subr.mxu0 0.0
  %1153 = vmatpush1.msra.mxu0 0.0
  %1154 = vmatprep.subr.mxu0 0.0
  %1155 = vmatpush1.msra.mxu0 0.0
  %1156 = vmatprep.subr.mxu0 0.0
  %1157 = vmatpush1.msra.mxu0 0.0
  %1158 = vmatprep.subr.mxu0 0.0
  %1159 = vmatpush1.msra.mxu0 0.0
  %1160 = vmatprep.subr.mxu0 0.0
  %1161 = vmatpush1.msra.mxu0 0.0
  %1162 = vmatprep.subr.mxu0 0.0
  %1163 = vmatpush1.msra.mxu0 0.0
  %1164 = vmatprep.subr.mxu0 0.0
  %1165 = vmatpush1.msra.mxu0 0.0
  %1166 = vmatprep.subr.mxu0 0.0
  %1167 = vmatpush1.msra.mxu0 0.0
  %1168 = vmatprep.subr.mxu0 0.0
  %1169 = vmatpush1.msra.mxu0 0.0
  %1170 = vmatprep.subr.mxu0 0.0
  %1171 = vmatpush1.msra.mxu0 0.0
  %1172 = vmatprep.subr.mxu0 0.0
  %1173 = vmatpush1.msra.mxu0 0.0
  %1174 = vmatprep.subr.mxu0 0.0
  %1175 = vmatpush1.msra.mxu0 0.0
  %1176 = vmatprep.subr.mxu0 0.0
  %1177 = vmatpush1.msra.mxu0 0.0
  %1178 = vmatprep.subr.mxu0 0.0
  %1179 = vmatpush1.msra.mxu0 0.0
  %1180 = vmatprep.mubr.f32.mxu0 0.0
  %1181 = vmatmul.mubr.f32.gmra.mrb[0].mxu0 %v1114
  %v1182 = vpop.f32.mrb[0].mxu0
  %v1183 = vadd.f32 %v1111, %v1182
  %v1184 = vpop.f32.mrb[0].mxu0
  %1185 = vdwg.mxu0
  %vm1186 = vcmask 122880
  %1187 = vst.msk [vmem:[%s25] sm:$0x1] %vm1186, %v1089
  %v1188 = vld [vmem:[%s3] sm:$0xff]
  %v1189 = vld [vmem:[%s3 + $0x8] sm:$0xff]
  %v1190 = vld [vmem:[%s3 + $0x10] sm:$0xff]
  %v1191 = vld [vmem:[%s3 + $0x18] sm:$0xff]
  %v1192 = vld [vmem:[%s3 + $0x20] sm:$0xff]
  %v1193 = vld [vmem:[%s3 + $0x28] sm:$0xff]
  %v1194 = vld [vmem:[%s3 + $0x30] sm:$0xff]
  %v1195 = vld [vmem:[%s3 + $0x38] sm:$0xff]
  %v1196 = vld [vmem:[%s3 + $0x40] sm:$0xff]
  %v1197 = vld [vmem:[%s3 + $0x48] sm:$0xff]
  %v1198 = vld [vmem:[%s3 + $0x50] sm:$0xff]
  %v1199 = vld [vmem:[%s3 + $0x58] sm:$0xff]
  %v1200 = vld [vmem:[%s3 + $0x60] sm:$0xff]
  %v1201 = vld [vmem:[%s3 + $0x68] sm:$0xff]
  %v1202 = vld [vmem:[%s3 + $0x70] sm:$0xff]
  %v1203 = vld [vmem:[%s3 + $0x78] sm:$0xff]
  %v1204 = vld [vmem:[%s4] sm:$0x1]
  %v1205 = vld [vmem:[%s12] sm:$0xff]
  %v1206 = vld [vmem:[%s12 + $0x8] sm:$0x7]
  %v1207 = vld [vmem:[%s13] sm:$0xff]
  %v1208 = vld [vmem:[%s13 + $0x8] sm:$0xff]
  %v1209 = vld [vmem:[%s13 + $0x10] sm:$0xff]
  %v1210 = vld [vmem:[%s13 + $0x18] sm:$0xff]
  %v1211 = vld [vmem:[%s13 + $0x20] sm:$0xff]
  %v1212 = vld [vmem:[%s13 + $0x28] sm:$0xff]
  %v1213 = vld [vmem:[%s13 + $0x30] sm:$0xff]
  %v1214 = vld [vmem:[%s13 + $0x38] sm:$0xff]
  %v1215 = vld [vmem:[%s13 + $0x40] sm:$0xff]
  %v1216 = vld [vmem:[%s13 + $0x48] sm:$0xff]
  %v1217 = vld [vmem:[%s13 + $0x50] sm:$0xff]
  %v1218 = vld [vmem:[%s13 + $0x58] sm:$0xff]
  %v1219 = vld [vmem:[%s13 + $0x60] sm:$0xff]
  %v1220 = vld [vmem:[%s13 + $0x68] sm:$0xff]
  %v1221 = vld [vmem:[%s13 + $0x70] sm:$0xff]
  %v1222 = vld [vmem:[%s13 + $0x78] sm:$0xff]
  %v1223 = vld [vmem:[%s14] sm:$0xff]
  %v1224 = vld [vmem:[%s14 + $0x8] sm:$0xff]
  %v1225 = vld [vmem:[%s14 + $0x10] sm:$0xff]
  %v1226 = vld [vmem:[%s14 + $0x18] sm:$0xff]
  %v1227 = vld [vmem:[%s14 + $0x20] sm:$0xff]
  %v1228 = vld [vmem:[%s14 + $0x28] sm:$0xff]
  %v1229 = vld [vmem:[%s14 + $0x30] sm:$0xff]
  %v1230 = vld [vmem:[%s14 + $0x38] sm:$0xff]
  %v1231 = vld [vmem:[%s14 + $0x40] sm:$0xff]
  %v1232 = vld [vmem:[%s14 + $0x48] sm:$0xff]
  %v1233 = vld [vmem:[%s14 + $0x50] sm:$0xff]
  %v1234 = vld [vmem:[%s14 + $0x58] sm:$0xff]
  %v1235 = vld [vmem:[%s14 + $0x60] sm:$0xff]
  %v1236 = vld [vmem:[%s14 + $0x68] sm:$0xff]
  %v1237 = vld [vmem:[%s14 + $0x70] sm:$0xff]
  %v1238 = vld [vmem:[%s14 + $0x78] sm:$0xff]
  %v1239 = vld [vmem:[%s15] sm:$0xff]
  %v1240 = vld [vmem:[%s23] sm:$0xff]
  %v1241 = vld [vmem:[%s23 + $0x8] sm:$0xff]
  %v1242 = vld [vmem:[%s23 + $0x10] sm:$0xff]
  %v1243 = vld [vmem:[%s23 + $0x18] sm:$0xff]
  %v1244 = vld [vmem:[%s24] sm:$0x1]
  %vm1245 = vcmask 89088
  %v1247 = vsel %vm1245, %v1188, 0
  %v1250 = vsel %vm1245, %v1189, 0
  %v1253 = vsel %vm1245, %v1190, 0
  %v1256 = vsel %vm1245, %v1191, 0
  %v1259 = vsel %vm1245, %v1192, 0
  %v1262 = vsel %vm1245, %v1193, 0
  %v1265 = vsel %vm1245, %v1194, 0
  %v1268 = vsel %vm1245, %v1195, 0
  %v1271 = vsel %vm1245, %v1196, 0
  %v1274 = vsel %vm1245, %v1197, 0
  %v1277 = vsel %vm1245, %v1198, 0
  %v1280 = vsel %vm1245, %v1199, 0
  %v1283 = vsel %vm1245, %v1200, 0
  %v1286 = vsel %vm1245, %v1201, 0
  %v1289 = vsel %vm1245, %v1202, 0
  %v1292 = vsel %vm1245, %v1203, 0
  %vm1294 = vcmask 1042432
  %v1296 = vsel %vm1294, %v1206, 0
  %1298 = vmatprep.subr.mxu0 0.0
  %1299 = vmatpush1.msra.mxu0 %v1205
  %1300 = vmatprep.subr.mxu0 0.0
  %1301 = vmatpush1.msra.mxu0 %v1296
  %1302 = vmatprep.subr.mxu0 0.0
  %1303 = vmatpush1.msra.mxu0 0.0
  %1304 = vmatprep.subr.mxu0 0.0
  %1305 = vmatpush1.msra.mxu0 0.0
  %1306 = vmatprep.subr.mxu0 0.0
  %1307 = vmatpush1.msra.mxu0 0.0
  %1308 = vmatprep.subr.mxu0 0.0
  %1309 = vmatpush1.msra.mxu0 0.0
  %1310 = vmatprep.subr.mxu0 0.0
  %1311 = vmatpush1.msra.mxu0 0.0
  %1312 = vmatprep.subr.mxu0 0.0
  %1313 = vmatpush1.msra.mxu0 0.0
  %1314 = vmatprep.subr.mxu0 0.0
  %1315 = vmatpush1.msra.mxu0 0.0
  %1316 = vmatprep.subr.mxu0 0.0
  %1317 = vmatpush1.msra.mxu0 0.0
  %1318 = vmatprep.subr.mxu0 0.0
  %1319 = vmatpush1.msra.mxu0 0.0
  %1320 = vmatprep.subr.mxu0 0.0
  %1321 = vmatpush1.msra.mxu0 0.0
  %1322 = vmatprep.subr.mxu0 0.0
  %1323 = vmatpush1.msra.mxu0 0.0
  %1324 = vmatprep.subr.mxu0 0.0
  %1325 = vmatpush1.msra.mxu0 0.0
  %1326 = vmatprep.subr.mxu0 0.0
  %1327 = vmatpush1.msra.mxu0 0.0
  %1328 = vmatprep.subr.mxu0 0.0
  %1329 = vmatpush1.msra.mxu0 0.0
  %1330 = vmatprep.subr.mxu0 0.0
  %1331 = vmatpush1.msra.mxu0 0.0
  %1332 = vmatprep.subr.mxu0 0.0
  %1333 = vmatpush1.msra.mxu0 0.0
  %1334 = vmatprep.subr.mxu0 0.0
  %1335 = vmatpush1.msra.mxu0 0.0
  %1336 = vmatprep.subr.mxu0 0.0
  %1337 = vmatpush1.msra.mxu0 0.0
  %1338 = vmatprep.subr.mxu0 0.0
  %1339 = vmatpush1.msra.mxu0 0.0
  %1340 = vmatprep.subr.mxu0 0.0
  %1341 = vmatpush1.msra.mxu0 0.0
  %1342 = vmatprep.subr.mxu0 0.0
  %1343 = vmatpush1.msra.mxu0 0.0
  %1344 = vmatprep.subr.mxu0 0.0
  %1345 = vmatpush1.msra.mxu0 0.0
  %1346 = vmatprep.subr.mxu0 0.0
  %1347 = vmatpush1.msra.mxu0 0.0
  %1348 = vmatprep.subr.mxu0 0.0
  %1349 = vmatpush1.msra.mxu0 0.0
  %1350 = vmatprep.subr.mxu0 0.0
  %1351 = vmatpush1.msra.mxu0 0.0
  %1352 = vmatprep.subr.mxu0 0.0
  %1353 = vmatpush1.msra.mxu0 0.0
  %1354 = vmatprep.subr.mxu0 0.0
  %1355 = vmatpush1.msra.mxu0 0.0
  %1356 = vmatprep.subr.mxu0 0.0
  %1357 = vmatpush1.msra.mxu0 0.0
  %1358 = vmatprep.subr.mxu0 0.0
  %1359 = vmatpush1.msra.mxu0 0.0
  %1360 = vmatprep.subr.mxu0 0.0
  %1361 = vmatpush1.msra.mxu0 0.0
  %1362 = vmatprep.mubr.f32.mxu0 0.0
  %1363 = vmatmul.mubr.f32.gmra.mrb[0].mxu0 %v1247
  %v1364 = vpop.f32.mrb[0].mxu0
  %v1365 = vadd.f32 %v1207, %v1364
  %v1366 = vpop.f32.mrb[0].mxu0
  %1367 = vmatprep.mubr.f32.mxu0 0.0
  %1368 = vmatmul.mubr.f32.gmra.mrb[0].mxu0 %v1250
  %v1369 = vpop.f32.mrb[0].mxu0
  %v1370 = vadd.f32 %v1208, %v1369
  %v1371 = vpop.f32.mrb[0].mxu0
  %1372 = vmatprep.mubr.f32.mxu0 0.0
  %1373 = vmatmul.mubr.f32.gmra.mrb[0].mxu0 %v1253
  %v1374 = vpop.f32.mrb[0].mxu0
  %v1375 = vadd.f32 %v1209, %v1374
  %v1376 = vpop.f32.mrb[0].mxu0
  %1377 = vmatprep.mubr.f32.mxu0 0.0
  %1378 = vmatmul.mubr.f32.gmra.mrb[0].mxu0 %v1256
  %v1379 = vpop.f32.mrb[0].mxu0
  %v1380 = vadd.f32 %v1210, %v1379
  %v1381 = vpop.f32.mrb[0].mxu0
  %1382 = vmatprep.mubr.f32.mxu0 0.0
  %1383 = vmatmul.mubr.f32.gmra.mrb[0].mxu0 %v1259
  %v1384 = vpop.f32.mrb[0].mxu0
  %v1385 = vadd.f32 %v1211, %v1384
  %v1386 = vpop.f32.mrb[0].mxu0
  %1387 = vmatprep.mubr.f32.mxu0 0.0
  %1388 = vmatmul.mubr.f32.gmra.mrb[0].mxu0 %v1262
  %v1389 = vpop.f32.mrb[0].mxu0
  %v1390 = vadd.f32 %v1212, %v1389
  %v1391 = vpop.f32.mrb[0].mxu0
  %1392 = vmatprep.mubr.f32.mxu0 0.0
  %1393 = vmatmul.mubr.f32.gmra.mrb[0].mxu0 %v1265
  %v1394 = vpop.f32.mrb[0].mxu0
  %v1395 = vadd.f32 %v1213, %v1394
  %v1396 = vpop.f32.mrb[0].mxu0
  %1397 = vmatprep.mubr.f32.mxu0 0.0
  %1398 = vmatmul.mubr.f32.gmra.mrb[0].mxu0 %v1268
  %v1399 = vpop.f32.mrb[0].mxu0
  %v1400 = vadd.f32 %v1214, %v1399
  %v1401 = vpop.f32.mrb[0].mxu0
  %1402 = vmatprep.mubr.f32.mxu0 0.0
  %1403 = vmatmul.mubr.f32.gmra.mrb[0].mxu0 %v1271
  %v1404 = vpop.f32.mrb[0].mxu0
  %v1405 = vadd.f32 %v1215, %v1404
  %v1406 = vpop.f32.mrb[0].mxu0
  %1407 = vmatprep.mubr.f32.mxu0 0.0
  %1408 = vmatmul.mubr.f32.gmra.mrb[0].mxu0 %v1274
  %v1409 = vpop.f32.mrb[0].mxu0
  %v1410 = vadd.f32 %v1216, %v1409
  %v1411 = vpop.f32.mrb[0].mxu0
  %1412 = vmatprep.mubr.f32.mxu0 0.0
  %1413 = vmatmul.mubr.f32.gmra.mrb[0].mxu0 %v1277
  %v1414 = vpop.f32.mrb[0].mxu0
  %v1415 = vadd.f32 %v1217, %v1414
  %v1416 = vpop.f32.mrb[0].mxu0
  %1417 = vmatprep.mubr.f32.mxu0 0.0
  %1418 = vmatmul.mubr.f32.gmra.mrb[0].mxu0 %v1280
  %v1419 = vpop.f32.mrb[0].mxu0
  %v1420 = vadd.f32 %v1218, %v1419
  %v1421 = vpop.f32.mrb[0].mxu0
  %1422 = vmatprep.mubr.f32.mxu0 0.0
  %1423 = vmatmul.mubr.f32.gmra.mrb[0].mxu0 %v1283
  %v1424 = vpop.f32.mrb[0].mxu0
  %v1425 = vadd.f32 %v1219, %v1424
  %v1426 = vpop.f32.mrb[0].mxu0
  %1427 = vmatprep.mubr.f32.mxu0 0.0
  %1428 = vmatmul.mubr.f32.gmra.mrb[0].mxu0 %v1286
  %v1429 = vpop.f32.mrb[0].mxu0
  %v1430 = vadd.f32 %v1220, %v1429
  %v1431 = vpop.f32.mrb[0].mxu0
  %1432 = vmatprep.mubr.f32.mxu0 0.0
  %1433 = vmatmul.mubr.f32.gmra.mrb[0].mxu0 %v1289
  %v1434 = vpop.f32.mrb[0].mxu0
  %v1435 = vadd.f32 %v1221, %v1434
  %v1436 = vpop.f32.mrb[0].mxu0
  %1437 = vmatprep.mubr.f32.mxu0 0.0
  %1438 = vmatmul.mubr.f32.gmra.mrb[0].mxu0 %v1292
  %v1439 = vpop.f32.mrb[0].mxu0
  %v1440 = vadd.f32 %v1222, %v1439
  %v1441 = vpop.f32.mrb[0].mxu0
  %1442 = vdwg.mxu0
  %v1443 = vlaneseq
  %v1444 = vshrl.u32 %v1443, 7
  %v1445 = vadd.s32 %v1444, 8
  %v1446 = vadd.s32 %v1444, 16
  %v1447 = vadd.s32 %v1444, 24
  %v1448 = vadd.s32 %v1444, 32
  %v1449 = vadd.s32 %v1444, 40
  %v1450 = vadd.s32 %v1444, 48
  %v1451 = vadd.s32 %v1444, 56
  %v1452 = vadd.s32 %v1444, 64
  %v1453 = vadd.s32 %v1444, 72
  %v1454 = vadd.s32 %v1444, 80
  %v1455 = vadd.s32 %v1444, 88
  %v1456 = vadd.s32 %v1444, 96
  %v1457 = vadd.s32 %v1444, 104
  %v1458 = vadd.s32 %v1444, 112
  %v1459 = vadd.s32 %v1444, 120
  %vm1460 = vcmp.eq.s32.totalorder %v1444, 0
  %vm1461 = vcmp.eq.s32.totalorder %v1445, 0
  %vm1462 = vcmp.eq.s32.totalorder %v1446, 0
  %vm1463 = vcmp.eq.s32.totalorder %v1447, 0
  %vm1464 = vcmp.eq.s32.totalorder %v1448, 0
  %vm1465 = vcmp.eq.s32.totalorder %v1449, 0
  %vm1466 = vcmp.eq.s32.totalorder %v1450, 0
  %vm1467 = vcmp.eq.s32.totalorder %v1451, 0
  %vm1468 = vcmp.eq.s32.totalorder %v1452, 0
  %vm1469 = vcmp.eq.s32.totalorder %v1453, 0
  %vm1470 = vcmp.eq.s32.totalorder %v1454, 0
  %vm1471 = vcmp.eq.s32.totalorder %v1455, 0
  %vm1472 = vcmp.eq.s32.totalorder %v1456, 0
  %vm1473 = vcmp.eq.s32.totalorder %v1457, 0
  %vm1474 = vcmp.eq.s32.totalorder %v1458, 0
  %vm1475 = vcmp.eq.s32.totalorder %v1459, 0
  %v1476 = vsel %vm1460, 1, 0
  %v1477 = vsel %vm1461, 1, 0
  %v1478 = vsel %vm1462, 1, 0
  %v1479 = vsel %vm1463, 1, 0
  %v1480 = vsel %vm1464, 1, 0
  %v1481 = vsel %vm1465, 1, 0
  %v1482 = vsel %vm1466, 1, 0
  %v1483 = vsel %vm1467, 1, 0
  %v1484 = vsel %vm1468, 1, 0
  %v1485 = vsel %vm1469, 1, 0
  %v1486 = vsel %vm1470, 1, 0
  %v1487 = vsel %vm1471, 1, 0
  %v1488 = vsel %vm1472, 1, 0
  %v1489 = vsel %vm1473, 1, 0
  %v1490 = vsel %vm1474, 1, 0
  %v1491 = vsel %vm1475, 1, 0
  %vm1492 = vcmp.eq.s32.totalorder %v1476, 1
  %vm1493 = vcmp.eq.s32.totalorder %v1477, 1
  %vm1494 = vcmp.eq.s32.totalorder %v1478, 1
  %vm1495 = vcmp.eq.s32.totalorder %v1479, 1
  %vm1496 = vcmp.eq.s32.totalorder %v1480, 1
  %vm1497 = vcmp.eq.s32.totalorder %v1481, 1
  %vm1498 = vcmp.eq.s32.totalorder %v1482, 1
  %vm1499 = vcmp.eq.s32.totalorder %v1483, 1
  %vm1500 = vcmp.eq.s32.totalorder %v1484, 1
  %vm1501 = vcmp.eq.s32.totalorder %v1485, 1
  %vm1502 = vcmp.eq.s32.totalorder %v1486, 1
  %vm1503 = vcmp.eq.s32.totalorder %v1487, 1
  %vm1504 = vcmp.eq.s32.totalorder %v1488, 1
  %vm1505 = vcmp.eq.s32.totalorder %v1489, 1
  %vm1506 = vcmp.eq.s32.totalorder %v1490, 1
  %vm1507 = vcmp.eq.s32.totalorder %v1491, 1
  %v1508 = vlaneseq
  %v1509 = vshrl.u32 %v1508, 7
  %v1510 = vsub.s32 0, %v1509
  %v1511 = vrot.slane %v1183, %v1510
  %v1512 = vsel %vm1492, %v1511, 0.0
  %v1513 = vsel %vm1493, %v1511, 0.0
  %v1514 = vsel %vm1494, %v1511, 0.0
  %v1515 = vsel %vm1495, %v1511, 0.0
  %v1516 = vsel %vm1496, %v1511, 0.0
  %v1517 = vsel %vm1497, %v1511, 0.0
  %v1518 = vsel %vm1498, %v1511, 0.0
  %v1519 = vsel %vm1499, %v1511, 0.0
  %v1520 = vsel %vm1500, %v1511, 0.0
  %v1521 = vsel %vm1501, %v1511, 0.0
  %v1522 = vsel %vm1502, %v1511, 0.0
  %v1523 = vsel %vm1503, %v1511, 0.0
  %v1524 = vsel %vm1504, %v1511, 0.0
  %v1525 = vsel %vm1505, %v1511, 0.0
  %v1526 = vsel %vm1506, %v1511, 0.0
  %v1527 = vsel %vm1507, %v1511, 0.0
  %v1528 = vadd.f32 %v1365, %v1512
  %v1529 = vadd.f32 %v1370, %v1513
  %v1530 = vadd.f32 %v1375, %v1514
  %v1531 = vadd.f32 %v1380, %v1515
  %v1532 = vadd.f32 %v1385, %v1516
  %v1533 = vadd.f32 %v1390, %v1517
  %v1534 = vadd.f32 %v1395, %v1518
  %v1535 = vadd.f32 %v1400, %v1519
  %v1536 = vadd.f32 %v1405, %v1520
  %v1537 = vadd.f32 %v1410, %v1521
  %v1538 = vadd.f32 %v1415, %v1522
  %v1539 = vadd.f32 %v1420, %v1523
  %v1540 = vadd.f32 %v1425, %v1524
  %v1541 = vadd.f32 %v1430, %v1525
  %v1542 = vadd.f32 %v1435, %v1526
  %v1543 = vadd.f32 %v1440, %v1527
  %v1544 = vadd.f32 %v1528, %v1223
  %v1545 = vadd.f32 %v1529, %v1224
  %v1546 = vadd.f32 %v1530, %v1225
  %v1547 = vadd.f32 %v1531, %v1226
  %v1548 = vadd.f32 %v1532, %v1227
  %v1549 = vadd.f32 %v1533, %v1228
  %v1550 = vadd.f32 %v1534, %v1229
  %v1551 = vadd.f32 %v1535, %v1230
  %v1552 = vadd.f32 %v1536, %v1231
  %v1553 = vadd.f32 %v1537, %v1232
  %v1554 = vadd.f32 %v1538, %v1233
  %v1555 = vadd.f32 %v1539, %v1234
  %v1556 = vadd.f32 %v1540, %v1235
  %v1557 = vadd.f32 %v1541, %v1236
  %v1558 = vadd.f32 %v1542, %v1237
  %v1559 = vadd.f32 %v1543, %v1238
  %s1560 = scalar_lea.vmem %s16, 128
  %v1561 = vld [vmem:[%s1560] sm:$0xff]
  %v1562 = vld [vmem:[%s1560 + $0x8] sm:$0xff]
  %v1563 = vld [vmem:[%s1560 + $0x10] sm:$0xff]
  %v1564 = vld [vmem:[%s1560 + $0x18] sm:$0xff]
  %s1565 = scalar_lea.vmem %s17, 4
  %v1566 = vld [vmem:[%s1565] sm:$0x1]
  %v1568 = vlaneseq
  %v1569 = vshrl.u32 %v1568, 7
  %v1570 = vsub.s32 0, %v1569
  %v1571 = vrot.slane %v1566, %v1570
  %v1574 = vsel %vm186, %v1544, 0
  %v1577 = vsel %vm186, %v1545, 0
  %v1580 = vsel %vm186, %v1546, 0
  %v1583 = vsel %vm186, %v1547, 0
  %v1586 = vsel %vm186, %v1548, 0
  %v1589 = vsel %vm186, %v1549, 0
  %v1592 = vsel %vm186, %v1550, 0
  %v1595 = vsel %vm186, %v1551, 0
  %v1598 = vsel %vm186, %v1552, 0
  %v1601 = vsel %vm186, %v1553, 0
  %v1604 = vsel %vm186, %v1554, 0
  %v1607 = vsel %vm186, %v1555, 0
  %v1610 = vsel %vm186, %v1556, 0
  %v1613 = vsel %vm186, %v1557, 0
  %v1616 = vsel %vm186, %v1558, 0
  %v1619 = vsel %vm186, %v1559, 0
  %1621 = vmatprep.subr.mxu0 0.0
  %1622 = vmatpush1.msra.mxu0 %v1561
  %1623 = vmatprep.subr.mxu0 0.0
  %1624 = vmatpush1.msra.mxu0 %v1562
  %1625 = vmatprep.subr.mxu0 0.0
  %1626 = vmatpush1.msra.mxu0 %v1563
  %1627 = vmatprep.subr.mxu0 0.0
  %1628 = vmatpush1.msra.mxu0 %v1564
  %1629 = vmatprep.subr.mxu0 0.0
  %1630 = vmatpush1.msra.mxu0 0.0
  %1631 = vmatprep.subr.mxu0 0.0
  %1632 = vmatpush1.msra.mxu0 0.0
  %1633 = vmatprep.subr.mxu0 0.0
  %1634 = vmatpush1.msra.mxu0 0.0
  %1635 = vmatprep.subr.mxu0 0.0
  %1636 = vmatpush1.msra.mxu0 0.0
  %1637 = vmatprep.subr.mxu0 0.0
  %1638 = vmatpush1.msra.mxu0 0.0
  %1639 = vmatprep.subr.mxu0 0.0
  %1640 = vmatpush1.msra.mxu0 0.0
  %1641 = vmatprep.subr.mxu0 0.0
  %1642 = vmatpush1.msra.mxu0 0.0
  %1643 = vmatprep.subr.mxu0 0.0
  %1644 = vmatpush1.msra.mxu0 0.0
  %1645 = vmatprep.subr.mxu0 0.0
  %1646 = vmatpush1.msra.mxu0 0.0
  %1647 = vmatprep.subr.mxu0 0.0
  %1648 = vmatpush1.msra.mxu0 0.0
  %1649 = vmatprep.subr.mxu0 0.0
  %1650 = vmatpush1.msra.mxu0 0.0
  %1651 = vmatprep.subr.mxu0 0.0
  %1652 = vmatpush1.msra.mxu0 0.0
  %1653 = vmatprep.subr.mxu0 0.0
  %1654 = vmatpush1.msra.mxu0 0.0
  %1655 = vmatprep.subr.mxu0 0.0
  %1656 = vmatpush1.msra.mxu0 0.0
  %1657 = vmatprep.subr.mxu0 0.0
  %1658 = vmatpush1.msra.mxu0 0.0
  %1659 = vmatprep.subr.mxu0 0.0
  %1660 = vmatpush1.msra.mxu0 0.0
  %1661 = vmatprep.subr.mxu0 0.0
  %1662 = vmatpush1.msra.mxu0 0.0
  %1663 = vmatprep.subr.mxu0 0.0
  %1664 = vmatpush1.msra.mxu0 0.0
  %1665 = vmatprep.subr.mxu0 0.0
  %1666 = vmatpush1.msra.mxu0 0.0
  %1667 = vmatprep.subr.mxu0 0.0
  %1668 = vmatpush1.msra.mxu0 0.0
  %1669 = vmatprep.subr.mxu0 0.0
  %1670 = vmatpush1.msra.mxu0 0.0
  %1671 = vmatprep.subr.mxu0 0.0
  %1672 = vmatpush1.msra.mxu0 0.0
  %1673 = vmatprep.subr.mxu0 0.0
  %1674 = vmatpush1.msra.mxu0 0.0
  %1675 = vmatprep.subr.mxu0 0.0
  %1676 = vmatpush1.msra.mxu0 0.0
  %1677 = vmatprep.subr.mxu0 0.0
  %1678 = vmatpush1.msra.mxu0 0.0
  %1679 = vmatprep.subr.mxu0 0.0
  %1680 = vmatpush1.msra.mxu0 0.0
  %1681 = vmatprep.subr.mxu0 0.0
  %1682 = vmatpush1.msra.mxu0 0.0
  %1683 = vmatprep.subr.mxu0 0.0
  %1684 = vmatpush1.msra.mxu0 0.0
  %1685 = vmatprep.mubr.f32.mxu0 0.0
  %1686 = vmatmul.mubr.f32.gmra.mrb[0].mxu0 %v1574
  %v1687 = vpop.f32.mrb[0].mxu0
  %v1688 = vadd.f32 %v1571, %v1687
  %v1689 = vpop.f32.mrb[0].mxu0
  %1690 = vmatprep.mubr.f32.mxu0 0.0
  %1691 = vmatmul.mubr.f32.gmra.mrb[0].mxu0 %v1577
  %v1692 = vpop.f32.mrb[0].mxu0
  %v1693 = vadd.f32 %v1571, %v1692
  %v1694 = vpop.f32.mrb[0].mxu0
  %1695 = vmatprep.mubr.f32.mxu0 0.0
  %1696 = vmatmul.mubr.f32.gmra.mrb[0].mxu0 %v1580
  %v1697 = vpop.f32.mrb[0].mxu0
  %v1698 = vadd.f32 %v1571, %v1697
  %v1699 = vpop.f32.mrb[0].mxu0
  %1700 = vmatprep.mubr.f32.mxu0 0.0
  %1701 = vmatmul.mubr.f32.gmra.mrb[0].mxu0 %v1583
  %v1702 = vpop.f32.mrb[0].mxu0
  %v1703 = vadd.f32 %v1571, %v1702
  %v1704 = vpop.f32.mrb[0].mxu0
  %1705 = vmatprep.mubr.f32.mxu0 0.0
  %1706 = vmatmul.mubr.f32.gmra.mrb[0].mxu0 %v1586
  %v1707 = vpop.f32.mrb[0].mxu0
  %v1708 = vadd.f32 %v1571, %v1707
  %v1709 = vpop.f32.mrb[0].mxu0
  %1710 = vmatprep.mubr.f32.mxu0 0.0
  %1711 = vmatmul.mubr.f32.gmra.mrb[0].mxu0 %v1589
  %v1712 = vpop.f32.mrb[0].mxu0
  %v1713 = vadd.f32 %v1571, %v1712
  %v1714 = vpop.f32.mrb[0].mxu0
  %1715 = vmatprep.mubr.f32.mxu0 0.0
  %1716 = vmatmul.mubr.f32.gmra.mrb[0].mxu0 %v1592
  %v1717 = vpop.f32.mrb[0].mxu0
  %v1718 = vadd.f32 %v1571, %v1717
  %v1719 = vpop.f32.mrb[0].mxu0
  %1720 = vmatprep.mubr.f32.mxu0 0.0
  %1721 = vmatmul.mubr.f32.gmra.mrb[0].mxu0 %v1595
  %v1722 = vpop.f32.mrb[0].mxu0
  %v1723 = vadd.f32 %v1571, %v1722
  %v1724 = vpop.f32.mrb[0].mxu0
  %1725 = vmatprep.mubr.f32.mxu0 0.0
  %1726 = vmatmul.mubr.f32.gmra.mrb[0].mxu0 %v1598
  %v1727 = vpop.f32.mrb[0].mxu0
  %v1728 = vadd.f32 %v1571, %v1727
  %v1729 = vpop.f32.mrb[0].mxu0
  %1730 = vmatprep.mubr.f32.mxu0 0.0
  %1731 = vmatmul.mubr.f32.gmra.mrb[0].mxu0 %v1601
  %v1732 = vpop.f32.mrb[0].mxu0
  %v1733 = vadd.f32 %v1571, %v1732
  %v1734 = vpop.f32.mrb[0].mxu0
  %1735 = vmatprep.mubr.f32.mxu0 0.0
  %1736 = vmatmul.mubr.f32.gmra.mrb[0].mxu0 %v1604
  %v1737 = vpop.f32.mrb[0].mxu0
  %v1738 = vadd.f32 %v1571, %v1737
  %v1739 = vpop.f32.mrb[0].mxu0
  %1740 = vmatprep.mubr.f32.mxu0 0.0
  %1741 = vmatmul.mubr.f32.gmra.mrb[0].mxu0 %v1607
  %v1742 = vpop.f32.mrb[0].mxu0
  %v1743 = vadd.f32 %v1571, %v1742
  %v1744 = vpop.f32.mrb[0].mxu0
  %1745 = vmatprep.mubr.f32.mxu0 0.0
  %1746 = vmatmul.mubr.f32.gmra.mrb[0].mxu0 %v1610
  %v1747 = vpop.f32.mrb[0].mxu0
  %v1748 = vadd.f32 %v1571, %v1747
  %v1749 = vpop.f32.mrb[0].mxu0
  %1750 = vmatprep.mubr.f32.mxu0 0.0
  %1751 = vmatmul.mubr.f32.gmra.mrb[0].mxu0 %v1613
  %v1752 = vpop.f32.mrb[0].mxu0
  %v1753 = vadd.f32 %v1571, %v1752
  %v1754 = vpop.f32.mrb[0].mxu0
  %1755 = vmatprep.mubr.f32.mxu0 0.0
  %1756 = vmatmul.mubr.f32.gmra.mrb[0].mxu0 %v1616
  %v1757 = vpop.f32.mrb[0].mxu0
  %v1758 = vadd.f32 %v1571, %v1757
  %v1759 = vpop.f32.mrb[0].mxu0
  %1760 = vmatprep.mubr.f32.mxu0 0.0
  %1761 = vmatmul.mubr.f32.gmra.mrb[0].mxu0 %v1619
  %v1762 = vpop.f32.mrb[0].mxu0
  %v1763 = vadd.f32 %v1571, %v1762
  %v1764 = vpop.f32.mrb[0].mxu0
  %1765 = vdwg.mxu0
  %s1766 = scalar_lea.vmem %s16, 160
  %v1767 = vld [vmem:[%s1766] sm:$0xff]
  %v1768 = vld [vmem:[%s1766 + $0x8] sm:$0xff]
  %v1769 = vld [vmem:[%s1766 + $0x10] sm:$0xff]
  %v1770 = vld [vmem:[%s1766 + $0x18] sm:$0xff]
  %s1771 = scalar_lea.vmem %s17, 5
  %v1772 = vld [vmem:[%s1771] sm:$0x1]
  %v1774 = vlaneseq
  %v1775 = vshrl.u32 %v1774, 7
  %v1776 = vsub.s32 0, %v1775
  %v1777 = vrot.slane %v1772, %v1776
  %1779 = vmatprep.subr.mxu0 0.0
  %1780 = vmatpush1.msra.mxu0 %v1767
  %1781 = vmatprep.subr.mxu0 0.0
  %1782 = vmatpush1.msra.mxu0 %v1768
  %1783 = vmatprep.subr.mxu0 0.0
  %1784 = vmatpush1.msra.mxu0 %v1769
  %1785 = vmatprep.subr.mxu0 0.0
  %1786 = vmatpush1.msra.mxu0 %v1770
  %1787 = vmatprep.subr.mxu0 0.0
  %1788 = vmatpush1.msra.mxu0 0.0
  %1789 = vmatprep.subr.mxu0 0.0
  %1790 = vmatpush1.msra.mxu0 0.0
  %1791 = vmatprep.subr.mxu0 0.0
  %1792 = vmatpush1.msra.mxu0 0.0
  %1793 = vmatprep.subr.mxu0 0.0
  %1794 = vmatpush1.msra.mxu0 0.0
  %1795 = vmatprep.subr.mxu0 0.0
  %1796 = vmatpush1.msra.mxu0 0.0
  %1797 = vmatprep.subr.mxu0 0.0
  %1798 = vmatpush1.msra.mxu0 0.0
  %1799 = vmatprep.subr.mxu0 0.0
  %1800 = vmatpush1.msra.mxu0 0.0
  %1801 = vmatprep.subr.mxu0 0.0
  %1802 = vmatpush1.msra.mxu0 0.0
  %1803 = vmatprep.subr.mxu0 0.0
  %1804 = vmatpush1.msra.mxu0 0.0
  %1805 = vmatprep.subr.mxu0 0.0
  %1806 = vmatpush1.msra.mxu0 0.0
  %1807 = vmatprep.subr.mxu0 0.0
  %1808 = vmatpush1.msra.mxu0 0.0
  %1809 = vmatprep.subr.mxu0 0.0
  %1810 = vmatpush1.msra.mxu0 0.0
  %1811 = vmatprep.subr.mxu0 0.0
  %1812 = vmatpush1.msra.mxu0 0.0
  %1813 = vmatprep.subr.mxu0 0.0
  %1814 = vmatpush1.msra.mxu0 0.0
  %1815 = vmatprep.subr.mxu0 0.0
  %1816 = vmatpush1.msra.mxu0 0.0
  %1817 = vmatprep.subr.mxu0 0.0
  %1818 = vmatpush1.msra.mxu0 0.0
  %1819 = vmatprep.subr.mxu0 0.0
  %1820 = vmatpush1.msra.mxu0 0.0
  %1821 = vmatprep.subr.mxu0 0.0
  %1822 = vmatpush1.msra.mxu0 0.0
  %1823 = vmatprep.subr.mxu0 0.0
  %1824 = vmatpush1.msra.mxu0 0.0
  %1825 = vmatprep.subr.mxu0 0.0
  %1826 = vmatpush1.msra.mxu0 0.0
  %1827 = vmatprep.subr.mxu0 0.0
  %1828 = vmatpush1.msra.mxu0 0.0
  %1829 = vmatprep.subr.mxu0 0.0
  %1830 = vmatpush1.msra.mxu0 0.0
  %1831 = vmatprep.subr.mxu0 0.0
  %1832 = vmatpush1.msra.mxu0 0.0
  %1833 = vmatprep.subr.mxu0 0.0
  %1834 = vmatpush1.msra.mxu0 0.0
  %1835 = vmatprep.subr.mxu0 0.0
  %1836 = vmatpush1.msra.mxu0 0.0
  %1837 = vmatprep.subr.mxu0 0.0
  %1838 = vmatpush1.msra.mxu0 0.0
  %1839 = vmatprep.subr.mxu0 0.0
  %1840 = vmatpush1.msra.mxu0 0.0
  %1841 = vmatprep.subr.mxu0 0.0
  %1842 = vmatpush1.msra.mxu0 0.0
  %1843 = vmatprep.mubr.f32.mxu0 0.0
  %1844 = vmatmul.mubr.f32.gmra.mrb[0].mxu0 %v1574
  %v1845 = vpop.f32.mrb[0].mxu0
  %v1846 = vadd.f32 %v1777, %v1845
  %v1847 = vpop.f32.mrb[0].mxu0
  %1848 = vmatprep.mubr.f32.mxu0 0.0
  %1849 = vmatmul.mubr.f32.gmra.mrb[0].mxu0 %v1577
  %v1850 = vpop.f32.mrb[0].mxu0
  %v1851 = vadd.f32 %v1777, %v1850
  %v1852 = vpop.f32.mrb[0].mxu0
  %1853 = vmatprep.mubr.f32.mxu0 0.0
  %1854 = vmatmul.mubr.f32.gmra.mrb[0].mxu0 %v1580
  %v1855 = vpop.f32.mrb[0].mxu0
  %v1856 = vadd.f32 %v1777, %v1855
  %v1857 = vpop.f32.mrb[0].mxu0
  %1858 = vmatprep.mubr.f32.mxu0 0.0
  %1859 = vmatmul.mubr.f32.gmra.mrb[0].mxu0 %v1583
  %v1860 = vpop.f32.mrb[0].mxu0
  %v1861 = vadd.f32 %v1777, %v1860
  %v1862 = vpop.f32.mrb[0].mxu0
  %1863 = vmatprep.mubr.f32.mxu0 0.0
  %1864 = vmatmul.mubr.f32.gmra.mrb[0].mxu0 %v1586
  %v1865 = vpop.f32.mrb[0].mxu0
  %v1866 = vadd.f32 %v1777, %v1865
  %v1867 = vpop.f32.mrb[0].mxu0
  %1868 = vmatprep.mubr.f32.mxu0 0.0
  %1869 = vmatmul.mubr.f32.gmra.mrb[0].mxu0 %v1589
  %v1870 = vpop.f32.mrb[0].mxu0
  %v1871 = vadd.f32 %v1777, %v1870
  %v1872 = vpop.f32.mrb[0].mxu0
  %1873 = vmatprep.mubr.f32.mxu0 0.0
  %1874 = vmatmul.mubr.f32.gmra.mrb[0].mxu0 %v1592
  %v1875 = vpop.f32.mrb[0].mxu0
  %v1876 = vadd.f32 %v1777, %v1875
  %v1877 = vpop.f32.mrb[0].mxu0
  %1878 = vmatprep.mubr.f32.mxu0 0.0
  %1879 = vmatmul.mubr.f32.gmra.mrb[0].mxu0 %v1595
  %v1880 = vpop.f32.mrb[0].mxu0
  %v1881 = vadd.f32 %v1777, %v1880
  %v1882 = vpop.f32.mrb[0].mxu0
  %1883 = vmatprep.mubr.f32.mxu0 0.0
  %1884 = vmatmul.mubr.f32.gmra.mrb[0].mxu0 %v1598
  %v1885 = vpop.f32.mrb[0].mxu0
  %v1886 = vadd.f32 %v1777, %v1885
  %v1887 = vpop.f32.mrb[0].mxu0
  %1888 = vmatprep.mubr.f32.mxu0 0.0
  %1889 = vmatmul.mubr.f32.gmra.mrb[0].mxu0 %v1601
  %v1890 = vpop.f32.mrb[0].mxu0
  %v1891 = vadd.f32 %v1777, %v1890
  %v1892 = vpop.f32.mrb[0].mxu0
  %1893 = vmatprep.mubr.f32.mxu0 0.0
  %1894 = vmatmul.mubr.f32.gmra.mrb[0].mxu0 %v1604
  %v1895 = vpop.f32.mrb[0].mxu0
  %v1896 = vadd.f32 %v1777, %v1895
  %v1897 = vpop.f32.mrb[0].mxu0
  %1898 = vmatprep.mubr.f32.mxu0 0.0
  %1899 = vmatmul.mubr.f32.gmra.mrb[0].mxu0 %v1607
  %v1900 = vpop.f32.mrb[0].mxu0
  %v1901 = vadd.f32 %v1777, %v1900
  %v1902 = vpop.f32.mrb[0].mxu0
  %1903 = vmatprep.mubr.f32.mxu0 0.0
  %1904 = vmatmul.mubr.f32.gmra.mrb[0].mxu0 %v1610
  %v1905 = vpop.f32.mrb[0].mxu0
  %v1906 = vadd.f32 %v1777, %v1905
  %v1907 = vpop.f32.mrb[0].mxu0
  %1908 = vmatprep.mubr.f32.mxu0 0.0
  %1909 = vmatmul.mubr.f32.gmra.mrb[0].mxu0 %v1613
  %v1910 = vpop.f32.mrb[0].mxu0
  %v1911 = vadd.f32 %v1777, %v1910
  %v1912 = vpop.f32.mrb[0].mxu0
  %1913 = vmatprep.mubr.f32.mxu0 0.0
  %1914 = vmatmul.mubr.f32.gmra.mrb[0].mxu0 %v1616
  %v1915 = vpop.f32.mrb[0].mxu0
  %v1916 = vadd.f32 %v1777, %v1915
  %v1917 = vpop.f32.mrb[0].mxu0
  %1918 = vmatprep.mubr.f32.mxu0 0.0
  %1919 = vmatmul.mubr.f32.gmra.mrb[0].mxu0 %v1619
  %v1920 = vpop.f32.mrb[0].mxu0
  %v1921 = vadd.f32 %v1777, %v1920
  %v1922 = vpop.f32.mrb[0].mxu0
  %1923 = vdwg.mxu0
  %s1924 = scalar_lea.vmem %s16, 192
  %v1925 = vld [vmem:[%s1924] sm:$0xff]
  %v1926 = vld [vmem:[%s1924 + $0x8] sm:$0xff]
  %v1927 = vld [vmem:[%s1924 + $0x10] sm:$0xff]
  %v1928 = vld [vmem:[%s1924 + $0x18] sm:$0xff]
  %s1929 = scalar_lea.vmem %s17, 6
  %v1930 = vld [vmem:[%s1929] sm:$0x1]
  %v1932 = vlaneseq
  %v1933 = vshrl.u32 %v1932, 7
  %v1934 = vsub.s32 0, %v1933
  %v1935 = vrot.slane %v1930, %v1934
  %v1938 = vsel %vm186, %v1528, 0
  %v1941 = vsel %vm186, %v1529, 0
  %v1944 = vsel %vm186, %v1530, 0
  %v1947 = vsel %vm186, %v1531, 0
  %v1950 = vsel %vm186, %v1532, 0
  %v1953 = vsel %vm186, %v1533, 0
  %v1956 = vsel %vm186, %v1534, 0
  %v1959 = vsel %vm186, %v1535, 0
  %v1962 = vsel %vm186, %v1536, 0
  %v1965 = vsel %vm186, %v1537, 0
  %v1968 = vsel %vm186, %v1538, 0
  %v1971 = vsel %vm186, %v1539, 0
  %v1974 = vsel %vm186, %v1540, 0
  %v1977 = vsel %vm186, %v1541, 0
  %v1980 = vsel %vm186, %v1542, 0
  %v1983 = vsel %vm186, %v1543, 0
  %1985 = vmatprep.subr.mxu0 0.0
  %1986 = vmatpush1.msra.mxu0 %v1925
  %1987 = vmatprep.subr.mxu0 0.0
  %1988 = vmatpush1.msra.mxu0 %v1926
  %1989 = vmatprep.subr.mxu0 0.0
  %1990 = vmatpush1.msra.mxu0 %v1927
  %1991 = vmatprep.subr.mxu0 0.0
  %1992 = vmatpush1.msra.mxu0 %v1928
  %1993 = vmatprep.subr.mxu0 0.0
  %1994 = vmatpush1.msra.mxu0 0.0
  %1995 = vmatprep.subr.mxu0 0.0
  %1996 = vmatpush1.msra.mxu0 0.0
  %1997 = vmatprep.subr.mxu0 0.0
  %1998 = vmatpush1.msra.mxu0 0.0
  %1999 = vmatprep.subr.mxu0 0.0
  %2000 = vmatpush1.msra.mxu0 0.0
  %2001 = vmatprep.subr.mxu0 0.0
  %2002 = vmatpush1.msra.mxu0 0.0
  %2003 = vmatprep.subr.mxu0 0.0
  %2004 = vmatpush1.msra.mxu0 0.0
  %2005 = vmatprep.subr.mxu0 0.0
  %2006 = vmatpush1.msra.mxu0 0.0
  %2007 = vmatprep.subr.mxu0 0.0
  %2008 = vmatpush1.msra.mxu0 0.0
  %2009 = vmatprep.subr.mxu0 0.0
  %2010 = vmatpush1.msra.mxu0 0.0
  %2011 = vmatprep.subr.mxu0 0.0
  %2012 = vmatpush1.msra.mxu0 0.0
  %2013 = vmatprep.subr.mxu0 0.0
  %2014 = vmatpush1.msra.mxu0 0.0
  %2015 = vmatprep.subr.mxu0 0.0
  %2016 = vmatpush1.msra.mxu0 0.0
  %2017 = vmatprep.subr.mxu0 0.0
  %2018 = vmatpush1.msra.mxu0 0.0
  %2019 = vmatprep.subr.mxu0 0.0
  %2020 = vmatpush1.msra.mxu0 0.0
  %2021 = vmatprep.subr.mxu0 0.0
  %2022 = vmatpush1.msra.mxu0 0.0
  %2023 = vmatprep.subr.mxu0 0.0
  %2024 = vmatpush1.msra.mxu0 0.0
  %2025 = vmatprep.subr.mxu0 0.0
  %2026 = vmatpush1.msra.mxu0 0.0
  %2027 = vmatprep.subr.mxu0 0.0
  %2028 = vmatpush1.msra.mxu0 0.0
  %2029 = vmatprep.subr.mxu0 0.0
  %2030 = vmatpush1.msra.mxu0 0.0
  %2031 = vmatprep.subr.mxu0 0.0
  %2032 = vmatpush1.msra.mxu0 0.0
  %2033 = vmatprep.subr.mxu0 0.0
  %2034 = vmatpush1.msra.mxu0 0.0
  %2035 = vmatprep.subr.mxu0 0.0
  %2036 = vmatpush1.msra.mxu0 0.0
  %2037 = vmatprep.subr.mxu0 0.0
  %2038 = vmatpush1.msra.mxu0 0.0
  %2039 = vmatprep.subr.mxu0 0.0
  %2040 = vmatpush1.msra.mxu0 0.0
  %2041 = vmatprep.subr.mxu0 0.0
  %2042 = vmatpush1.msra.mxu0 0.0
  %2043 = vmatprep.subr.mxu0 0.0
  %2044 = vmatpush1.msra.mxu0 0.0
  %2045 = vmatprep.subr.mxu0 0.0
  %2046 = vmatpush1.msra.mxu0 0.0
  %2047 = vmatprep.subr.mxu0 0.0
  %2048 = vmatpush1.msra.mxu0 0.0
  %2049 = vmatprep.mubr.f32.mxu0 0.0
  %2050 = vmatmul.mubr.f32.gmra.mrb[0].mxu0 %v1938
  %v2051 = vpop.f32.mrb[0].mxu0
  %v2052 = vadd.f32 %v1935, %v2051
  %v2053 = vpop.f32.mrb[0].mxu0
  %2054 = vmatprep.mubr.f32.mxu0 0.0
  %2055 = vmatmul.mubr.f32.gmra.mrb[0].mxu0 %v1941
  %v2056 = vpop.f32.mrb[0].mxu0
  %v2057 = vadd.f32 %v1935, %v2056
  %v2058 = vpop.f32.mrb[0].mxu0
  %2059 = vmatprep.mubr.f32.mxu0 0.0
  %2060 = vmatmul.mubr.f32.gmra.mrb[0].mxu0 %v1944
  %v2061 = vpop.f32.mrb[0].mxu0
  %v2062 = vadd.f32 %v1935, %v2061
  %v2063 = vpop.f32.mrb[0].mxu0
  %2064 = vmatprep.mubr.f32.mxu0 0.0
  %2065 = vmatmul.mubr.f32.gmra.mrb[0].mxu0 %v1947
  %v2066 = vpop.f32.mrb[0].mxu0
  %v2067 = vadd.f32 %v1935, %v2066
  %v2068 = vpop.f32.mrb[0].mxu0
  %2069 = vmatprep.mubr.f32.mxu0 0.0
  %2070 = vmatmul.mubr.f32.gmra.mrb[0].mxu0 %v1950
  %v2071 = vpop.f32.mrb[0].mxu0
  %v2072 = vadd.f32 %v1935, %v2071
  %v2073 = vpop.f32.mrb[0].mxu0
  %2074 = vmatprep.mubr.f32.mxu0 0.0
  %2075 = vmatmul.mubr.f32.gmra.mrb[0].mxu0 %v1953
  %v2076 = vpop.f32.mrb[0].mxu0
  %v2077 = vadd.f32 %v1935, %v2076
  %v2078 = vpop.f32.mrb[0].mxu0
  %2079 = vmatprep.mubr.f32.mxu0 0.0
  %2080 = vmatmul.mubr.f32.gmra.mrb[0].mxu0 %v1956
  %v2081 = vpop.f32.mrb[0].mxu0
  %v2082 = vadd.f32 %v1935, %v2081
  %v2083 = vpop.f32.mrb[0].mxu0
  %2084 = vmatprep.mubr.f32.mxu0 0.0
  %2085 = vmatmul.mubr.f32.gmra.mrb[0].mxu0 %v1959
  %v2086 = vpop.f32.mrb[0].mxu0
  %v2087 = vadd.f32 %v1935, %v2086
  %v2088 = vpop.f32.mrb[0].mxu0
  %2089 = vmatprep.mubr.f32.mxu0 0.0
  %2090 = vmatmul.mubr.f32.gmra.mrb[0].mxu0 %v1962
  %v2091 = vpop.f32.mrb[0].mxu0
  %v2092 = vadd.f32 %v1935, %v2091
  %v2093 = vpop.f32.mrb[0].mxu0
  %2094 = vmatprep.mubr.f32.mxu0 0.0
  %2095 = vmatmul.mubr.f32.gmra.mrb[0].mxu0 %v1965
  %v2096 = vpop.f32.mrb[0].mxu0
  %v2097 = vadd.f32 %v1935, %v2096
  %v2098 = vpop.f32.mrb[0].mxu0
  %2099 = vmatprep.mubr.f32.mxu0 0.0
  %2100 = vmatmul.mubr.f32.gmra.mrb[0].mxu0 %v1968
  %v2101 = vpop.f32.mrb[0].mxu0
  %v2102 = vadd.f32 %v1935, %v2101
  %v2103 = vpop.f32.mrb[0].mxu0
  %2104 = vmatprep.mubr.f32.mxu0 0.0
  %2105 = vmatmul.mubr.f32.gmra.mrb[0].mxu0 %v1971
  %v2106 = vpop.f32.mrb[0].mxu0
  %v2107 = vadd.f32 %v1935, %v2106
  %v2108 = vpop.f32.mrb[0].mxu0
  %2109 = vmatprep.mubr.f32.mxu0 0.0
  %2110 = vmatmul.mubr.f32.gmra.mrb[0].mxu0 %v1974
  %v2111 = vpop.f32.mrb[0].mxu0
  %v2112 = vadd.f32 %v1935, %v2111
  %v2113 = vpop.f32.mrb[0].mxu0
  %2114 = vmatprep.mubr.f32.mxu0 0.0
  %2115 = vmatmul.mubr.f32.gmra.mrb[0].mxu0 %v1977
  %v2116 = vpop.f32.mrb[0].mxu0
  %v2117 = vadd.f32 %v1935, %v2116
  %v2118 = vpop.f32.mrb[0].mxu0
  %2119 = vmatprep.mubr.f32.mxu0 0.0
  %2120 = vmatmul.mubr.f32.gmra.mrb[0].mxu0 %v1980
  %v2121 = vpop.f32.mrb[0].mxu0
  %v2122 = vadd.f32 %v1935, %v2121
  %v2123 = vpop.f32.mrb[0].mxu0
  %2124 = vmatprep.mubr.f32.mxu0 0.0
  %2125 = vmatmul.mubr.f32.gmra.mrb[0].mxu0 %v1983
  %v2126 = vpop.f32.mrb[0].mxu0
  %v2127 = vadd.f32 %v1935, %v2126
  %v2128 = vpop.f32.mrb[0].mxu0
  %2129 = vdwg.mxu0
  %v2131 = vsel %vm186, %v1688, 0
  %v2134 = vsel %vm186, %v1693, 0
  %v2137 = vsel %vm186, %v1698, 0
  %v2140 = vsel %vm186, %v1703, 0
  %v2143 = vsel %vm186, %v1708, 0
  %v2146 = vsel %vm186, %v1713, 0
  %v2149 = vsel %vm186, %v1718, 0
  %v2152 = vsel %vm186, %v1723, 0
  %v2155 = vsel %vm186, %v1728, 0
  %v2158 = vsel %vm186, %v1733, 0
  %v2161 = vsel %vm186, %v1738, 0
  %v2164 = vsel %vm186, %v1743, 0
  %v2167 = vsel %vm186, %v1748, 0
  %v2170 = vsel %vm186, %v1753, 0
  %v2173 = vsel %vm186, %v1758, 0
  %v2176 = vsel %vm186, %v1763, 0
  %v2179 = vsel %vm186, %v1846, 0
  %v2182 = vsel %vm186, %v1851, 0
  %v2185 = vsel %vm186, %v1856, 0
  %v2188 = vsel %vm186, %v1861, 0
  %v2191 = vsel %vm186, %v1866, 0
  %v2194 = vsel %vm186, %v1871, 0
  %v2197 = vsel %vm186, %v1876, 0
  %v2200 = vsel %vm186, %v1881, 0
  %v2203 = vsel %vm186, %v1886, 0
  %v2206 = vsel %vm186, %v1891, 0
  %v2209 = vsel %vm186, %v1896, 0
  %v2212 = vsel %vm186, %v1901, 0
  %v2215 = vsel %vm186, %v1906, 0
  %v2218 = vsel %vm186, %v1911, 0
  %v2221 = vsel %vm186, %v1916, 0
  %v2224 = vsel %vm186, %v1921, 0
  %2226 = vmatprep.subr.mxu0 0.0
  %2227 = vmatpush1.xpose.msra.mxu0 %v2179
  %2228 = vmatprep.subr.mxu0 0.0
  %2229 = vmatpush1.xpose.msra.mxu0 %v2182
  %2230 = vmatprep.subr.mxu0 0.0
  %2231 = vmatpush1.xpose.msra.mxu0 %v2185
  %2232 = vmatprep.subr.mxu0 0.0
  %2233 = vmatpush1.xpose.msra.mxu0 %v2188
  %2234 = vmatprep.subr.mxu0 0.0
  %2235 = vmatpush1.xpose.msra.mxu0 %v2191
  %2236 = vmatprep.subr.mxu0 0.0
  %2237 = vmatpush1.xpose.msra.mxu0 %v2194
  %2238 = vmatprep.subr.mxu0 0.0
  %2239 = vmatpush1.xpose.msra.mxu0 %v2197
  %2240 = vmatprep.subr.mxu0 0.0
  %2241 = vmatpush1.xpose.msra.mxu0 %v2200
  %2242 = vmatprep.subr.mxu0 0.0
  %2243 = vmatpush1.xpose.msra.mxu0 %v2203
  %2244 = vmatprep.subr.mxu0 0.0
  %2245 = vmatpush1.xpose.msra.mxu0 %v2206
  %2246 = vmatprep.subr.mxu0 0.0
  %2247 = vmatpush1.xpose.msra.mxu0 %v2209
  %2248 = vmatprep.subr.mxu0 0.0
  %2249 = vmatpush1.xpose.msra.mxu0 %v2212
  %2250 = vmatprep.subr.mxu0 0.0
  %2251 = vmatpush1.xpose.msra.mxu0 %v2215
  %2252 = vmatprep.subr.mxu0 0.0
  %2253 = vmatpush1.xpose.msra.mxu0 %v2218
  %2254 = vmatprep.subr.mxu0 0.0
  %2255 = vmatpush1.xpose.msra.mxu0 %v2221
  %2256 = vmatprep.subr.mxu0 0.0
  %2257 = vmatpush1.xpose.msra.mxu0 %v2224
  %2258 = vmatprep.subr.mxu0 0.0
  %2259 = vmatpush1.xpose.msra.mxu0 0.0
  %2260 = vmatprep.subr.mxu0 0.0
  %2261 = vmatpush1.xpose.msra.mxu0 0.0
  %2262 = vmatprep.subr.mxu0 0.0
  %2263 = vmatpush1.xpose.msra.mxu0 0.0
  %2264 = vmatprep.subr.mxu0 0.0
  %2265 = vmatpush1.xpose.msra.mxu0 0.0
  %2266 = vmatprep.subr.mxu0 0.0
  %2267 = vmatpush1.xpose.msra.mxu0 0.0
  %2268 = vmatprep.subr.mxu0 0.0
  %2269 = vmatpush1.xpose.msra.mxu0 0.0
  %2270 = vmatprep.subr.mxu0 0.0
  %2271 = vmatpush1.xpose.msra.mxu0 0.0
  %2272 = vmatprep.subr.mxu0 0.0
  %2273 = vmatpush1.xpose.msra.mxu0 0.0
  %2274 = vmatprep.subr.mxu0 0.0
  %2275 = vmatpush1.xpose.msra.mxu0 0.0
  %2276 = vmatprep.subr.mxu0 0.0
  %2277 = vmatpush1.xpose.msra.mxu0 0.0
  %2278 = vmatprep.subr.mxu0 0.0
  %2279 = vmatpush1.xpose.msra.mxu0 0.0
  %2280 = vmatprep.subr.mxu0 0.0
  %2281 = vmatpush1.xpose.msra.mxu0 0.0
  %2282 = vmatprep.subr.mxu0 0.0
  %2283 = vmatpush1.xpose.msra.mxu0 0.0
  %2284 = vmatprep.subr.mxu0 0.0
  %2285 = vmatpush1.xpose.msra.mxu0 0.0
  %2286 = vmatprep.subr.mxu0 0.0
  %2287 = vmatpush1.xpose.msra.mxu0 0.0
  %2288 = vmatprep.subr.mxu0 0.0
  %2289 = vmatpush1.xpose.msra.mxu0 0.0
  %2290 = vmatprep.mubr.f32.mxu0 0.0
  %2291 = vmatmul.mubr.f32.gmra.mrb[0].mxu0 %v2131
  %v2292 = vpop.f32.mrb[0].mxu0
  %v2293 = vadd.f32 0.0, %v2292
  %v2294 = vpop.f32.mrb[0].mxu0
  %2295 = vmatprep.mubr.f32.mxu0 0.0
  %2296 = vmatmul.mubr.f32.gmra.mrb[0].mxu0 %v2134
  %v2297 = vpop.f32.mrb[0].mxu0
  %v2298 = vadd.f32 0.0, %v2297
  %v2299 = vpop.f32.mrb[0].mxu0
  %2300 = vmatprep.mubr.f32.mxu0 0.0
  %2301 = vmatmul.mubr.f32.gmra.mrb[0].mxu0 %v2137
  %v2302 = vpop.f32.mrb[0].mxu0
  %v2303 = vadd.f32 0.0, %v2302
  %v2304 = vpop.f32.mrb[0].mxu0
  %2305 = vmatprep.mubr.f32.mxu0 0.0
  %2306 = vmatmul.mubr.f32.gmra.mrb[0].mxu0 %v2140
  %v2307 = vpop.f32.mrb[0].mxu0
  %v2308 = vadd.f32 0.0, %v2307
  %v2309 = vpop.f32.mrb[0].mxu0
  %2310 = vmatprep.mubr.f32.mxu0 0.0
  %2311 = vmatmul.mubr.f32.gmra.mrb[0].mxu0 %v2143
  %v2312 = vpop.f32.mrb[0].mxu0
  %v2313 = vadd.f32 0.0, %v2312
  %v2314 = vpop.f32.mrb[0].mxu0
  %2315 = vmatprep.mubr.f32.mxu0 0.0
  %2316 = vmatmul.mubr.f32.gmra.mrb[0].mxu0 %v2146
  %v2317 = vpop.f32.mrb[0].mxu0
  %v2318 = vadd.f32 0.0, %v2317
  %v2319 = vpop.f32.mrb[0].mxu0
  %2320 = vmatprep.mubr.f32.mxu0 0.0
  %2321 = vmatmul.mubr.f32.gmra.mrb[0].mxu0 %v2149
  %v2322 = vpop.f32.mrb[0].mxu0
  %v2323 = vadd.f32 0.0, %v2322
  %v2324 = vpop.f32.mrb[0].mxu0
  %2325 = vmatprep.mubr.f32.mxu0 0.0
  %2326 = vmatmul.mubr.f32.gmra.mrb[0].mxu0 %v2152
  %v2327 = vpop.f32.mrb[0].mxu0
  %v2328 = vadd.f32 0.0, %v2327
  %v2329 = vpop.f32.mrb[0].mxu0
  %2330 = vmatprep.mubr.f32.mxu0 0.0
  %2331 = vmatmul.mubr.f32.gmra.mrb[0].mxu0 %v2155
  %v2332 = vpop.f32.mrb[0].mxu0
  %v2333 = vadd.f32 0.0, %v2332
  %v2334 = vpop.f32.mrb[0].mxu0
  %2335 = vmatprep.mubr.f32.mxu0 0.0
  %2336 = vmatmul.mubr.f32.gmra.mrb[0].mxu0 %v2158
  %v2337 = vpop.f32.mrb[0].mxu0
  %v2338 = vadd.f32 0.0, %v2337
  %v2339 = vpop.f32.mrb[0].mxu0
  %2340 = vmatprep.mubr.f32.mxu0 0.0
  %2341 = vmatmul.mubr.f32.gmra.mrb[0].mxu0 %v2161
  %v2342 = vpop.f32.mrb[0].mxu0
  %v2343 = vadd.f32 0.0, %v2342
  %v2344 = vpop.f32.mrb[0].mxu0
  %2345 = vmatprep.mubr.f32.mxu0 0.0
  %2346 = vmatmul.mubr.f32.gmra.mrb[0].mxu0 %v2164
  %v2347 = vpop.f32.mrb[0].mxu0
  %v2348 = vadd.f32 0.0, %v2347
  %v2349 = vpop.f32.mrb[0].mxu0
  %2350 = vmatprep.mubr.f32.mxu0 0.0
  %2351 = vmatmul.mubr.f32.gmra.mrb[0].mxu0 %v2167
  %v2352 = vpop.f32.mrb[0].mxu0
  %v2353 = vadd.f32 0.0, %v2352
  %v2354 = vpop.f32.mrb[0].mxu0
  %2355 = vmatprep.mubr.f32.mxu0 0.0
  %2356 = vmatmul.mubr.f32.gmra.mrb[0].mxu0 %v2170
  %v2357 = vpop.f32.mrb[0].mxu0
  %v2358 = vadd.f32 0.0, %v2357
  %v2359 = vpop.f32.mrb[0].mxu0
  %2360 = vmatprep.mubr.f32.mxu0 0.0
  %2361 = vmatmul.mubr.f32.gmra.mrb[0].mxu0 %v2173
  %v2362 = vpop.f32.mrb[0].mxu0
  %v2363 = vadd.f32 0.0, %v2362
  %v2364 = vpop.f32.mrb[0].mxu0
  %2365 = vmatprep.mubr.f32.mxu0 0.0
  %2366 = vmatmul.mubr.f32.gmra.mrb[0].mxu0 %v2176
  %v2367 = vpop.f32.mrb[0].mxu0
  %v2368 = vadd.f32 0.0, %v2367
  %v2369 = vpop.f32.mrb[0].mxu0
  %2370 = vdwg.mxu0
  %v2371 = vmul.f32 %v2293, 0.17677669
  %v2372 = vmul.f32 %v2298, 0.17677669
  %v2373 = vmul.f32 %v2303, 0.17677669
  %v2374 = vmul.f32 %v2308, 0.17677669
  %v2375 = vmul.f32 %v2313, 0.17677669
  %v2376 = vmul.f32 %v2318, 0.17677669
  %v2377 = vmul.f32 %v2323, 0.17677669
  %v2378 = vmul.f32 %v2328, 0.17677669
  %v2379 = vmul.f32 %v2333, 0.17677669
  %v2380 = vmul.f32 %v2338, 0.17677669
  %v2381 = vmul.f32 %v2343, 0.17677669
  %v2382 = vmul.f32 %v2348, 0.17677669
  %v2383 = vmul.f32 %v2353, 0.17677669
  %v2384 = vmul.f32 %v2358, 0.17677669
  %v2385 = vmul.f32 %v2363, 0.17677669
  %v2386 = vmul.f32 %v2368, 0.17677669
  %v2388 = vlaneseq
  %v2389 = vshrl.u32 %v2388, 7
  %v2390 = vsub.s32 0, %v2389
  %v2391 = vrot.slane %v1204, %v2390
  %v2393 = vadd.f32 %v2371, %v2391
  %v2394 = vadd.f32 %v2372, %v2391
  %v2395 = vadd.f32 %v2373, %v2391
  %v2396 = vadd.f32 %v2374, %v2391
  %v2397 = vadd.f32 %v2375, %v2391
  %v2398 = vadd.f32 %v2376, %v2391
  %v2399 = vadd.f32 %v2377, %v2391
  %v2400 = vadd.f32 %v2378, %v2391
  %v2401 = vadd.f32 %v2379, %v2391
  %v2402 = vadd.f32 %v2380, %v2391
  %v2403 = vadd.f32 %v2381, %v2391
  %v2404 = vadd.f32 %v2382, %v2391
  %v2405 = vadd.f32 %v2383, %v2391
  %v2406 = vadd.f32 %v2384, %v2391
  %v2407 = vadd.f32 %v2385, %v2391
  %v2408 = vadd.f32 %v2386, %v2391
  %2409 = vmax.xlane.f32.xlu0 %v2393
  %v2410 = vpop.xlane.xlu0 %2409
  %2411 = vmax.xlane.f32.xlu0 %v2394
  %v2412 = vpop.xlane.xlu0 %2411
  %2413 = vmax.xlane.f32.xlu0 %v2395
  %v2414 = vpop.xlane.xlu0 %2413
  %2415 = vmax.xlane.f32.xlu0 %v2396
  %v2416 = vpop.xlane.xlu0 %2415
  %2417 = vmax.xlane.f32.xlu0 %v2397
  %v2418 = vpop.xlane.xlu0 %2417
  %2419 = vmax.xlane.f32.xlu0 %v2398
  %v2420 = vpop.xlane.xlu0 %2419
  %2421 = vmax.xlane.f32.xlu0 %v2399
  %v2422 = vpop.xlane.xlu0 %2421
  %2423 = vmax.xlane.f32.xlu0 %v2400
  %v2424 = vpop.xlane.xlu0 %2423
  %2425 = vmax.xlane.f32.xlu0 %v2401
  %v2426 = vpop.xlane.xlu0 %2425
  %2427 = vmax.xlane.f32.xlu0 %v2402
  %v2428 = vpop.xlane.xlu0 %2427
  %2429 = vmax.xlane.f32.xlu0 %v2403
  %v2430 = vpop.xlane.xlu0 %2429
  %2431 = vmax.xlane.f32.xlu0 %v2404
  %v2432 = vpop.xlane.xlu0 %2431
  %2433 = vmax.xlane.f32.xlu0 %v2405
  %v2434 = vpop.xlane.xlu0 %2433
  %2435 = vmax.xlane.f32.xlu0 %v2406
  %v2436 = vpop.xlane.xlu0 %2435
  %2437 = vmax.xlane.f32.xlu0 %v2407
  %v2438 = vpop.xlane.xlu0 %2437
  %2439 = vmax.xlane.f32.xlu0 %v2408
  %v2440 = vpop.xlane.xlu0 %2439
  %v2441 = vsub.f32 %v2393, %v2410
  %v2442 = vsub.f32 %v2394, %v2412
  %v2443 = vsub.f32 %v2395, %v2414
  %v2444 = vsub.f32 %v2396, %v2416
  %v2445 = vsub.f32 %v2397, %v2418
  %v2446 = vsub.f32 %v2398, %v2420
  %v2447 = vsub.f32 %v2399, %v2422
  %v2448 = vsub.f32 %v2400, %v2424
  %v2449 = vsub.f32 %v2401, %v2426
  %v2450 = vsub.f32 %v2402, %v2428
  %v2451 = vsub.f32 %v2403, %v2430
  %v2452 = vsub.f32 %v2404, %v2432
  %v2453 = vsub.f32 %v2405, %v2434
  %v2454 = vsub.f32 %v2406, %v2436
  %v2455 = vsub.f32 %v2407, %v2438
  %v2456 = vsub.f32 %v2408, %v2440
  %v2457 = vmul.f32 %v2441, 1.442695
  %v2458 = vpow.pop %v2457
  %v2459 = vmul.f32 %v2442, 1.442695
  %v2460 = vpow.pop %v2459
  %v2461 = vmul.f32 %v2443, 1.442695
  %v2462 = vpow.pop %v2461
  %v2463 = vmul.f32 %v2444, 1.442695
  %v2464 = vpow.pop %v2463
  %v2465 = vmul.f32 %v2445, 1.442695
  %v2466 = vpow.pop %v2465
  %v2467 = vmul.f32 %v2446, 1.442695
  %v2468 = vpow.pop %v2467
  %v2469 = vmul.f32 %v2447, 1.442695
  %v2470 = vpow.pop %v2469
  %v2471 = vmul.f32 %v2448, 1.442695
  %v2472 = vpow.pop %v2471
  %v2473 = vmul.f32 %v2449, 1.442695
  %v2474 = vpow.pop %v2473
  %v2475 = vmul.f32 %v2450, 1.442695
  %v2476 = vpow.pop %v2475
  %v2477 = vmul.f32 %v2451, 1.442695
  %v2478 = vpow.pop %v2477
  %v2479 = vmul.f32 %v2452, 1.442695
  %v2480 = vpow.pop %v2479
  %v2481 = vmul.f32 %v2453, 1.442695
  %v2482 = vpow.pop %v2481
  %v2483 = vmul.f32 %v2454, 1.442695
  %v2484 = vpow.pop %v2483
  %v2485 = vmul.f32 %v2455, 1.442695
  %v2486 = vpow.pop %v2485
  %v2487 = vmul.f32 %v2456, 1.442695
  %v2488 = vpow.pop %v2487
  %2489 = vadd.xlane.f32.xlu0 %v2458
  %v2490 = vpop.xlane.xlu0 %2489
  %2491 = vadd.xlane.f32.xlu0 %v2460
  %v2492 = vpop.xlane.xlu0 %2491
  %2493 = vadd.xlane.f32.xlu0 %v2462
  %v2494 = vpop.xlane.xlu0 %2493
  %2495 = vadd.xlane.f32.xlu0 %v2464
  %v2496 = vpop.xlane.xlu0 %2495
  %2497 = vadd.xlane.f32.xlu0 %v2466
  %v2498 = vpop.xlane.xlu0 %2497
  %2499 = vadd.xlane.f32.xlu0 %v2468
  %v2500 = vpop.xlane.xlu0 %2499
  %2501 = vadd.xlane.f32.xlu0 %v2470
  %v2502 = vpop.xlane.xlu0 %2501
  %2503 = vadd.xlane.f32.xlu0 %v2472
  %v2504 = vpop.xlane.xlu0 %2503
  %2505 = vadd.xlane.f32.xlu0 %v2474
  %v2506 = vpop.xlane.xlu0 %2505
  %2507 = vadd.xlane.f32.xlu0 %v2476
  %v2508 = vpop.xlane.xlu0 %2507
  %2509 = vadd.xlane.f32.xlu0 %v2478
  %v2510 = vpop.xlane.xlu0 %2509
  %2511 = vadd.xlane.f32.xlu0 %v2480
  %v2512 = vpop.xlane.xlu0 %2511
  %2513 = vadd.xlane.f32.xlu0 %v2482
  %v2514 = vpop.xlane.xlu0 %2513
  %2515 = vadd.xlane.f32.xlu0 %v2484
  %v2516 = vpop.xlane.xlu0 %2515
  %2517 = vadd.xlane.f32.xlu0 %v2486
  %v2518 = vpop.xlane.xlu0 %2517
  %2519 = vadd.xlane.f32.xlu0 %v2488
  %v2520 = vpop.xlane.xlu0 %2519
  %v2521 = vrcp.pop %v2490
  %v2522 = vmul.f32 %v2458, %v2521
  %v2523 = vrcp.pop %v2492
  %v2524 = vmul.f32 %v2460, %v2523
  %v2525 = vrcp.pop %v2494
  %v2526 = vmul.f32 %v2462, %v2525
  %v2527 = vrcp.pop %v2496
  %v2528 = vmul.f32 %v2464, %v2527
  %v2529 = vrcp.pop %v2498
  %v2530 = vmul.f32 %v2466, %v2529
  %v2531 = vrcp.pop %v2500
  %v2532 = vmul.f32 %v2468, %v2531
  %v2533 = vrcp.pop %v2502
  %v2534 = vmul.f32 %v2470, %v2533
  %v2535 = vrcp.pop %v2504
  %v2536 = vmul.f32 %v2472, %v2535
  %v2537 = vrcp.pop %v2506
  %v2538 = vmul.f32 %v2474, %v2537
  %v2539 = vrcp.pop %v2508
  %v2540 = vmul.f32 %v2476, %v2539
  %v2541 = vrcp.pop %v2510
  %v2542 = vmul.f32 %v2478, %v2541
  %v2543 = vrcp.pop %v2512
  %v2544 = vmul.f32 %v2480, %v2543
  %v2545 = vrcp.pop %v2514
  %v2546 = vmul.f32 %v2482, %v2545
  %v2547 = vrcp.pop %v2516
  %v2548 = vmul.f32 %v2484, %v2547
  %v2549 = vrcp.pop %v2518
  %v2550 = vmul.f32 %v2486, %v2549
  %v2551 = vrcp.pop %v2520
  %v2552 = vmul.f32 %v2488, %v2551
  %2553 = vmatprep.subr.mxu0 0.0
  %2554 = vmatpush1.msra.mxu0 %v2052
  %2555 = vmatprep.subr.mxu0 0.0
  %2556 = vmatpush1.msra.mxu0 %v2057
  %2557 = vmatprep.subr.mxu0 0.0
  %2558 = vmatpush1.msra.mxu0 %v2062
  %2559 = vmatprep.subr.mxu0 0.0
  %2560 = vmatpush1.msra.mxu0 %v2067
  %2561 = vmatprep.subr.mxu0 0.0
  %2562 = vmatpush1.msra.mxu0 %v2072
  %2563 = vmatprep.subr.mxu0 0.0
  %2564 = vmatpush1.msra.mxu0 %v2077
  %2565 = vmatprep.subr.mxu0 0.0
  %2566 = vmatpush1.msra.mxu0 %v2082
  %2567 = vmatprep.subr.mxu0 0.0
  %2568 = vmatpush1.msra.mxu0 %v2087
  %2569 = vmatprep.subr.mxu0 0.0
  %2570 = vmatpush1.msra.mxu0 %v2092
  %2571 = vmatprep.subr.mxu0 0.0
  %2572 = vmatpush1.msra.mxu0 %v2097
  %2573 = vmatprep.subr.mxu0 0.0
  %2574 = vmatpush1.msra.mxu0 %v2102
  %2575 = vmatprep.subr.mxu0 0.0
  %2576 = vmatpush1.msra.mxu0 %v2107
  %2577 = vmatprep.subr.mxu0 0.0
  %2578 = vmatpush1.msra.mxu0 %v2112
  %2579 = vmatprep.subr.mxu0 0.0
  %2580 = vmatpush1.msra.mxu0 %v2117
  %2581 = vmatprep.subr.mxu0 0.0
  %2582 = vmatpush1.msra.mxu0 %v2122
  %2583 = vmatprep.subr.mxu0 0.0
  %2584 = vmatpush1.msra.mxu0 %v2127
  %2585 = vmatprep.subr.mxu0 0.0
  %2586 = vmatpush1.msra.mxu0 0.0
  %2587 = vmatprep.subr.mxu0 0.0
  %2588 = vmatpush1.msra.mxu0 0.0
  %2589 = vmatprep.subr.mxu0 0.0
  %2590 = vmatpush1.msra.mxu0 0.0
  %2591 = vmatprep.subr.mxu0 0.0
  %2592 = vmatpush1.msra.mxu0 0.0
  %2593 = vmatprep.subr.mxu0 0.0
  %2594 = vmatpush1.msra.mxu0 0.0
  %2595 = vmatprep.subr.mxu0 0.0
  %2596 = vmatpush1.msra.mxu0 0.0
  %2597 = vmatprep.subr.mxu0 0.0
  %2598 = vmatpush1.msra.mxu0 0.0
  %2599 = vmatprep.subr.mxu0 0.0
  %2600 = vmatpush1.msra.mxu0 0.0
  %2601 = vmatprep.subr.mxu0 0.0
  %2602 = vmatpush1.msra.mxu0 0.0
  %2603 = vmatprep.subr.mxu0 0.0
  %2604 = vmatpush1.msra.mxu0 0.0
  %2605 = vmatprep.subr.mxu0 0.0
  %2606 = vmatpush1.msra.mxu0 0.0
  %2607 = vmatprep.subr.mxu0 0.0
  %2608 = vmatpush1.msra.mxu0 0.0
  %2609 = vmatprep.subr.mxu0 0.0
  %2610 = vmatpush1.msra.mxu0 0.0
  %2611 = vmatprep.subr.mxu0 0.0
  %2612 = vmatpush1.msra.mxu0 0.0
  %2613 = vmatprep.subr.mxu0 0.0
  %2614 = vmatpush1.msra.mxu0 0.0
  %2615 = vmatprep.subr.mxu0 0.0
  %2616 = vmatpush1.msra.mxu0 0.0
  %2617 = vmatprep.mubr.f32.mxu0 0.0
  %2618 = vmatmul.mubr.f32.gmra.mrb[0].mxu0 %v2522
  %v2619 = vpop.f32.mrb[0].mxu0
  %v2620 = vadd.f32 0.0, %v2619
  %v2621 = vpop.f32.mrb[0].mxu0
  %2622 = vmatprep.mubr.f32.mxu0 0.0
  %2623 = vmatmul.mubr.f32.gmra.mrb[0].mxu0 %v2524
  %v2624 = vpop.f32.mrb[0].mxu0
  %v2625 = vadd.f32 0.0, %v2624
  %v2626 = vpop.f32.mrb[0].mxu0
  %2627 = vmatprep.mubr.f32.mxu0 0.0
  %2628 = vmatmul.mubr.f32.gmra.mrb[0].mxu0 %v2526
  %v2629 = vpop.f32.mrb[0].mxu0
  %v2630 = vadd.f32 0.0, %v2629
  %v2631 = vpop.f32.mrb[0].mxu0
  %2632 = vmatprep.mubr.f32.mxu0 0.0
  %2633 = vmatmul.mubr.f32.gmra.mrb[0].mxu0 %v2528
  %v2634 = vpop.f32.mrb[0].mxu0
  %v2635 = vadd.f32 0.0, %v2634
  %v2636 = vpop.f32.mrb[0].mxu0
  %2637 = vmatprep.mubr.f32.mxu0 0.0
  %2638 = vmatmul.mubr.f32.gmra.mrb[0].mxu0 %v2530
  %v2639 = vpop.f32.mrb[0].mxu0
  %v2640 = vadd.f32 0.0, %v2639
  %v2641 = vpop.f32.mrb[0].mxu0
  %2642 = vmatprep.mubr.f32.mxu0 0.0
  %2643 = vmatmul.mubr.f32.gmra.mrb[0].mxu0 %v2532
  %v2644 = vpop.f32.mrb[0].mxu0
  %v2645 = vadd.f32 0.0, %v2644
  %v2646 = vpop.f32.mrb[0].mxu0
  %2647 = vmatprep.mubr.f32.mxu0 0.0
  %2648 = vmatmul.mubr.f32.gmra.mrb[0].mxu0 %v2534
  %v2649 = vpop.f32.mrb[0].mxu0
  %v2650 = vadd.f32 0.0, %v2649
  %v2651 = vpop.f32.mrb[0].mxu0
  %2652 = vmatprep.mubr.f32.mxu0 0.0
  %2653 = vmatmul.mubr.f32.gmra.mrb[0].mxu0 %v2536
  %v2654 = vpop.f32.mrb[0].mxu0
  %v2655 = vadd.f32 0.0, %v2654
  %v2656 = vpop.f32.mrb[0].mxu0
  %2657 = vmatprep.mubr.f32.mxu0 0.0
  %2658 = vmatmul.mubr.f32.gmra.mrb[0].mxu0 %v2538
  %v2659 = vpop.f32.mrb[0].mxu0
  %v2660 = vadd.f32 0.0, %v2659
  %v2661 = vpop.f32.mrb[0].mxu0
  %2662 = vmatprep.mubr.f32.mxu0 0.0
  %2663 = vmatmul.mubr.f32.gmra.mrb[0].mxu0 %v2540
  %v2664 = vpop.f32.mrb[0].mxu0
  %v2665 = vadd.f32 0.0, %v2664
  %v2666 = vpop.f32.mrb[0].mxu0
  %2667 = vmatprep.mubr.f32.mxu0 0.0
  %2668 = vmatmul.mubr.f32.gmra.mrb[0].mxu0 %v2542
  %v2669 = vpop.f32.mrb[0].mxu0
  %v2670 = vadd.f32 0.0, %v2669
  %v2671 = vpop.f32.mrb[0].mxu0
  %2672 = vmatprep.mubr.f32.mxu0 0.0
  %2673 = vmatmul.mubr.f32.gmra.mrb[0].mxu0 %v2544
  %v2674 = vpop.f32.mrb[0].mxu0
  %v2675 = vadd.f32 0.0, %v2674
  %v2676 = vpop.f32.mrb[0].mxu0
  %2677 = vmatprep.mubr.f32.mxu0 0.0
  %2678 = vmatmul.mubr.f32.gmra.mrb[0].mxu0 %v2546
  %v2679 = vpop.f32.mrb[0].mxu0
  %v2680 = vadd.f32 0.0, %v2679
  %v2681 = vpop.f32.mrb[0].mxu0
  %2682 = vmatprep.mubr.f32.mxu0 0.0
  %2683 = vmatmul.mubr.f32.gmra.mrb[0].mxu0 %v2548
  %v2684 = vpop.f32.mrb[0].mxu0
  %v2685 = vadd.f32 0.0, %v2684
  %v2686 = vpop.f32.mrb[0].mxu0
  %2687 = vmatprep.mubr.f32.mxu0 0.0
  %2688 = vmatmul.mubr.f32.gmra.mrb[0].mxu0 %v2550
  %v2689 = vpop.f32.mrb[0].mxu0
  %v2690 = vadd.f32 0.0, %v2689
  %v2691 = vpop.f32.mrb[0].mxu0
  %2692 = vmatprep.mubr.f32.mxu0 0.0
  %2693 = vmatmul.mubr.f32.gmra.mrb[0].mxu0 %v2552
  %v2694 = vpop.f32.mrb[0].mxu0
  %v2695 = vadd.f32 0.0, %v2694
  %v2696 = vpop.f32.mrb[0].mxu0
  %2697 = vdwg.mxu0
  %s2698 = scalar_lea.vmem %s16, 224
  %v2699 = vld [vmem:[%s2698] sm:$0xff]
  %v2700 = vld [vmem:[%s2698 + $0x8] sm:$0xff]
  %v2701 = vld [vmem:[%s2698 + $0x10] sm:$0xff]
  %v2702 = vld [vmem:[%s2698 + $0x18] sm:$0xff]
  %s2703 = scalar_lea.vmem %s17, 7
  %v2704 = vld [vmem:[%s2703] sm:$0x1]
  %v2706 = vlaneseq
  %v2707 = vshrl.u32 %v2706, 7
  %v2708 = vsub.s32 0, %v2707
  %v2709 = vrot.slane %v2704, %v2708
  %v2712 = vsel %vm186, %v2620, 0
  %v2715 = vsel %vm186, %v2625, 0
  %v2718 = vsel %vm186, %v2630, 0
  %v2721 = vsel %vm186, %v2635, 0
  %v2724 = vsel %vm186, %v2640, 0
  %v2727 = vsel %vm186, %v2645, 0
  %v2730 = vsel %vm186, %v2650, 0
  %v2733 = vsel %vm186, %v2655, 0
  %v2736 = vsel %vm186, %v2660, 0
  %v2739 = vsel %vm186, %v2665, 0
  %v2742 = vsel %vm186, %v2670, 0
  %v2745 = vsel %vm186, %v2675, 0
  %v2748 = vsel %vm186, %v2680, 0
  %v2751 = vsel %vm186, %v2685, 0
  %v2754 = vsel %vm186, %v2690, 0
  %v2757 = vsel %vm186, %v2695, 0
  %2759 = vmatprep.subr.mxu0 0.0
  %2760 = vmatpush1.msra.mxu0 %v2699
  %2761 = vmatprep.subr.mxu0 0.0
  %2762 = vmatpush1.msra.mxu0 %v2700
  %2763 = vmatprep.subr.mxu0 0.0
  %2764 = vmatpush1.msra.mxu0 %v2701
  %2765 = vmatprep.subr.mxu0 0.0
  %2766 = vmatpush1.msra.mxu0 %v2702
  %2767 = vmatprep.subr.mxu0 0.0
  %2768 = vmatpush1.msra.mxu0 0.0
  %2769 = vmatprep.subr.mxu0 0.0
  %2770 = vmatpush1.msra.mxu0 0.0
  %2771 = vmatprep.subr.mxu0 0.0
  %2772 = vmatpush1.msra.mxu0 0.0
  %2773 = vmatprep.subr.mxu0 0.0
  %2774 = vmatpush1.msra.mxu0 0.0
  %2775 = vmatprep.subr.mxu0 0.0
  %2776 = vmatpush1.msra.mxu0 0.0
  %2777 = vmatprep.subr.mxu0 0.0
  %2778 = vmatpush1.msra.mxu0 0.0
  %2779 = vmatprep.subr.mxu0 0.0
  %2780 = vmatpush1.msra.mxu0 0.0
  %2781 = vmatprep.subr.mxu0 0.0
  %2782 = vmatpush1.msra.mxu0 0.0
  %2783 = vmatprep.subr.mxu0 0.0
  %2784 = vmatpush1.msra.mxu0 0.0
  %2785 = vmatprep.subr.mxu0 0.0
  %2786 = vmatpush1.msra.mxu0 0.0
  %2787 = vmatprep.subr.mxu0 0.0
  %2788 = vmatpush1.msra.mxu0 0.0
  %2789 = vmatprep.subr.mxu0 0.0
  %2790 = vmatpush1.msra.mxu0 0.0
  %2791 = vmatprep.subr.mxu0 0.0
  %2792 = vmatpush1.msra.mxu0 0.0
  %2793 = vmatprep.subr.mxu0 0.0
  %2794 = vmatpush1.msra.mxu0 0.0
  %2795 = vmatprep.subr.mxu0 0.0
  %2796 = vmatpush1.msra.mxu0 0.0
  %2797 = vmatprep.subr.mxu0 0.0
  %2798 = vmatpush1.msra.mxu0 0.0
  %2799 = vmatprep.subr.mxu0 0.0
  %2800 = vmatpush1.msra.mxu0 0.0
  %2801 = vmatprep.subr.mxu0 0.0
  %2802 = vmatpush1.msra.mxu0 0.0
  %2803 = vmatprep.subr.mxu0 0.0
  %2804 = vmatpush1.msra.mxu0 0.0
  %2805 = vmatprep.subr.mxu0 0.0
  %2806 = vmatpush1.msra.mxu0 0.0
  %2807 = vmatprep.subr.mxu0 0.0
  %2808 = vmatpush1.msra.mxu0 0.0
  %2809 = vmatprep.subr.mxu0 0.0
  %2810 = vmatpush1.msra.mxu0 0.0
  %2811 = vmatprep.subr.mxu0 0.0
  %2812 = vmatpush1.msra.mxu0 0.0
  %2813 = vmatprep.subr.mxu0 0.0
  %2814 = vmatpush1.msra.mxu0 0.0
  %2815 = vmatprep.subr.mxu0 0.0
  %2816 = vmatpush1.msra.mxu0 0.0
  %2817 = vmatprep.subr.mxu0 0.0
  %2818 = vmatpush1.msra.mxu0 0.0
  %2819 = vmatprep.subr.mxu0 0.0
  %2820 = vmatpush1.msra.mxu0 0.0
  %2821 = vmatprep.subr.mxu0 0.0
  %2822 = vmatpush1.msra.mxu0 0.0
  %2823 = vmatprep.mubr.f32.mxu0 0.0
  %2824 = vmatmul.mubr.f32.gmra.mrb[0].mxu0 %v2712
  %v2825 = vpop.f32.mrb[0].mxu0
  %v2826 = vadd.f32 %v2709, %v2825
  %v2827 = vpop.f32.mrb[0].mxu0
  %2828 = vmatprep.mubr.f32.mxu0 0.0
  %2829 = vmatmul.mubr.f32.gmra.mrb[0].mxu0 %v2715
  %v2830 = vpop.f32.mrb[0].mxu0
  %v2831 = vadd.f32 %v2709, %v2830
  %v2832 = vpop.f32.mrb[0].mxu0
  %2833 = vmatprep.mubr.f32.mxu0 0.0
  %2834 = vmatmul.mubr.f32.gmra.mrb[0].mxu0 %v2718
  %v2835 = vpop.f32.mrb[0].mxu0
  %v2836 = vadd.f32 %v2709, %v2835
  %v2837 = vpop.f32.mrb[0].mxu0
  %2838 = vmatprep.mubr.f32.mxu0 0.0
  %2839 = vmatmul.mubr.f32.gmra.mrb[0].mxu0 %v2721
  %v2840 = vpop.f32.mrb[0].mxu0
  %v2841 = vadd.f32 %v2709, %v2840
  %v2842 = vpop.f32.mrb[0].mxu0
  %2843 = vmatprep.mubr.f32.mxu0 0.0
  %2844 = vmatmul.mubr.f32.gmra.mrb[0].mxu0 %v2724
  %v2845 = vpop.f32.mrb[0].mxu0
  %v2846 = vadd.f32 %v2709, %v2845
  %v2847 = vpop.f32.mrb[0].mxu0
  %2848 = vmatprep.mubr.f32.mxu0 0.0
  %2849 = vmatmul.mubr.f32.gmra.mrb[0].mxu0 %v2727
  %v2850 = vpop.f32.mrb[0].mxu0
  %v2851 = vadd.f32 %v2709, %v2850
  %v2852 = vpop.f32.mrb[0].mxu0
  %2853 = vmatprep.mubr.f32.mxu0 0.0
  %2854 = vmatmul.mubr.f32.gmra.mrb[0].mxu0 %v2730
  %v2855 = vpop.f32.mrb[0].mxu0
  %v2856 = vadd.f32 %v2709, %v2855
  %v2857 = vpop.f32.mrb[0].mxu0
  %2858 = vmatprep.mubr.f32.mxu0 0.0
  %2859 = vmatmul.mubr.f32.gmra.mrb[0].mxu0 %v2733
  %v2860 = vpop.f32.mrb[0].mxu0
  %v2861 = vadd.f32 %v2709, %v2860
  %v2862 = vpop.f32.mrb[0].mxu0
  %2863 = vmatprep.mubr.f32.mxu0 0.0
  %2864 = vmatmul.mubr.f32.gmra.mrb[0].mxu0 %v2736
  %v2865 = vpop.f32.mrb[0].mxu0
  %v2866 = vadd.f32 %v2709, %v2865
  %v2867 = vpop.f32.mrb[0].mxu0
  %2868 = vmatprep.mubr.f32.mxu0 0.0
  %2869 = vmatmul.mubr.f32.gmra.mrb[0].mxu0 %v2739
  %v2870 = vpop.f32.mrb[0].mxu0
  %v2871 = vadd.f32 %v2709, %v2870
  %v2872 = vpop.f32.mrb[0].mxu0
  %2873 = vmatprep.mubr.f32.mxu0 0.0
  %2874 = vmatmul.mubr.f32.gmra.mrb[0].mxu0 %v2742
  %v2875 = vpop.f32.mrb[0].mxu0
  %v2876 = vadd.f32 %v2709, %v2875
  %v2877 = vpop.f32.mrb[0].mxu0
  %2878 = vmatprep.mubr.f32.mxu0 0.0
  %2879 = vmatmul.mubr.f32.gmra.mrb[0].mxu0 %v2745
  %v2880 = vpop.f32.mrb[0].mxu0
  %v2881 = vadd.f32 %v2709, %v2880
  %v2882 = vpop.f32.mrb[0].mxu0
  %2883 = vmatprep.mubr.f32.mxu0 0.0
  %2884 = vmatmul.mubr.f32.gmra.mrb[0].mxu0 %v2748
  %v2885 = vpop.f32.mrb[0].mxu0
  %v2886 = vadd.f32 %v2709, %v2885
  %v2887 = vpop.f32.mrb[0].mxu0
  %2888 = vmatprep.mubr.f32.mxu0 0.0
  %2889 = vmatmul.mubr.f32.gmra.mrb[0].mxu0 %v2751
  %v2890 = vpop.f32.mrb[0].mxu0
  %v2891 = vadd.f32 %v2709, %v2890
  %v2892 = vpop.f32.mrb[0].mxu0
  %2893 = vmatprep.mubr.f32.mxu0 0.0
  %2894 = vmatmul.mubr.f32.gmra.mrb[0].mxu0 %v2754
  %v2895 = vpop.f32.mrb[0].mxu0
  %v2896 = vadd.f32 %v2709, %v2895
  %v2897 = vpop.f32.mrb[0].mxu0
  %2898 = vmatprep.mubr.f32.mxu0 0.0
  %2899 = vmatmul.mubr.f32.gmra.mrb[0].mxu0 %v2757
  %v2900 = vpop.f32.mrb[0].mxu0
  %v2901 = vadd.f32 %v2709, %v2900
  %v2902 = vpop.f32.mrb[0].mxu0
  %2903 = vdwg.mxu0
  %v2904 = vadd.f32 %v1528, %v2826
  %v2905 = vadd.f32 %v1529, %v2831
  %v2906 = vadd.f32 %v1530, %v2836
  %v2907 = vadd.f32 %v1531, %v2841
  %v2908 = vadd.f32 %v1532, %v2846
  %v2909 = vadd.f32 %v1533, %v2851
  %v2910 = vadd.f32 %v1534, %v2856
  %v2911 = vadd.f32 %v1535, %v2861
  %v2912 = vadd.f32 %v1536, %v2866
  %v2913 = vadd.f32 %v1537, %v2871
  %v2914 = vadd.f32 %v1538, %v2876
  %v2915 = vadd.f32 %v1539, %v2881
  %v2916 = vadd.f32 %v1540, %v2886
  %v2917 = vadd.f32 %v1541, %v2891
  %v2918 = vadd.f32 %v1542, %v2896
  %v2919 = vadd.f32 %v1543, %v2901
  %s2920 = scalar_lea.vmem %s18, 4
  %v2921 = vld [vmem:[%s2920] sm:$0x1]
  %s2922 = scalar_lea.vmem %s18, 5
  %v2923 = vld [vmem:[%s2922] sm:$0x1]
  %v2924 = vsel %vm186, %v2904, 0.0
  %2925 = vadd.xlane.f32.xlu0 %v2924
  %v2926 = vpop.xlane.xlu0 %2925
  %v2927 = vsel %vm186, %v2905, 0.0
  %2928 = vadd.xlane.f32.xlu0 %v2927
  %v2929 = vpop.xlane.xlu0 %2928
  %v2930 = vsel %vm186, %v2906, 0.0
  %2931 = vadd.xlane.f32.xlu0 %v2930
  %v2932 = vpop.xlane.xlu0 %2931
  %v2933 = vsel %vm186, %v2907, 0.0
  %2934 = vadd.xlane.f32.xlu0 %v2933
  %v2935 = vpop.xlane.xlu0 %2934
  %v2936 = vsel %vm186, %v2908, 0.0
  %2937 = vadd.xlane.f32.xlu0 %v2936
  %v2938 = vpop.xlane.xlu0 %2937
  %v2939 = vsel %vm186, %v2909, 0.0
  %2940 = vadd.xlane.f32.xlu0 %v2939
  %v2941 = vpop.xlane.xlu0 %2940
  %v2942 = vsel %vm186, %v2910, 0.0
  %2943 = vadd.xlane.f32.xlu0 %v2942
  %v2944 = vpop.xlane.xlu0 %2943
  %v2945 = vsel %vm186, %v2911, 0.0
  %2946 = vadd.xlane.f32.xlu0 %v2945
  %v2947 = vpop.xlane.xlu0 %2946
  %v2948 = vsel %vm186, %v2912, 0.0
  %2949 = vadd.xlane.f32.xlu0 %v2948
  %v2950 = vpop.xlane.xlu0 %2949
  %v2951 = vsel %vm186, %v2913, 0.0
  %2952 = vadd.xlane.f32.xlu0 %v2951
  %v2953 = vpop.xlane.xlu0 %2952
  %v2954 = vsel %vm186, %v2914, 0.0
  %2955 = vadd.xlane.f32.xlu0 %v2954
  %v2956 = vpop.xlane.xlu0 %2955
  %v2957 = vsel %vm186, %v2915, 0.0
  %2958 = vadd.xlane.f32.xlu0 %v2957
  %v2959 = vpop.xlane.xlu0 %2958
  %v2960 = vsel %vm186, %v2916, 0.0
  %2961 = vadd.xlane.f32.xlu0 %v2960
  %v2962 = vpop.xlane.xlu0 %2961
  %v2963 = vsel %vm186, %v2917, 0.0
  %2964 = vadd.xlane.f32.xlu0 %v2963
  %v2965 = vpop.xlane.xlu0 %2964
  %v2966 = vsel %vm186, %v2918, 0.0
  %2967 = vadd.xlane.f32.xlu0 %v2966
  %v2968 = vpop.xlane.xlu0 %2967
  %v2969 = vsel %vm186, %v2919, 0.0
  %2970 = vadd.xlane.f32.xlu0 %v2969
  %v2971 = vpop.xlane.xlu0 %2970
  %v2972 = vmul.f32 %v2926, %v755
  %v2973 = vmul.f32 %v2929, %v755
  %v2974 = vmul.f32 %v2932, %v755
  %v2975 = vmul.f32 %v2935, %v755
  %v2976 = vmul.f32 %v2938, %v755
  %v2977 = vmul.f32 %v2941, %v755
  %v2978 = vmul.f32 %v2944, %v755
  %v2979 = vmul.f32 %v2947, %v755
  %v2980 = vmul.f32 %v2950, %v755
  %v2981 = vmul.f32 %v2953, %v755
  %v2982 = vmul.f32 %v2956, %v755
  %v2983 = vmul.f32 %v2959, %v755
  %v2984 = vmul.f32 %v2962, %v755
  %v2985 = vmul.f32 %v2965, %v755
  %v2986 = vmul.f32 %v2968, %v755
  %v2987 = vmul.f32 %v2971, %v755
  %v2988 = vsub.f32 %v2904, %v2972
  %v2989 = vsub.f32 %v2905, %v2973
  %v2990 = vsub.f32 %v2906, %v2974
  %v2991 = vsub.f32 %v2907, %v2975
  %v2992 = vsub.f32 %v2908, %v2976
  %v2993 = vsub.f32 %v2909, %v2977
  %v2994 = vsub.f32 %v2910, %v2978
  %v2995 = vsub.f32 %v2911, %v2979
  %v2996 = vsub.f32 %v2912, %v2980
  %v2997 = vsub.f32 %v2913, %v2981
  %v2998 = vsub.f32 %v2914, %v2982
  %v2999 = vsub.f32 %v2915, %v2983
  %v3000 = vsub.f32 %v2916, %v2984
  %v3001 = vsub.f32 %v2917, %v2985
  %v3002 = vsub.f32 %v2918, %v2986
  %v3003 = vsub.f32 %v2919, %v2987
  %v3004 = vmul.f32 %v2988, %v2988
  %v3005 = vmul.f32 %v2989, %v2989
  %v3006 = vmul.f32 %v2990, %v2990
  %v3007 = vmul.f32 %v2991, %v2991
  %v3008 = vmul.f32 %v2992, %v2992
  %v3009 = vmul.f32 %v2993, %v2993
  %v3010 = vmul.f32 %v2994, %v2994
  %v3011 = vmul.f32 %v2995, %v2995
  %v3012 = vmul.f32 %v2996, %v2996
  %v3013 = vmul.f32 %v2997, %v2997
  %v3014 = vmul.f32 %v2998, %v2998
  %v3015 = vmul.f32 %v2999, %v2999
  %v3016 = vmul.f32 %v3000, %v3000
  %v3017 = vmul.f32 %v3001, %v3001
  %v3018 = vmul.f32 %v3002, %v3002
  %v3019 = vmul.f32 %v3003, %v3003
  %v3020 = vsel %vm186, %v3004, 0.0
  %3021 = vadd.xlane.f32.xlu0 %v3020
  %v3022 = vpop.xlane.xlu0 %3021
  %v3023 = vsel %vm186, %v3005, 0.0
  %3024 = vadd.xlane.f32.xlu0 %v3023
  %v3025 = vpop.xlane.xlu0 %3024
  %v3026 = vsel %vm186, %v3006, 0.0
  %3027 = vadd.xlane.f32.xlu0 %v3026
  %v3028 = vpop.xlane.xlu0 %3027
  %v3029 = vsel %vm186, %v3007, 0.0
  %3030 = vadd.xlane.f32.xlu0 %v3029
  %v3031 = vpop.xlane.xlu0 %3030
  %v3032 = vsel %vm186, %v3008, 0.0
  %3033 = vadd.xlane.f32.xlu0 %v3032
  %v3034 = vpop.xlane.xlu0 %3033
  %v3035 = vsel %vm186, %v3009, 0.0
  %3036 = vadd.xlane.f32.xlu0 %v3035
  %v3037 = vpop.xlane.xlu0 %3036
  %v3038 = vsel %vm186, %v3010, 0.0
  %3039 = vadd.xlane.f32.xlu0 %v3038
  %v3040 = vpop.xlane.xlu0 %3039
  %v3041 = vsel %vm186, %v3011, 0.0
  %3042 = vadd.xlane.f32.xlu0 %v3041
  %v3043 = vpop.xlane.xlu0 %3042
  %v3044 = vsel %vm186, %v3012, 0.0
  %3045 = vadd.xlane.f32.xlu0 %v3044
  %v3046 = vpop.xlane.xlu0 %3045
  %v3047 = vsel %vm186, %v3013, 0.0
  %3048 = vadd.xlane.f32.xlu0 %v3047
  %v3049 = vpop.xlane.xlu0 %3048
  %v3050 = vsel %vm186, %v3014, 0.0
  %3051 = vadd.xlane.f32.xlu0 %v3050
  %v3052 = vpop.xlane.xlu0 %3051
  %v3053 = vsel %vm186, %v3015, 0.0
  %3054 = vadd.xlane.f32.xlu0 %v3053
  %v3055 = vpop.xlane.xlu0 %3054
  %v3056 = vsel %vm186, %v3016, 0.0
  %3057 = vadd.xlane.f32.xlu0 %v3056
  %v3058 = vpop.xlane.xlu0 %3057
  %v3059 = vsel %vm186, %v3017, 0.0
  %3060 = vadd.xlane.f32.xlu0 %v3059
  %v3061 = vpop.xlane.xlu0 %3060
  %v3062 = vsel %vm186, %v3018, 0.0
  %3063 = vadd.xlane.f32.xlu0 %v3062
  %v3064 = vpop.xlane.xlu0 %3063
  %v3065 = vsel %vm186, %v3019, 0.0
  %3066 = vadd.xlane.f32.xlu0 %v3065
  %v3067 = vpop.xlane.xlu0 %3066
  %v3068 = vmul.f32 %v3022, %v755
  %v3069 = vmul.f32 %v3025, %v755
  %v3070 = vmul.f32 %v3028, %v755
  %v3071 = vmul.f32 %v3031, %v755
  %v3072 = vmul.f32 %v3034, %v755
  %v3073 = vmul.f32 %v3037, %v755
  %v3074 = vmul.f32 %v3040, %v755
  %v3075 = vmul.f32 %v3043, %v755
  %v3076 = vmul.f32 %v3046, %v755
  %v3077 = vmul.f32 %v3049, %v755
  %v3078 = vmul.f32 %v3052, %v755
  %v3079 = vmul.f32 %v3055, %v755
  %v3080 = vmul.f32 %v3058, %v755
  %v3081 = vmul.f32 %v3061, %v755
  %v3082 = vmul.f32 %v3064, %v755
  %v3083 = vmul.f32 %v3067, %v755
  %v3084 = vadd.f32 %v3068, 1e-05
  %v3085 = vadd.f32 %v3069, 1e-05
  %v3086 = vadd.f32 %v3070, 1e-05
  %v3087 = vadd.f32 %v3071, 1e-05
  %v3088 = vadd.f32 %v3072, 1e-05
  %v3089 = vadd.f32 %v3073, 1e-05
  %v3090 = vadd.f32 %v3074, 1e-05
  %v3091 = vadd.f32 %v3075, 1e-05
  %v3092 = vadd.f32 %v3076, 1e-05
  %v3093 = vadd.f32 %v3077, 1e-05
  %v3094 = vadd.f32 %v3078, 1e-05
  %v3095 = vadd.f32 %v3079, 1e-05
  %v3096 = vadd.f32 %v3080, 1e-05
  %v3097 = vadd.f32 %v3081, 1e-05
  %v3098 = vadd.f32 %v3082, 1e-05
  %v3099 = vadd.f32 %v3083, 1e-05
  %v3100 = vrsqrt.pop %v3084
  %v3101 = vrsqrt.pop %v3085
  %v3102 = vrsqrt.pop %v3086
  %v3103 = vrsqrt.pop %v3087
  %v3104 = vrsqrt.pop %v3088
  %v3105 = vrsqrt.pop %v3089
  %v3106 = vrsqrt.pop %v3090
  %v3107 = vrsqrt.pop %v3091
  %v3108 = vrsqrt.pop %v3092
  %v3109 = vrsqrt.pop %v3093
  %v3110 = vrsqrt.pop %v3094
  %v3111 = vrsqrt.pop %v3095
  %v3112 = vrsqrt.pop %v3096
  %v3113 = vrsqrt.pop %v3097
  %v3114 = vrsqrt.pop %v3098
  %v3115 = vrsqrt.pop %v3099
  %v3116 = vmul.f32 %v2988, %v3100
  %v3117 = vmul.f32 %v2989, %v3101
  %v3118 = vmul.f32 %v2990, %v3102
  %v3119 = vmul.f32 %v2991, %v3103
  %v3120 = vmul.f32 %v2992, %v3104
  %v3121 = vmul.f32 %v2993, %v3105
  %v3122 = vmul.f32 %v2994, %v3106
  %v3123 = vmul.f32 %v2995, %v3107
  %v3124 = vmul.f32 %v2996, %v3108
  %v3125 = vmul.f32 %v2997, %v3109
  %v3126 = vmul.f32 %v2998, %v3110
  %v3127 = vmul.f32 %v2999, %v3111
  %v3128 = vmul.f32 %v3000, %v3112
  %v3129 = vmul.f32 %v3001, %v3113
  %v3130 = vmul.f32 %v3002, %v3114
  %v3131 = vmul.f32 %v3003, %v3115
  %v3133 = vlaneseq
  %v3134 = vshrl.u32 %v3133, 7
  %v3135 = vsub.s32 0, %v3134
  %v3136 = vrot.slane %v2921, %v3135
  %v3138 = vmul.f32 %v3116, %v3136
  %v3139 = vmul.f32 %v3117, %v3136
  %v3140 = vmul.f32 %v3118, %v3136
  %v3141 = vmul.f32 %v3119, %v3136
  %v3142 = vmul.f32 %v3120, %v3136
  %v3143 = vmul.f32 %v3121, %v3136
  %v3144 = vmul.f32 %v3122, %v3136
  %v3145 = vmul.f32 %v3123, %v3136
  %v3146 = vmul.f32 %v3124, %v3136
  %v3147 = vmul.f32 %v3125, %v3136
  %v3148 = vmul.f32 %v3126, %v3136
  %v3149 = vmul.f32 %v3127, %v3136
  %v3150 = vmul.f32 %v3128, %v3136
  %v3151 = vmul.f32 %v3129, %v3136
  %v3152 = vmul.f32 %v3130, %v3136
  %v3153 = vmul.f32 %v3131, %v3136
  %v3155 = vlaneseq
  %v3156 = vshrl.u32 %v3155, 7
  %v3157 = vsub.s32 0, %v3156
  %v3158 = vrot.slane %v2923, %v3157
  %v3160 = vadd.f32 %v3138, %v3158
  %v3161 = vadd.f32 %v3139, %v3158
  %v3162 = vadd.f32 %v3140, %v3158
  %v3163 = vadd.f32 %v3141, %v3158
  %v3164 = vadd.f32 %v3142, %v3158
  %v3165 = vadd.f32 %v3143, %v3158
  %v3166 = vadd.f32 %v3144, %v3158
  %v3167 = vadd.f32 %v3145, %v3158
  %v3168 = vadd.f32 %v3146, %v3158
  %v3169 = vadd.f32 %v3147, %v3158
  %v3170 = vadd.f32 %v3148, %v3158
  %v3171 = vadd.f32 %v3149, %v3158
  %v3172 = vadd.f32 %v3150, %v3158
  %v3173 = vadd.f32 %v3151, %v3158
  %v3174 = vadd.f32 %v3152, %v3158
  %v3175 = vadd.f32 %v3153, %v3158
  %s3176 = scalar_lea.vmem %s19, 32
  %v3177 = vld [vmem:[%s3176] sm:$0xff]
  %v3178 = vld [vmem:[%s3176 + $0x8] sm:$0xff]
  %v3179 = vld [vmem:[%s3176 + $0x10] sm:$0xff]
  %v3180 = vld [vmem:[%s3176 + $0x18] sm:$0xff]
  %s3181 = scalar_lea.vmem %s20, 1
  %v3182 = vld [vmem:[%s3181] sm:$0x1]
  %v3184 = vlaneseq
  %v3185 = vshrl.u32 %v3184, 7
  %v3186 = vsub.s32 0, %v3185
  %v3187 = vrot.slane %v3182, %v3186
  %v3190 = vsel %vm186, %v3160, 0
  %v3193 = vsel %vm186, %v3161, 0
  %v3196 = vsel %vm186, %v3162, 0
  %v3199 = vsel %vm186, %v3163, 0
  %v3202 = vsel %vm186, %v3164, 0
  %v3205 = vsel %vm186, %v3165, 0
  %v3208 = vsel %vm186, %v3166, 0
  %v3211 = vsel %vm186, %v3167, 0
  %v3214 = vsel %vm186, %v3168, 0
  %v3217 = vsel %vm186, %v3169, 0
  %v3220 = vsel %vm186, %v3170, 0
  %v3223 = vsel %vm186, %v3171, 0
  %v3226 = vsel %vm186, %v3172, 0
  %v3229 = vsel %vm186, %v3173, 0
  %v3232 = vsel %vm186, %v3174, 0
  %v3235 = vsel %vm186, %v3175, 0
  %3237 = vmatprep.subr.mxu0 0.0
  %3238 = vmatpush1.msra.mxu0 %v3177
  %3239 = vmatprep.subr.mxu0 0.0
  %3240 = vmatpush1.msra.mxu0 %v3178
  %3241 = vmatprep.subr.mxu0 0.0
  %3242 = vmatpush1.msra.mxu0 %v3179
  %3243 = vmatprep.subr.mxu0 0.0
  %3244 = vmatpush1.msra.mxu0 %v3180
  %3245 = vmatprep.subr.mxu0 0.0
  %3246 = vmatpush1.msra.mxu0 0.0
  %3247 = vmatprep.subr.mxu0 0.0
  %3248 = vmatpush1.msra.mxu0 0.0
  %3249 = vmatprep.subr.mxu0 0.0
  %3250 = vmatpush1.msra.mxu0 0.0
  %3251 = vmatprep.subr.mxu0 0.0
  %3252 = vmatpush1.msra.mxu0 0.0
  %3253 = vmatprep.subr.mxu0 0.0
  %3254 = vmatpush1.msra.mxu0 0.0
  %3255 = vmatprep.subr.mxu0 0.0
  %3256 = vmatpush1.msra.mxu0 0.0
  %3257 = vmatprep.subr.mxu0 0.0
  %3258 = vmatpush1.msra.mxu0 0.0
  %3259 = vmatprep.subr.mxu0 0.0
  %3260 = vmatpush1.msra.mxu0 0.0
  %3261 = vmatprep.subr.mxu0 0.0
  %3262 = vmatpush1.msra.mxu0 0.0
  %3263 = vmatprep.subr.mxu0 0.0
  %3264 = vmatpush1.msra.mxu0 0.0
  %3265 = vmatprep.subr.mxu0 0.0
  %3266 = vmatpush1.msra.mxu0 0.0
  %3267 = vmatprep.subr.mxu0 0.0
  %3268 = vmatpush1.msra.mxu0 0.0
  %3269 = vmatprep.subr.mxu0 0.0
  %3270 = vmatpush1.msra.mxu0 0.0
  %3271 = vmatprep.subr.mxu0 0.0
  %3272 = vmatpush1.msra.mxu0 0.0
  %3273 = vmatprep.subr.mxu0 0.0
  %3274 = vmatpush1.msra.mxu0 0.0
  %3275 = vmatprep.subr.mxu0 0.0
  %3276 = vmatpush1.msra.mxu0 0.0
  %3277 = vmatprep.subr.mxu0 0.0
  %3278 = vmatpush1.msra.mxu0 0.0
  %3279 = vmatprep.subr.mxu0 0.0
  %3280 = vmatpush1.msra.mxu0 0.0
  %3281 = vmatprep.subr.mxu0 0.0
  %3282 = vmatpush1.msra.mxu0 0.0
  %3283 = vmatprep.subr.mxu0 0.0
  %3284 = vmatpush1.msra.mxu0 0.0
  %3285 = vmatprep.subr.mxu0 0.0
  %3286 = vmatpush1.msra.mxu0 0.0
  %3287 = vmatprep.subr.mxu0 0.0
  %3288 = vmatpush1.msra.mxu0 0.0
  %3289 = vmatprep.subr.mxu0 0.0
  %3290 = vmatpush1.msra.mxu0 0.0
  %3291 = vmatprep.subr.mxu0 0.0
  %3292 = vmatpush1.msra.mxu0 0.0
  %3293 = vmatprep.subr.mxu0 0.0
  %3294 = vmatpush1.msra.mxu0 0.0
  %3295 = vmatprep.subr.mxu0 0.0
  %3296 = vmatpush1.msra.mxu0 0.0
  %3297 = vmatprep.subr.mxu0 0.0
  %3298 = vmatpush1.msra.mxu0 0.0
  %3299 = vmatprep.subr.mxu0 0.0
  %3300 = vmatpush1.msra.mxu0 0.0
  %3301 = vmatprep.mubr.f32.mxu0 0.0
  %3302 = vmatmul.mubr.f32.gmra.mrb[0].mxu0 %v3190
  %v3303 = vpop.f32.mrb[0].mxu0
  %v3304 = vadd.f32 %v3187, %v3303
  %v3305 = vpop.f32.mrb[0].mxu0
  %3306 = vmatprep.mubr.f32.mxu0 0.0
  %3307 = vmatmul.mubr.f32.gmra.mrb[0].mxu0 %v3193
  %v3308 = vpop.f32.mrb[0].mxu0
  %v3309 = vadd.f32 %v3187, %v3308
  %v3310 = vpop.f32.mrb[0].mxu0
  %3311 = vmatprep.mubr.f32.mxu0 0.0
  %3312 = vmatmul.mubr.f32.gmra.mrb[0].mxu0 %v3196
  %v3313 = vpop.f32.mrb[0].mxu0
  %v3314 = vadd.f32 %v3187, %v3313
  %v3315 = vpop.f32.mrb[0].mxu0
  %3316 = vmatprep.mubr.f32.mxu0 0.0
  %3317 = vmatmul.mubr.f32.gmra.mrb[0].mxu0 %v3199
  %v3318 = vpop.f32.mrb[0].mxu0
  %v3319 = vadd.f32 %v3187, %v3318
  %v3320 = vpop.f32.mrb[0].mxu0
  %3321 = vmatprep.mubr.f32.mxu0 0.0
  %3322 = vmatmul.mubr.f32.gmra.mrb[0].mxu0 %v3202
  %v3323 = vpop.f32.mrb[0].mxu0
  %v3324 = vadd.f32 %v3187, %v3323
  %v3325 = vpop.f32.mrb[0].mxu0
  %3326 = vmatprep.mubr.f32.mxu0 0.0
  %3327 = vmatmul.mubr.f32.gmra.mrb[0].mxu0 %v3205
  %v3328 = vpop.f32.mrb[0].mxu0
  %v3329 = vadd.f32 %v3187, %v3328
  %v3330 = vpop.f32.mrb[0].mxu0
  %3331 = vmatprep.mubr.f32.mxu0 0.0
  %3332 = vmatmul.mubr.f32.gmra.mrb[0].mxu0 %v3208
  %v3333 = vpop.f32.mrb[0].mxu0
  %v3334 = vadd.f32 %v3187, %v3333
  %v3335 = vpop.f32.mrb[0].mxu0
  %3336 = vmatprep.mubr.f32.mxu0 0.0
  %3337 = vmatmul.mubr.f32.gmra.mrb[0].mxu0 %v3211
  %v3338 = vpop.f32.mrb[0].mxu0
  %v3339 = vadd.f32 %v3187, %v3338
  %v3340 = vpop.f32.mrb[0].mxu0
  %3341 = vmatprep.mubr.f32.mxu0 0.0
  %3342 = vmatmul.mubr.f32.gmra.mrb[0].mxu0 %v3214
  %v3343 = vpop.f32.mrb[0].mxu0
  %v3344 = vadd.f32 %v3187, %v3343
  %v3345 = vpop.f32.mrb[0].mxu0
  %3346 = vmatprep.mubr.f32.mxu0 0.0
  %3347 = vmatmul.mubr.f32.gmra.mrb[0].mxu0 %v3217
  %v3348 = vpop.f32.mrb[0].mxu0
  %v3349 = vadd.f32 %v3187, %v3348
  %v3350 = vpop.f32.mrb[0].mxu0
  %3351 = vmatprep.mubr.f32.mxu0 0.0
  %3352 = vmatmul.mubr.f32.gmra.mrb[0].mxu0 %v3220
  %v3353 = vpop.f32.mrb[0].mxu0
  %v3354 = vadd.f32 %v3187, %v3353
  %v3355 = vpop.f32.mrb[0].mxu0
  %3356 = vmatprep.mubr.f32.mxu0 0.0
  %3357 = vmatmul.mubr.f32.gmra.mrb[0].mxu0 %v3223
  %v3358 = vpop.f32.mrb[0].mxu0
  %v3359 = vadd.f32 %v3187, %v3358
  %v3360 = vpop.f32.mrb[0].mxu0
  %3361 = vmatprep.mubr.f32.mxu0 0.0
  %3362 = vmatmul.mubr.f32.gmra.mrb[0].mxu0 %v3226
  %v3363 = vpop.f32.mrb[0].mxu0
  %v3364 = vadd.f32 %v3187, %v3363
  %v3365 = vpop.f32.mrb[0].mxu0
  %3366 = vmatprep.mubr.f32.mxu0 0.0
  %3367 = vmatmul.mubr.f32.gmra.mrb[0].mxu0 %v3229
  %v3368 = vpop.f32.mrb[0].mxu0
  %v3369 = vadd.f32 %v3187, %v3368
  %v3370 = vpop.f32.mrb[0].mxu0
  %3371 = vmatprep.mubr.f32.mxu0 0.0
  %3372 = vmatmul.mubr.f32.gmra.mrb[0].mxu0 %v3232
  %v3373 = vpop.f32.mrb[0].mxu0
  %v3374 = vadd.f32 %v3187, %v3373
  %v3375 = vpop.f32.mrb[0].mxu0
  %3376 = vmatprep.mubr.f32.mxu0 0.0
  %3377 = vmatmul.mubr.f32.gmra.mrb[0].mxu0 %v3235
  %v3378 = vpop.f32.mrb[0].mxu0
  %v3379 = vadd.f32 %v3187, %v3378
  %v3380 = vpop.f32.mrb[0].mxu0
  %3381 = vdwg.mxu0
  %v3382 = vmax.f32 %v3304, 0.0
  %v3383 = vmax.f32 %v3309, 0.0
  %v3384 = vmax.f32 %v3314, 0.0
  %v3385 = vmax.f32 %v3319, 0.0
  %v3386 = vmax.f32 %v3324, 0.0
  %v3387 = vmax.f32 %v3329, 0.0
  %v3388 = vmax.f32 %v3334, 0.0
  %v3389 = vmax.f32 %v3339, 0.0
  %v3390 = vmax.f32 %v3344, 0.0
  %v3391 = vmax.f32 %v3349, 0.0
  %v3392 = vmax.f32 %v3354, 0.0
  %v3393 = vmax.f32 %v3359, 0.0
  %v3394 = vmax.f32 %v3364, 0.0
  %v3395 = vmax.f32 %v3369, 0.0
  %v3396 = vmax.f32 %v3374, 0.0
  %v3397 = vmax.f32 %v3379, 0.0
  %s3398 = scalar_lea.vmem %s21, 64
  %v3399 = vld [vmem:[%s3398] sm:$0xff]
  %v3400 = vld [vmem:[%s3398 + $0x8] sm:$0xff]
  %v3401 = vld [vmem:[%s3398 + $0x10] sm:$0xff]
  %v3402 = vld [vmem:[%s3398 + $0x18] sm:$0xff]
  %v3403 = vld [vmem:[%s3398 + $0x20] sm:$0xff]
  %v3404 = vld [vmem:[%s3398 + $0x28] sm:$0xff]
  %v3405 = vld [vmem:[%s3398 + $0x30] sm:$0xff]
  %v3406 = vld [vmem:[%s3398 + $0x38] sm:$0xff]
  %s3407 = scalar_lea.vmem %s22, 1
  %v3408 = vld [vmem:[%s3407] sm:$0x1]
  %v3410 = vlaneseq
  %v3411 = vshrl.u32 %v3410, 7
  %v3412 = vsub.s32 0, %v3411
  %v3413 = vrot.slane %v3408, %v3412
  %v3416 = vsel %vm901, %v3382, 0
  %v3419 = vsel %vm901, %v3383, 0
  %v3422 = vsel %vm901, %v3384, 0
  %v3425 = vsel %vm901, %v3385, 0
  %v3428 = vsel %vm901, %v3386, 0
  %v3431 = vsel %vm901, %v3387, 0
  %v3434 = vsel %vm901, %v3388, 0
  %v3437 = vsel %vm901, %v3389, 0
  %v3440 = vsel %vm901, %v3390, 0
  %v3443 = vsel %vm901, %v3391, 0
  %v3446 = vsel %vm901, %v3392, 0
  %v3449 = vsel %vm901, %v3393, 0
  %v3452 = vsel %vm901, %v3394, 0
  %v3455 = vsel %vm901, %v3395, 0
  %v3458 = vsel %vm901, %v3396, 0
  %v3461 = vsel %vm901, %v3397, 0
  %3463 = vmatprep.subr.mxu0 0.0
  %3464 = vmatpush1.msra.mxu0 %v3399
  %3465 = vmatprep.subr.mxu0 0.0
  %3466 = vmatpush1.msra.mxu0 %v3400
  %3467 = vmatprep.subr.mxu0 0.0
  %3468 = vmatpush1.msra.mxu0 %v3401
  %3469 = vmatprep.subr.mxu0 0.0
  %3470 = vmatpush1.msra.mxu0 %v3402
  %3471 = vmatprep.subr.mxu0 0.0
  %3472 = vmatpush1.msra.mxu0 %v3403
  %3473 = vmatprep.subr.mxu0 0.0
  %3474 = vmatpush1.msra.mxu0 %v3404
  %3475 = vmatprep.subr.mxu0 0.0
  %3476 = vmatpush1.msra.mxu0 %v3405
  %3477 = vmatprep.subr.mxu0 0.0
  %3478 = vmatpush1.msra.mxu0 %v3406
  %3479 = vmatprep.subr.mxu0 0.0
  %3480 = vmatpush1.msra.mxu0 0.0
  %3481 = vmatprep.subr.mxu0 0.0
  %3482 = vmatpush1.msra.mxu0 0.0
  %3483 = vmatprep.subr.mxu0 0.0
  %3484 = vmatpush1.msra.mxu0 0.0
  %3485 = vmatprep.subr.mxu0 0.0
  %3486 = vmatpush1.msra.mxu0 0.0
  %3487 = vmatprep.subr.mxu0 0.0
  %3488 = vmatpush1.msra.mxu0 0.0
  %3489 = vmatprep.subr.mxu0 0.0
  %3490 = vmatpush1.msra.mxu0 0.0
  %3491 = vmatprep.subr.mxu0 0.0
  %3492 = vmatpush1.msra.mxu0 0.0
  %3493 = vmatprep.subr.mxu0 0.0
  %3494 = vmatpush1.msra.mxu0 0.0
  %3495 = vmatprep.subr.mxu0 0.0
  %3496 = vmatpush1.msra.mxu0 0.0
  %3497 = vmatprep.subr.mxu0 0.0
  %3498 = vmatpush1.msra.mxu0 0.0
  %3499 = vmatprep.subr.mxu0 0.0
  %3500 = vmatpush1.msra.mxu0 0.0
  %3501 = vmatprep.subr.mxu0 0.0
  %3502 = vmatpush1.msra.mxu0 0.0
  %3503 = vmatprep.subr.mxu0 0.0
  %3504 = vmatpush1.msra.mxu0 0.0
  %3505 = vmatprep.subr.mxu0 0.0
  %3506 = vmatpush1.msra.mxu0 0.0
  %3507 = vmatprep.subr.mxu0 0.0
  %3508 = vmatpush1.msra.mxu0 0.0
  %3509 = vmatprep.subr.mxu0 0.0
  %3510 = vmatpush1.msra.mxu0 0.0
  %3511 = vmatprep.subr.mxu0 0.0
  %3512 = vmatpush1.msra.mxu0 0.0
  %3513 = vmatprep.subr.mxu0 0.0
  %3514 = vmatpush1.msra.mxu0 0.0
  %3515 = vmatprep.subr.mxu0 0.0
  %3516 = vmatpush1.msra.mxu0 0.0
  %3517 = vmatprep.subr.mxu0 0.0
  %3518 = vmatpush1.msra.mxu0 0.0
  %3519 = vmatprep.subr.mxu0 0.0
  %3520 = vmatpush1.msra.mxu0 0.0
  %3521 = vmatprep.subr.mxu0 0.0
  %3522 = vmatpush1.msra.mxu0 0.0
  %3523 = vmatprep.subr.mxu0 0.0
  %3524 = vmatpush1.msra.mxu0 0.0
  %3525 = vmatprep.subr.mxu0 0.0
  %3526 = vmatpush1.msra.mxu0 0.0
  %3527 = vmatprep.mubr.f32.mxu0 0.0
  %3528 = vmatmul.mubr.f32.gmra.mrb[0].mxu0 %v3416
  %v3529 = vpop.f32.mrb[0].mxu0
  %v3530 = vadd.f32 %v3413, %v3529
  %v3531 = vpop.f32.mrb[0].mxu0
  %3532 = vmatprep.mubr.f32.mxu0 0.0
  %3533 = vmatmul.mubr.f32.gmra.mrb[0].mxu0 %v3419
  %v3534 = vpop.f32.mrb[0].mxu0
  %v3535 = vadd.f32 %v3413, %v3534
  %v3536 = vpop.f32.mrb[0].mxu0
  %3537 = vmatprep.mubr.f32.mxu0 0.0
  %3538 = vmatmul.mubr.f32.gmra.mrb[0].mxu0 %v3422
  %v3539 = vpop.f32.mrb[0].mxu0
  %v3540 = vadd.f32 %v3413, %v3539
  %v3541 = vpop.f32.mrb[0].mxu0
  %3542 = vmatprep.mubr.f32.mxu0 0.0
  %3543 = vmatmul.mubr.f32.gmra.mrb[0].mxu0 %v3425
  %v3544 = vpop.f32.mrb[0].mxu0
  %v3545 = vadd.f32 %v3413, %v3544
  %v3546 = vpop.f32.mrb[0].mxu0
  %3547 = vmatprep.mubr.f32.mxu0 0.0
  %3548 = vmatmul.mubr.f32.gmra.mrb[0].mxu0 %v3428
  %v3549 = vpop.f32.mrb[0].mxu0
  %v3550 = vadd.f32 %v3413, %v3549
  %v3551 = vpop.f32.mrb[0].mxu0
  %3552 = vmatprep.mubr.f32.mxu0 0.0
  %3553 = vmatmul.mubr.f32.gmra.mrb[0].mxu0 %v3431
  %v3554 = vpop.f32.mrb[0].mxu0
  %v3555 = vadd.f32 %v3413, %v3554
  %v3556 = vpop.f32.mrb[0].mxu0
  %3557 = vmatprep.mubr.f32.mxu0 0.0
  %3558 = vmatmul.mubr.f32.gmra.mrb[0].mxu0 %v3434
  %v3559 = vpop.f32.mrb[0].mxu0
  %v3560 = vadd.f32 %v3413, %v3559
  %v3561 = vpop.f32.mrb[0].mxu0
  %3562 = vmatprep.mubr.f32.mxu0 0.0
  %3563 = vmatmul.mubr.f32.gmra.mrb[0].mxu0 %v3437
  %v3564 = vpop.f32.mrb[0].mxu0
  %v3565 = vadd.f32 %v3413, %v3564
  %v3566 = vpop.f32.mrb[0].mxu0
  %3567 = vmatprep.mubr.f32.mxu0 0.0
  %3568 = vmatmul.mubr.f32.gmra.mrb[0].mxu0 %v3440
  %v3569 = vpop.f32.mrb[0].mxu0
  %v3570 = vadd.f32 %v3413, %v3569
  %v3571 = vpop.f32.mrb[0].mxu0
  %3572 = vmatprep.mubr.f32.mxu0 0.0
  %3573 = vmatmul.mubr.f32.gmra.mrb[0].mxu0 %v3443
  %v3574 = vpop.f32.mrb[0].mxu0
  %v3575 = vadd.f32 %v3413, %v3574
  %v3576 = vpop.f32.mrb[0].mxu0
  %3577 = vmatprep.mubr.f32.mxu0 0.0
  %3578 = vmatmul.mubr.f32.gmra.mrb[0].mxu0 %v3446
  %v3579 = vpop.f32.mrb[0].mxu0
  %v3580 = vadd.f32 %v3413, %v3579
  %v3581 = vpop.f32.mrb[0].mxu0
  %3582 = vmatprep.mubr.f32.mxu0 0.0
  %3583 = vmatmul.mubr.f32.gmra.mrb[0].mxu0 %v3449
  %v3584 = vpop.f32.mrb[0].mxu0
  %v3585 = vadd.f32 %v3413, %v3584
  %v3586 = vpop.f32.mrb[0].mxu0
  %3587 = vmatprep.mubr.f32.mxu0 0.0
  %3588 = vmatmul.mubr.f32.gmra.mrb[0].mxu0 %v3452
  %v3589 = vpop.f32.mrb[0].mxu0
  %v3590 = vadd.f32 %v3413, %v3589
  %v3591 = vpop.f32.mrb[0].mxu0
  %3592 = vmatprep.mubr.f32.mxu0 0.0
  %3593 = vmatmul.mubr.f32.gmra.mrb[0].mxu0 %v3455
  %v3594 = vpop.f32.mrb[0].mxu0
  %v3595 = vadd.f32 %v3413, %v3594
  %v3596 = vpop.f32.mrb[0].mxu0
  %3597 = vmatprep.mubr.f32.mxu0 0.0
  %3598 = vmatmul.mubr.f32.gmra.mrb[0].mxu0 %v3458
  %v3599 = vpop.f32.mrb[0].mxu0
  %v3600 = vadd.f32 %v3413, %v3599
  %v3601 = vpop.f32.mrb[0].mxu0
  %3602 = vmatprep.mubr.f32.mxu0 0.0
  %3603 = vmatmul.mubr.f32.gmra.mrb[0].mxu0 %v3461
  %v3604 = vpop.f32.mrb[0].mxu0
  %v3605 = vadd.f32 %v3413, %v3604
  %v3606 = vpop.f32.mrb[0].mxu0
  %3607 = vdwg.mxu0
  %v3608 = vadd.f32 %v3160, %v3530
  %v3609 = vadd.f32 %v3161, %v3535
  %v3610 = vadd.f32 %v3162, %v3540
  %v3611 = vadd.f32 %v3163, %v3545
  %v3612 = vadd.f32 %v3164, %v3550
  %v3613 = vadd.f32 %v3165, %v3555
  %v3614 = vadd.f32 %v3166, %v3560
  %v3615 = vadd.f32 %v3167, %v3565
  %v3616 = vadd.f32 %v3168, %v3570
  %v3617 = vadd.f32 %v3169, %v3575
  %v3618 = vadd.f32 %v3170, %v3580
  %v3619 = vadd.f32 %v3171, %v3585
  %v3620 = vadd.f32 %v3172, %v3590
  %v3621 = vadd.f32 %v3173, %v3595
  %v3622 = vadd.f32 %v3174, %v3600
  %v3623 = vadd.f32 %v3175, %v3605
  %s3624 = scalar_lea.vmem %s18, 6
  %v3625 = vld [vmem:[%s3624] sm:$0x1]
  %s3626 = scalar_lea.vmem %s18, 7
  %v3627 = vld [vmem:[%s3626] sm:$0x1]
  %v3628 = vsel %vm186, %v3608, 0.0
  %3629 = vadd.xlane.f32.xlu0 %v3628
  %v3630 = vpop.xlane.xlu0 %3629
  %v3631 = vsel %vm186, %v3609, 0.0
  %3632 = vadd.xlane.f32.xlu0 %v3631
  %v3633 = vpop.xlane.xlu0 %3632
  %v3634 = vsel %vm186, %v3610, 0.0
  %3635 = vadd.xlane.f32.xlu0 %v3634
  %v3636 = vpop.xlane.xlu0 %3635
  %v3637 = vsel %vm186, %v3611, 0.0
  %3638 = vadd.xlane.f32.xlu0 %v3637
  %v3639 = vpop.xlane.xlu0 %3638
  %v3640 = vsel %vm186, %v3612, 0.0
  %3641 = vadd.xlane.f32.xlu0 %v3640
  %v3642 = vpop.xlane.xlu0 %3641
  %v3643 = vsel %vm186, %v3613, 0.0
  %3644 = vadd.xlane.f32.xlu0 %v3643
  %v3645 = vpop.xlane.xlu0 %3644
  %v3646 = vsel %vm186, %v3614, 0.0
  %3647 = vadd.xlane.f32.xlu0 %v3646
  %v3648 = vpop.xlane.xlu0 %3647
  %v3649 = vsel %vm186, %v3615, 0.0
  %3650 = vadd.xlane.f32.xlu0 %v3649
  %v3651 = vpop.xlane.xlu0 %3650
  %v3652 = vsel %vm186, %v3616, 0.0
  %3653 = vadd.xlane.f32.xlu0 %v3652
  %v3654 = vpop.xlane.xlu0 %3653
  %v3655 = vsel %vm186, %v3617, 0.0
  %3656 = vadd.xlane.f32.xlu0 %v3655
  %v3657 = vpop.xlane.xlu0 %3656
  %v3658 = vsel %vm186, %v3618, 0.0
  %3659 = vadd.xlane.f32.xlu0 %v3658
  %v3660 = vpop.xlane.xlu0 %3659
  %v3661 = vsel %vm186, %v3619, 0.0
  %3662 = vadd.xlane.f32.xlu0 %v3661
  %v3663 = vpop.xlane.xlu0 %3662
  %v3664 = vsel %vm186, %v3620, 0.0
  %3665 = vadd.xlane.f32.xlu0 %v3664
  %v3666 = vpop.xlane.xlu0 %3665
  %v3667 = vsel %vm186, %v3621, 0.0
  %3668 = vadd.xlane.f32.xlu0 %v3667
  %v3669 = vpop.xlane.xlu0 %3668
  %v3670 = vsel %vm186, %v3622, 0.0
  %3671 = vadd.xlane.f32.xlu0 %v3670
  %v3672 = vpop.xlane.xlu0 %3671
  %v3673 = vsel %vm186, %v3623, 0.0
  %3674 = vadd.xlane.f32.xlu0 %v3673
  %v3675 = vpop.xlane.xlu0 %3674
  %v3676 = vmul.f32 %v3630, %v755
  %v3677 = vmul.f32 %v3633, %v755
  %v3678 = vmul.f32 %v3636, %v755
  %v3679 = vmul.f32 %v3639, %v755
  %v3680 = vmul.f32 %v3642, %v755
  %v3681 = vmul.f32 %v3645, %v755
  %v3682 = vmul.f32 %v3648, %v755
  %v3683 = vmul.f32 %v3651, %v755
  %v3684 = vmul.f32 %v3654, %v755
  %v3685 = vmul.f32 %v3657, %v755
  %v3686 = vmul.f32 %v3660, %v755
  %v3687 = vmul.f32 %v3663, %v755
  %v3688 = vmul.f32 %v3666, %v755
  %v3689 = vmul.f32 %v3669, %v755
  %v3690 = vmul.f32 %v3672, %v755
  %v3691 = vmul.f32 %v3675, %v755
  %v3692 = vsub.f32 %v3608, %v3676
  %v3693 = vsub.f32 %v3609, %v3677
  %v3694 = vsub.f32 %v3610, %v3678
  %v3695 = vsub.f32 %v3611, %v3679
  %v3696 = vsub.f32 %v3612, %v3680
  %v3697 = vsub.f32 %v3613, %v3681
  %v3698 = vsub.f32 %v3614, %v3682
  %v3699 = vsub.f32 %v3615, %v3683
  %v3700 = vsub.f32 %v3616, %v3684
  %v3701 = vsub.f32 %v3617, %v3685
  %v3702 = vsub.f32 %v3618, %v3686
  %v3703 = vsub.f32 %v3619, %v3687
  %v3704 = vsub.f32 %v3620, %v3688
  %v3705 = vsub.f32 %v3621, %v3689
  %v3706 = vsub.f32 %v3622, %v3690
  %v3707 = vsub.f32 %v3623, %v3691
  %v3708 = vmul.f32 %v3692, %v3692
  %v3709 = vmul.f32 %v3693, %v3693
  %v3710 = vmul.f32 %v3694, %v3694
  %v3711 = vmul.f32 %v3695, %v3695
  %v3712 = vmul.f32 %v3696, %v3696
  %v3713 = vmul.f32 %v3697, %v3697
  %v3714 = vmul.f32 %v3698, %v3698
  %v3715 = vmul.f32 %v3699, %v3699
  %v3716 = vmul.f32 %v3700, %v3700
  %v3717 = vmul.f32 %v3701, %v3701
  %v3718 = vmul.f32 %v3702, %v3702
  %v3719 = vmul.f32 %v3703, %v3703
  %v3720 = vmul.f32 %v3704, %v3704
  %v3721 = vmul.f32 %v3705, %v3705
  %v3722 = vmul.f32 %v3706, %v3706
  %v3723 = vmul.f32 %v3707, %v3707
  %v3724 = vsel %vm186, %v3708, 0.0
  %3725 = vadd.xlane.f32.xlu0 %v3724
  %v3726 = vpop.xlane.xlu0 %3725
  %v3727 = vsel %vm186, %v3709, 0.0
  %3728 = vadd.xlane.f32.xlu0 %v3727
  %v3729 = vpop.xlane.xlu0 %3728
  %v3730 = vsel %vm186, %v3710, 0.0
  %3731 = vadd.xlane.f32.xlu0 %v3730
  %v3732 = vpop.xlane.xlu0 %3731
  %v3733 = vsel %vm186, %v3711, 0.0
  %3734 = vadd.xlane.f32.xlu0 %v3733
  %v3735 = vpop.xlane.xlu0 %3734
  %v3736 = vsel %vm186, %v3712, 0.0
  %3737 = vadd.xlane.f32.xlu0 %v3736
  %v3738 = vpop.xlane.xlu0 %3737
  %v3739 = vsel %vm186, %v3713, 0.0
  %3740 = vadd.xlane.f32.xlu0 %v3739
  %v3741 = vpop.xlane.xlu0 %3740
  %v3742 = vsel %vm186, %v3714, 0.0
  %3743 = vadd.xlane.f32.xlu0 %v3742
  %v3744 = vpop.xlane.xlu0 %3743
  %v3745 = vsel %vm186, %v3715, 0.0
  %3746 = vadd.xlane.f32.xlu0 %v3745
  %v3747 = vpop.xlane.xlu0 %3746
  %v3748 = vsel %vm186, %v3716, 0.0
  %3749 = vadd.xlane.f32.xlu0 %v3748
  %v3750 = vpop.xlane.xlu0 %3749
  %v3751 = vsel %vm186, %v3717, 0.0
  %3752 = vadd.xlane.f32.xlu0 %v3751
  %v3753 = vpop.xlane.xlu0 %3752
  %v3754 = vsel %vm186, %v3718, 0.0
  %3755 = vadd.xlane.f32.xlu0 %v3754
  %v3756 = vpop.xlane.xlu0 %3755
  %v3757 = vsel %vm186, %v3719, 0.0
  %3758 = vadd.xlane.f32.xlu0 %v3757
  %v3759 = vpop.xlane.xlu0 %3758
  %v3760 = vsel %vm186, %v3720, 0.0
  %3761 = vadd.xlane.f32.xlu0 %v3760
  %v3762 = vpop.xlane.xlu0 %3761
  %v3763 = vsel %vm186, %v3721, 0.0
  %3764 = vadd.xlane.f32.xlu0 %v3763
  %v3765 = vpop.xlane.xlu0 %3764
  %v3766 = vsel %vm186, %v3722, 0.0
  %3767 = vadd.xlane.f32.xlu0 %v3766
  %v3768 = vpop.xlane.xlu0 %3767
  %v3769 = vsel %vm186, %v3723, 0.0
  %3770 = vadd.xlane.f32.xlu0 %v3769
  %v3771 = vpop.xlane.xlu0 %3770
  %v3772 = vmul.f32 %v3726, %v755
  %v3773 = vmul.f32 %v3729, %v755
  %v3774 = vmul.f32 %v3732, %v755
  %v3775 = vmul.f32 %v3735, %v755
  %v3776 = vmul.f32 %v3738, %v755
  %v3777 = vmul.f32 %v3741, %v755
  %v3778 = vmul.f32 %v3744, %v755
  %v3779 = vmul.f32 %v3747, %v755
  %v3780 = vmul.f32 %v3750, %v755
  %v3781 = vmul.f32 %v3753, %v755
  %v3782 = vmul.f32 %v3756, %v755
  %v3783 = vmul.f32 %v3759, %v755
  %v3784 = vmul.f32 %v3762, %v755
  %v3785 = vmul.f32 %v3765, %v755
  %v3786 = vmul.f32 %v3768, %v755
  %v3787 = vmul.f32 %v3771, %v755
  %v3788 = vadd.f32 %v3772, 1e-05
  %v3789 = vadd.f32 %v3773, 1e-05
  %v3790 = vadd.f32 %v3774, 1e-05
  %v3791 = vadd.f32 %v3775, 1e-05
  %v3792 = vadd.f32 %v3776, 1e-05
  %v3793 = vadd.f32 %v3777, 1e-05
  %v3794 = vadd.f32 %v3778, 1e-05
  %v3795 = vadd.f32 %v3779, 1e-05
  %v3796 = vadd.f32 %v3780, 1e-05
  %v3797 = vadd.f32 %v3781, 1e-05
  %v3798 = vadd.f32 %v3782, 1e-05
  %v3799 = vadd.f32 %v3783, 1e-05
  %v3800 = vadd.f32 %v3784, 1e-05
  %v3801 = vadd.f32 %v3785, 1e-05
  %v3802 = vadd.f32 %v3786, 1e-05
  %v3803 = vadd.f32 %v3787, 1e-05
  %v3804 = vrsqrt.pop %v3788
  %v3805 = vrsqrt.pop %v3789
  %v3806 = vrsqrt.pop %v3790
  %v3807 = vrsqrt.pop %v3791
  %v3808 = vrsqrt.pop %v3792
  %v3809 = vrsqrt.pop %v3793
  %v3810 = vrsqrt.pop %v3794
  %v3811 = vrsqrt.pop %v3795
  %v3812 = vrsqrt.pop %v3796
  %v3813 = vrsqrt.pop %v3797
  %v3814 = vrsqrt.pop %v3798
  %v3815 = vrsqrt.pop %v3799
  %v3816 = vrsqrt.pop %v3800
  %v3817 = vrsqrt.pop %v3801
  %v3818 = vrsqrt.pop %v3802
  %v3819 = vrsqrt.pop %v3803
  %v3820 = vmul.f32 %v3692, %v3804
  %v3821 = vmul.f32 %v3693, %v3805
  %v3822 = vmul.f32 %v3694, %v3806
  %v3823 = vmul.f32 %v3695, %v3807
  %v3824 = vmul.f32 %v3696, %v3808
  %v3825 = vmul.f32 %v3697, %v3809
  %v3826 = vmul.f32 %v3698, %v3810
  %v3827 = vmul.f32 %v3699, %v3811
  %v3828 = vmul.f32 %v3700, %v3812
  %v3829 = vmul.f32 %v3701, %v3813
  %v3830 = vmul.f32 %v3702, %v3814
  %v3831 = vmul.f32 %v3703, %v3815
  %v3832 = vmul.f32 %v3704, %v3816
  %v3833 = vmul.f32 %v3705, %v3817
  %v3834 = vmul.f32 %v3706, %v3818
  %v3835 = vmul.f32 %v3707, %v3819
  %v3837 = vlaneseq
  %v3838 = vshrl.u32 %v3837, 7
  %v3839 = vsub.s32 0, %v3838
  %v3840 = vrot.slane %v3625, %v3839
  %v3842 = vmul.f32 %v3820, %v3840
  %v3843 = vmul.f32 %v3821, %v3840
  %v3844 = vmul.f32 %v3822, %v3840
  %v3845 = vmul.f32 %v3823, %v3840
  %v3846 = vmul.f32 %v3824, %v3840
  %v3847 = vmul.f32 %v3825, %v3840
  %v3848 = vmul.f32 %v3826, %v3840
  %v3849 = vmul.f32 %v3827, %v3840
  %v3850 = vmul.f32 %v3828, %v3840
  %v3851 = vmul.f32 %v3829, %v3840
  %v3852 = vmul.f32 %v3830, %v3840
  %v3853 = vmul.f32 %v3831, %v3840
  %v3854 = vmul.f32 %v3832, %v3840
  %v3855 = vmul.f32 %v3833, %v3840
  %v3856 = vmul.f32 %v3834, %v3840
  %v3857 = vmul.f32 %v3835, %v3840
  %v3859 = vlaneseq
  %v3860 = vshrl.u32 %v3859, 7
  %v3861 = vsub.s32 0, %v3860
  %v3862 = vrot.slane %v3627, %v3861
  %v3864 = vadd.f32 %v3842, %v3862
  %v3865 = vadd.f32 %v3843, %v3862
  %v3866 = vadd.f32 %v3844, %v3862
  %v3867 = vadd.f32 %v3845, %v3862
  %v3868 = vadd.f32 %v3846, %v3862
  %v3869 = vadd.f32 %v3847, %v3862
  %v3870 = vadd.f32 %v3848, %v3862
  %v3871 = vadd.f32 %v3849, %v3862
  %v3872 = vadd.f32 %v3850, %v3862
  %v3873 = vadd.f32 %v3851, %v3862
  %v3874 = vadd.f32 %v3852, %v3862
  %v3875 = vadd.f32 %v3853, %v3862
  %v3876 = vadd.f32 %v3854, %v3862
  %v3877 = vadd.f32 %v3855, %v3862
  %v3878 = vadd.f32 %v3856, %v3862
  %v3879 = vadd.f32 %v3857, %v3862
  %v3880 = vadd.f32 %v1239, 0.0
  %s3881 = scalar_lea.vmem %s16, 256
  %v3882 = vld [vmem:[%s3881] sm:$0xff]
  %v3883 = vld [vmem:[%s3881 + $0x8] sm:$0xff]
  %v3884 = vld [vmem:[%s3881 + $0x10] sm:$0xff]
  %v3885 = vld [vmem:[%s3881 + $0x18] sm:$0xff]
  %s3886 = scalar_lea.vmem %s17, 8
  %v3887 = vld [vmem:[%s3886] sm:$0x1]
  %v3889 = vlaneseq
  %v3890 = vshrl.u32 %v3889, 7
  %v3891 = vsub.s32 0, %v3890
  %v3892 = vrot.slane %v3887, %v3891
  %v3895 = vsel %vm186, %v3880, 0
  %3897 = vmatprep.subr.mxu0 0.0
  %3898 = vmatpush1.msra.mxu0 %v3882
  %3899 = vmatprep.subr.mxu0 0.0
  %3900 = vmatpush1.msra.mxu0 %v3883
  %3901 = vmatprep.subr.mxu0 0.0
  %3902 = vmatpush1.msra.mxu0 %v3884
  %3903 = vmatprep.subr.mxu0 0.0
  %3904 = vmatpush1.msra.mxu0 %v3885
  %3905 = vmatprep.subr.mxu0 0.0
  %3906 = vmatpush1.msra.mxu0 0.0
  %3907 = vmatprep.subr.mxu0 0.0
  %3908 = vmatpush1.msra.mxu0 0.0
  %3909 = vmatprep.subr.mxu0 0.0
  %3910 = vmatpush1.msra.mxu0 0.0
  %3911 = vmatprep.subr.mxu0 0.0
  %3912 = vmatpush1.msra.mxu0 0.0
  %3913 = vmatprep.subr.mxu0 0.0
  %3914 = vmatpush1.msra.mxu0 0.0
  %3915 = vmatprep.subr.mxu0 0.0
  %3916 = vmatpush1.msra.mxu0 0.0
  %3917 = vmatprep.subr.mxu0 0.0
  %3918 = vmatpush1.msra.mxu0 0.0
  %3919 = vmatprep.subr.mxu0 0.0
  %3920 = vmatpush1.msra.mxu0 0.0
  %3921 = vmatprep.subr.mxu0 0.0
  %3922 = vmatpush1.msra.mxu0 0.0
  %3923 = vmatprep.subr.mxu0 0.0
  %3924 = vmatpush1.msra.mxu0 0.0
  %3925 = vmatprep.subr.mxu0 0.0
  %3926 = vmatpush1.msra.mxu0 0.0
  %3927 = vmatprep.subr.mxu0 0.0
  %3928 = vmatpush1.msra.mxu0 0.0
  %3929 = vmatprep.subr.mxu0 0.0
  %3930 = vmatpush1.msra.mxu0 0.0
  %3931 = vmatprep.subr.mxu0 0.0
  %3932 = vmatpush1.msra.mxu0 0.0
  %3933 = vmatprep.subr.mxu0 0.0
  %3934 = vmatpush1.msra.mxu0 0.0
  %3935 = vmatprep.subr.mxu0 0.0
  %3936 = vmatpush1.msra.mxu0 0.0
  %3937 = vmatprep.subr.mxu0 0.0
  %3938 = vmatpush1.msra.mxu0 0.0
  %3939 = vmatprep.subr.mxu0 0.0
  %3940 = vmatpush1.msra.mxu0 0.0
  %3941 = vmatprep.subr.mxu0 0.0
  %3942 = vmatpush1.msra.mxu0 0.0
  %3943 = vmatprep.subr.mxu0 0.0
  %3944 = vmatpush1.msra.mxu0 0.0
  %3945 = vmatprep.subr.mxu0 0.0
  %3946 = vmatpush1.msra.mxu0 0.0
  %3947 = vmatprep.subr.mxu0 0.0
  %3948 = vmatpush1.msra.mxu0 0.0
  %3949 = vmatprep.subr.mxu0 0.0
  %3950 = vmatpush1.msra.mxu0 0.0
  %3951 = vmatprep.subr.mxu0 0.0
  %3952 = vmatpush1.msra.mxu0 0.0
  %3953 = vmatprep.subr.mxu0 0.0
  %3954 = vmatpush1.msra.mxu0 0.0
  %3955 = vmatprep.subr.mxu0 0.0
  %3956 = vmatpush1.msra.mxu0 0.0
  %3957 = vmatprep.subr.mxu0 0.0
  %3958 = vmatpush1.msra.mxu0 0.0
  %3959 = vmatprep.subr.mxu0 0.0
  %3960 = vmatpush1.msra.mxu0 0.0
  %3961 = vmatprep.mubr.f32.mxu0 0.0
  %3962 = vmatmul.mubr.f32.gmra.mrb[0].mxu0 %v3895
  %v3963 = vpop.f32.mrb[0].mxu0
  %v3964 = vadd.f32 %v3892, %v3963
  %v3965 = vpop.f32.mrb[0].mxu0
  %3966 = vdwg.mxu0
  %s3967 = scalar_lea.vmem %s16, 288
  %v3968 = vld [vmem:[%s3967] sm:$0xff]
  %v3969 = vld [vmem:[%s3967 + $0x8] sm:$0xff]
  %v3970 = vld [vmem:[%s3967 + $0x10] sm:$0xff]
  %v3971 = vld [vmem:[%s3967 + $0x18] sm:$0xff]
  %s3972 = scalar_lea.vmem %s17, 9
  %v3973 = vld [vmem:[%s3972] sm:$0x1]
  %v3975 = vlaneseq
  %v3976 = vshrl.u32 %v3975, 7
  %v3977 = vsub.s32 0, %v3976
  %v3978 = vrot.slane %v3973, %v3977
  %3980 = vmatprep.subr.mxu0 0.0
  %3981 = vmatpush1.msra.mxu0 %v3968
  %3982 = vmatprep.subr.mxu0 0.0
  %3983 = vmatpush1.msra.mxu0 %v3969
  %3984 = vmatprep.subr.mxu0 0.0
  %3985 = vmatpush1.msra.mxu0 %v3970
  %3986 = vmatprep.subr.mxu0 0.0
  %3987 = vmatpush1.msra.mxu0 %v3971
  %3988 = vmatprep.subr.mxu0 0.0
  %3989 = vmatpush1.msra.mxu0 0.0
  %3990 = vmatprep.subr.mxu0 0.0
  %3991 = vmatpush1.msra.mxu0 0.0
  %3992 = vmatprep.subr.mxu0 0.0
  %3993 = vmatpush1.msra.mxu0 0.0
  %3994 = vmatprep.subr.mxu0 0.0
  %3995 = vmatpush1.msra.mxu0 0.0
  %3996 = vmatprep.subr.mxu0 0.0
  %3997 = vmatpush1.msra.mxu0 0.0
  %3998 = vmatprep.subr.mxu0 0.0
  %3999 = vmatpush1.msra.mxu0 0.0
  %4000 = vmatprep.subr.mxu0 0.0
  %4001 = vmatpush1.msra.mxu0 0.0
  %4002 = vmatprep.subr.mxu0 0.0
  %4003 = vmatpush1.msra.mxu0 0.0
  %4004 = vmatprep.subr.mxu0 0.0
  %4005 = vmatpush1.msra.mxu0 0.0
  %4006 = vmatprep.subr.mxu0 0.0
  %4007 = vmatpush1.msra.mxu0 0.0
  %4008 = vmatprep.subr.mxu0 0.0
  %4009 = vmatpush1.msra.mxu0 0.0
  %4010 = vmatprep.subr.mxu0 0.0
  %4011 = vmatpush1.msra.mxu0 0.0
  %4012 = vmatprep.subr.mxu0 0.0
  %4013 = vmatpush1.msra.mxu0 0.0
  %4014 = vmatprep.subr.mxu0 0.0
  %4015 = vmatpush1.msra.mxu0 0.0
  %4016 = vmatprep.subr.mxu0 0.0
  %4017 = vmatpush1.msra.mxu0 0.0
  %4018 = vmatprep.subr.mxu0 0.0
  %4019 = vmatpush1.msra.mxu0 0.0
  %4020 = vmatprep.subr.mxu0 0.0
  %4021 = vmatpush1.msra.mxu0 0.0
  %4022 = vmatprep.subr.mxu0 0.0
  %4023 = vmatpush1.msra.mxu0 0.0
  %4024 = vmatprep.subr.mxu0 0.0
  %4025 = vmatpush1.msra.mxu0 0.0
  %4026 = vmatprep.subr.mxu0 0.0
  %4027 = vmatpush1.msra.mxu0 0.0
  %4028 = vmatprep.subr.mxu0 0.0
  %4029 = vmatpush1.msra.mxu0 0.0
  %4030 = vmatprep.subr.mxu0 0.0
  %4031 = vmatpush1.msra.mxu0 0.0
  %4032 = vmatprep.subr.mxu0 0.0
  %4033 = vmatpush1.msra.mxu0 0.0
  %4034 = vmatprep.subr.mxu0 0.0
  %4035 = vmatpush1.msra.mxu0 0.0
  %4036 = vmatprep.subr.mxu0 0.0
  %4037 = vmatpush1.msra.mxu0 0.0
  %4038 = vmatprep.subr.mxu0 0.0
  %4039 = vmatpush1.msra.mxu0 0.0
  %4040 = vmatprep.subr.mxu0 0.0
  %4041 = vmatpush1.msra.mxu0 0.0
  %4042 = vmatprep.subr.mxu0 0.0
  %4043 = vmatpush1.msra.mxu0 0.0
  %4044 = vmatprep.mubr.f32.mxu0 0.0
  %4045 = vmatmul.mubr.f32.gmra.mrb[0].mxu0 %v3895
  %v4046 = vpop.f32.mrb[0].mxu0
  %v4047 = vadd.f32 %v3978, %v4046
  %v4048 = vpop.f32.mrb[0].mxu0
  %4049 = vdwg.mxu0
  %s4050 = scalar_lea.vmem %s16, 320
  %v4051 = vld [vmem:[%s4050] sm:$0xff]
  %v4052 = vld [vmem:[%s4050 + $0x8] sm:$0xff]
  %v4053 = vld [vmem:[%s4050 + $0x10] sm:$0xff]
  %v4054 = vld [vmem:[%s4050 + $0x18] sm:$0xff]
  %s4055 = scalar_lea.vmem %s17, 10
  %v4056 = vld [vmem:[%s4055] sm:$0x1]
  %v4058 = vlaneseq
  %v4059 = vshrl.u32 %v4058, 7
  %v4060 = vsub.s32 0, %v4059
  %v4061 = vrot.slane %v4056, %v4060
  %v4064 = vsel %vm186, 0.0, 0
  %4066 = vmatprep.subr.mxu0 0.0
  %4067 = vmatpush1.msra.mxu0 %v4051
  %4068 = vmatprep.subr.mxu0 0.0
  %4069 = vmatpush1.msra.mxu0 %v4052
  %4070 = vmatprep.subr.mxu0 0.0
  %4071 = vmatpush1.msra.mxu0 %v4053
  %4072 = vmatprep.subr.mxu0 0.0
  %4073 = vmatpush1.msra.mxu0 %v4054
  %4074 = vmatprep.subr.mxu0 0.0
  %4075 = vmatpush1.msra.mxu0 0.0
  %4076 = vmatprep.subr.mxu0 0.0
  %4077 = vmatpush1.msra.mxu0 0.0
  %4078 = vmatprep.subr.mxu0 0.0
  %4079 = vmatpush1.msra.mxu0 0.0
  %4080 = vmatprep.subr.mxu0 0.0
  %4081 = vmatpush1.msra.mxu0 0.0
  %4082 = vmatprep.subr.mxu0 0.0
  %4083 = vmatpush1.msra.mxu0 0.0
  %4084 = vmatprep.subr.mxu0 0.0
  %4085 = vmatpush1.msra.mxu0 0.0
  %4086 = vmatprep.subr.mxu0 0.0
  %4087 = vmatpush1.msra.mxu0 0.0
  %4088 = vmatprep.subr.mxu0 0.0
  %4089 = vmatpush1.msra.mxu0 0.0
  %4090 = vmatprep.subr.mxu0 0.0
  %4091 = vmatpush1.msra.mxu0 0.0
  %4092 = vmatprep.subr.mxu0 0.0
  %4093 = vmatpush1.msra.mxu0 0.0
  %4094 = vmatprep.subr.mxu0 0.0
  %4095 = vmatpush1.msra.mxu0 0.0
  %4096 = vmatprep.subr.mxu0 0.0
  %4097 = vmatpush1.msra.mxu0 0.0
  %4098 = vmatprep.subr.mxu0 0.0
  %4099 = vmatpush1.msra.mxu0 0.0
  %4100 = vmatprep.subr.mxu0 0.0
  %4101 = vmatpush1.msra.mxu0 0.0
  %4102 = vmatprep.subr.mxu0 0.0
  %4103 = vmatpush1.msra.mxu0 0.0
  %4104 = vmatprep.subr.mxu0 0.0
  %4105 = vmatpush1.msra.mxu0 0.0
  %4106 = vmatprep.subr.mxu0 0.0
  %4107 = vmatpush1.msra.mxu0 0.0
  %4108 = vmatprep.subr.mxu0 0.0
  %4109 = vmatpush1.msra.mxu0 0.0
  %4110 = vmatprep.subr.mxu0 0.0
  %4111 = vmatpush1.msra.mxu0 0.0
  %4112 = vmatprep.subr.mxu0 0.0
  %4113 = vmatpush1.msra.mxu0 0.0
  %4114 = vmatprep.subr.mxu0 0.0
  %4115 = vmatpush1.msra.mxu0 0.0
  %4116 = vmatprep.subr.mxu0 0.0
  %4117 = vmatpush1.msra.mxu0 0.0
  %4118 = vmatprep.subr.mxu0 0.0
  %4119 = vmatpush1.msra.mxu0 0.0
  %4120 = vmatprep.subr.mxu0 0.0
  %4121 = vmatpush1.msra.mxu0 0.0
  %4122 = vmatprep.subr.mxu0 0.0
  %4123 = vmatpush1.msra.mxu0 0.0
  %4124 = vmatprep.subr.mxu0 0.0
  %4125 = vmatpush1.msra.mxu0 0.0
  %4126 = vmatprep.subr.mxu0 0.0
  %4127 = vmatpush1.msra.mxu0 0.0
  %4128 = vmatprep.subr.mxu0 0.0
  %4129 = vmatpush1.msra.mxu0 0.0
  %4130 = vmatprep.mubr.f32.mxu0 0.0
  %4131 = vmatmul.mubr.f32.gmra.mrb[0].mxu0 %v4064
  %v4132 = vpop.f32.mrb[0].mxu0
  %v4133 = vadd.f32 %v4061, %v4132
  %v4134 = vpop.f32.mrb[0].mxu0
  %4135 = vdwg.mxu0
  %v4137 = vsel %vm186, %v3964, 0
  %v4140 = vsel %vm186, %v4047, 0
  %4142 = vmatprep.subr.mxu0 0.0
  %4143 = vmatpush1.xpose.msra.mxu0 %v4140
  %4144 = vmatprep.subr.mxu0 0.0
  %4145 = vmatpush1.xpose.msra.mxu0 0.0
  %4146 = vmatprep.subr.mxu0 0.0
  %4147 = vmatpush1.xpose.msra.mxu0 0.0
  %4148 = vmatprep.subr.mxu0 0.0
  %4149 = vmatpush1.xpose.msra.mxu0 0.0
  %4150 = vmatprep.subr.mxu0 0.0
  %4151 = vmatpush1.xpose.msra.mxu0 0.0
  %4152 = vmatprep.subr.mxu0 0.0
  %4153 = vmatpush1.xpose.msra.mxu0 0.0
  %4154 = vmatprep.subr.mxu0 0.0
  %4155 = vmatpush1.xpose.msra.mxu0 0.0
  %4156 = vmatprep.subr.mxu0 0.0
  %4157 = vmatpush1.xpose.msra.mxu0 0.0
  %4158 = vmatprep.subr.mxu0 0.0
  %4159 = vmatpush1.xpose.msra.mxu0 0.0
  %4160 = vmatprep.subr.mxu0 0.0
  %4161 = vmatpush1.xpose.msra.mxu0 0.0
  %4162 = vmatprep.subr.mxu0 0.0
  %4163 = vmatpush1.xpose.msra.mxu0 0.0
  %4164 = vmatprep.subr.mxu0 0.0
  %4165 = vmatpush1.xpose.msra.mxu0 0.0
  %4166 = vmatprep.subr.mxu0 0.0
  %4167 = vmatpush1.xpose.msra.mxu0 0.0
  %4168 = vmatprep.subr.mxu0 0.0
  %4169 = vmatpush1.xpose.msra.mxu0 0.0
  %4170 = vmatprep.subr.mxu0 0.0
  %4171 = vmatpush1.xpose.msra.mxu0 0.0
  %4172 = vmatprep.subr.mxu0 0.0
  %4173 = vmatpush1.xpose.msra.mxu0 0.0
  %4174 = vmatprep.subr.mxu0 0.0
  %4175 = vmatpush1.xpose.msra.mxu0 0.0
  %4176 = vmatprep.subr.mxu0 0.0
  %4177 = vmatpush1.xpose.msra.mxu0 0.0
  %4178 = vmatprep.subr.mxu0 0.0
  %4179 = vmatpush1.xpose.msra.mxu0 0.0
  %4180 = vmatprep.subr.mxu0 0.0
  %4181 = vmatpush1.xpose.msra.mxu0 0.0
  %4182 = vmatprep.subr.mxu0 0.0
  %4183 = vmatpush1.xpose.msra.mxu0 0.0
  %4184 = vmatprep.subr.mxu0 0.0
  %4185 = vmatpush1.xpose.msra.mxu0 0.0
  %4186 = vmatprep.subr.mxu0 0.0
  %4187 = vmatpush1.xpose.msra.mxu0 0.0
  %4188 = vmatprep.subr.mxu0 0.0
  %4189 = vmatpush1.xpose.msra.mxu0 0.0
  %4190 = vmatprep.subr.mxu0 0.0
  %4191 = vmatpush1.xpose.msra.mxu0 0.0
  %4192 = vmatprep.subr.mxu0 0.0
  %4193 = vmatpush1.xpose.msra.mxu0 0.0
  %4194 = vmatprep.subr.mxu0 0.0
  %4195 = vmatpush1.xpose.msra.mxu0 0.0
  %4196 = vmatprep.subr.mxu0 0.0
  %4197 = vmatpush1.xpose.msra.mxu0 0.0
  %4198 = vmatprep.subr.mxu0 0.0
  %4199 = vmatpush1.xpose.msra.mxu0 0.0
  %4200 = vmatprep.subr.mxu0 0.0
  %4201 = vmatpush1.xpose.msra.mxu0 0.0
  %4202 = vmatprep.subr.mxu0 0.0
  %4203 = vmatpush1.xpose.msra.mxu0 0.0
  %4204 = vmatprep.subr.mxu0 0.0
  %4205 = vmatpush1.xpose.msra.mxu0 0.0
  %4206 = vmatprep.mubr.f32.mxu0 0.0
  %4207 = vmatmul.mubr.f32.gmra.mrb[0].mxu0 %v4137
  %v4208 = vpop.f32.mrb[0].mxu0
  %v4209 = vadd.f32 0.0, %v4208
  %v4210 = vpop.f32.mrb[0].mxu0
  %4211 = vdwg.mxu0
  %v4212 = vmul.f32 %v4209, 0.17677669
  %v4213 = vadd.f32 %v4212, 0.0
  %v4214 = vsel %vm1112, %v4213, -inf
  %4215 = vmax.xlane.f32.xlu0 %v4214
  %v4216 = vpop.xlane.xlu0 %4215
  %v4217 = vsub.f32 %v4213, %v4216
  %v4218 = vmul.f32 %v4217, 1.442695
  %v4219 = vpow.pop %v4218
  %v4220 = vsel %vm1112, %v4219, 0.0
  %4221 = vadd.xlane.f32.xlu0 %v4220
  %v4222 = vpop.xlane.xlu0 %4221
  %v4223 = vrcp.pop %v4222
  %v4224 = vmul.f32 %v4219, %v4223
  %v4226 = vsel %vm1112, %v4224, 0
  %4228 = vmatprep.subr.mxu0 0.0
  %4229 = vmatpush1.msra.mxu0 %v4133
  %4230 = vmatprep.subr.mxu0 0.0
  %4231 = vmatpush1.msra.mxu0 0.0
  %4232 = vmatprep.subr.mxu0 0.0
  %4233 = vmatpush1.msra.mxu0 0.0
  %4234 = vmatprep.subr.mxu0 0.0
  %4235 = vmatpush1.msra.mxu0 0.0
  %4236 = vmatprep.subr.mxu0 0.0
  %4237 = vmatpush1.msra.mxu0 0.0
  %4238 = vmatprep.subr.mxu0 0.0
  %4239 = vmatpush1.msra.mxu0 0.0
  %4240 = vmatprep.subr.mxu0 0.0
  %4241 = vmatpush1.msra.mxu0 0.0
  %4242 = vmatprep.subr.mxu0 0.0
  %4243 = vmatpush1.msra.mxu0 0.0
  %4244 = vmatprep.subr.mxu0 0.0
  %4245 = vmatpush1.msra.mxu0 0.0
  %4246 = vmatprep.subr.mxu0 0.0
  %4247 = vmatpush1.msra.mxu0 0.0
  %4248 = vmatprep.subr.mxu0 0.0
  %4249 = vmatpush1.msra.mxu0 0.0
  %4250 = vmatprep.subr.mxu0 0.0
  %4251 = vmatpush1.msra.mxu0 0.0
  %4252 = vmatprep.subr.mxu0 0.0
  %4253 = vmatpush1.msra.mxu0 0.0
  %4254 = vmatprep.subr.mxu0 0.0
  %4255 = vmatpush1.msra.mxu0 0.0
  %4256 = vmatprep.subr.mxu0 0.0
  %4257 = vmatpush1.msra.mxu0 0.0
  %4258 = vmatprep.subr.mxu0 0.0
  %4259 = vmatpush1.msra.mxu0 0.0
  %4260 = vmatprep.subr.mxu0 0.0
  %4261 = vmatpush1.msra.mxu0 0.0
  %4262 = vmatprep.subr.mxu0 0.0
  %4263 = vmatpush1.msra.mxu0 0.0
  %4264 = vmatprep.subr.mxu0 0.0
  %4265 = vmatpush1.msra.mxu0 0.0
  %4266 = vmatprep.subr.mxu0 0.0
  %4267 = vmatpush1.msra.mxu0 0.0
  %4268 = vmatprep.subr.mxu0 0.0
  %4269 = vmatpush1.msra.mxu0 0.0
  %4270 = vmatprep.subr.mxu0 0.0
  %4271 = vmatpush1.msra.mxu0 0.0
  %4272 = vmatprep.subr.mxu0 0.0
  %4273 = vmatpush1.msra.mxu0 0.0
  %4274 = vmatprep.subr.mxu0 0.0
  %4275 = vmatpush1.msra.mxu0 0.0
  %4276 = vmatprep.subr.mxu0 0.0
  %4277 = vmatpush1.msra.mxu0 0.0
  %4278 = vmatprep.subr.mxu0 0.0
  %4279 = vmatpush1.msra.mxu0 0.0
  %4280 = vmatprep.subr.mxu0 0.0
  %4281 = vmatpush1.msra.mxu0 0.0
  %4282 = vmatprep.subr.mxu0 0.0
  %4283 = vmatpush1.msra.mxu0 0.0
  %4284 = vmatprep.subr.mxu0 0.0
  %4285 = vmatpush1.msra.mxu0 0.0
  %4286 = vmatprep.subr.mxu0 0.0
  %4287 = vmatpush1.msra.mxu0 0.0
  %4288 = vmatprep.subr.mxu0 0.0
  %4289 = vmatpush1.msra.mxu0 0.0
  %4290 = vmatprep.subr.mxu0 0.0
  %4291 = vmatpush1.msra.mxu0 0.0
  %4292 = vmatprep.mubr.f32.mxu0 0.0
  %4293 = vmatmul.mubr.f32.gmra.mrb[0].mxu0 %v4226
  %v4294 = vpop.f32.mrb[0].mxu0
  %v4295 = vadd.f32 0.0, %v4294
  %v4296 = vpop.f32.mrb[0].mxu0
  %4297 = vdwg.mxu0
  %s4298 = scalar_lea.vmem %s16, 352
  %v4299 = vld [vmem:[%s4298] sm:$0xff]
  %v4300 = vld [vmem:[%s4298 + $0x8] sm:$0xff]
  %v4301 = vld [vmem:[%s4298 + $0x10] sm:$0xff]
  %v4302 = vld [vmem:[%s4298 + $0x18] sm:$0xff]
  %s4303 = scalar_lea.vmem %s17, 11
  %v4304 = vld [vmem:[%s4303] sm:$0x1]
  %v4306 = vlaneseq
  %v4307 = vshrl.u32 %v4306, 7
  %v4308 = vsub.s32 0, %v4307
  %v4309 = vrot.slane %v4304, %v4308
  %v4312 = vsel %vm186, %v4295, 0
  %4314 = vmatprep.subr.mxu0 0.0
  %4315 = vmatpush1.msra.mxu0 %v4299
  %4316 = vmatprep.subr.mxu0 0.0
  %4317 = vmatpush1.msra.mxu0 %v4300
  %4318 = vmatprep.subr.mxu0 0.0
  %4319 = vmatpush1.msra.mxu0 %v4301
  %4320 = vmatprep.subr.mxu0 0.0
  %4321 = vmatpush1.msra.mxu0 %v4302
  %4322 = vmatprep.subr.mxu0 0.0
  %4323 = vmatpush1.msra.mxu0 0.0
  %4324 = vmatprep.subr.mxu0 0.0
  %4325 = vmatpush1.msra.mxu0 0.0
  %4326 = vmatprep.subr.mxu0 0.0
  %4327 = vmatpush1.msra.mxu0 0.0
  %4328 = vmatprep.subr.mxu0 0.0
  %4329 = vmatpush1.msra.mxu0 0.0
  %4330 = vmatprep.subr.mxu0 0.0
  %4331 = vmatpush1.msra.mxu0 0.0
  %4332 = vmatprep.subr.mxu0 0.0
  %4333 = vmatpush1.msra.mxu0 0.0
  %4334 = vmatprep.subr.mxu0 0.0
  %4335 = vmatpush1.msra.mxu0 0.0
  %4336 = vmatprep.subr.mxu0 0.0
  %4337 = vmatpush1.msra.mxu0 0.0
  %4338 = vmatprep.subr.mxu0 0.0
  %4339 = vmatpush1.msra.mxu0 0.0
  %4340 = vmatprep.subr.mxu0 0.0
  %4341 = vmatpush1.msra.mxu0 0.0
  %4342 = vmatprep.subr.mxu0 0.0
  %4343 = vmatpush1.msra.mxu0 0.0
  %4344 = vmatprep.subr.mxu0 0.0
  %4345 = vmatpush1.msra.mxu0 0.0
  %4346 = vmatprep.subr.mxu0 0.0
  %4347 = vmatpush1.msra.mxu0 0.0
  %4348 = vmatprep.subr.mxu0 0.0
  %4349 = vmatpush1.msra.mxu0 0.0
  %4350 = vmatprep.subr.mxu0 0.0
  %4351 = vmatpush1.msra.mxu0 0.0
  %4352 = vmatprep.subr.mxu0 0.0
  %4353 = vmatpush1.msra.mxu0 0.0
  %4354 = vmatprep.subr.mxu0 0.0
  %4355 = vmatpush1.msra.mxu0 0.0
  %4356 = vmatprep.subr.mxu0 0.0
  %4357 = vmatpush1.msra.mxu0 0.0
  %4358 = vmatprep.subr.mxu0 0.0
  %4359 = vmatpush1.msra.mxu0 0.0
  %4360 = vmatprep.subr.mxu0 0.0
  %4361 = vmatpush1.msra.mxu0 0.0
  %4362 = vmatprep.subr.mxu0 0.0
  %4363 = vmatpush1.msra.mxu0 0.0
  %4364 = vmatprep.subr.mxu0 0.0
  %4365 = vmatpush1.msra.mxu0 0.0
  %4366 = vmatprep.subr.mxu0 0.0
  %4367 = vmatpush1.msra.mxu0 0.0
  %4368 = vmatprep.subr.mxu0 0.0
  %4369 = vmatpush1.msra.mxu0 0.0
  %4370 = vmatprep.subr.mxu0 0.0
  %4371 = vmatpush1.msra.mxu0 0.0
  %4372 = vmatprep.subr.mxu0 0.0
  %4373 = vmatpush1.msra.mxu0 0.0
  %4374 = vmatprep.subr.mxu0 0.0
  %4375 = vmatpush1.msra.mxu0 0.0
  %4376 = vmatprep.subr.mxu0 0.0
  %4377 = vmatpush1.msra.mxu0 0.0
  %4378 = vmatprep.mubr.f32.mxu0 0.0
  %4379 = vmatmul.mubr.f32.gmra.mrb[0].mxu0 %v4312
  %v4380 = vpop.f32.mrb[0].mxu0
  %v4381 = vadd.f32 %v4309, %v4380
  %v4382 = vpop.f32.mrb[0].mxu0
  %4383 = vdwg.mxu0
  %v4384 = vadd.f32 %v4381, 0.0
  %s4385 = scalar_lea.vmem %s18, 8
  %v4386 = vld [vmem:[%s4385] sm:$0x1]
  %s4387 = scalar_lea.vmem %s18, 9
  %v4388 = vld [vmem:[%s4387] sm:$0x1]
  %v4389 = vsel %vm186, %v4384, 0.0
  %4390 = vadd.xlane.f32.xlu0 %v4389
  %v4391 = vpop.xlane.xlu0 %4390
  %v4392 = vmul.f32 %v4391, %v755
  %v4393 = vsub.f32 %v4384, %v4392
  %v4394 = vmul.f32 %v4393, %v4393
  %v4395 = vsel %vm186, %v4394, 0.0
  %4396 = vadd.xlane.f32.xlu0 %v4395
  %v4397 = vpop.xlane.xlu0 %4396
  %v4398 = vmul.f32 %v4397, %v755
  %v4399 = vadd.f32 %v4398, 1e-05
  %v4400 = vrsqrt.pop %v4399
  %v4401 = vmul.f32 %v4393, %v4400
  %v4403 = vlaneseq
  %v4404 = vshrl.u32 %v4403, 7
  %v4405 = vsub.s32 0, %v4404
  %v4406 = vrot.slane %v4386, %v4405
  %v4408 = vmul.f32 %v4401, %v4406
  %v4410 = vlaneseq
  %v4411 = vshrl.u32 %v4410, 7
  %v4412 = vsub.s32 0, %v4411
  %v4413 = vrot.slane %v4388, %v4412
  %v4415 = vadd.f32 %v4408, %v4413
  %v4416 = vadd.f32 %v4415, %v1239
  %v4417 = vadd.f32 %v3864, %v1223
  %v4418 = vadd.f32 %v3865, %v1224
  %v4419 = vadd.f32 %v3866, %v1225
  %v4420 = vadd.f32 %v3867, %v1226
  %v4421 = vadd.f32 %v3868, %v1227
  %v4422 = vadd.f32 %v3869, %v1228
  %v4423 = vadd.f32 %v3870, %v1229
  %v4424 = vadd.f32 %v3871, %v1230
  %v4425 = vadd.f32 %v3872, %v1231
  %v4426 = vadd.f32 %v3873, %v1232
  %v4427 = vadd.f32 %v3874, %v1233
  %v4428 = vadd.f32 %v3875, %v1234
  %v4429 = vadd.f32 %v3876, %v1235
  %v4430 = vadd.f32 %v3877, %v1236
  %v4431 = vadd.f32 %v3878, %v1237
  %v4432 = vadd.f32 %v3879, %v1238
  %s4433 = scalar_lea.vmem %s16, 384
  %v4434 = vld [vmem:[%s4433] sm:$0xff]
  %v4435 = vld [vmem:[%s4433 + $0x8] sm:$0xff]
  %v4436 = vld [vmem:[%s4433 + $0x10] sm:$0xff]
  %v4437 = vld [vmem:[%s4433 + $0x18] sm:$0xff]
  %s4438 = scalar_lea.vmem %s17, 12
  %v4439 = vld [vmem:[%s4438] sm:$0x1]
  %v4441 = vlaneseq
  %v4442 = vshrl.u32 %v4441, 7
  %v4443 = vsub.s32 0, %v4442
  %v4444 = vrot.slane %v4439, %v4443
  %v4447 = vsel %vm186, %v4416, 0
  %4449 = vmatprep.subr.mxu0 0.0
  %4450 = vmatpush1.msra.mxu0 %v4434
  %4451 = vmatprep.subr.mxu0 0.0
  %4452 = vmatpush1.msra.mxu0 %v4435
  %4453 = vmatprep.subr.mxu0 0.0
  %4454 = vmatpush1.msra.mxu0 %v4436
  %4455 = vmatprep.subr.mxu0 0.0
  %4456 = vmatpush1.msra.mxu0 %v4437
  %4457 = vmatprep.subr.mxu0 0.0
  %4458 = vmatpush1.msra.mxu0 0.0
  %4459 = vmatprep.subr.mxu0 0.0
  %4460 = vmatpush1.msra.mxu0 0.0
  %4461 = vmatprep.subr.mxu0 0.0
  %4462 = vmatpush1.msra.mxu0 0.0
  %4463 = vmatprep.subr.mxu0 0.0
  %4464 = vmatpush1.msra.mxu0 0.0
  %4465 = vmatprep.subr.mxu0 0.0
  %4466 = vmatpush1.msra.mxu0 0.0
  %4467 = vmatprep.subr.mxu0 0.0
  %4468 = vmatpush1.msra.mxu0 0.0
  %4469 = vmatprep.subr.mxu0 0.0
  %4470 = vmatpush1.msra.mxu0 0.0
  %4471 = vmatprep.subr.mxu0 0.0
  %4472 = vmatpush1.msra.mxu0 0.0
  %4473 = vmatprep.subr.mxu0 0.0
  %4474 = vmatpush1.msra.mxu0 0.0
  %4475 = vmatprep.subr.mxu0 0.0
  %4476 = vmatpush1.msra.mxu0 0.0
  %4477 = vmatprep.subr.mxu0 0.0
  %4478 = vmatpush1.msra.mxu0 0.0
  %4479 = vmatprep.subr.mxu0 0.0
  %4480 = vmatpush1.msra.mxu0 0.0
  %4481 = vmatprep.subr.mxu0 0.0
  %4482 = vmatpush1.msra.mxu0 0.0
  %4483 = vmatprep.subr.mxu0 0.0
  %4484 = vmatpush1.msra.mxu0 0.0
  %4485 = vmatprep.subr.mxu0 0.0
  %4486 = vmatpush1.msra.mxu0 0.0
  %4487 = vmatprep.subr.mxu0 0.0
  %4488 = vmatpush1.msra.mxu0 0.0
  %4489 = vmatprep.subr.mxu0 0.0
  %4490 = vmatpush1.msra.mxu0 0.0
  %4491 = vmatprep.subr.mxu0 0.0
  %4492 = vmatpush1.msra.mxu0 0.0
  %4493 = vmatprep.subr.mxu0 0.0
  %4494 = vmatpush1.msra.mxu0 0.0
  %4495 = vmatprep.subr.mxu0 0.0
  %4496 = vmatpush1.msra.mxu0 0.0
  %4497 = vmatprep.subr.mxu0 0.0
  %4498 = vmatpush1.msra.mxu0 0.0
  %4499 = vmatprep.subr.mxu0 0.0
  %4500 = vmatpush1.msra.mxu0 0.0
  %4501 = vmatprep.subr.mxu0 0.0
  %4502 = vmatpush1.msra.mxu0 0.0
  %4503 = vmatprep.subr.mxu0 0.0
  %4504 = vmatpush1.msra.mxu0 0.0
  %4505 = vmatprep.subr.mxu0 0.0
  %4506 = vmatpush1.msra.mxu0 0.0
  %4507 = vmatprep.subr.mxu0 0.0
  %4508 = vmatpush1.msra.mxu0 0.0
  %4509 = vmatprep.subr.mxu0 0.0
  %4510 = vmatpush1.msra.mxu0 0.0
  %4511 = vmatprep.subr.mxu0 0.0
  %4512 = vmatpush1.msra.mxu0 0.0
  %4513 = vmatprep.mubr.f32.mxu0 0.0
  %4514 = vmatmul.mubr.f32.gmra.mrb[0].mxu0 %v4447
  %v4515 = vpop.f32.mrb[0].mxu0
  %v4516 = vadd.f32 %v4444, %v4515
  %v4517 = vpop.f32.mrb[0].mxu0
  %4518 = vdwg.mxu0
  %s4519 = scalar_lea.vmem %s16, 416
  %v4520 = vld [vmem:[%s4519] sm:$0xff]
  %v4521 = vld [vmem:[%s4519 + $0x8] sm:$0xff]
  %v4522 = vld [vmem:[%s4519 + $0x10] sm:$0xff]
  %v4523 = vld [vmem:[%s4519 + $0x18] sm:$0xff]
  %s4524 = scalar_lea.vmem %s17, 13
  %v4525 = vld [vmem:[%s4524] sm:$0x1]
  %v4527 = vlaneseq
  %v4528 = vshrl.u32 %v4527, 7
  %v4529 = vsub.s32 0, %v4528
  %v4530 = vrot.slane %v4525, %v4529
  %v4533 = vsel %vm186, %v4417, 0
  %v4536 = vsel %vm186, %v4418, 0
  %v4539 = vsel %vm186, %v4419, 0
  %v4542 = vsel %vm186, %v4420, 0
  %v4545 = vsel %vm186, %v4421, 0
  %v4548 = vsel %vm186, %v4422, 0
  %v4551 = vsel %vm186, %v4423, 0
  %v4554 = vsel %vm186, %v4424, 0
  %v4557 = vsel %vm186, %v4425, 0
  %v4560 = vsel %vm186, %v4426, 0
  %v4563 = vsel %vm186, %v4427, 0
  %v4566 = vsel %vm186, %v4428, 0
  %v4569 = vsel %vm186, %v4429, 0
  %v4572 = vsel %vm186, %v4430, 0
  %v4575 = vsel %vm186, %v4431, 0
  %v4578 = vsel %vm186, %v4432, 0
  %4580 = vmatprep.subr.mxu0 0.0
  %4581 = vmatpush1.msra.mxu0 %v4520
  %4582 = vmatprep.subr.mxu0 0.0
  %4583 = vmatpush1.msra.mxu0 %v4521
  %4584 = vmatprep.subr.mxu0 0.0
  %4585 = vmatpush1.msra.mxu0 %v4522
  %4586 = vmatprep.subr.mxu0 0.0
  %4587 = vmatpush1.msra.mxu0 %v4523
  %4588 = vmatprep.subr.mxu0 0.0
  %4589 = vmatpush1.msra.mxu0 0.0
  %4590 = vmatprep.subr.mxu0 0.0
  %4591 = vmatpush1.msra.mxu0 0.0
  %4592 = vmatprep.subr.mxu0 0.0
  %4593 = vmatpush1.msra.mxu0 0.0
  %4594 = vmatprep.subr.mxu0 0.0
  %4595 = vmatpush1.msra.mxu0 0.0
  %4596 = vmatprep.subr.mxu0 0.0
  %4597 = vmatpush1.msra.mxu0 0.0
  %4598 = vmatprep.subr.mxu0 0.0
  %4599 = vmatpush1.msra.mxu0 0.0
  %4600 = vmatprep.subr.mxu0 0.0
  %4601 = vmatpush1.msra.mxu0 0.0
  %4602 = vmatprep.subr.mxu0 0.0
  %4603 = vmatpush1.msra.mxu0 0.0
  %4604 = vmatprep.subr.mxu0 0.0
  %4605 = vmatpush1.msra.mxu0 0.0
  %4606 = vmatprep.subr.mxu0 0.0
  %4607 = vmatpush1.msra.mxu0 0.0
  %4608 = vmatprep.subr.mxu0 0.0
  %4609 = vmatpush1.msra.mxu0 0.0
  %4610 = vmatprep.subr.mxu0 0.0
  %4611 = vmatpush1.msra.mxu0 0.0
  %4612 = vmatprep.subr.mxu0 0.0
  %4613 = vmatpush1.msra.mxu0 0.0
  %4614 = vmatprep.subr.mxu0 0.0
  %4615 = vmatpush1.msra.mxu0 0.0
  %4616 = vmatprep.subr.mxu0 0.0
  %4617 = vmatpush1.msra.mxu0 0.0
  %4618 = vmatprep.subr.mxu0 0.0
  %4619 = vmatpush1.msra.mxu0 0.0
  %4620 = vmatprep.subr.mxu0 0.0
  %4621 = vmatpush1.msra.mxu0 0.0
  %4622 = vmatprep.subr.mxu0 0.0
  %4623 = vmatpush1.msra.mxu0 0.0
  %4624 = vmatprep.subr.mxu0 0.0
  %4625 = vmatpush1.msra.mxu0 0.0
  %4626 = vmatprep.subr.mxu0 0.0
  %4627 = vmatpush1.msra.mxu0 0.0
  %4628 = vmatprep.subr.mxu0 0.0
  %4629 = vmatpush1.msra.mxu0 0.0
  %4630 = vmatprep.subr.mxu0 0.0
  %4631 = vmatpush1.msra.mxu0 0.0
  %4632 = vmatprep.subr.mxu0 0.0
  %4633 = vmatpush1.msra.mxu0 0.0
  %4634 = vmatprep.subr.mxu0 0.0
  %4635 = vmatpush1.msra.mxu0 0.0
  %4636 = vmatprep.subr.mxu0 0.0
  %4637 = vmatpush1.msra.mxu0 0.0
  %4638 = vmatprep.subr.mxu0 0.0
  %4639 = vmatpush1.msra.mxu0 0.0
  %4640 = vmatprep.subr.mxu0 0.0
  %4641 = vmatpush1.msra.mxu0 0.0
  %4642 = vmatprep.subr.mxu0 0.0
  %4643 = vmatpush1.msra.mxu0 0.0
  %4644 = vmatprep.mubr.f32.mxu0 0.0
  %4645 = vmatmul.mubr.f32.gmra.mrb[0].mxu0 %v4533
  %v4646 = vpop.f32.mrb[0].mxu0
  %v4647 = vadd.f32 %v4530, %v4646
  %v4648 = vpop.f32.mrb[0].mxu0
  %4649 = vmatprep.mubr.f32.mxu0 0.0
  %4650 = vmatmul.mubr.f32.gmra.mrb[0].mxu0 %v4536
  %v4651 = vpop.f32.mrb[0].mxu0
  %v4652 = vadd.f32 %v4530, %v4651
  %v4653 = vpop.f32.mrb[0].mxu0
  %4654 = vmatprep.mubr.f32.mxu0 0.0
  %4655 = vmatmul.mubr.f32.gmra.mrb[0].mxu0 %v4539
  %v4656 = vpop.f32.mrb[0].mxu0
  %v4657 = vadd.f32 %v4530, %v4656
  %v4658 = vpop.f32.mrb[0].mxu0
  %4659 = vmatprep.mubr.f32.mxu0 0.0
  %4660 = vmatmul.mubr.f32.gmra.mrb[0].mxu0 %v4542
  %v4661 = vpop.f32.mrb[0].mxu0
  %v4662 = vadd.f32 %v4530, %v4661
  %v4663 = vpop.f32.mrb[0].mxu0
  %4664 = vmatprep.mubr.f32.mxu0 0.0
  %4665 = vmatmul.mubr.f32.gmra.mrb[0].mxu0 %v4545
  %v4666 = vpop.f32.mrb[0].mxu0
  %v4667 = vadd.f32 %v4530, %v4666
  %v4668 = vpop.f32.mrb[0].mxu0
  %4669 = vmatprep.mubr.f32.mxu0 0.0
  %4670 = vmatmul.mubr.f32.gmra.mrb[0].mxu0 %v4548
  %v4671 = vpop.f32.mrb[0].mxu0
  %v4672 = vadd.f32 %v4530, %v4671
  %v4673 = vpop.f32.mrb[0].mxu0
  %4674 = vmatprep.mubr.f32.mxu0 0.0
  %4675 = vmatmul.mubr.f32.gmra.mrb[0].mxu0 %v4551
  %v4676 = vpop.f32.mrb[0].mxu0
  %v4677 = vadd.f32 %v4530, %v4676
  %v4678 = vpop.f32.mrb[0].mxu0
  %4679 = vmatprep.mubr.f32.mxu0 0.0
  %4680 = vmatmul.mubr.f32.gmra.mrb[0].mxu0 %v4554
  %v4681 = vpop.f32.mrb[0].mxu0
  %v4682 = vadd.f32 %v4530, %v4681
  %v4683 = vpop.f32.mrb[0].mxu0
  %4684 = vmatprep.mubr.f32.mxu0 0.0
  %4685 = vmatmul.mubr.f32.gmra.mrb[0].mxu0 %v4557
  %v4686 = vpop.f32.mrb[0].mxu0
  %v4687 = vadd.f32 %v4530, %v4686
  %v4688 = vpop.f32.mrb[0].mxu0
  %4689 = vmatprep.mubr.f32.mxu0 0.0
  %4690 = vmatmul.mubr.f32.gmra.mrb[0].mxu0 %v4560
  %v4691 = vpop.f32.mrb[0].mxu0
  %v4692 = vadd.f32 %v4530, %v4691
  %v4693 = vpop.f32.mrb[0].mxu0
  %4694 = vmatprep.mubr.f32.mxu0 0.0
  %4695 = vmatmul.mubr.f32.gmra.mrb[0].mxu0 %v4563
  %v4696 = vpop.f32.mrb[0].mxu0
  %v4697 = vadd.f32 %v4530, %v4696
  %v4698 = vpop.f32.mrb[0].mxu0
  %4699 = vmatprep.mubr.f32.mxu0 0.0
  %4700 = vmatmul.mubr.f32.gmra.mrb[0].mxu0 %v4566
  %v4701 = vpop.f32.mrb[0].mxu0
  %v4702 = vadd.f32 %v4530, %v4701
  %v4703 = vpop.f32.mrb[0].mxu0
  %4704 = vmatprep.mubr.f32.mxu0 0.0
  %4705 = vmatmul.mubr.f32.gmra.mrb[0].mxu0 %v4569
  %v4706 = vpop.f32.mrb[0].mxu0
  %v4707 = vadd.f32 %v4530, %v4706
  %v4708 = vpop.f32.mrb[0].mxu0
  %4709 = vmatprep.mubr.f32.mxu0 0.0
  %4710 = vmatmul.mubr.f32.gmra.mrb[0].mxu0 %v4572
  %v4711 = vpop.f32.mrb[0].mxu0
  %v4712 = vadd.f32 %v4530, %v4711
  %v4713 = vpop.f32.mrb[0].mxu0
  %4714 = vmatprep.mubr.f32.mxu0 0.0
  %4715 = vmatmul.mubr.f32.gmra.mrb[0].mxu0 %v4575
  %v4716 = vpop.f32.mrb[0].mxu0
  %v4717 = vadd.f32 %v4530, %v4716
  %v4718 = vpop.f32.mrb[0].mxu0
  %4719 = vmatprep.mubr.f32.mxu0 0.0
  %4720 = vmatmul.mubr.f32.gmra.mrb[0].mxu0 %v4578
  %v4721 = vpop.f32.mrb[0].mxu0
  %v4722 = vadd.f32 %v4530, %v4721
  %v4723 = vpop.f32.mrb[0].mxu0
  %4724 = vdwg.mxu0
  %s4725 = scalar_lea.vmem %s16, 448
  %v4726 = vld [vmem:[%s4725] sm:$0xff]
  %v4727 = vld [vmem:[%s4725 + $0x8] sm:$0xff]
  %v4728 = vld [vmem:[%s4725 + $0x10] sm:$0xff]
  %v4729 = vld [vmem:[%s4725 + $0x18] sm:$0xff]
  %s4730 = scalar_lea.vmem %s17, 14
  %v4731 = vld [vmem:[%s4730] sm:$0x1]
  %v4733 = vlaneseq
  %v4734 = vshrl.u32 %v4733, 7
  %v4735 = vsub.s32 0, %v4734
  %v4736 = vrot.slane %v4731, %v4735
  %v4739 = vsel %vm186, %v3864, 0
  %v4742 = vsel %vm186, %v3865, 0
  %v4745 = vsel %vm186, %v3866, 0
  %v4748 = vsel %vm186, %v3867, 0
  %v4751 = vsel %vm186, %v3868, 0
  %v4754 = vsel %vm186, %v3869, 0
  %v4757 = vsel %vm186, %v3870, 0
  %v4760 = vsel %vm186, %v3871, 0
  %v4763 = vsel %vm186, %v3872, 0
  %v4766 = vsel %vm186, %v3873, 0
  %v4769 = vsel %vm186, %v3874, 0
  %v4772 = vsel %vm186, %v3875, 0
  %v4775 = vsel %vm186, %v3876, 0
  %v4778 = vsel %vm186, %v3877, 0
  %v4781 = vsel %vm186, %v3878, 0
  %v4784 = vsel %vm186, %v3879, 0
  %4786 = vmatprep.subr.mxu0 0.0
  %4787 = vmatpush1.msra.mxu0 %v4726
  %4788 = vmatprep.subr.mxu0 0.0
  %4789 = vmatpush1.msra.mxu0 %v4727
  %4790 = vmatprep.subr.mxu0 0.0
  %4791 = vmatpush1.msra.mxu0 %v4728
  %4792 = vmatprep.subr.mxu0 0.0
  %4793 = vmatpush1.msra.mxu0 %v4729
  %4794 = vmatprep.subr.mxu0 0.0
  %4795 = vmatpush1.msra.mxu0 0.0
  %4796 = vmatprep.subr.mxu0 0.0
  %4797 = vmatpush1.msra.mxu0 0.0
  %4798 = vmatprep.subr.mxu0 0.0
  %4799 = vmatpush1.msra.mxu0 0.0
  %4800 = vmatprep.subr.mxu0 0.0
  %4801 = vmatpush1.msra.mxu0 0.0
  %4802 = vmatprep.subr.mxu0 0.0
  %4803 = vmatpush1.msra.mxu0 0.0
  %4804 = vmatprep.subr.mxu0 0.0
  %4805 = vmatpush1.msra.mxu0 0.0
  %4806 = vmatprep.subr.mxu0 0.0
  %4807 = vmatpush1.msra.mxu0 0.0
  %4808 = vmatprep.subr.mxu0 0.0
  %4809 = vmatpush1.msra.mxu0 0.0
  %4810 = vmatprep.subr.mxu0 0.0
  %4811 = vmatpush1.msra.mxu0 0.0
  %4812 = vmatprep.subr.mxu0 0.0
  %4813 = vmatpush1.msra.mxu0 0.0
  %4814 = vmatprep.subr.mxu0 0.0
  %4815 = vmatpush1.msra.mxu0 0.0
  %4816 = vmatprep.subr.mxu0 0.0
  %4817 = vmatpush1.msra.mxu0 0.0
  %4818 = vmatprep.subr.mxu0 0.0
  %4819 = vmatpush1.msra.mxu0 0.0
  %4820 = vmatprep.subr.mxu0 0.0
  %4821 = vmatpush1.msra.mxu0 0.0
  %4822 = vmatprep.subr.mxu0 0.0
  %4823 = vmatpush1.msra.mxu0 0.0
  %4824 = vmatprep.subr.mxu0 0.0
  %4825 = vmatpush1.msra.mxu0 0.0
  %4826 = vmatprep.subr.mxu0 0.0
  %4827 = vmatpush1.msra.mxu0 0.0
  %4828 = vmatprep.subr.mxu0 0.0
  %4829 = vmatpush1.msra.mxu0 0.0
  %4830 = vmatprep.subr.mxu0 0.0
  %4831 = vmatpush1.msra.mxu0 0.0
  %4832 = vmatprep.subr.mxu0 0.0
  %4833 = vmatpush1.msra.mxu0 0.0
  %4834 = vmatprep.subr.mxu0 0.0
  %4835 = vmatpush1.msra.mxu0 0.0
  %4836 = vmatprep.subr.mxu0 0.0
  %4837 = vmatpush1.msra.mxu0 0.0
  %4838 = vmatprep.subr.mxu0 0.0
  %4839 = vmatpush1.msra.mxu0 0.0
  %4840 = vmatprep.subr.mxu0 0.0
  %4841 = vmatpush1.msra.mxu0 0.0
  %4842 = vmatprep.subr.mxu0 0.0
  %4843 = vmatpush1.msra.mxu0 0.0
  %4844 = vmatprep.subr.mxu0 0.0
  %4845 = vmatpush1.msra.mxu0 0.0
  %4846 = vmatprep.subr.mxu0 0.0
  %4847 = vmatpush1.msra.mxu0 0.0
  %4848 = vmatprep.subr.mxu0 0.0
  %4849 = vmatpush1.msra.mxu0 0.0
  %4850 = vmatprep.mubr.f32.mxu0 0.0
  %4851 = vmatmul.mubr.f32.gmra.mrb[0].mxu0 %v4739
  %v4852 = vpop.f32.mrb[0].mxu0
  %v4853 = vadd.f32 %v4736, %v4852
  %v4854 = vpop.f32.mrb[0].mxu0
  %4855 = vmatprep.mubr.f32.mxu0 0.0
  %4856 = vmatmul.mubr.f32.gmra.mrb[0].mxu0 %v4742
  %v4857 = vpop.f32.mrb[0].mxu0
  %v4858 = vadd.f32 %v4736, %v4857
  %v4859 = vpop.f32.mrb[0].mxu0
  %4860 = vmatprep.mubr.f32.mxu0 0.0
  %4861 = vmatmul.mubr.f32.gmra.mrb[0].mxu0 %v4745
  %v4862 = vpop.f32.mrb[0].mxu0
  %v4863 = vadd.f32 %v4736, %v4862
  %v4864 = vpop.f32.mrb[0].mxu0
  %4865 = vmatprep.mubr.f32.mxu0 0.0
  %4866 = vmatmul.mubr.f32.gmra.mrb[0].mxu0 %v4748
  %v4867 = vpop.f32.mrb[0].mxu0
  %v4868 = vadd.f32 %v4736, %v4867
  %v4869 = vpop.f32.mrb[0].mxu0
  %4870 = vmatprep.mubr.f32.mxu0 0.0
  %4871 = vmatmul.mubr.f32.gmra.mrb[0].mxu0 %v4751
  %v4872 = vpop.f32.mrb[0].mxu0
  %v4873 = vadd.f32 %v4736, %v4872
  %v4874 = vpop.f32.mrb[0].mxu0
  %4875 = vmatprep.mubr.f32.mxu0 0.0
  %4876 = vmatmul.mubr.f32.gmra.mrb[0].mxu0 %v4754
  %v4877 = vpop.f32.mrb[0].mxu0
  %v4878 = vadd.f32 %v4736, %v4877
  %v4879 = vpop.f32.mrb[0].mxu0
  %4880 = vmatprep.mubr.f32.mxu0 0.0
  %4881 = vmatmul.mubr.f32.gmra.mrb[0].mxu0 %v4757
  %v4882 = vpop.f32.mrb[0].mxu0
  %v4883 = vadd.f32 %v4736, %v4882
  %v4884 = vpop.f32.mrb[0].mxu0
  %4885 = vmatprep.mubr.f32.mxu0 0.0
  %4886 = vmatmul.mubr.f32.gmra.mrb[0].mxu0 %v4760
  %v4887 = vpop.f32.mrb[0].mxu0
  %v4888 = vadd.f32 %v4736, %v4887
  %v4889 = vpop.f32.mrb[0].mxu0
  %4890 = vmatprep.mubr.f32.mxu0 0.0
  %4891 = vmatmul.mubr.f32.gmra.mrb[0].mxu0 %v4763
  %v4892 = vpop.f32.mrb[0].mxu0
  %v4893 = vadd.f32 %v4736, %v4892
  %v4894 = vpop.f32.mrb[0].mxu0
  %4895 = vmatprep.mubr.f32.mxu0 0.0
  %4896 = vmatmul.mubr.f32.gmra.mrb[0].mxu0 %v4766
  %v4897 = vpop.f32.mrb[0].mxu0
  %v4898 = vadd.f32 %v4736, %v4897
  %v4899 = vpop.f32.mrb[0].mxu0
  %4900 = vmatprep.mubr.f32.mxu0 0.0
  %4901 = vmatmul.mubr.f32.gmra.mrb[0].mxu0 %v4769
  %v4902 = vpop.f32.mrb[0].mxu0
  %v4903 = vadd.f32 %v4736, %v4902
  %v4904 = vpop.f32.mrb[0].mxu0
  %4905 = vmatprep.mubr.f32.mxu0 0.0
  %4906 = vmatmul.mubr.f32.gmra.mrb[0].mxu0 %v4772
  %v4907 = vpop.f32.mrb[0].mxu0
  %v4908 = vadd.f32 %v4736, %v4907
  %v4909 = vpop.f32.mrb[0].mxu0
  %4910 = vmatprep.mubr.f32.mxu0 0.0
  %4911 = vmatmul.mubr.f32.gmra.mrb[0].mxu0 %v4775
  %v4912 = vpop.f32.mrb[0].mxu0
  %v4913 = vadd.f32 %v4736, %v4912
  %v4914 = vpop.f32.mrb[0].mxu0
  %4915 = vmatprep.mubr.f32.mxu0 0.0
  %4916 = vmatmul.mubr.f32.gmra.mrb[0].mxu0 %v4778
  %v4917 = vpop.f32.mrb[0].mxu0
  %v4918 = vadd.f32 %v4736, %v4917
  %v4919 = vpop.f32.mrb[0].mxu0
  %4920 = vmatprep.mubr.f32.mxu0 0.0
  %4921 = vmatmul.mubr.f32.gmra.mrb[0].mxu0 %v4781
  %v4922 = vpop.f32.mrb[0].mxu0
  %v4923 = vadd.f32 %v4736, %v4922
  %v4924 = vpop.f32.mrb[0].mxu0
  %4925 = vmatprep.mubr.f32.mxu0 0.0
  %4926 = vmatmul.mubr.f32.gmra.mrb[0].mxu0 %v4784
  %v4927 = vpop.f32.mrb[0].mxu0
  %v4928 = vadd.f32 %v4736, %v4927
  %v4929 = vpop.f32.mrb[0].mxu0
  %4930 = vdwg.mxu0
  %v4932 = vsel %vm186, %v4516, 0
  %v4935 = vsel %vm186, %v4647, 0
  %v4938 = vsel %vm186, %v4652, 0
  %v4941 = vsel %vm186, %v4657, 0
  %v4944 = vsel %vm186, %v4662, 0
  %v4947 = vsel %vm186, %v4667, 0
  %v4950 = vsel %vm186, %v4672, 0
  %v4953 = vsel %vm186, %v4677, 0
  %v4956 = vsel %vm186, %v4682, 0
  %v4959 = vsel %vm186, %v4687, 0
  %v4962 = vsel %vm186, %v4692, 0
  %v4965 = vsel %vm186, %v4697, 0
  %v4968 = vsel %vm186, %v4702, 0
  %v4971 = vsel %vm186, %v4707, 0
  %v4974 = vsel %vm186, %v4712, 0
  %v4977 = vsel %vm186, %v4717, 0
  %v4980 = vsel %vm186, %v4722, 0
  %4982 = vmatprep.subr.mxu0 0.0
  %4983 = vmatpush1.xpose.msra.mxu0 %v4935
  %4984 = vmatprep.subr.mxu0 0.0
  %4985 = vmatpush1.xpose.msra.mxu0 %v4938
  %4986 = vmatprep.subr.mxu0 0.0
  %4987 = vmatpush1.xpose.msra.mxu0 %v4941
  %4988 = vmatprep.subr.mxu0 0.0
  %4989 = vmatpush1.xpose.msra.mxu0 %v4944
  %4990 = vmatprep.subr.mxu0 0.0
  %4991 = vmatpush1.xpose.msra.mxu0 %v4947
  %4992 = vmatprep.subr.mxu0 0.0
  %4993 = vmatpush1.xpose.msra.mxu0 %v4950
  %4994 = vmatprep.subr.mxu0 0.0
  %4995 = vmatpush1.xpose.msra.mxu0 %v4953
  %4996 = vmatprep.subr.mxu0 0.0
  %4997 = vmatpush1.xpose.msra.mxu0 %v4956
  %4998 = vmatprep.subr.mxu0 0.0
  %4999 = vmatpush1.xpose.msra.mxu0 %v4959
  %5000 = vmatprep.subr.mxu0 0.0
  %5001 = vmatpush1.xpose.msra.mxu0 %v4962
  %5002 = vmatprep.subr.mxu0 0.0
  %5003 = vmatpush1.xpose.msra.mxu0 %v4965
  %5004 = vmatprep.subr.mxu0 0.0
  %5005 = vmatpush1.xpose.msra.mxu0 %v4968
  %5006 = vmatprep.subr.mxu0 0.0
  %5007 = vmatpush1.xpose.msra.mxu0 %v4971
  %5008 = vmatprep.subr.mxu0 0.0
  %5009 = vmatpush1.xpose.msra.mxu0 %v4974
  %5010 = vmatprep.subr.mxu0 0.0
  %5011 = vmatpush1.xpose.msra.mxu0 %v4977
  %5012 = vmatprep.subr.mxu0 0.0
  %5013 = vmatpush1.xpose.msra.mxu0 %v4980
  %5014 = vmatprep.subr.mxu0 0.0
  %5015 = vmatpush1.xpose.msra.mxu0 0.0
  %5016 = vmatprep.subr.mxu0 0.0
  %5017 = vmatpush1.xpose.msra.mxu0 0.0
  %5018 = vmatprep.subr.mxu0 0.0
  %5019 = vmatpush1.xpose.msra.mxu0 0.0
  %5020 = vmatprep.subr.mxu0 0.0
  %5021 = vmatpush1.xpose.msra.mxu0 0.0
  %5022 = vmatprep.subr.mxu0 0.0
  %5023 = vmatpush1.xpose.msra.mxu0 0.0
  %5024 = vmatprep.subr.mxu0 0.0
  %5025 = vmatpush1.xpose.msra.mxu0 0.0
  %5026 = vmatprep.subr.mxu0 0.0
  %5027 = vmatpush1.xpose.msra.mxu0 0.0
  %5028 = vmatprep.subr.mxu0 0.0
  %5029 = vmatpush1.xpose.msra.mxu0 0.0
  %5030 = vmatprep.subr.mxu0 0.0
  %5031 = vmatpush1.xpose.msra.mxu0 0.0
  %5032 = vmatprep.subr.mxu0 0.0
  %5033 = vmatpush1.xpose.msra.mxu0 0.0
  %5034 = vmatprep.subr.mxu0 0.0
  %5035 = vmatpush1.xpose.msra.mxu0 0.0
  %5036 = vmatprep.subr.mxu0 0.0
  %5037 = vmatpush1.xpose.msra.mxu0 0.0
  %5038 = vmatprep.subr.mxu0 0.0
  %5039 = vmatpush1.xpose.msra.mxu0 0.0
  %5040 = vmatprep.subr.mxu0 0.0
  %5041 = vmatpush1.xpose.msra.mxu0 0.0
  %5042 = vmatprep.subr.mxu0 0.0
  %5043 = vmatpush1.xpose.msra.mxu0 0.0
  %5044 = vmatprep.subr.mxu0 0.0
  %5045 = vmatpush1.xpose.msra.mxu0 0.0
  %5046 = vmatprep.mubr.f32.mxu0 0.0
  %5047 = vmatmul.mubr.f32.gmra.mrb[0].mxu0 %v4932
  %v5048 = vpop.f32.mrb[0].mxu0
  %v5049 = vadd.f32 0.0, %v5048
  %v5050 = vpop.f32.mrb[0].mxu0
  %5051 = vdwg.mxu0
  %v5052 = vmul.f32 %v5049, 0.17677669
  %v5053 = vadd.f32 %v5052, %v2391
  %5054 = vmax.xlane.f32.xlu0 %v5053
  %v5055 = vpop.xlane.xlu0 %5054
  %v5056 = vsub.f32 %v5053, %v5055
  %v5057 = vmul.f32 %v5056, 1.442695
  %v5058 = vpow.pop %v5057
  %5059 = vadd.xlane.f32.xlu0 %v5058
  %v5060 = vpop.xlane.xlu0 %5059
  %v5061 = vrcp.pop %v5060
  %v5062 = vmul.f32 %v5058, %v5061
  %5063 = vmatprep.subr.mxu0 0.0
  %5064 = vmatpush1.msra.mxu0 %v4853
  %5065 = vmatprep.subr.mxu0 0.0
  %5066 = vmatpush1.msra.mxu0 %v4858
  %5067 = vmatprep.subr.mxu0 0.0
  %5068 = vmatpush1.msra.mxu0 %v4863
  %5069 = vmatprep.subr.mxu0 0.0
  %5070 = vmatpush1.msra.mxu0 %v4868
  %5071 = vmatprep.subr.mxu0 0.0
  %5072 = vmatpush1.msra.mxu0 %v4873
  %5073 = vmatprep.subr.mxu0 0.0
  %5074 = vmatpush1.msra.mxu0 %v4878
  %5075 = vmatprep.subr.mxu0 0.0
  %5076 = vmatpush1.msra.mxu0 %v4883
  %5077 = vmatprep.subr.mxu0 0.0
  %5078 = vmatpush1.msra.mxu0 %v4888
  %5079 = vmatprep.subr.mxu0 0.0
  %5080 = vmatpush1.msra.mxu0 %v4893
  %5081 = vmatprep.subr.mxu0 0.0
  %5082 = vmatpush1.msra.mxu0 %v4898
  %5083 = vmatprep.subr.mxu0 0.0
  %5084 = vmatpush1.msra.mxu0 %v4903
  %5085 = vmatprep.subr.mxu0 0.0
  %5086 = vmatpush1.msra.mxu0 %v4908
  %5087 = vmatprep.subr.mxu0 0.0
  %5088 = vmatpush1.msra.mxu0 %v4913
  %5089 = vmatprep.subr.mxu0 0.0
  %5090 = vmatpush1.msra.mxu0 %v4918
  %5091 = vmatprep.subr.mxu0 0.0
  %5092 = vmatpush1.msra.mxu0 %v4923
  %5093 = vmatprep.subr.mxu0 0.0
  %5094 = vmatpush1.msra.mxu0 %v4928
  %5095 = vmatprep.subr.mxu0 0.0
  %5096 = vmatpush1.msra.mxu0 0.0
  %5097 = vmatprep.subr.mxu0 0.0
  %5098 = vmatpush1.msra.mxu0 0.0
  %5099 = vmatprep.subr.mxu0 0.0
  %5100 = vmatpush1.msra.mxu0 0.0
  %5101 = vmatprep.subr.mxu0 0.0
  %5102 = vmatpush1.msra.mxu0 0.0
  %5103 = vmatprep.subr.mxu0 0.0
  %5104 = vmatpush1.msra.mxu0 0.0
  %5105 = vmatprep.subr.mxu0 0.0
  %5106 = vmatpush1.msra.mxu0 0.0
  %5107 = vmatprep.subr.mxu0 0.0
  %5108 = vmatpush1.msra.mxu0 0.0
  %5109 = vmatprep.subr.mxu0 0.0
  %5110 = vmatpush1.msra.mxu0 0.0
  %5111 = vmatprep.subr.mxu0 0.0
  %5112 = vmatpush1.msra.mxu0 0.0
  %5113 = vmatprep.subr.mxu0 0.0
  %5114 = vmatpush1.msra.mxu0 0.0
  %5115 = vmatprep.subr.mxu0 0.0
  %5116 = vmatpush1.msra.mxu0 0.0
  %5117 = vmatprep.subr.mxu0 0.0
  %5118 = vmatpush1.msra.mxu0 0.0
  %5119 = vmatprep.subr.mxu0 0.0
  %5120 = vmatpush1.msra.mxu0 0.0
  %5121 = vmatprep.subr.mxu0 0.0
  %5122 = vmatpush1.msra.mxu0 0.0
  %5123 = vmatprep.subr.mxu0 0.0
  %5124 = vmatpush1.msra.mxu0 0.0
  %5125 = vmatprep.subr.mxu0 0.0
  %5126 = vmatpush1.msra.mxu0 0.0
  %5127 = vmatprep.mubr.f32.mxu0 0.0
  %5128 = vmatmul.mubr.f32.gmra.mrb[0].mxu0 %v5062
  %v5129 = vpop.f32.mrb[0].mxu0
  %v5130 = vadd.f32 0.0, %v5129
  %v5131 = vpop.f32.mrb[0].mxu0
  %5132 = vdwg.mxu0
  %s5133 = scalar_lea.vmem %s16, 480
  %v5134 = vld [vmem:[%s5133] sm:$0xff]
  %v5135 = vld [vmem:[%s5133 + $0x8] sm:$0xff]
  %v5136 = vld [vmem:[%s5133 + $0x10] sm:$0xff]
  %v5137 = vld [vmem:[%s5133 + $0x18] sm:$0xff]
  %s5138 = scalar_lea.vmem %s17, 15
  %v5139 = vld [vmem:[%s5138] sm:$0x1]
  %v5141 = vlaneseq
  %v5142 = vshrl.u32 %v5141, 7
  %v5143 = vsub.s32 0, %v5142
  %v5144 = vrot.slane %v5139, %v5143
  %v5147 = vsel %vm186, %v5130, 0
  %5149 = vmatprep.subr.mxu0 0.0
  %5150 = vmatpush1.msra.mxu0 %v5134
  %5151 = vmatprep.subr.mxu0 0.0
  %5152 = vmatpush1.msra.mxu0 %v5135
  %5153 = vmatprep.subr.mxu0 0.0
  %5154 = vmatpush1.msra.mxu0 %v5136
  %5155 = vmatprep.subr.mxu0 0.0
  %5156 = vmatpush1.msra.mxu0 %v5137
  %5157 = vmatprep.subr.mxu0 0.0
  %5158 = vmatpush1.msra.mxu0 0.0
  %5159 = vmatprep.subr.mxu0 0.0
  %5160 = vmatpush1.msra.mxu0 0.0
  %5161 = vmatprep.subr.mxu0 0.0
  %5162 = vmatpush1.msra.mxu0 0.0
  %5163 = vmatprep.subr.mxu0 0.0
  %5164 = vmatpush1.msra.mxu0 0.0
  %5165 = vmatprep.subr.mxu0 0.0
  %5166 = vmatpush1.msra.mxu0 0.0
  %5167 = vmatprep.subr.mxu0 0.0
  %5168 = vmatpush1.msra.mxu0 0.0
  %5169 = vmatprep.subr.mxu0 0.0
  %5170 = vmatpush1.msra.mxu0 0.0
  %5171 = vmatprep.subr.mxu0 0.0
  %5172 = vmatpush1.msra.mxu0 0.0
  %5173 = vmatprep.subr.mxu0 0.0
  %5174 = vmatpush1.msra.mxu0 0.0
  %5175 = vmatprep.subr.mxu0 0.0
  %5176 = vmatpush1.msra.mxu0 0.0
  %5177 = vmatprep.subr.mxu0 0.0
  %5178 = vmatpush1.msra.mxu0 0.0
  %5179 = vmatprep.subr.mxu0 0.0
  %5180 = vmatpush1.msra.mxu0 0.0
  %5181 = vmatprep.subr.mxu0 0.0
  %5182 = vmatpush1.msra.mxu0 0.0
  %5183 = vmatprep.subr.mxu0 0.0
  %5184 = vmatpush1.msra.mxu0 0.0
  %5185 = vmatprep.subr.mxu0 0.0
  %5186 = vmatpush1.msra.mxu0 0.0
  %5187 = vmatprep.subr.mxu0 0.0
  %5188 = vmatpush1.msra.mxu0 0.0
  %5189 = vmatprep.subr.mxu0 0.0
  %5190 = vmatpush1.msra.mxu0 0.0
  %5191 = vmatprep.subr.mxu0 0.0
  %5192 = vmatpush1.msra.mxu0 0.0
  %5193 = vmatprep.subr.mxu0 0.0
  %5194 = vmatpush1.msra.mxu0 0.0
  %5195 = vmatprep.subr.mxu0 0.0
  %5196 = vmatpush1.msra.mxu0 0.0
  %5197 = vmatprep.subr.mxu0 0.0
  %5198 = vmatpush1.msra.mxu0 0.0
  %5199 = vmatprep.subr.mxu0 0.0
  %5200 = vmatpush1.msra.mxu0 0.0
  %5201 = vmatprep.subr.mxu0 0.0
  %5202 = vmatpush1.msra.mxu0 0.0
  %5203 = vmatprep.subr.mxu0 0.0
  %5204 = vmatpush1.msra.mxu0 0.0
  %5205 = vmatprep.subr.mxu0 0.0
  %5206 = vmatpush1.msra.mxu0 0.0
  %5207 = vmatprep.subr.mxu0 0.0
  %5208 = vmatpush1.msra.mxu0 0.0
  %5209 = vmatprep.subr.mxu0 0.0
  %5210 = vmatpush1.msra.mxu0 0.0
  %5211 = vmatprep.subr.mxu0 0.0
  %5212 = vmatpush1.msra.mxu0 0.0
  %5213 = vmatprep.mubr.f32.mxu0 0.0
  %5214 = vmatmul.mubr.f32.gmra.mrb[0].mxu0 %v5147
  %v5215 = vpop.f32.mrb[0].mxu0
  %v5216 = vadd.f32 %v5144, %v5215
  %v5217 = vpop.f32.mrb[0].mxu0
  %5218 = vdwg.mxu0
  %v5219 = vadd.f32 %v4415, %v5216
  %s5220 = scalar_lea.vmem %s18, 10
  %v5221 = vld [vmem:[%s5220] sm:$0x1]
  %s5222 = scalar_lea.vmem %s18, 11
  %v5223 = vld [vmem:[%s5222] sm:$0x1]
  %v5224 = vsel %vm186, %v5219, 0.0
  %5225 = vadd.xlane.f32.xlu0 %v5224
  %v5226 = vpop.xlane.xlu0 %5225
  %v5227 = vmul.f32 %v5226, %v755
  %v5228 = vsub.f32 %v5219, %v5227
  %v5229 = vmul.f32 %v5228, %v5228
  %v5230 = vsel %vm186, %v5229, 0.0
  %5231 = vadd.xlane.f32.xlu0 %v5230
  %v5232 = vpop.xlane.xlu0 %5231
  %v5233 = vmul.f32 %v5232, %v755
  %v5234 = vadd.f32 %v5233, 1e-05
  %v5235 = vrsqrt.pop %v5234
  %v5236 = vmul.f32 %v5228, %v5235
  %v5238 = vlaneseq
  %v5239 = vshrl.u32 %v5238, 7
  %v5240 = vsub.s32 0, %v5239
  %v5241 = vrot.slane %v5221, %v5240
  %v5243 = vmul.f32 %v5236, %v5241
  %v5245 = vlaneseq
  %v5246 = vshrl.u32 %v5245, 7
  %v5247 = vsub.s32 0, %v5246
  %v5248 = vrot.slane %v5223, %v5247
  %v5250 = vadd.f32 %v5243, %v5248
  %s5251 = scalar_lea.vmem %s19, 64
  %v5252 = vld [vmem:[%s5251] sm:$0xff]
  %v5253 = vld [vmem:[%s5251 + $0x8] sm:$0xff]
  %v5254 = vld [vmem:[%s5251 + $0x10] sm:$0xff]
  %v5255 = vld [vmem:[%s5251 + $0x18] sm:$0xff]
  %s5256 = scalar_lea.vmem %s20, 2
  %v5257 = vld [vmem:[%s5256] sm:$0x1]
  %v5259 = vlaneseq
  %v5260 = vshrl.u32 %v5259, 7
  %v5261 = vsub.s32 0, %v5260
  %v5262 = vrot.slane %v5257, %v5261
  %v5265 = vsel %vm186, %v5250, 0
  %5267 = vmatprep.subr.mxu0 0.0
  %5268 = vmatpush1.msra.mxu0 %v5252
  %5269 = vmatprep.subr.mxu0 0.0
  %5270 = vmatpush1.msra.mxu0 %v5253
  %5271 = vmatprep.subr.mxu0 0.0
  %5272 = vmatpush1.msra.mxu0 %v5254
  %5273 = vmatprep.subr.mxu0 0.0
  %5274 = vmatpush1.msra.mxu0 %v5255
  %5275 = vmatprep.subr.mxu0 0.0
  %5276 = vmatpush1.msra.mxu0 0.0
  %5277 = vmatprep.subr.mxu0 0.0
  %5278 = vmatpush1.msra.mxu0 0.0
  %5279 = vmatprep.subr.mxu0 0.0
  %5280 = vmatpush1.msra.mxu0 0.0
  %5281 = vmatprep.subr.mxu0 0.0
  %5282 = vmatpush1.msra.mxu0 0.0
  %5283 = vmatprep.subr.mxu0 0.0
  %5284 = vmatpush1.msra.mxu0 0.0
  %5285 = vmatprep.subr.mxu0 0.0
  %5286 = vmatpush1.msra.mxu0 0.0
  %5287 = vmatprep.subr.mxu0 0.0
  %5288 = vmatpush1.msra.mxu0 0.0
  %5289 = vmatprep.subr.mxu0 0.0
  %5290 = vmatpush1.msra.mxu0 0.0
  %5291 = vmatprep.subr.mxu0 0.0
  %5292 = vmatpush1.msra.mxu0 0.0
  %5293 = vmatprep.subr.mxu0 0.0
  %5294 = vmatpush1.msra.mxu0 0.0
  %5295 = vmatprep.subr.mxu0 0.0
  %5296 = vmatpush1.msra.mxu0 0.0
  %5297 = vmatprep.subr.mxu0 0.0
  %5298 = vmatpush1.msra.mxu0 0.0
  %5299 = vmatprep.subr.mxu0 0.0
  %5300 = vmatpush1.msra.mxu0 0.0
  %5301 = vmatprep.subr.mxu0 0.0
  %5302 = vmatpush1.msra.mxu0 0.0
  %5303 = vmatprep.subr.mxu0 0.0
  %5304 = vmatpush1.msra.mxu0 0.0
  %5305 = vmatprep.subr.mxu0 0.0
  %5306 = vmatpush1.msra.mxu0 0.0
  %5307 = vmatprep.subr.mxu0 0.0
  %5308 = vmatpush1.msra.mxu0 0.0
  %5309 = vmatprep.subr.mxu0 0.0
  %5310 = vmatpush1.msra.mxu0 0.0
  %5311 = vmatprep.subr.mxu0 0.0
  %5312 = vmatpush1.msra.mxu0 0.0
  %5313 = vmatprep.subr.mxu0 0.0
  %5314 = vmatpush1.msra.mxu0 0.0
  %5315 = vmatprep.subr.mxu0 0.0
  %5316 = vmatpush1.msra.mxu0 0.0
  %5317 = vmatprep.subr.mxu0 0.0
  %5318 = vmatpush1.msra.mxu0 0.0
  %5319 = vmatprep.subr.mxu0 0.0
  %5320 = vmatpush1.msra.mxu0 0.0
  %5321 = vmatprep.subr.mxu0 0.0
  %5322 = vmatpush1.msra.mxu0 0.0
  %5323 = vmatprep.subr.mxu0 0.0
  %5324 = vmatpush1.msra.mxu0 0.0
  %5325 = vmatprep.subr.mxu0 0.0
  %5326 = vmatpush1.msra.mxu0 0.0
  %5327 = vmatprep.subr.mxu0 0.0
  %5328 = vmatpush1.msra.mxu0 0.0
  %5329 = vmatprep.subr.mxu0 0.0
  %5330 = vmatpush1.msra.mxu0 0.0
  %5331 = vmatprep.mubr.f32.mxu0 0.0
  %5332 = vmatmul.mubr.f32.gmra.mrb[0].mxu0 %v5265
  %v5333 = vpop.f32.mrb[0].mxu0
  %v5334 = vadd.f32 %v5262, %v5333
  %v5335 = vpop.f32.mrb[0].mxu0
  %5336 = vdwg.mxu0
  %v5337 = vmax.f32 %v5334, 0.0
  %s5338 = scalar_lea.vmem %s21, 128
  %v5339 = vld [vmem:[%s5338] sm:$0xff]
  %v5340 = vld [vmem:[%s5338 + $0x8] sm:$0xff]
  %v5341 = vld [vmem:[%s5338 + $0x10] sm:$0xff]
  %v5342 = vld [vmem:[%s5338 + $0x18] sm:$0xff]
  %v5343 = vld [vmem:[%s5338 + $0x20] sm:$0xff]
  %v5344 = vld [vmem:[%s5338 + $0x28] sm:$0xff]
  %v5345 = vld [vmem:[%s5338 + $0x30] sm:$0xff]
  %v5346 = vld [vmem:[%s5338 + $0x38] sm:$0xff]
  %s5347 = scalar_lea.vmem %s22, 2
  %v5348 = vld [vmem:[%s5347] sm:$0x1]
  %v5350 = vlaneseq
  %v5351 = vshrl.u32 %v5350, 7
  %v5352 = vsub.s32 0, %v5351
  %v5353 = vrot.slane %v5348, %v5352
  %v5356 = vsel %vm901, %v5337, 0
  %5358 = vmatprep.subr.mxu0 0.0
  %5359 = vmatpush1.msra.mxu0 %v5339
  %5360 = vmatprep.subr.mxu0 0.0
  %5361 = vmatpush1.msra.mxu0 %v5340
  %5362 = vmatprep.subr.mxu0 0.0
  %5363 = vmatpush1.msra.mxu0 %v5341
  %5364 = vmatprep.subr.mxu0 0.0
  %5365 = vmatpush1.msra.mxu0 %v5342
  %5366 = vmatprep.subr.mxu0 0.0
  %5367 = vmatpush1.msra.mxu0 %v5343
  %5368 = vmatprep.subr.mxu0 0.0
  %5369 = vmatpush1.msra.mxu0 %v5344
  %5370 = vmatprep.subr.mxu0 0.0
  %5371 = vmatpush1.msra.mxu0 %v5345
  %5372 = vmatprep.subr.mxu0 0.0
  %5373 = vmatpush1.msra.mxu0 %v5346
  %5374 = vmatprep.subr.mxu0 0.0
  %5375 = vmatpush1.msra.mxu0 0.0
  %5376 = vmatprep.subr.mxu0 0.0
  %5377 = vmatpush1.msra.mxu0 0.0
  %5378 = vmatprep.subr.mxu0 0.0
  %5379 = vmatpush1.msra.mxu0 0.0
  %5380 = vmatprep.subr.mxu0 0.0
  %5381 = vmatpush1.msra.mxu0 0.0
  %5382 = vmatprep.subr.mxu0 0.0
  %5383 = vmatpush1.msra.mxu0 0.0
  %5384 = vmatprep.subr.mxu0 0.0
  %5385 = vmatpush1.msra.mxu0 0.0
  %5386 = vmatprep.subr.mxu0 0.0
  %5387 = vmatpush1.msra.mxu0 0.0
  %5388 = vmatprep.subr.mxu0 0.0
  %5389 = vmatpush1.msra.mxu0 0.0
  %5390 = vmatprep.subr.mxu0 0.0
  %5391 = vmatpush1.msra.mxu0 0.0
  %5392 = vmatprep.subr.mxu0 0.0
  %5393 = vmatpush1.msra.mxu0 0.0
  %5394 = vmatprep.subr.mxu0 0.0
  %5395 = vmatpush1.msra.mxu0 0.0
  %5396 = vmatprep.subr.mxu0 0.0
  %5397 = vmatpush1.msra.mxu0 0.0
  %5398 = vmatprep.subr.mxu0 0.0
  %5399 = vmatpush1.msra.mxu0 0.0
  %5400 = vmatprep.subr.mxu0 0.0
  %5401 = vmatpush1.msra.mxu0 0.0
  %5402 = vmatprep.subr.mxu0 0.0
  %5403 = vmatpush1.msra.mxu0 0.0
  %5404 = vmatprep.subr.mxu0 0.0
  %5405 = vmatpush1.msra.mxu0 0.0
  %5406 = vmatprep.subr.mxu0 0.0
  %5407 = vmatpush1.msra.mxu0 0.0
  %5408 = vmatprep.subr.mxu0 0.0
  %5409 = vmatpush1.msra.mxu0 0.0
  %5410 = vmatprep.subr.mxu0 0.0
  %5411 = vmatpush1.msra.mxu0 0.0
  %5412 = vmatprep.subr.mxu0 0.0
  %5413 = vmatpush1.msra.mxu0 0.0
  %5414 = vmatprep.subr.mxu0 0.0
  %5415 = vmatpush1.msra.mxu0 0.0
  %5416 = vmatprep.subr.mxu0 0.0
  %5417 = vmatpush1.msra.mxu0 0.0
  %5418 = vmatprep.subr.mxu0 0.0
  %5419 = vmatpush1.msra.mxu0 0.0
  %5420 = vmatprep.subr.mxu0 0.0
  %5421 = vmatpush1.msra.mxu0 0.0
  %5422 = vmatprep.mubr.f32.mxu0 0.0
  %5423 = vmatmul.mubr.f32.gmra.mrb[0].mxu0 %v5356
  %v5424 = vpop.f32.mrb[0].mxu0
  %v5425 = vadd.f32 %v5353, %v5424
  %v5426 = vpop.f32.mrb[0].mxu0
  %5427 = vdwg.mxu0
  %v5428 = vadd.f32 %v5250, %v5425
  %s5429 = scalar_lea.vmem %s18, 12
  %v5430 = vld [vmem:[%s5429] sm:$0x1]
  %s5431 = scalar_lea.vmem %s18, 13
  %v5432 = vld [vmem:[%s5431] sm:$0x1]
  %v5433 = vsel %vm186, %v5428, 0.0
  %5434 = vadd.xlane.f32.xlu0 %v5433
  %v5435 = vpop.xlane.xlu0 %5434
  %v5436 = vmul.f32 %v5435, %v755
  %v5437 = vsub.f32 %v5428, %v5436
  %v5438 = vmul.f32 %v5437, %v5437
  %v5439 = vsel %vm186, %v5438, 0.0
  %5440 = vadd.xlane.f32.xlu0 %v5439
  %v5441 = vpop.xlane.xlu0 %5440
  %v5442 = vmul.f32 %v5441, %v755
  %v5443 = vadd.f32 %v5442, 1e-05
  %v5444 = vrsqrt.pop %v5443
  %v5445 = vmul.f32 %v5437, %v5444
  %v5447 = vlaneseq
  %v5448 = vshrl.u32 %v5447, 7
  %v5449 = vsub.s32 0, %v5448
  %v5450 = vrot.slane %v5430, %v5449
  %v5452 = vmul.f32 %v5445, %v5450
  %v5454 = vlaneseq
  %v5455 = vshrl.u32 %v5454, 7
  %v5456 = vsub.s32 0, %v5455
  %v5457 = vrot.slane %v5432, %v5456
  %v5459 = vadd.f32 %v5452, %v5457
  %v5461 = vlaneseq
  %v5462 = vshrl.u32 %v5461, 7
  %v5463 = vsub.s32 0, %v5462
  %v5464 = vrot.slane %v1244, %v5463
  %v5467 = vsel %vm186, %v5459, 0
  %5469 = vmatprep.subr.mxu0 0.0
  %5470 = vmatpush1.msra.mxu0 %v1240
  %5471 = vmatprep.subr.mxu0 0.0
  %5472 = vmatpush1.msra.mxu0 %v1241
  %5473 = vmatprep.subr.mxu0 0.0
  %5474 = vmatpush1.msra.mxu0 %v1242
  %5475 = vmatprep.subr.mxu0 0.0
  %5476 = vmatpush1.msra.mxu0 %v1243
  %5477 = vmatprep.subr.mxu0 0.0
  %5478 = vmatpush1.msra.mxu0 0.0
  %5479 = vmatprep.subr.mxu0 0.0
  %5480 = vmatpush1.msra.mxu0 0.0
  %5481 = vmatprep.subr.mxu0 0.0
  %5482 = vmatpush1.msra.mxu0 0.0
  %5483 = vmatprep.subr.mxu0 0.0
  %5484 = vmatpush1.msra.mxu0 0.0
  %5485 = vmatprep.subr.mxu0 0.0
  %5486 = vmatpush1.msra.mxu0 0.0
  %5487 = vmatprep.subr.mxu0 0.0
  %5488 = vmatpush1.msra.mxu0 0.0
  %5489 = vmatprep.subr.mxu0 0.0
  %5490 = vmatpush1.msra.mxu0 0.0
  %5491 = vmatprep.subr.mxu0 0.0
  %5492 = vmatpush1.msra.mxu0 0.0
  %5493 = vmatprep.subr.mxu0 0.0
  %5494 = vmatpush1.msra.mxu0 0.0
  %5495 = vmatprep.subr.mxu0 0.0
  %5496 = vmatpush1.msra.mxu0 0.0
  %5497 = vmatprep.subr.mxu0 0.0
  %5498 = vmatpush1.msra.mxu0 0.0
  %5499 = vmatprep.subr.mxu0 0.0
  %5500 = vmatpush1.msra.mxu0 0.0
  %5501 = vmatprep.subr.mxu0 0.0
  %5502 = vmatpush1.msra.mxu0 0.0
  %5503 = vmatprep.subr.mxu0 0.0
  %5504 = vmatpush1.msra.mxu0 0.0
  %5505 = vmatprep.subr.mxu0 0.0
  %5506 = vmatpush1.msra.mxu0 0.0
  %5507 = vmatprep.subr.mxu0 0.0
  %5508 = vmatpush1.msra.mxu0 0.0
  %5509 = vmatprep.subr.mxu0 0.0
  %5510 = vmatpush1.msra.mxu0 0.0
  %5511 = vmatprep.subr.mxu0 0.0
  %5512 = vmatpush1.msra.mxu0 0.0
  %5513 = vmatprep.subr.mxu0 0.0
  %5514 = vmatpush1.msra.mxu0 0.0
  %5515 = vmatprep.subr.mxu0 0.0
  %5516 = vmatpush1.msra.mxu0 0.0
  %5517 = vmatprep.subr.mxu0 0.0
  %5518 = vmatpush1.msra.mxu0 0.0
  %5519 = vmatprep.subr.mxu0 0.0
  %5520 = vmatpush1.msra.mxu0 0.0
  %5521 = vmatprep.subr.mxu0 0.0
  %5522 = vmatpush1.msra.mxu0 0.0
  %5523 = vmatprep.subr.mxu0 0.0
  %5524 = vmatpush1.msra.mxu0 0.0
  %5525 = vmatprep.subr.mxu0 0.0
  %5526 = vmatpush1.msra.mxu0 0.0
  %5527 = vmatprep.subr.mxu0 0.0
  %5528 = vmatpush1.msra.mxu0 0.0
  %5529 = vmatprep.subr.mxu0 0.0
  %5530 = vmatpush1.msra.mxu0 0.0
  %5531 = vmatprep.subr.mxu0 0.0
  %5532 = vmatpush1.msra.mxu0 0.0
  %5533 = vmatprep.mubr.f32.mxu0 0.0
  %5534 = vmatmul.mubr.f32.gmra.mrb[0].mxu0 %v5467
  %v5535 = vpop.f32.mrb[0].mxu0
  %v5536 = vadd.f32 %v5464, %v5535
  %v5537 = vpop.f32.mrb[0].mxu0
  %5538 = vdwg.mxu0
  %vm5539 = vcmask 72704
  %5540 = vst.msk [vmem:[%s26] sm:$0xff] %vm5539, %v5536
  %s5541 = scalar_lea.vmem %s0, 16
  %v5542 = vld [vmem:[%s5541] sm:$0xff]
  %v5543 = vld [vmem:[%s5541 + $0x8] sm:$0xff]
  %v5544 = vld [vmem:[%s5] sm:$0xff]
  %v5545 = vld [vmem:[%s5 + $0x8] sm:$0xff]
  %v5546 = vld [vmem:[%s6] sm:$0xff]
  %v5547 = vld [vmem:[%s6 + $0x8] sm:$0xff]
  %v5549 = vsel %vm88, %v5542, 0
  %v5552 = vsel %vm88, %v5543, 0
  %5554 = vmatprep.subr.mxu0 0.0
  %5555 = vmatpush1.msra.mxu0 %v5544
  %5556 = vmatprep.subr.mxu0 0.0
  %5557 = vmatpush1.msra.mxu0 %v5545
  %5558 = vmatprep.subr.mxu0 0.0
  %5559 = vmatpush1.msra.mxu0 0.0
  %5560 = vmatprep.subr.mxu0 0.0
  %5561 = vmatpush1.msra.mxu0 0.0
  %5562 = vmatprep.subr.mxu0 0.0
  %5563 = vmatpush1.msra.mxu0 0.0
  %5564 = vmatprep.subr.mxu0 0.0
  %5565 = vmatpush1.msra.mxu0 0.0
  %5566 = vmatprep.subr.mxu0 0.0
  %5567 = vmatpush1.msra.mxu0 0.0
  %5568 = vmatprep.subr.mxu0 0.0
  %5569 = vmatpush1.msra.mxu0 0.0
  %5570 = vmatprep.subr.mxu0 0.0
  %5571 = vmatpush1.msra.mxu0 0.0
  %5572 = vmatprep.subr.mxu0 0.0
  %5573 = vmatpush1.msra.mxu0 0.0
  %5574 = vmatprep.subr.mxu0 0.0
  %5575 = vmatpush1.msra.mxu0 0.0
  %5576 = vmatprep.subr.mxu0 0.0
  %5577 = vmatpush1.msra.mxu0 0.0
  %5578 = vmatprep.subr.mxu0 0.0
  %5579 = vmatpush1.msra.mxu0 0.0
  %5580 = vmatprep.subr.mxu0 0.0
  %5581 = vmatpush1.msra.mxu0 0.0
  %5582 = vmatprep.subr.mxu0 0.0
  %5583 = vmatpush1.msra.mxu0 0.0
  %5584 = vmatprep.subr.mxu0 0.0
  %5585 = vmatpush1.msra.mxu0 0.0
  %5586 = vmatprep.subr.mxu0 0.0
  %5587 = vmatpush1.msra.mxu0 0.0
  %5588 = vmatprep.subr.mxu0 0.0
  %5589 = vmatpush1.msra.mxu0 0.0
  %5590 = vmatprep.subr.mxu0 0.0
  %5591 = vmatpush1.msra.mxu0 0.0
  %5592 = vmatprep.subr.mxu0 0.0
  %5593 = vmatpush1.msra.mxu0 0.0
  %5594 = vmatprep.subr.mxu0 0.0
  %5595 = vmatpush1.msra.mxu0 0.0
  %5596 = vmatprep.subr.mxu0 0.0
  %5597 = vmatpush1.msra.mxu0 0.0
  %5598 = vmatprep.subr.mxu0 0.0
  %5599 = vmatpush1.msra.mxu0 0.0
  %5600 = vmatprep.subr.mxu0 0.0
  %5601 = vmatpush1.msra.mxu0 0.0
  %5602 = vmatprep.subr.mxu0 0.0
  %5603 = vmatpush1.msra.mxu0 0.0
  %5604 = vmatprep.subr.mxu0 0.0
  %5605 = vmatpush1.msra.mxu0 0.0
  %5606 = vmatprep.subr.mxu0 0.0
  %5607 = vmatpush1.msra.mxu0 0.0
  %5608 = vmatprep.subr.mxu0 0.0
  %5609 = vmatpush1.msra.mxu0 0.0
  %5610 = vmatprep.subr.mxu0 0.0
  %5611 = vmatpush1.msra.mxu0 0.0
  %5612 = vmatprep.subr.mxu0 0.0
  %5613 = vmatpush1.msra.mxu0 0.0
  %5614 = vmatprep.subr.mxu0 0.0
  %5615 = vmatpush1.msra.mxu0 0.0
  %5616 = vmatprep.subr.mxu0 0.0
  %5617 = vmatpush1.msra.mxu0 0.0
  %5618 = vmatprep.mubr.f32.mxu0 0.0
  %5619 = vmatmul.mubr.f32.gmra.mrb[0].mxu0 %v5549
  %v5620 = vpop.f32.mrb[0].mxu0
  %v5621 = vadd.f32 %v5546, %v5620
  %v5622 = vpop.f32.mrb[0].mxu0
  %5623 = vmatprep.mubr.f32.mxu0 0.0
  %5624 = vmatmul.mubr.f32.gmra.mrb[0].mxu0 %v5552
  %v5625 = vpop.f32.mrb[0].mxu0
  %v5626 = vadd.f32 %v5547, %v5625
  %v5627 = vpop.f32.mrb[0].mxu0
  %5628 = vdwg.mxu0
  %v5629 = vld [vmem:[%s7] sm:$0xff]
  %v5630 = vld [vmem:[%s7 + $0x8] sm:$0xff]
  %s5631 = scalar_lea.vmem %s1, 1
  %v5632 = vld [vmem:[%s5631] sm:$0x1]
  %v5633 = vadd.f32 %v5621, %v5629
  %v5634 = vadd.f32 %v5626, %v5630
  %v5635 = vld [vmem:[%s16] sm:$0xff]
  %v5636 = vld [vmem:[%s16 + $0x8] sm:$0xff]
  %v5637 = vld [vmem:[%s16 + $0x10] sm:$0xff]
  %v5638 = vld [vmem:[%s16 + $0x18] sm:$0xff]
  %v5639 = vld [vmem:[%s17] sm:$0x1]
  %v5641 = vlaneseq
  %v5642 = vshrl.u32 %v5641, 7
  %v5643 = vsub.s32 0, %v5642
  %v5644 = vrot.slane %v5639, %v5643
  %v5647 = vsel %vm186, %v5633, 0
  %v5650 = vsel %vm186, %v5634, 0
  %5652 = vmatprep.subr.mxu0 0.0
  %5653 = vmatpush1.msra.mxu0 %v5635
  %5654 = vmatprep.subr.mxu0 0.0
  %5655 = vmatpush1.msra.mxu0 %v5636
  %5656 = vmatprep.subr.mxu0 0.0
  %5657 = vmatpush1.msra.mxu0 %v5637
  %5658 = vmatprep.subr.mxu0 0.0
  %5659 = vmatpush1.msra.mxu0 %v5638
  %5660 = vmatprep.subr.mxu0 0.0
  %5661 = vmatpush1.msra.mxu0 0.0
  %5662 = vmatprep.subr.mxu0 0.0
  %5663 = vmatpush1.msra.mxu0 0.0
  %5664 = vmatprep.subr.mxu0 0.0
  %5665 = vmatpush1.msra.mxu0 0.0
  %5666 = vmatprep.subr.mxu0 0.0
  %5667 = vmatpush1.msra.mxu0 0.0
  %5668 = vmatprep.subr.mxu0 0.0
  %5669 = vmatpush1.msra.mxu0 0.0
  %5670 = vmatprep.subr.mxu0 0.0
  %5671 = vmatpush1.msra.mxu0 0.0
  %5672 = vmatprep.subr.mxu0 0.0
  %5673 = vmatpush1.msra.mxu0 0.0
  %5674 = vmatprep.subr.mxu0 0.0
  %5675 = vmatpush1.msra.mxu0 0.0
  %5676 = vmatprep.subr.mxu0 0.0
  %5677 = vmatpush1.msra.mxu0 0.0
  %5678 = vmatprep.subr.mxu0 0.0
  %5679 = vmatpush1.msra.mxu0 0.0
  %5680 = vmatprep.subr.mxu0 0.0
  %5681 = vmatpush1.msra.mxu0 0.0
  %5682 = vmatprep.subr.mxu0 0.0
  %5683 = vmatpush1.msra.mxu0 0.0
  %5684 = vmatprep.subr.mxu0 0.0
  %5685 = vmatpush1.msra.mxu0 0.0
  %5686 = vmatprep.subr.mxu0 0.0
  %5687 = vmatpush1.msra.mxu0 0.0
  %5688 = vmatprep.subr.mxu0 0.0
  %5689 = vmatpush1.msra.mxu0 0.0
  %5690 = vmatprep.subr.mxu0 0.0
  %5691 = vmatpush1.msra.mxu0 0.0
  %5692 = vmatprep.subr.mxu0 0.0
  %5693 = vmatpush1.msra.mxu0 0.0
  %5694 = vmatprep.subr.mxu0 0.0
  %5695 = vmatpush1.msra.mxu0 0.0
  %5696 = vmatprep.subr.mxu0 0.0
  %5697 = vmatpush1.msra.mxu0 0.0
  %5698 = vmatprep.subr.mxu0 0.0
  %5699 = vmatpush1.msra.mxu0 0.0
  %5700 = vmatprep.subr.mxu0 0.0
  %5701 = vmatpush1.msra.mxu0 0.0
  %5702 = vmatprep.subr.mxu0 0.0
  %5703 = vmatpush1.msra.mxu0 0.0
  %5704 = vmatprep.subr.mxu0 0.0
  %5705 = vmatpush1.msra.mxu0 0.0
  %5706 = vmatprep.subr.mxu0 0.0
  %5707 = vmatpush1.msra.mxu0 0.0
  %5708 = vmatprep.subr.mxu0 0.0
  %5709 = vmatpush1.msra.mxu0 0.0
  %5710 = vmatprep.subr.mxu0 0.0
  %5711 = vmatpush1.msra.mxu0 0.0
  %5712 = vmatprep.subr.mxu0 0.0
  %5713 = vmatpush1.msra.mxu0 0.0
  %5714 = vmatprep.subr.mxu0 0.0
  %5715 = vmatpush1.msra.mxu0 0.0
  %5716 = vmatprep.mubr.f32.mxu0 0.0
  %5717 = vmatmul.mubr.f32.gmra.mrb[0].mxu0 %v5647
  %v5718 = vpop.f32.mrb[0].mxu0
  %v5719 = vadd.f32 %v5644, %v5718
  %v5720 = vpop.f32.mrb[0].mxu0
  %5721 = vmatprep.mubr.f32.mxu0 0.0
  %5722 = vmatmul.mubr.f32.gmra.mrb[0].mxu0 %v5650
  %v5723 = vpop.f32.mrb[0].mxu0
  %v5724 = vadd.f32 %v5644, %v5723
  %v5725 = vpop.f32.mrb[0].mxu0
  %5726 = vdwg.mxu0
  %v5727 = vld [vmem:[%s268] sm:$0xff]
  %v5728 = vld [vmem:[%s268 + $0x8] sm:$0xff]
  %v5729 = vld [vmem:[%s268 + $0x10] sm:$0xff]
  %v5730 = vld [vmem:[%s268 + $0x18] sm:$0xff]
  %v5731 = vld [vmem:[%s273] sm:$0x1]
  %v5733 = vlaneseq
  %v5734 = vshrl.u32 %v5733, 7
  %v5735 = vsub.s32 0, %v5734
  %v5736 = vrot.slane %v5731, %v5735
  %5738 = vmatprep.subr.mxu0 0.0
  %5739 = vmatpush1.msra.mxu0 %v5727
  %5740 = vmatprep.subr.mxu0 0.0
  %5741 = vmatpush1.msra.mxu0 %v5728
  %5742 = vmatprep.subr.mxu0 0.0
  %5743 = vmatpush1.msra.mxu0 %v5729
  %5744 = vmatprep.subr.mxu0 0.0
  %5745 = vmatpush1.msra.mxu0 %v5730
  %5746 = vmatprep.subr.mxu0 0.0
  %5747 = vmatpush1.msra.mxu0 0.0
  %5748 = vmatprep.subr.mxu0 0.0
  %5749 = vmatpush1.msra.mxu0 0.0
  %5750 = vmatprep.subr.mxu0 0.0
  %5751 = vmatpush1.msra.mxu0 0.0
  %5752 = vmatprep.subr.mxu0 0.0
  %5753 = vmatpush1.msra.mxu0 0.0
  %5754 = vmatprep.subr.mxu0 0.0
  %5755 = vmatpush1.msra.mxu0 0.0
  %5756 = vmatprep.subr.mxu0 0.0
  %5757 = vmatpush1.msra.mxu0 0.0
  %5758 = vmatprep.subr.mxu0 0.0
  %5759 = vmatpush1.msra.mxu0 0.0
  %5760 = vmatprep.subr.mxu0 0.0
  %5761 = vmatpush1.msra.mxu0 0.0
  %5762 = vmatprep.subr.mxu0 0.0
  %5763 = vmatpush1.msra.mxu0 0.0
  %5764 = vmatprep.subr.mxu0 0.0
  %5765 = vmatpush1.msra.mxu0 0.0
  %5766 = vmatprep.subr.mxu0 0.0
  %5767 = vmatpush1.msra.mxu0 0.0
  %5768 = vmatprep.subr.mxu0 0.0
  %5769 = vmatpush1.msra.mxu0 0.0
  %5770 = vmatprep.subr.mxu0 0.0
  %5771 = vmatpush1.msra.mxu0 0.0
  %5772 = vmatprep.subr.mxu0 0.0
  %5773 = vmatpush1.msra.mxu0 0.0
  %5774 = vmatprep.subr.mxu0 0.0
  %5775 = vmatpush1.msra.mxu0 0.0
  %5776 = vmatprep.subr.mxu0 0.0
  %5777 = vmatpush1.msra.mxu0 0.0
  %5778 = vmatprep.subr.mxu0 0.0
  %5779 = vmatpush1.msra.mxu0 0.0
  %5780 = vmatprep.subr.mxu0 0.0
  %5781 = vmatpush1.msra.mxu0 0.0
  %5782 = vmatprep.subr.mxu0 0.0
  %5783 = vmatpush1.msra.mxu0 0.0
  %5784 = vmatprep.subr.mxu0 0.0
  %5785 = vmatpush1.msra.mxu0 0.0
  %5786 = vmatprep.subr.mxu0 0.0
  %5787 = vmatpush1.msra.mxu0 0.0
  %5788 = vmatprep.subr.mxu0 0.0
  %5789 = vmatpush1.msra.mxu0 0.0
  %5790 = vmatprep.subr.mxu0 0.0
  %5791 = vmatpush1.msra.mxu0 0.0
  %5792 = vmatprep.subr.mxu0 0.0
  %5793 = vmatpush1.msra.mxu0 0.0
  %5794 = vmatprep.subr.mxu0 0.0
  %5795 = vmatpush1.msra.mxu0 0.0
  %5796 = vmatprep.subr.mxu0 0.0
  %5797 = vmatpush1.msra.mxu0 0.0
  %5798 = vmatprep.subr.mxu0 0.0
  %5799 = vmatpush1.msra.mxu0 0.0
  %5800 = vmatprep.subr.mxu0 0.0
  %5801 = vmatpush1.msra.mxu0 0.0
  %5802 = vmatprep.mubr.f32.mxu0 0.0
  %5803 = vmatmul.mubr.f32.gmra.mrb[0].mxu0 %v5647
  %v5804 = vpop.f32.mrb[0].mxu0
  %v5805 = vadd.f32 %v5736, %v5804
  %v5806 = vpop.f32.mrb[0].mxu0
  %5807 = vmatprep.mubr.f32.mxu0 0.0
  %5808 = vmatmul.mubr.f32.gmra.mrb[0].mxu0 %v5650
  %v5809 = vpop.f32.mrb[0].mxu0
  %v5810 = vadd.f32 %v5736, %v5809
  %v5811 = vpop.f32.mrb[0].mxu0
  %5812 = vdwg.mxu0
  %v5813 = vld [vmem:[%s356] sm:$0xff]
  %v5814 = vld [vmem:[%s356 + $0x8] sm:$0xff]
  %v5815 = vld [vmem:[%s356 + $0x10] sm:$0xff]
  %v5816 = vld [vmem:[%s356 + $0x18] sm:$0xff]
  %v5817 = vld [vmem:[%s361] sm:$0x1]
  %v5819 = vlaneseq
  %v5820 = vshrl.u32 %v5819, 7
  %v5821 = vsub.s32 0, %v5820
  %v5822 = vrot.slane %v5817, %v5821
  %v5825 = vsel %vm186, %v5621, 0
  %v5828 = vsel %vm186, %v5626, 0
  %5830 = vmatprep.subr.mxu0 0.0
  %5831 = vmatpush1.msra.mxu0 %v5813
  %5832 = vmatprep.subr.mxu0 0.0
  %5833 = vmatpush1.msra.mxu0 %v5814
  %5834 = vmatprep.subr.mxu0 0.0
  %5835 = vmatpush1.msra.mxu0 %v5815
  %5836 = vmatprep.subr.mxu0 0.0
  %5837 = vmatpush1.msra.mxu0 %v5816
  %5838 = vmatprep.subr.mxu0 0.0
  %5839 = vmatpush1.msra.mxu0 0.0
  %5840 = vmatprep.subr.mxu0 0.0
  %5841 = vmatpush1.msra.mxu0 0.0
  %5842 = vmatprep.subr.mxu0 0.0
  %5843 = vmatpush1.msra.mxu0 0.0
  %5844 = vmatprep.subr.mxu0 0.0
  %5845 = vmatpush1.msra.mxu0 0.0
  %5846 = vmatprep.subr.mxu0 0.0
  %5847 = vmatpush1.msra.mxu0 0.0
  %5848 = vmatprep.subr.mxu0 0.0
  %5849 = vmatpush1.msra.mxu0 0.0
  %5850 = vmatprep.subr.mxu0 0.0
  %5851 = vmatpush1.msra.mxu0 0.0
  %5852 = vmatprep.subr.mxu0 0.0
  %5853 = vmatpush1.msra.mxu0 0.0
  %5854 = vmatprep.subr.mxu0 0.0
  %5855 = vmatpush1.msra.mxu0 0.0
  %5856 = vmatprep.subr.mxu0 0.0
  %5857 = vmatpush1.msra.mxu0 0.0
  %5858 = vmatprep.subr.mxu0 0.0
  %5859 = vmatpush1.msra.mxu0 0.0
  %5860 = vmatprep.subr.mxu0 0.0
  %5861 = vmatpush1.msra.mxu0 0.0
  %5862 = vmatprep.subr.mxu0 0.0
  %5863 = vmatpush1.msra.mxu0 0.0
  %5864 = vmatprep.subr.mxu0 0.0
  %5865 = vmatpush1.msra.mxu0 0.0
  %5866 = vmatprep.subr.mxu0 0.0
  %5867 = vmatpush1.msra.mxu0 0.0
  %5868 = vmatprep.subr.mxu0 0.0
  %5869 = vmatpush1.msra.mxu0 0.0
  %5870 = vmatprep.subr.mxu0 0.0
  %5871 = vmatpush1.msra.mxu0 0.0
  %5872 = vmatprep.subr.mxu0 0.0
  %5873 = vmatpush1.msra.mxu0 0.0
  %5874 = vmatprep.subr.mxu0 0.0
  %5875 = vmatpush1.msra.mxu0 0.0
  %5876 = vmatprep.subr.mxu0 0.0
  %5877 = vmatpush1.msra.mxu0 0.0
  %5878 = vmatprep.subr.mxu0 0.0
  %5879 = vmatpush1.msra.mxu0 0.0
  %5880 = vmatprep.subr.mxu0 0.0
  %5881 = vmatpush1.msra.mxu0 0.0
  %5882 = vmatprep.subr.mxu0 0.0
  %5883 = vmatpush1.msra.mxu0 0.0
  %5884 = vmatprep.subr.mxu0 0.0
  %5885 = vmatpush1.msra.mxu0 0.0
  %5886 = vmatprep.subr.mxu0 0.0
  %5887 = vmatpush1.msra.mxu0 0.0
  %5888 = vmatprep.subr.mxu0 0.0
  %5889 = vmatpush1.msra.mxu0 0.0
  %5890 = vmatprep.subr.mxu0 0.0
  %5891 = vmatpush1.msra.mxu0 0.0
  %5892 = vmatprep.subr.mxu0 0.0
  %5893 = vmatpush1.msra.mxu0 0.0
  %5894 = vmatprep.mubr.f32.mxu0 0.0
  %5895 = vmatmul.mubr.f32.gmra.mrb[0].mxu0 %v5825
  %v5896 = vpop.f32.mrb[0].mxu0
  %v5897 = vadd.f32 %v5822, %v5896
  %v5898 = vpop.f32.mrb[0].mxu0
  %5899 = vmatprep.mubr.f32.mxu0 0.0
  %5900 = vmatmul.mubr.f32.gmra.mrb[0].mxu0 %v5828
  %v5901 = vpop.f32.mrb[0].mxu0
  %v5902 = vadd.f32 %v5822, %v5901
  %v5903 = vpop.f32.mrb[0].mxu0
  %5904 = vdwg.mxu0
  %v5906 = vsel %vm186, %v5719, 0
  %v5909 = vsel %vm186, %v5724, 0
  %v5912 = vsel %vm186, %v5805, 0
  %v5915 = vsel %vm186, %v5810, 0
  %5917 = vmatprep.subr.mxu0 0.0
  %5918 = vmatpush1.xpose.msra.mxu0 %v5912
  %5919 = vmatprep.subr.mxu0 0.0
  %5920 = vmatpush1.xpose.msra.mxu0 %v5915
  %5921 = vmatprep.subr.mxu0 0.0
  %5922 = vmatpush1.xpose.msra.mxu0 0.0
  %5923 = vmatprep.subr.mxu0 0.0
  %5924 = vmatpush1.xpose.msra.mxu0 0.0
  %5925 = vmatprep.subr.mxu0 0.0
  %5926 = vmatpush1.xpose.msra.mxu0 0.0
  %5927 = vmatprep.subr.mxu0 0.0
  %5928 = vmatpush1.xpose.msra.mxu0 0.0
  %5929 = vmatprep.subr.mxu0 0.0
  %5930 = vmatpush1.xpose.msra.mxu0 0.0
  %5931 = vmatprep.subr.mxu0 0.0
  %5932 = vmatpush1.xpose.msra.mxu0 0.0
  %5933 = vmatprep.subr.mxu0 0.0
  %5934 = vmatpush1.xpose.msra.mxu0 0.0
  %5935 = vmatprep.subr.mxu0 0.0
  %5936 = vmatpush1.xpose.msra.mxu0 0.0
  %5937 = vmatprep.subr.mxu0 0.0
  %5938 = vmatpush1.xpose.msra.mxu0 0.0
  %5939 = vmatprep.subr.mxu0 0.0
  %5940 = vmatpush1.xpose.msra.mxu0 0.0
  %5941 = vmatprep.subr.mxu0 0.0
  %5942 = vmatpush1.xpose.msra.mxu0 0.0
  %5943 = vmatprep.subr.mxu0 0.0
  %5944 = vmatpush1.xpose.msra.mxu0 0.0
  %5945 = vmatprep.subr.mxu0 0.0
  %5946 = vmatpush1.xpose.msra.mxu0 0.0
  %5947 = vmatprep.subr.mxu0 0.0
  %5948 = vmatpush1.xpose.msra.mxu0 0.0
  %5949 = vmatprep.subr.mxu0 0.0
  %5950 = vmatpush1.xpose.msra.mxu0 0.0
  %5951 = vmatprep.subr.mxu0 0.0
  %5952 = vmatpush1.xpose.msra.mxu0 0.0
  %5953 = vmatprep.subr.mxu0 0.0
  %5954 = vmatpush1.xpose.msra.mxu0 0.0
  %5955 = vmatprep.subr.mxu0 0.0
  %5956 = vmatpush1.xpose.msra.mxu0 0.0
  %5957 = vmatprep.subr.mxu0 0.0
  %5958 = vmatpush1.xpose.msra.mxu0 0.0
  %5959 = vmatprep.subr.mxu0 0.0
  %5960 = vmatpush1.xpose.msra.mxu0 0.0
  %5961 = vmatprep.subr.mxu0 0.0
  %5962 = vmatpush1.xpose.msra.mxu0 0.0
  %5963 = vmatprep.subr.mxu0 0.0
  %5964 = vmatpush1.xpose.msra.mxu0 0.0
  %5965 = vmatprep.subr.mxu0 0.0
  %5966 = vmatpush1.xpose.msra.mxu0 0.0
  %5967 = vmatprep.subr.mxu0 0.0
  %5968 = vmatpush1.xpose.msra.mxu0 0.0
  %5969 = vmatprep.subr.mxu0 0.0
  %5970 = vmatpush1.xpose.msra.mxu0 0.0
  %5971 = vmatprep.subr.mxu0 0.0
  %5972 = vmatpush1.xpose.msra.mxu0 0.0
  %5973 = vmatprep.subr.mxu0 0.0
  %5974 = vmatpush1.xpose.msra.mxu0 0.0
  %5975 = vmatprep.subr.mxu0 0.0
  %5976 = vmatpush1.xpose.msra.mxu0 0.0
  %5977 = vmatprep.subr.mxu0 0.0
  %5978 = vmatpush1.xpose.msra.mxu0 0.0
  %5979 = vmatprep.subr.mxu0 0.0
  %5980 = vmatpush1.xpose.msra.mxu0 0.0
  %5981 = vmatprep.mubr.f32.mxu0 0.0
  %5982 = vmatmul.mubr.f32.gmra.mrb[0].mxu0 %v5906
  %v5983 = vpop.f32.mrb[0].mxu0
  %v5984 = vadd.f32 0.0, %v5983
  %v5985 = vpop.f32.mrb[0].mxu0
  %5986 = vmatprep.mubr.f32.mxu0 0.0
  %5987 = vmatmul.mubr.f32.gmra.mrb[0].mxu0 %v5909
  %v5988 = vpop.f32.mrb[0].mxu0
  %v5989 = vadd.f32 0.0, %v5988
  %v5990 = vpop.f32.mrb[0].mxu0
  %5991 = vdwg.mxu0
  %v5992 = vmul.f32 %v5984, 0.17677669
  %v5993 = vmul.f32 %v5989, 0.17677669
  %v5995 = vlaneseq
  %v5996 = vshrl.u32 %v5995, 7
  %v5997 = vsub.s32 0, %v5996
  %v5998 = vrot.slane %v5632, %v5997
  %v6000 = vadd.f32 %v5992, %v5998
  %v6001 = vadd.f32 %v5993, %v5998
  %v6002 = vsel %vm88, %v6000, -inf
  %6003 = vmax.xlane.f32.xlu0 %v6002
  %v6004 = vpop.xlane.xlu0 %6003
  %v6005 = vsel %vm88, %v6001, -inf
  %6006 = vmax.xlane.f32.xlu0 %v6005
  %v6007 = vpop.xlane.xlu0 %6006
  %v6008 = vsub.f32 %v6000, %v6004
  %v6009 = vsub.f32 %v6001, %v6007
  %v6010 = vmul.f32 %v6008, 1.442695
  %v6011 = vpow.pop %v6010
  %v6012 = vmul.f32 %v6009, 1.442695
  %v6013 = vpow.pop %v6012
  %v6014 = vsel %vm88, %v6011, 0.0
  %6015 = vadd.xlane.f32.xlu0 %v6014
  %v6016 = vpop.xlane.xlu0 %6015
  %v6017 = vsel %vm88, %v6013, 0.0
  %6018 = vadd.xlane.f32.xlu0 %v6017
  %v6019 = vpop.xlane.xlu0 %6018
  %v6020 = vrcp.pop %v6016
  %v6021 = vmul.f32 %v6011, %v6020
  %v6022 = vrcp.pop %v6019
  %v6023 = vmul.f32 %v6013, %v6022
  %v6025 = vsel %vm88, %v6021, 0
  %v6028 = vsel %vm88, %v6023, 0
  %6030 = vmatprep.subr.mxu0 0.0
  %6031 = vmatpush1.msra.mxu0 %v5897
  %6032 = vmatprep.subr.mxu0 0.0
  %6033 = vmatpush1.msra.mxu0 %v5902
  %6034 = vmatprep.subr.mxu0 0.0
  %6035 = vmatpush1.msra.mxu0 0.0
  %6036 = vmatprep.subr.mxu0 0.0
  %6037 = vmatpush1.msra.mxu0 0.0
  %6038 = vmatprep.subr.mxu0 0.0
  %6039 = vmatpush1.msra.mxu0 0.0
  %6040 = vmatprep.subr.mxu0 0.0
  %6041 = vmatpush1.msra.mxu0 0.0
  %6042 = vmatprep.subr.mxu0 0.0
  %6043 = vmatpush1.msra.mxu0 0.0
  %6044 = vmatprep.subr.mxu0 0.0
  %6045 = vmatpush1.msra.mxu0 0.0
  %6046 = vmatprep.subr.mxu0 0.0
  %6047 = vmatpush1.msra.mxu0 0.0
  %6048 = vmatprep.subr.mxu0 0.0
  %6049 = vmatpush1.msra.mxu0 0.0
  %6050 = vmatprep.subr.mxu0 0.0
  %6051 = vmatpush1.msra.mxu0 0.0
  %6052 = vmatprep.subr.mxu0 0.0
  %6053 = vmatpush1.msra.mxu0 0.0
  %6054 = vmatprep.subr.mxu0 0.0
  %6055 = vmatpush1.msra.mxu0 0.0
  %6056 = vmatprep.subr.mxu0 0.0
  %6057 = vmatpush1.msra.mxu0 0.0
  %6058 = vmatprep.subr.mxu0 0.0
  %6059 = vmatpush1.msra.mxu0 0.0
  %6060 = vmatprep.subr.mxu0 0.0
  %6061 = vmatpush1.msra.mxu0 0.0
  %6062 = vmatprep.subr.mxu0 0.0
  %6063 = vmatpush1.msra.mxu0 0.0
  %6064 = vmatprep.subr.mxu0 0.0
  %6065 = vmatpush1.msra.mxu0 0.0
  %6066 = vmatprep.subr.mxu0 0.0
  %6067 = vmatpush1.msra.mxu0 0.0
  %6068 = vmatprep.subr.mxu0 0.0
  %6069 = vmatpush1.msra.mxu0 0.0
  %6070 = vmatprep.subr.mxu0 0.0
  %6071 = vmatpush1.msra.mxu0 0.0
  %6072 = vmatprep.subr.mxu0 0.0
  %6073 = vmatpush1.msra.mxu0 0.0
  %6074 = vmatprep.subr.mxu0 0.0
  %6075 = vmatpush1.msra.mxu0 0.0
  %6076 = vmatprep.subr.mxu0 0.0
  %6077 = vmatpush1.msra.mxu0 0.0
  %6078 = vmatprep.subr.mxu0 0.0
  %6079 = vmatpush1.msra.mxu0 0.0
  %6080 = vmatprep.subr.mxu0 0.0
  %6081 = vmatpush1.msra.mxu0 0.0
  %6082 = vmatprep.subr.mxu0 0.0
  %6083 = vmatpush1.msra.mxu0 0.0
  %6084 = vmatprep.subr.mxu0 0.0
  %6085 = vmatpush1.msra.mxu0 0.0
  %6086 = vmatprep.subr.mxu0 0.0
  %6087 = vmatpush1.msra.mxu0 0.0
  %6088 = vmatprep.subr.mxu0 0.0
  %6089 = vmatpush1.msra.mxu0 0.0
  %6090 = vmatprep.subr.mxu0 0.0
  %6091 = vmatpush1.msra.mxu0 0.0
  %6092 = vmatprep.subr.mxu0 0.0
  %6093 = vmatpush1.msra.mxu0 0.0
  %6094 = vmatprep.mubr.f32.mxu0 0.0
  %6095 = vmatmul.mubr.f32.gmra.mrb[0].mxu0 %v6025
  %v6096 = vpop.f32.mrb[0].mxu0
  %v6097 = vadd.f32 0.0, %v6096
  %v6098 = vpop.f32.mrb[0].mxu0
  %6099 = vmatprep.mubr.f32.mxu0 0.0
  %6100 = vmatmul.mubr.f32.gmra.mrb[0].mxu0 %v6028
  %v6101 = vpop.f32.mrb[0].mxu0
  %v6102 = vadd.f32 0.0, %v6101
  %v6103 = vpop.f32.mrb[0].mxu0
  %6104 = vdwg.mxu0
  %v6105 = vld [vmem:[%s650] sm:$0xff]
  %v6106 = vld [vmem:[%s650 + $0x8] sm:$0xff]
  %v6107 = vld [vmem:[%s650 + $0x10] sm:$0xff]
  %v6108 = vld [vmem:[%s650 + $0x18] sm:$0xff]
  %v6109 = vld [vmem:[%s655] sm:$0x1]
  %v6111 = vlaneseq
  %v6112 = vshrl.u32 %v6111, 7
  %v6113 = vsub.s32 0, %v6112
  %v6114 = vrot.slane %v6109, %v6113
  %v6117 = vsel %vm186, %v6097, 0
  %v6120 = vsel %vm186, %v6102, 0
  %6122 = vmatprep.subr.mxu0 0.0
  %6123 = vmatpush1.msra.mxu0 %v6105
  %6124 = vmatprep.subr.mxu0 0.0
  %6125 = vmatpush1.msra.mxu0 %v6106
  %6126 = vmatprep.subr.mxu0 0.0
  %6127 = vmatpush1.msra.mxu0 %v6107
  %6128 = vmatprep.subr.mxu0 0.0
  %6129 = vmatpush1.msra.mxu0 %v6108
  %6130 = vmatprep.subr.mxu0 0.0
  %6131 = vmatpush1.msra.mxu0 0.0
  %6132 = vmatprep.subr.mxu0 0.0
  %6133 = vmatpush1.msra.mxu0 0.0
  %6134 = vmatprep.subr.mxu0 0.0
  %6135 = vmatpush1.msra.mxu0 0.0
  %6136 = vmatprep.subr.mxu0 0.0
  %6137 = vmatpush1.msra.mxu0 0.0
  %6138 = vmatprep.subr.mxu0 0.0
  %6139 = vmatpush1.msra.mxu0 0.0
  %6140 = vmatprep.subr.mxu0 0.0
  %6141 = vmatpush1.msra.mxu0 0.0
  %6142 = vmatprep.subr.mxu0 0.0
  %6143 = vmatpush1.msra.mxu0 0.0
  %6144 = vmatprep.subr.mxu0 0.0
  %6145 = vmatpush1.msra.mxu0 0.0
  %6146 = vmatprep.subr.mxu0 0.0
  %6147 = vmatpush1.msra.mxu0 0.0
  %6148 = vmatprep.subr.mxu0 0.0
  %6149 = vmatpush1.msra.mxu0 0.0
  %6150 = vmatprep.subr.mxu0 0.0
  %6151 = vmatpush1.msra.mxu0 0.0
  %6152 = vmatprep.subr.mxu0 0.0
  %6153 = vmatpush1.msra.mxu0 0.0
  %6154 = vmatprep.subr.mxu0 0.0
  %6155 = vmatpush1.msra.mxu0 0.0
  %6156 = vmatprep.subr.mxu0 0.0
  %6157 = vmatpush1.msra.mxu0 0.0
  %6158 = vmatprep.subr.mxu0 0.0
  %6159 = vmatpush1.msra.mxu0 0.0
  %6160 = vmatprep.subr.mxu0 0.0
  %6161 = vmatpush1.msra.mxu0 0.0
  %6162 = vmatprep.subr.mxu0 0.0
  %6163 = vmatpush1.msra.mxu0 0.0
  %6164 = vmatprep.subr.mxu0 0.0
  %6165 = vmatpush1.msra.mxu0 0.0
  %6166 = vmatprep.subr.mxu0 0.0
  %6167 = vmatpush1.msra.mxu0 0.0
  %6168 = vmatprep.subr.mxu0 0.0
  %6169 = vmatpush1.msra.mxu0 0.0
  %6170 = vmatprep.subr.mxu0 0.0
  %6171 = vmatpush1.msra.mxu0 0.0
  %6172 = vmatprep.subr.mxu0 0.0
  %6173 = vmatpush1.msra.mxu0 0.0
  %6174 = vmatprep.subr.mxu0 0.0
  %6175 = vmatpush1.msra.mxu0 0.0
  %6176 = vmatprep.subr.mxu0 0.0
  %6177 = vmatpush1.msra.mxu0 0.0
  %6178 = vmatprep.subr.mxu0 0.0
  %6179 = vmatpush1.msra.mxu0 0.0
  %6180 = vmatprep.subr.mxu0 0.0
  %6181 = vmatpush1.msra.mxu0 0.0
  %6182 = vmatprep.subr.mxu0 0.0
  %6183 = vmatpush1.msra.mxu0 0.0
  %6184 = vmatprep.subr.mxu0 0.0
  %6185 = vmatpush1.msra.mxu0 0.0
  %6186 = vmatprep.mubr.f32.mxu0 0.0
  %6187 = vmatmul.mubr.f32.gmra.mrb[0].mxu0 %v6117
  %v6188 = vpop.f32.mrb[0].mxu0
  %v6189 = vadd.f32 %v6114, %v6188
  %v6190 = vpop.f32.mrb[0].mxu0
  %6191 = vmatprep.mubr.f32.mxu0 0.0
  %6192 = vmatmul.mubr.f32.gmra.mrb[0].mxu0 %v6120
  %v6193 = vpop.f32.mrb[0].mxu0
  %v6194 = vadd.f32 %v6114, %v6193
  %v6195 = vpop.f32.mrb[0].mxu0
  %6196 = vdwg.mxu0
  %v6197 = vadd.f32 %v5621, %v6189
  %v6198 = vadd.f32 %v5626, %v6194
  %v6199 = vld [vmem:[%s18] sm:$0x1]
  %v6200 = vld [vmem:[%s747] sm:$0x1]
  %v6201 = vsel %vm186, %v6197, 0.0
  %6202 = vadd.xlane.f32.xlu0 %v6201
  %v6203 = vpop.xlane.xlu0 %6202
  %v6204 = vsel %vm186, %v6198, 0.0
  %6205 = vadd.xlane.f32.xlu0 %v6204
  %v6206 = vpop.xlane.xlu0 %6205
  %v6207 = vmul.f32 %v6203, %v755
  %v6208 = vmul.f32 %v6206, %v755
  %v6209 = vsub.f32 %v6197, %v6207
  %v6210 = vsub.f32 %v6198, %v6208
  %v6211 = vmul.f32 %v6209, %v6209
  %v6212 = vmul.f32 %v6210, %v6210
  %v6213 = vsel %vm186, %v6211, 0.0
  %6214 = vadd.xlane.f32.xlu0 %v6213
  %v6215 = vpop.xlane.xlu0 %6214
  %v6216 = vsel %vm186, %v6212, 0.0
  %6217 = vadd.xlane.f32.xlu0 %v6216
  %v6218 = vpop.xlane.xlu0 %6217
  %v6219 = vmul.f32 %v6215, %v755
  %v6220 = vmul.f32 %v6218, %v755
  %v6221 = vadd.f32 %v6219, 1e-05
  %v6222 = vadd.f32 %v6220, 1e-05
  %v6223 = vrsqrt.pop %v6221
  %v6224 = vrsqrt.pop %v6222
  %v6225 = vmul.f32 %v6209, %v6223
  %v6226 = vmul.f32 %v6210, %v6224
  %v6228 = vlaneseq
  %v6229 = vshrl.u32 %v6228, 7
  %v6230 = vsub.s32 0, %v6229
  %v6231 = vrot.slane %v6199, %v6230
  %v6233 = vmul.f32 %v6225, %v6231
  %v6234 = vmul.f32 %v6226, %v6231
  %v6236 = vlaneseq
  %v6237 = vshrl.u32 %v6236, 7
  %v6238 = vsub.s32 0, %v6237
  %v6239 = vrot.slane %v6200, %v6238
  %v6241 = vadd.f32 %v6233, %v6239
  %v6242 = vadd.f32 %v6234, %v6239
  %v6243 = vld [vmem:[%s19] sm:$0xff]
  %v6244 = vld [vmem:[%s19 + $0x8] sm:$0xff]
  %v6245 = vld [vmem:[%s19 + $0x10] sm:$0xff]
  %v6246 = vld [vmem:[%s19 + $0x18] sm:$0xff]
  %v6247 = vld [vmem:[%s20] sm:$0x1]
  %v6249 = vlaneseq
  %v6250 = vshrl.u32 %v6249, 7
  %v6251 = vsub.s32 0, %v6250
  %v6252 = vrot.slane %v6247, %v6251
  %v6255 = vsel %vm186, %v6241, 0
  %v6258 = vsel %vm186, %v6242, 0
  %6260 = vmatprep.subr.mxu0 0.0
  %6261 = vmatpush1.msra.mxu0 %v6243
  %6262 = vmatprep.subr.mxu0 0.0
  %6263 = vmatpush1.msra.mxu0 %v6244
  %6264 = vmatprep.subr.mxu0 0.0
  %6265 = vmatpush1.msra.mxu0 %v6245
  %6266 = vmatprep.subr.mxu0 0.0
  %6267 = vmatpush1.msra.mxu0 %v6246
  %6268 = vmatprep.subr.mxu0 0.0
  %6269 = vmatpush1.msra.mxu0 0.0
  %6270 = vmatprep.subr.mxu0 0.0
  %6271 = vmatpush1.msra.mxu0 0.0
  %6272 = vmatprep.subr.mxu0 0.0
  %6273 = vmatpush1.msra.mxu0 0.0
  %6274 = vmatprep.subr.mxu0 0.0
  %6275 = vmatpush1.msra.mxu0 0.0
  %6276 = vmatprep.subr.mxu0 0.0
  %6277 = vmatpush1.msra.mxu0 0.0
  %6278 = vmatprep.subr.mxu0 0.0
  %6279 = vmatpush1.msra.mxu0 0.0
  %6280 = vmatprep.subr.mxu0 0.0
  %6281 = vmatpush1.msra.mxu0 0.0
  %6282 = vmatprep.subr.mxu0 0.0
  %6283 = vmatpush1.msra.mxu0 0.0
  %6284 = vmatprep.subr.mxu0 0.0
  %6285 = vmatpush1.msra.mxu0 0.0
  %6286 = vmatprep.subr.mxu0 0.0
  %6287 = vmatpush1.msra.mxu0 0.0
  %6288 = vmatprep.subr.mxu0 0.0
  %6289 = vmatpush1.msra.mxu0 0.0
  %6290 = vmatprep.subr.mxu0 0.0
  %6291 = vmatpush1.msra.mxu0 0.0
  %6292 = vmatprep.subr.mxu0 0.0
  %6293 = vmatpush1.msra.mxu0 0.0
  %6294 = vmatprep.subr.mxu0 0.0
  %6295 = vmatpush1.msra.mxu0 0.0
  %6296 = vmatprep.subr.mxu0 0.0
  %6297 = vmatpush1.msra.mxu0 0.0
  %6298 = vmatprep.subr.mxu0 0.0
  %6299 = vmatpush1.msra.mxu0 0.0
  %6300 = vmatprep.subr.mxu0 0.0
  %6301 = vmatpush1.msra.mxu0 0.0
  %6302 = vmatprep.subr.mxu0 0.0
  %6303 = vmatpush1.msra.mxu0 0.0
  %6304 = vmatprep.subr.mxu0 0.0
  %6305 = vmatpush1.msra.mxu0 0.0
  %6306 = vmatprep.subr.mxu0 0.0
  %6307 = vmatpush1.msra.mxu0 0.0
  %6308 = vmatprep.subr.mxu0 0.0
  %6309 = vmatpush1.msra.mxu0 0.0
  %6310 = vmatprep.subr.mxu0 0.0
  %6311 = vmatpush1.msra.mxu0 0.0
  %6312 = vmatprep.subr.mxu0 0.0
  %6313 = vmatpush1.msra.mxu0 0.0
  %6314 = vmatprep.subr.mxu0 0.0
  %6315 = vmatpush1.msra.mxu0 0.0
  %6316 = vmatprep.subr.mxu0 0.0
  %6317 = vmatpush1.msra.mxu0 0.0
  %6318 = vmatprep.subr.mxu0 0.0
  %6319 = vmatpush1.msra.mxu0 0.0
  %6320 = vmatprep.subr.mxu0 0.0
  %6321 = vmatpush1.msra.mxu0 0.0
  %6322 = vmatprep.subr.mxu0 0.0
  %6323 = vmatpush1.msra.mxu0 0.0
  %6324 = vmatprep.mubr.f32.mxu0 0.0
  %6325 = vmatmul.mubr.f32.gmra.mrb[0].mxu0 %v6255
  %v6326 = vpop.f32.mrb[0].mxu0
  %v6327 = vadd.f32 %v6252, %v6326
  %v6328 = vpop.f32.mrb[0].mxu0
  %6329 = vmatprep.mubr.f32.mxu0 0.0
  %6330 = vmatmul.mubr.f32.gmra.mrb[0].mxu0 %v6258
  %v6331 = vpop.f32.mrb[0].mxu0
  %v6332 = vadd.f32 %v6252, %v6331
  %v6333 = vpop.f32.mrb[0].mxu0
  %6334 = vdwg.mxu0
  %v6335 = vmax.f32 %v6327, 0.0
  %v6336 = vmax.f32 %v6332, 0.0
  %v6337 = vld [vmem:[%s21] sm:$0xff]
  %v6338 = vld [vmem:[%s21 + $0x8] sm:$0xff]
  %v6339 = vld [vmem:[%s21 + $0x10] sm:$0xff]
  %v6340 = vld [vmem:[%s21 + $0x18] sm:$0xff]
  %v6341 = vld [vmem:[%s21 + $0x20] sm:$0xff]
  %v6342 = vld [vmem:[%s21 + $0x28] sm:$0xff]
  %v6343 = vld [vmem:[%s21 + $0x30] sm:$0xff]
  %v6344 = vld [vmem:[%s21 + $0x38] sm:$0xff]
  %v6345 = vld [vmem:[%s22] sm:$0x1]
  %v6347 = vlaneseq
  %v6348 = vshrl.u32 %v6347, 7
  %v6349 = vsub.s32 0, %v6348
  %v6350 = vrot.slane %v6345, %v6349
  %v6353 = vsel %vm901, %v6335, 0
  %v6356 = vsel %vm901, %v6336, 0
  %6358 = vmatprep.subr.mxu0 0.0
  %6359 = vmatpush1.msra.mxu0 %v6337
  %6360 = vmatprep.subr.mxu0 0.0
  %6361 = vmatpush1.msra.mxu0 %v6338
  %6362 = vmatprep.subr.mxu0 0.0
  %6363 = vmatpush1.msra.mxu0 %v6339
  %6364 = vmatprep.subr.mxu0 0.0
  %6365 = vmatpush1.msra.mxu0 %v6340
  %6366 = vmatprep.subr.mxu0 0.0
  %6367 = vmatpush1.msra.mxu0 %v6341
  %6368 = vmatprep.subr.mxu0 0.0
  %6369 = vmatpush1.msra.mxu0 %v6342
  %6370 = vmatprep.subr.mxu0 0.0
  %6371 = vmatpush1.msra.mxu0 %v6343
  %6372 = vmatprep.subr.mxu0 0.0
  %6373 = vmatpush1.msra.mxu0 %v6344
  %6374 = vmatprep.subr.mxu0 0.0
  %6375 = vmatpush1.msra.mxu0 0.0
  %6376 = vmatprep.subr.mxu0 0.0
  %6377 = vmatpush1.msra.mxu0 0.0
  %6378 = vmatprep.subr.mxu0 0.0
  %6379 = vmatpush1.msra.mxu0 0.0
  %6380 = vmatprep.subr.mxu0 0.0
  %6381 = vmatpush1.msra.mxu0 0.0
  %6382 = vmatprep.subr.mxu0 0.0
  %6383 = vmatpush1.msra.mxu0 0.0
  %6384 = vmatprep.subr.mxu0 0.0
  %6385 = vmatpush1.msra.mxu0 0.0
  %6386 = vmatprep.subr.mxu0 0.0
  %6387 = vmatpush1.msra.mxu0 0.0
  %6388 = vmatprep.subr.mxu0 0.0
  %6389 = vmatpush1.msra.mxu0 0.0
  %6390 = vmatprep.subr.mxu0 0.0
  %6391 = vmatpush1.msra.mxu0 0.0
  %6392 = vmatprep.subr.mxu0 0.0
  %6393 = vmatpush1.msra.mxu0 0.0
  %6394 = vmatprep.subr.mxu0 0.0
  %6395 = vmatpush1.msra.mxu0 0.0
  %6396 = vmatprep.subr.mxu0 0.0
  %6397 = vmatpush1.msra.mxu0 0.0
  %6398 = vmatprep.subr.mxu0 0.0
  %6399 = vmatpush1.msra.mxu0 0.0
  %6400 = vmatprep.subr.mxu0 0.0
  %6401 = vmatpush1.msra.mxu0 0.0
  %6402 = vmatprep.subr.mxu0 0.0
  %6403 = vmatpush1.msra.mxu0 0.0
  %6404 = vmatprep.subr.mxu0 0.0
  %6405 = vmatpush1.msra.mxu0 0.0
  %6406 = vmatprep.subr.mxu0 0.0
  %6407 = vmatpush1.msra.mxu0 0.0
  %6408 = vmatprep.subr.mxu0 0.0
  %6409 = vmatpush1.msra.mxu0 0.0
  %6410 = vmatprep.subr.mxu0 0.0
  %6411 = vmatpush1.msra.mxu0 0.0
  %6412 = vmatprep.subr.mxu0 0.0
  %6413 = vmatpush1.msra.mxu0 0.0
  %6414 = vmatprep.subr.mxu0 0.0
  %6415 = vmatpush1.msra.mxu0 0.0
  %6416 = vmatprep.subr.mxu0 0.0
  %6417 = vmatpush1.msra.mxu0 0.0
  %6418 = vmatprep.subr.mxu0 0.0
  %6419 = vmatpush1.msra.mxu0 0.0
  %6420 = vmatprep.subr.mxu0 0.0
  %6421 = vmatpush1.msra.mxu0 0.0
  %6422 = vmatprep.mubr.f32.mxu0 0.0
  %6423 = vmatmul.mubr.f32.gmra.mrb[0].mxu0 %v6353
  %v6424 = vpop.f32.mrb[0].mxu0
  %v6425 = vadd.f32 %v6350, %v6424
  %v6426 = vpop.f32.mrb[0].mxu0
  %6427 = vmatprep.mubr.f32.mxu0 0.0
  %6428 = vmatmul.mubr.f32.gmra.mrb[0].mxu0 %v6356
  %v6429 = vpop.f32.mrb[0].mxu0
  %v6430 = vpop.f32.mrb[0].mxu0
  %6431 = vdwg.mxu0
  %v6432 = vadd.f32 %v6241, %v6425
  %v6433 = vld [vmem:[%s983] sm:$0x1]
  %v6434 = vld [vmem:[%s985] sm:$0x1]
  %v6435 = vsel %vm186, %v6432, 0.0
  %6436 = vadd.xlane.f32.xlu0 %v6435
  %v6437 = vpop.xlane.xlu0 %6436
  %v6438 = vmul.f32 %v6437, %v755
  %v6439 = vsub.f32 %v6432, %v6438
  %v6440 = vmul.f32 %v6439, %v6439
  %v6441 = vsel %vm186, %v6440, 0.0
  %6442 = vadd.xlane.f32.xlu0 %v6441
  %v6443 = vpop.xlane.xlu0 %6442
  %v6444 = vmul.f32 %v6443, %v755
  %v6445 = vadd.f32 %v6444, 1e-05
  %v6446 = vrsqrt.pop %v6445
  %v6447 = vmul.f32 %v6439, %v6446
  %v6449 = vlaneseq
  %v6450 = vshrl.u32 %v6449, 7
  %v6451 = vsub.s32 0, %v6450
  %v6452 = vrot.slane %v6433, %v6451
  %v6454 = vmul.f32 %v6447, %v6452
  %v6456 = vlaneseq
  %v6457 = vshrl.u32 %v6456, 7
  %v6458 = vsub.s32 0, %v6457
  %v6459 = vrot.slane %v6434, %v6458
  %v6461 = vadd.f32 %v6454, %v6459
  %v6462 = vld [vmem:[%s8] sm:$0xff]
  %v6463 = vld [vmem:[%s8 + $0x8] sm:$0xff]
  %v6464 = vld [vmem:[%s8 + $0x10] sm:$0xff]
  %v6465 = vld [vmem:[%s8 + $0x18] sm:$0xff]
  %v6466 = vld [vmem:[%s9] sm:$0x1]
  %v6468 = vsel %vm186, %v6461, 0
  %6470 = vmatprep.subr.mxu0 0.0
  %6471 = vmatpush1.msra.mxu0 %v6462
  %6472 = vmatprep.subr.mxu0 0.0
  %6473 = vmatpush1.msra.mxu0 %v6463
  %6474 = vmatprep.subr.mxu0 0.0
  %6475 = vmatpush1.msra.mxu0 %v6464
  %6476 = vmatprep.subr.mxu0 0.0
  %6477 = vmatpush1.msra.mxu0 %v6465
  %6478 = vmatprep.subr.mxu0 0.0
  %6479 = vmatpush1.msra.mxu0 0.0
  %6480 = vmatprep.subr.mxu0 0.0
  %6481 = vmatpush1.msra.mxu0 0.0
  %6482 = vmatprep.subr.mxu0 0.0
  %6483 = vmatpush1.msra.mxu0 0.0
  %6484 = vmatprep.subr.mxu0 0.0
  %6485 = vmatpush1.msra.mxu0 0.0
  %6486 = vmatprep.subr.mxu0 0.0
  %6487 = vmatpush1.msra.mxu0 0.0
  %6488 = vmatprep.subr.mxu0 0.0
  %6489 = vmatpush1.msra.mxu0 0.0
  %6490 = vmatprep.subr.mxu0 0.0
  %6491 = vmatpush1.msra.mxu0 0.0
  %6492 = vmatprep.subr.mxu0 0.0
  %6493 = vmatpush1.msra.mxu0 0.0
  %6494 = vmatprep.subr.mxu0 0.0
  %6495 = vmatpush1.msra.mxu0 0.0
  %6496 = vmatprep.subr.mxu0 0.0
  %6497 = vmatpush1.msra.mxu0 0.0
  %6498 = vmatprep.subr.mxu0 0.0
  %6499 = vmatpush1.msra.mxu0 0.0
  %6500 = vmatprep.subr.mxu0 0.0
  %6501 = vmatpush1.msra.mxu0 0.0
  %6502 = vmatprep.subr.mxu0 0.0
  %6503 = vmatpush1.msra.mxu0 0.0
  %6504 = vmatprep.subr.mxu0 0.0
  %6505 = vmatpush1.msra.mxu0 0.0
  %6506 = vmatprep.subr.mxu0 0.0
  %6507 = vmatpush1.msra.mxu0 0.0
  %6508 = vmatprep.subr.mxu0 0.0
  %6509 = vmatpush1.msra.mxu0 0.0
  %6510 = vmatprep.subr.mxu0 0.0
  %6511 = vmatpush1.msra.mxu0 0.0
  %6512 = vmatprep.subr.mxu0 0.0
  %6513 = vmatpush1.msra.mxu0 0.0
  %6514 = vmatprep.subr.mxu0 0.0
  %6515 = vmatpush1.msra.mxu0 0.0
  %6516 = vmatprep.subr.mxu0 0.0
  %6517 = vmatpush1.msra.mxu0 0.0
  %6518 = vmatprep.subr.mxu0 0.0
  %6519 = vmatpush1.msra.mxu0 0.0
  %6520 = vmatprep.subr.mxu0 0.0
  %6521 = vmatpush1.msra.mxu0 0.0
  %6522 = vmatprep.subr.mxu0 0.0
  %6523 = vmatpush1.msra.mxu0 0.0
  %6524 = vmatprep.subr.mxu0 0.0
  %6525 = vmatpush1.msra.mxu0 0.0
  %6526 = vmatprep.subr.mxu0 0.0
  %6527 = vmatpush1.msra.mxu0 0.0
  %6528 = vmatprep.subr.mxu0 0.0
  %6529 = vmatpush1.msra.mxu0 0.0
  %6530 = vmatprep.subr.mxu0 0.0
  %6531 = vmatpush1.msra.mxu0 0.0
  %6532 = vmatprep.subr.mxu0 0.0
  %6533 = vmatpush1.msra.mxu0 0.0
  %6534 = vmatprep.mubr.f32.mxu0 0.0
  %6535 = vmatmul.mubr.f32.gmra.mrb[0].mxu0 %v6468
  %v6536 = vpop.f32.mrb[0].mxu0
  %v6537 = vadd.f32 %v6466, %v6536
  %v6538 = vpop.f32.mrb[0].mxu0
  %6539 = vdwg.mxu0
  %v6540 = vmul.f32 %v6537, 0.5
  %v6541 = vmul.f32 %v6540, 1.442695
  %v6542 = vpow.pop %v6541
  %s6543 = scalar_lea.vmem %s2, 1
  %v6544 = vld [vmem:[%s6543] sm:$0x1]
  %v6546 = vlaneseq
  %v6547 = vshrl.u32 %v6546, 7
  %v6548 = vsub.s32 0, %v6547
  %v6549 = vrot.slane %v6544, %v6548
  %6550 = vrot.lane.b32.xlu0 %v6549, 8
  %v6551 = vpop.permute.xlu0 %6550
  %v6553 = vmul.f32 %v6542, %v6551
  %6555 = vrot.lane.b32.xlu0 %v6553, 120
  %v6556 = vpop.permute.xlu0 %6555
  %v6558 = vadd.f32 %v6537, %v6556
  %v6559 = vld [vmem:[%s10] sm:$0xff]
  %v6560 = vld [vmem:[%s11] sm:$0x1]
  %v6562 = vsel %vm1112, %v6558, 0
  %6564 = vmatprep.subr.mxu0 0.0
  %6565 = vmatpush1.msra.mxu0 %v6559
  %6566 = vmatprep.subr.mxu0 0.0
  %6567 = vmatpush1.msra.mxu0 0.0
  %6568 = vmatprep.subr.mxu0 0.0
  %6569 = vmatpush1.msra.mxu0 0.0
  %6570 = vmatprep.subr.mxu0 0.0
  %6571 = vmatpush1.msra.mxu0 0.0
  %6572 = vmatprep.subr.mxu0 0.0
  %6573 = vmatpush1.msra.mxu0 0.0
  %6574 = vmatprep.subr.mxu0 0.0
  %6575 = vmatpush1.msra.mxu0 0.0
  %6576 = vmatprep.subr.mxu0 0.0
  %6577 = vmatpush1.msra.mxu0 0.0
  %6578 = vmatprep.subr.mxu0 0.0
  %6579 = vmatpush1.msra.mxu0 0.0
  %6580 = vmatprep.subr.mxu0 0.0
  %6581 = vmatpush1.msra.mxu0 0.0
  %6582 = vmatprep.subr.mxu0 0.0
  %6583 = vmatpush1.msra.mxu0 0.0
  %6584 = vmatprep.subr.mxu0 0.0
  %6585 = vmatpush1.msra.mxu0 0.0
  %6586 = vmatprep.subr.mxu0 0.0
  %6587 = vmatpush1.msra.mxu0 0.0
  %6588 = vmatprep.subr.mxu0 0.0
  %6589 = vmatpush1.msra.mxu0 0.0
  %6590 = vmatprep.subr.mxu0 0.0
  %6591 = vmatpush1.msra.mxu0 0.0
  %6592 = vmatprep.subr.mxu0 0.0
  %6593 = vmatpush1.msra.mxu0 0.0
  %6594 = vmatprep.subr.mxu0 0.0
  %6595 = vmatpush1.msra.mxu0 0.0
  %6596 = vmatprep.subr.mxu0 0.0
  %6597 = vmatpush1.msra.mxu0 0.0
  %6598 = vmatprep.subr.mxu0 0.0
  %6599 = vmatpush1.msra.mxu0 0.0
  %6600 = vmatprep.subr.mxu0 0.0
  %6601 = vmatpush1.msra.mxu0 0.0
  %6602 = vmatprep.subr.mxu0 0.0
  %6603 = vmatpush1.msra.mxu0 0.0
  %6604 = vmatprep.subr.mxu0 0.0
  %6605 = vmatpush1.msra.mxu0 0.0
  %6606 = vmatprep.subr.mxu0 0.0
  %6607 = vmatpush1.msra.mxu0 0.0
  %6608 = vmatprep.subr.mxu0 0.0
  %6609 = vmatpush1.msra.mxu0 0.0
  %6610 = vmatprep.subr.mxu0 0.0
  %6611 = vmatpush1.msra.mxu0 0.0
  %6612 = vmatprep.subr.mxu0 0.0
  %6613 = vmatpush1.msra.mxu0 0.0
  %6614 = vmatprep.subr.mxu0 0.0
  %6615 = vmatpush1.msra.mxu0 0.0
  %6616 = vmatprep.subr.mxu0 0.0
  %6617 = vmatpush1.msra.mxu0 0.0
  %6618 = vmatprep.subr.mxu0 0.0
  %6619 = vmatpush1.msra.mxu0 0.0
  %6620 = vmatprep.subr.mxu0 0.0
  %6621 = vmatpush1.msra.mxu0 0.0
  %6622 = vmatprep.subr.mxu0 0.0
  %6623 = vmatpush1.msra.mxu0 0.0
  %6624 = vmatprep.subr.mxu0 0.0
  %6625 = vmatpush1.msra.mxu0 0.0
  %6626 = vmatprep.subr.mxu0 0.0
  %6627 = vmatpush1.msra.mxu0 0.0
  %6628 = vmatprep.mubr.f32.mxu0 0.0
  %6629 = vmatmul.mubr.f32.gmra.mrb[0].mxu0 %v6562
  %v6630 = vpop.f32.mrb[0].mxu0
  %v6631 = vadd.f32 %v6560, %v6630
  %v6632 = vpop.f32.mrb[0].mxu0
  %6633 = vdwg.mxu0
  %s6634 = scalar_lea.vmem %s25, 1
  %6635 = vst.msk [vmem:[%s6634] sm:$0x1] %vm1186, %v6537
  %s6636 = scalar_lea.vmem %s3, 128
  %v6637 = vld [vmem:[%s6636] sm:$0xff]
  %v6638 = vld [vmem:[%s6636 + $0x8] sm:$0xff]
  %v6639 = vld [vmem:[%s6636 + $0x10] sm:$0xff]
  %v6640 = vld [vmem:[%s6636 + $0x18] sm:$0xff]
  %v6641 = vld [vmem:[%s6636 + $0x20] sm:$0xff]
  %v6642 = vld [vmem:[%s6636 + $0x28] sm:$0xff]
  %v6643 = vld [vmem:[%s6636 + $0x30] sm:$0xff]
  %v6644 = vld [vmem:[%s6636 + $0x38] sm:$0xff]
  %v6645 = vld [vmem:[%s6636 + $0x40] sm:$0xff]
  %v6646 = vld [vmem:[%s6636 + $0x48] sm:$0xff]
  %v6647 = vld [vmem:[%s6636 + $0x50] sm:$0xff]
  %v6648 = vld [vmem:[%s6636 + $0x58] sm:$0xff]
  %v6649 = vld [vmem:[%s6636 + $0x60] sm:$0xff]
  %v6650 = vld [vmem:[%s6636 + $0x68] sm:$0xff]
  %v6651 = vld [vmem:[%s6636 + $0x70] sm:$0xff]
  %v6652 = vld [vmem:[%s6636 + $0x78] sm:$0xff]
  %v6653 = vld [vmem:[%s4] sm:$0x1]
  %v6654 = vld [vmem:[%s12] sm:$0xff]
  %v6655 = vld [vmem:[%s12 + $0x8] sm:$0x7]
  %v6656 = vld [vmem:[%s13] sm:$0xff]
  %v6657 = vld [vmem:[%s13 + $0x8] sm:$0xff]
  %v6658 = vld [vmem:[%s13 + $0x10] sm:$0xff]
  %v6659 = vld [vmem:[%s13 + $0x18] sm:$0xff]
  %v6660 = vld [vmem:[%s13 + $0x20] sm:$0xff]
  %v6661 = vld [vmem:[%s13 + $0x28] sm:$0xff]
  %v6662 = vld [vmem:[%s13 + $0x30] sm:$0xff]
  %v6663 = vld [vmem:[%s13 + $0x38] sm:$0xff]
  %v6664 = vld [vmem:[%s13 + $0x40] sm:$0xff]
  %v6665 = vld [vmem:[%s13 + $0x48] sm:$0xff]
  %v6666 = vld [vmem:[%s13 + $0x50] sm:$0xff]
  %v6667 = vld [vmem:[%s13 + $0x58] sm:$0xff]
  %v6668 = vld [vmem:[%s13 + $0x60] sm:$0xff]
  %v6669 = vld [vmem:[%s13 + $0x68] sm:$0xff]
  %v6670 = vld [vmem:[%s13 + $0x70] sm:$0xff]
  %v6671 = vld [vmem:[%s13 + $0x78] sm:$0xff]
  %v6672 = vld [vmem:[%s14] sm:$0xff]
  %v6673 = vld [vmem:[%s14 + $0x8] sm:$0xff]
  %v6674 = vld [vmem:[%s14 + $0x10] sm:$0xff]
  %v6675 = vld [vmem:[%s14 + $0x18] sm:$0xff]
  %v6676 = vld [vmem:[%s14 + $0x20] sm:$0xff]
  %v6677 = vld [vmem:[%s14 + $0x28] sm:$0xff]
  %v6678 = vld [vmem:[%s14 + $0x30] sm:$0xff]
  %v6679 = vld [vmem:[%s14 + $0x38] sm:$0xff]
  %v6680 = vld [vmem:[%s14 + $0x40] sm:$0xff]
  %v6681 = vld [vmem:[%s14 + $0x48] sm:$0xff]
  %v6682 = vld [vmem:[%s14 + $0x50] sm:$0xff]
  %v6683 = vld [vmem:[%s14 + $0x58] sm:$0xff]
  %v6684 = vld [vmem:[%s14 + $0x60] sm:$0xff]
  %v6685 = vld [vmem:[%s14 + $0x68] sm:$0xff]
  %v6686 = vld [vmem:[%s14 + $0x70] sm:$0xff]
  %v6687 = vld [vmem:[%s14 + $0x78] sm:$0xff]
  %v6688 = vld [vmem:[%s15] sm:$0xff]
  %v6689 = vld [vmem:[%s23] sm:$0xff]
  %v6690 = vld [vmem:[%s23 + $0x8] sm:$0xff]
  %v6691 = vld [vmem:[%s23 + $0x10] sm:$0xff]
  %v6692 = vld [vmem:[%s23 + $0x18] sm:$0xff]
  %v6693 = vld [vmem:[%s24] sm:$0x1]
  %v6695 = vsel %vm1245, %v6637, 0
  %v6698 = vsel %vm1245, %v6638, 0
  %v6701 = vsel %vm1245, %v6639, 0
  %v6704 = vsel %vm1245, %v6640, 0
  %v6707 = vsel %vm1245, %v6641, 0
  %v6710 = vsel %vm1245, %v6642, 0
  %v6713 = vsel %vm1245, %v6643, 0
  %v6716 = vsel %vm1245, %v6644, 0
  %v6719 = vsel %vm1245, %v6645, 0
  %v6722 = vsel %vm1245, %v6646, 0
  %v6725 = vsel %vm1245, %v6647, 0
  %v6728 = vsel %vm1245, %v6648, 0
  %v6731 = vsel %vm1245, %v6649, 0
  %v6734 = vsel %vm1245, %v6650, 0
  %v6737 = vsel %vm1245, %v6651, 0
  %v6740 = vsel %vm1245, %v6652, 0
  %v6743 = vsel %vm1294, %v6655, 0
  %6745 = vmatprep.subr.mxu0 0.0
  %6746 = vmatpush1.msra.mxu0 %v6654
  %6747 = vmatprep.subr.mxu0 0.0
  %6748 = vmatpush1.msra.mxu0 %v6743
  %6749 = vmatprep.subr.mxu0 0.0
  %6750 = vmatpush1.msra.mxu0 0.0
  %6751 = vmatprep.subr.mxu0 0.0
  %6752 = vmatpush1.msra.mxu0 0.0
  %6753 = vmatprep.subr.mxu0 0.0
  %6754 = vmatpush1.msra.mxu0 0.0
  %6755 = vmatprep.subr.mxu0 0.0
  %6756 = vmatpush1.msra.mxu0 0.0
  %6757 = vmatprep.subr.mxu0 0.0
  %6758 = vmatpush1.msra.mxu0 0.0
  %6759 = vmatprep.subr.mxu0 0.0
  %6760 = vmatpush1.msra.mxu0 0.0
  %6761 = vmatprep.subr.mxu0 0.0
  %6762 = vmatpush1.msra.mxu0 0.0
  %6763 = vmatprep.subr.mxu0 0.0
  %6764 = vmatpush1.msra.mxu0 0.0
  %6765 = vmatprep.subr.mxu0 0.0
  %6766 = vmatpush1.msra.mxu0 0.0
  %6767 = vmatprep.subr.mxu0 0.0
  %6768 = vmatpush1.msra.mxu0 0.0
  %6769 = vmatprep.subr.mxu0 0.0
  %6770 = vmatpush1.msra.mxu0 0.0
  %6771 = vmatprep.subr.mxu0 0.0
  %6772 = vmatpush1.msra.mxu0 0.0
  %6773 = vmatprep.subr.mxu0 0.0
  %6774 = vmatpush1.msra.mxu0 0.0
  %6775 = vmatprep.subr.mxu0 0.0
  %6776 = vmatpush1.msra.mxu0 0.0
  %6777 = vmatprep.subr.mxu0 0.0
  %6778 = vmatpush1.msra.mxu0 0.0
  %6779 = vmatprep.subr.mxu0 0.0
  %6780 = vmatpush1.msra.mxu0 0.0
  %6781 = vmatprep.subr.mxu0 0.0
  %6782 = vmatpush1.msra.mxu0 0.0
  %6783 = vmatprep.subr.mxu0 0.0
  %6784 = vmatpush1.msra.mxu0 0.0
  %6785 = vmatprep.subr.mxu0 0.0
  %6786 = vmatpush1.msra.mxu0 0.0
  %6787 = vmatprep.subr.mxu0 0.0
  %6788 = vmatpush1.msra.mxu0 0.0
  %6789 = vmatprep.subr.mxu0 0.0
  %6790 = vmatpush1.msra.mxu0 0.0
  %6791 = vmatprep.subr.mxu0 0.0
  %6792 = vmatpush1.msra.mxu0 0.0
  %6793 = vmatprep.subr.mxu0 0.0
  %6794 = vmatpush1.msra.mxu0 0.0
  %6795 = vmatprep.subr.mxu0 0.0
  %6796 = vmatpush1.msra.mxu0 0.0
  %6797 = vmatprep.subr.mxu0 0.0
  %6798 = vmatpush1.msra.mxu0 0.0
  %6799 = vmatprep.subr.mxu0 0.0
  %6800 = vmatpush1.msra.mxu0 0.0
  %6801 = vmatprep.subr.mxu0 0.0
  %6802 = vmatpush1.msra.mxu0 0.0
  %6803 = vmatprep.subr.mxu0 0.0
  %6804 = vmatpush1.msra.mxu0 0.0
  %6805 = vmatprep.subr.mxu0 0.0
  %6806 = vmatpush1.msra.mxu0 0.0
  %6807 = vmatprep.subr.mxu0 0.0
  %6808 = vmatpush1.msra.mxu0 0.0
  %6809 = vmatprep.mubr.f32.mxu0 0.0
  %6810 = vmatmul.mubr.f32.gmra.mrb[0].mxu0 %v6695
  %v6811 = vpop.f32.mrb[0].mxu0
  %v6812 = vadd.f32 %v6656, %v6811
  %v6813 = vpop.f32.mrb[0].mxu0
  %6814 = vmatprep.mubr.f32.mxu0 0.0
  %6815 = vmatmul.mubr.f32.gmra.mrb[0].mxu0 %v6698
  %v6816 = vpop.f32.mrb[0].mxu0
  %v6817 = vadd.f32 %v6657, %v6816
  %v6818 = vpop.f32.mrb[0].mxu0
  %6819 = vmatprep.mubr.f32.mxu0 0.0
  %6820 = vmatmul.mubr.f32.gmra.mrb[0].mxu0 %v6701
  %v6821 = vpop.f32.mrb[0].mxu0
  %v6822 = vadd.f32 %v6658, %v6821
  %v6823 = vpop.f32.mrb[0].mxu0
  %6824 = vmatprep.mubr.f32.mxu0 0.0
  %6825 = vmatmul.mubr.f32.gmra.mrb[0].mxu0 %v6704
  %v6826 = vpop.f32.mrb[0].mxu0
  %v6827 = vadd.f32 %v6659, %v6826
  %v6828 = vpop.f32.mrb[0].mxu0
  %6829 = vmatprep.mubr.f32.mxu0 0.0
  %6830 = vmatmul.mubr.f32.gmra.mrb[0].mxu0 %v6707
  %v6831 = vpop.f32.mrb[0].mxu0
  %v6832 = vadd.f32 %v6660, %v6831
  %v6833 = vpop.f32.mrb[0].mxu0
  %6834 = vmatprep.mubr.f32.mxu0 0.0
  %6835 = vmatmul.mubr.f32.gmra.mrb[0].mxu0 %v6710
  %v6836 = vpop.f32.mrb[0].mxu0
  %v6837 = vadd.f32 %v6661, %v6836
  %v6838 = vpop.f32.mrb[0].mxu0
  %6839 = vmatprep.mubr.f32.mxu0 0.0
  %6840 = vmatmul.mubr.f32.gmra.mrb[0].mxu0 %v6713
  %v6841 = vpop.f32.mrb[0].mxu0
  %v6842 = vadd.f32 %v6662, %v6841
  %v6843 = vpop.f32.mrb[0].mxu0
  %6844 = vmatprep.mubr.f32.mxu0 0.0
  %6845 = vmatmul.mubr.f32.gmra.mrb[0].mxu0 %v6716
  %v6846 = vpop.f32.mrb[0].mxu0
  %v6847 = vadd.f32 %v6663, %v6846
  %v6848 = vpop.f32.mrb[0].mxu0
  %6849 = vmatprep.mubr.f32.mxu0 0.0
  %6850 = vmatmul.mubr.f32.gmra.mrb[0].mxu0 %v6719
  %v6851 = vpop.f32.mrb[0].mxu0
  %v6852 = vadd.f32 %v6664, %v6851
  %v6853 = vpop.f32.mrb[0].mxu0
  %6854 = vmatprep.mubr.f32.mxu0 0.0
  %6855 = vmatmul.mubr.f32.gmra.mrb[0].mxu0 %v6722
  %v6856 = vpop.f32.mrb[0].mxu0
  %v6857 = vadd.f32 %v6665, %v6856
  %v6858 = vpop.f32.mrb[0].mxu0
  %6859 = vmatprep.mubr.f32.mxu0 0.0
  %6860 = vmatmul.mubr.f32.gmra.mrb[0].mxu0 %v6725
  %v6861 = vpop.f32.mrb[0].mxu0
  %v6862 = vadd.f32 %v6666, %v6861
  %v6863 = vpop.f32.mrb[0].mxu0
  %6864 = vmatprep.mubr.f32.mxu0 0.0
  %6865 = vmatmul.mubr.f32.gmra.mrb[0].mxu0 %v6728
  %v6866 = vpop.f32.mrb[0].mxu0
  %v6867 = vadd.f32 %v6667, %v6866
  %v6868 = vpop.f32.mrb[0].mxu0
  %6869 = vmatprep.mubr.f32.mxu0 0.0
  %6870 = vmatmul.mubr.f32.gmra.mrb[0].mxu0 %v6731
  %v6871 = vpop.f32.mrb[0].mxu0
  %v6872 = vadd.f32 %v6668, %v6871
  %v6873 = vpop.f32.mrb[0].mxu0
  %6874 = vmatprep.mubr.f32.mxu0 0.0
  %6875 = vmatmul.mubr.f32.gmra.mrb[0].mxu0 %v6734
  %v6876 = vpop.f32.mrb[0].mxu0
  %v6877 = vadd.f32 %v6669, %v6876
  %v6878 = vpop.f32.mrb[0].mxu0
  %6879 = vmatprep.mubr.f32.mxu0 0.0
  %6880 = vmatmul.mubr.f32.gmra.mrb[0].mxu0 %v6737
  %v6881 = vpop.f32.mrb[0].mxu0
  %v6882 = vadd.f32 %v6670, %v6881
  %v6883 = vpop.f32.mrb[0].mxu0
  %6884 = vmatprep.mubr.f32.mxu0 0.0
  %6885 = vmatmul.mubr.f32.gmra.mrb[0].mxu0 %v6740
  %v6886 = vpop.f32.mrb[0].mxu0
  %v6887 = vadd.f32 %v6671, %v6886
  %v6888 = vpop.f32.mrb[0].mxu0
  %6889 = vdwg.mxu0
  %v6890 = vlaneseq
  %v6891 = vshrl.u32 %v6890, 7
  %v6892 = vsub.s32 0, %v6891
  %v6893 = vrot.slane %v6631, %v6892
  %v6894 = vsel %vm1492, %v6893, 0.0
  %v6895 = vsel %vm1493, %v6893, 0.0
  %v6896 = vsel %vm1494, %v6893, 0.0
  %v6897 = vsel %vm1495, %v6893, 0.0
  %v6898 = vsel %vm1496, %v6893, 0.0
  %v6899 = vsel %vm1497, %v6893, 0.0
  %v6900 = vsel %vm1498, %v6893, 0.0
  %v6901 = vsel %vm1499, %v6893, 0.0
  %v6902 = vsel %vm1500, %v6893, 0.0
  %v6903 = vsel %vm1501, %v6893, 0.0
  %v6904 = vsel %vm1502, %v6893, 0.0
  %v6905 = vsel %vm1503, %v6893, 0.0
  %v6906 = vsel %vm1504, %v6893, 0.0
  %v6907 = vsel %vm1505, %v6893, 0.0
  %v6908 = vsel %vm1506, %v6893, 0.0
  %v6909 = vsel %vm1507, %v6893, 0.0
  %v6910 = vadd.f32 %v6812, %v6894
  %v6911 = vadd.f32 %v6817, %v6895
  %v6912 = vadd.f32 %v6822, %v6896
  %v6913 = vadd.f32 %v6827, %v6897
  %v6914 = vadd.f32 %v6832, %v6898
  %v6915 = vadd.f32 %v6837, %v6899
  %v6916 = vadd.f32 %v6842, %v6900
  %v6917 = vadd.f32 %v6847, %v6901
  %v6918 = vadd.f32 %v6852, %v6902
  %v6919 = vadd.f32 %v6857, %v6903
  %v6920 = vadd.f32 %v6862, %v6904
  %v6921 = vadd.f32 %v6867, %v6905
  %v6922 = vadd.f32 %v6872, %v6906
  %v6923 = vadd.f32 %v6877, %v6907
  %v6924 = vadd.f32 %v6882, %v6908
  %v6925 = vadd.f32 %v6887, %v6909
  %v6926 = vadd.f32 %v6910, %v6672
  %v6927 = vadd.f32 %v6911, %v6673
  %v6928 = vadd.f32 %v6912, %v6674
  %v6929 = vadd.f32 %v6913, %v6675
  %v6930 = vadd.f32 %v6914, %v6676
  %v6931 = vadd.f32 %v6915, %v6677
  %v6932 = vadd.f32 %v6916, %v6678
  %v6933 = vadd.f32 %v6917, %v6679
  %v6934 = vadd.f32 %v6918, %v6680
  %v6935 = vadd.f32 %v6919, %v6681
  %v6936 = vadd.f32 %v6920, %v6682
  %v6937 = vadd.f32 %v6921, %v6683
  %v6938 = vadd.f32 %v6922, %v6684
  %v6939 = vadd.f32 %v6923, %v6685
  %v6940 = vadd.f32 %v6924, %v6686
  %v6941 = vadd.f32 %v6925, %v6687
  %v6942 = vld [vmem:[%s1560] sm:$0xff]
  %v6943 = vld [vmem:[%s1560 + $0x8] sm:$0xff]
  %v6944 = vld [vmem:[%s1560 + $0x10] sm:$0xff]
  %v6945 = vld [vmem:[%s1560 + $0x18] sm:$0xff]
  %v6946 = vld [vmem:[%s1565] sm:$0x1]
  %v6948 = vlaneseq
  %v6949 = vshrl.u32 %v6948, 7
  %v6950 = vsub.s32 0, %v6949
  %v6951 = vrot.slane %v6946, %v6950
  %v6954 = vsel %vm186, %v6926, 0
  %v6957 = vsel %vm186, %v6927, 0
  %v6960 = vsel %vm186, %v6928, 0
  %v6963 = vsel %vm186, %v6929, 0
  %v6966 = vsel %vm186, %v6930, 0
  %v6969 = vsel %vm186, %v6931, 0
  %v6972 = vsel %vm186, %v6932, 0
  %v6975 = vsel %vm186, %v6933, 0
  %v6978 = vsel %vm186, %v6934, 0
  %v6981 = vsel %vm186, %v6935, 0
  %v6984 = vsel %vm186, %v6936, 0
  %v6987 = vsel %vm186, %v6937, 0
  %v6990 = vsel %vm186, %v6938, 0
  %v6993 = vsel %vm186, %v6939, 0
  %v6996 = vsel %vm186, %v6940, 0
  %v6999 = vsel %vm186, %v6941, 0
  %7001 = vmatprep.subr.mxu0 0.0
  %7002 = vmatpush1.msra.mxu0 %v6942
  %7003 = vmatprep.subr.mxu0 0.0
  %7004 = vmatpush1.msra.mxu0 %v6943
  %7005 = vmatprep.subr.mxu0 0.0
  %7006 = vmatpush1.msra.mxu0 %v6944
  %7007 = vmatprep.subr.mxu0 0.0
  %7008 = vmatpush1.msra.mxu0 %v6945
  %7009 = vmatprep.subr.mxu0 0.0
  %7010 = vmatpush1.msra.mxu0 0.0
  %7011 = vmatprep.subr.mxu0 0.0
  %7012 = vmatpush1.msra.mxu0 0.0
  %7013 = vmatprep.subr.mxu0 0.0
  %7014 = vmatpush1.msra.mxu0 0.0
  %7015 = vmatprep.subr.mxu0 0.0
  %7016 = vmatpush1.msra.mxu0 0.0
  %7017 = vmatprep.subr.mxu0 0.0
  %7018 = vmatpush1.msra.mxu0 0.0
  %7019 = vmatprep.subr.mxu0 0.0
  %7020 = vmatpush1.msra.mxu0 0.0
  %7021 = vmatprep.subr.mxu0 0.0
  %7022 = vmatpush1.msra.mxu0 0.0
  %7023 = vmatprep.subr.mxu0 0.0
  %7024 = vmatpush1.msra.mxu0 0.0
  %7025 = vmatprep.subr.mxu0 0.0
  %7026 = vmatpush1.msra.mxu0 0.0
  %7027 = vmatprep.subr.mxu0 0.0
  %7028 = vmatpush1.msra.mxu0 0.0
  %7029 = vmatprep.subr.mxu0 0.0
  %7030 = vmatpush1.msra.mxu0 0.0
  %7031 = vmatprep.subr.mxu0 0.0
  %7032 = vmatpush1.msra.mxu0 0.0
  %7033 = vmatprep.subr.mxu0 0.0
  %7034 = vmatpush1.msra.mxu0 0.0
  %7035 = vmatprep.subr.mxu0 0.0
  %7036 = vmatpush1.msra.mxu0 0.0
  %7037 = vmatprep.subr.mxu0 0.0
  %7038 = vmatpush1.msra.mxu0 0.0
  %7039 = vmatprep.subr.mxu0 0.0
  %7040 = vmatpush1.msra.mxu0 0.0
  %7041 = vmatprep.subr.mxu0 0.0
  %7042 = vmatpush1.msra.mxu0 0.0
  %7043 = vmatprep.subr.mxu0 0.0
  %7044 = vmatpush1.msra.mxu0 0.0
  %7045 = vmatprep.subr.mxu0 0.0
  %7046 = vmatpush1.msra.mxu0 0.0
  %7047 = vmatprep.subr.mxu0 0.0
  %7048 = vmatpush1.msra.mxu0 0.0
  %7049 = vmatprep.subr.mxu0 0.0
  %7050 = vmatpush1.msra.mxu0 0.0
  %7051 = vmatprep.subr.mxu0 0.0
  %7052 = vmatpush1.msra.mxu0 0.0
  %7053 = vmatprep.subr.mxu0 0.0
  %7054 = vmatpush1.msra.mxu0 0.0
  %7055 = vmatprep.subr.mxu0 0.0
  %7056 = vmatpush1.msra.mxu0 0.0
  %7057 = vmatprep.subr.mxu0 0.0
  %7058 = vmatpush1.msra.mxu0 0.0
  %7059 = vmatprep.subr.mxu0 0.0
  %7060 = vmatpush1.msra.mxu0 0.0
  %7061 = vmatprep.subr.mxu0 0.0
  %7062 = vmatpush1.msra.mxu0 0.0
  %7063 = vmatprep.subr.mxu0 0.0
  %7064 = vmatpush1.msra.mxu0 0.0
  %7065 = vmatprep.mubr.f32.mxu0 0.0
  %7066 = vmatmul.mubr.f32.gmra.mrb[0].mxu0 %v6954
  %v7067 = vpop.f32.mrb[0].mxu0
  %v7068 = vadd.f32 %v6951, %v7067
  %v7069 = vpop.f32.mrb[0].mxu0
  %7070 = vmatprep.mubr.f32.mxu0 0.0
  %7071 = vmatmul.mubr.f32.gmra.mrb[0].mxu0 %v6957
  %v7072 = vpop.f32.mrb[0].mxu0
  %v7073 = vadd.f32 %v6951, %v7072
  %v7074 = vpop.f32.mrb[0].mxu0
  %7075 = vmatprep.mubr.f32.mxu0 0.0
  %7076 = vmatmul.mubr.f32.gmra.mrb[0].mxu0 %v6960
  %v7077 = vpop.f32.mrb[0].mxu0
  %v7078 = vadd.f32 %v6951, %v7077
  %v7079 = vpop.f32.mrb[0].mxu0
  %7080 = vmatprep.mubr.f32.mxu0 0.0
  %7081 = vmatmul.mubr.f32.gmra.mrb[0].mxu0 %v6963
  %v7082 = vpop.f32.mrb[0].mxu0
  %v7083 = vadd.f32 %v6951, %v7082
  %v7084 = vpop.f32.mrb[0].mxu0
  %7085 = vmatprep.mubr.f32.mxu0 0.0
  %7086 = vmatmul.mubr.f32.gmra.mrb[0].mxu0 %v6966
  %v7087 = vpop.f32.mrb[0].mxu0
  %v7088 = vadd.f32 %v6951, %v7087
  %v7089 = vpop.f32.mrb[0].mxu0
  %7090 = vmatprep.mubr.f32.mxu0 0.0
  %7091 = vmatmul.mubr.f32.gmra.mrb[0].mxu0 %v6969
  %v7092 = vpop.f32.mrb[0].mxu0
  %v7093 = vadd.f32 %v6951, %v7092
  %v7094 = vpop.f32.mrb[0].mxu0
  %7095 = vmatprep.mubr.f32.mxu0 0.0
  %7096 = vmatmul.mubr.f32.gmra.mrb[0].mxu0 %v6972
  %v7097 = vpop.f32.mrb[0].mxu0
  %v7098 = vadd.f32 %v6951, %v7097
  %v7099 = vpop.f32.mrb[0].mxu0
  %7100 = vmatprep.mubr.f32.mxu0 0.0
  %7101 = vmatmul.mubr.f32.gmra.mrb[0].mxu0 %v6975
  %v7102 = vpop.f32.mrb[0].mxu0
  %v7103 = vadd.f32 %v6951, %v7102
  %v7104 = vpop.f32.mrb[0].mxu0
  %7105 = vmatprep.mubr.f32.mxu0 0.0
  %7106 = vmatmul.mubr.f32.gmra.mrb[0].mxu0 %v6978
  %v7107 = vpop.f32.mrb[0].mxu0
  %v7108 = vadd.f32 %v6951, %v7107
  %v7109 = vpop.f32.mrb[0].mxu0
  %7110 = vmatprep.mubr.f32.mxu0 0.0
  %7111 = vmatmul.mubr.f32.gmra.mrb[0].mxu0 %v6981
  %v7112 = vpop.f32.mrb[0].mxu0
  %v7113 = vadd.f32 %v6951, %v7112
  %v7114 = vpop.f32.mrb[0].mxu0
  %7115 = vmatprep.mubr.f32.mxu0 0.0
  %7116 = vmatmul.mubr.f32.gmra.mrb[0].mxu0 %v6984
  %v7117 = vpop.f32.mrb[0].mxu0
  %v7118 = vadd.f32 %v6951, %v7117
  %v7119 = vpop.f32.mrb[0].mxu0
  %7120 = vmatprep.mubr.f32.mxu0 0.0
  %7121 = vmatmul.mubr.f32.gmra.mrb[0].mxu0 %v6987
  %v7122 = vpop.f32.mrb[0].mxu0
  %v7123 = vadd.f32 %v6951, %v7122
  %v7124 = vpop.f32.mrb[0].mxu0
  %7125 = vmatprep.mubr.f32.mxu0 0.0
  %7126 = vmatmul.mubr.f32.gmra.mrb[0].mxu0 %v6990
  %v7127 = vpop.f32.mrb[0].mxu0
  %v7128 = vadd.f32 %v6951, %v7127
  %v7129 = vpop.f32.mrb[0].mxu0
  %7130 = vmatprep.mubr.f32.mxu0 0.0
  %7131 = vmatmul.mubr.f32.gmra.mrb[0].mxu0 %v6993
  %v7132 = vpop.f32.mrb[0].mxu0
  %v7133 = vadd.f32 %v6951, %v7132
  %v7134 = vpop.f32.mrb[0].mxu0
  %7135 = vmatprep.mubr.f32.mxu0 0.0
  %7136 = vmatmul.mubr.f32.gmra.mrb[0].mxu0 %v6996
  %v7137 = vpop.f32.mrb[0].mxu0
  %v7138 = vadd.f32 %v6951, %v7137
  %v7139 = vpop.f32.mrb[0].mxu0
  %7140 = vmatprep.mubr.f32.mxu0 0.0
  %7141 = vmatmul.mubr.f32.gmra.mrb[0].mxu0 %v6999
  %v7142 = vpop.f32.mrb[0].mxu0
  %v7143 = vadd.f32 %v6951, %v7142
  %v7144 = vpop.f32.mrb[0].mxu0
  %7145 = vdwg.mxu0
  %v7146 = vld [vmem:[%s1766] sm:$0xff]
  %v7147 = vld [vmem:[%s1766 + $0x8] sm:$0xff]
  %v7148 = vld [vmem:[%s1766 + $0x10] sm:$0xff]
  %v7149 = vld [vmem:[%s1766 + $0x18] sm:$0xff]
  %v7150 = vld [vmem:[%s1771] sm:$0x1]
  %v7152 = vlaneseq
  %v7153 = vshrl.u32 %v7152, 7
  %v7154 = vsub.s32 0, %v7153
  %v7155 = vrot.slane %v7150, %v7154
  %7157 = vmatprep.subr.mxu0 0.0
  %7158 = vmatpush1.msra.mxu0 %v7146
  %7159 = vmatprep.subr.mxu0 0.0
  %7160 = vmatpush1.msra.mxu0 %v7147
  %7161 = vmatprep.subr.mxu0 0.0
  %7162 = vmatpush1.msra.mxu0 %v7148
  %7163 = vmatprep.subr.mxu0 0.0
  %7164 = vmatpush1.msra.mxu0 %v7149
  %7165 = vmatprep.subr.mxu0 0.0
  %7166 = vmatpush1.msra.mxu0 0.0
  %7167 = vmatprep.subr.mxu0 0.0
  %7168 = vmatpush1.msra.mxu0 0.0
  %7169 = vmatprep.subr.mxu0 0.0
  %7170 = vmatpush1.msra.mxu0 0.0
  %7171 = vmatprep.subr.mxu0 0.0
  %7172 = vmatpush1.msra.mxu0 0.0
  %7173 = vmatprep.subr.mxu0 0.0
  %7174 = vmatpush1.msra.mxu0 0.0
  %7175 = vmatprep.subr.mxu0 0.0
  %7176 = vmatpush1.msra.mxu0 0.0
  %7177 = vmatprep.subr.mxu0 0.0
  %7178 = vmatpush1.msra.mxu0 0.0
  %7179 = vmatprep.subr.mxu0 0.0
  %7180 = vmatpush1.msra.mxu0 0.0
  %7181 = vmatprep.subr.mxu0 0.0
  %7182 = vmatpush1.msra.mxu0 0.0
  %7183 = vmatprep.subr.mxu0 0.0
  %7184 = vmatpush1.msra.mxu0 0.0
  %7185 = vmatprep.subr.mxu0 0.0
  %7186 = vmatpush1.msra.mxu0 0.0
  %7187 = vmatprep.subr.mxu0 0.0
  %7188 = vmatpush1.msra.mxu0 0.0
  %7189 = vmatprep.subr.mxu0 0.0
  %7190 = vmatpush1.msra.mxu0 0.0
  %7191 = vmatprep.subr.mxu0 0.0
  %7192 = vmatpush1.msra.mxu0 0.0
  %7193 = vmatprep.subr.mxu0 0.0
  %7194 = vmatpush1.msra.mxu0 0.0
  %7195 = vmatprep.subr.mxu0 0.0
  %7196 = vmatpush1.msra.mxu0 0.0
  %7197 = vmatprep.subr.mxu0 0.0
  %7198 = vmatpush1.msra.mxu0 0.0
  %7199 = vmatprep.subr.mxu0 0.0
  %7200 = vmatpush1.msra.mxu0 0.0
  %7201 = vmatprep.subr.mxu0 0.0
  %7202 = vmatpush1.msra.mxu0 0.0
  %7203 = vmatprep.subr.mxu0 0.0
  %7204 = vmatpush1.msra.mxu0 0.0
  %7205 = vmatprep.subr.mxu0 0.0
  %7206 = vmatpush1.msra.mxu0 0.0
  %7207 = vmatprep.subr.mxu0 0.0
  %7208 = vmatpush1.msra.mxu0 0.0
  %7209 = vmatprep.subr.mxu0 0.0
  %7210 = vmatpush1.msra.mxu0 0.0
  %7211 = vmatprep.subr.mxu0 0.0
  %7212 = vmatpush1.msra.mxu0 0.0
  %7213 = vmatprep.subr.mxu0 0.0
  %7214 = vmatpush1.msra.mxu0 0.0
  %7215 = vmatprep.subr.mxu0 0.0
  %7216 = vmatpush1.msra.mxu0 0.0
  %7217 = vmatprep.subr.mxu0 0.0
  %7218 = vmatpush1.msra.mxu0 0.0
  %7219 = vmatprep.subr.mxu0 0.0
  %7220 = vmatpush1.msra.mxu0 0.0
  %7221 = vmatprep.mubr.f32.mxu0 0.0
  %7222 = vmatmul.mubr.f32.gmra.mrb[0].mxu0 %v6954
  %v7223 = vpop.f32.mrb[0].mxu0
  %v7224 = vadd.f32 %v7155, %v7223
  %v7225 = vpop.f32.mrb[0].mxu0
  %7226 = vmatprep.mubr.f32.mxu0 0.0
  %7227 = vmatmul.mubr.f32.gmra.mrb[0].mxu0 %v6957
  %v7228 = vpop.f32.mrb[0].mxu0
  %v7229 = vadd.f32 %v7155, %v7228
  %v7230 = vpop.f32.mrb[0].mxu0
  %7231 = vmatprep.mubr.f32.mxu0 0.0
  %7232 = vmatmul.mubr.f32.gmra.mrb[0].mxu0 %v6960
  %v7233 = vpop.f32.mrb[0].mxu0
  %v7234 = vadd.f32 %v7155, %v7233
  %v7235 = vpop.f32.mrb[0].mxu0
  %7236 = vmatprep.mubr.f32.mxu0 0.0
  %7237 = vmatmul.mubr.f32.gmra.mrb[0].mxu0 %v6963
  %v7238 = vpop.f32.mrb[0].mxu0
  %v7239 = vadd.f32 %v7155, %v7238
  %v7240 = vpop.f32.mrb[0].mxu0
  %7241 = vmatprep.mubr.f32.mxu0 0.0
  %7242 = vmatmul.mubr.f32.gmra.mrb[0].mxu0 %v6966
  %v7243 = vpop.f32.mrb[0].mxu0
  %v7244 = vadd.f32 %v7155, %v7243
  %v7245 = vpop.f32.mrb[0].mxu0
  %7246 = vmatprep.mubr.f32.mxu0 0.0
  %7247 = vmatmul.mubr.f32.gmra.mrb[0].mxu0 %v6969
  %v7248 = vpop.f32.mrb[0].mxu0
  %v7249 = vadd.f32 %v7155, %v7248
  %v7250 = vpop.f32.mrb[0].mxu0
  %7251 = vmatprep.mubr.f32.mxu0 0.0
  %7252 = vmatmul.mubr.f32.gmra.mrb[0].mxu0 %v6972
  %v7253 = vpop.f32.mrb[0].mxu0
  %v7254 = vadd.f32 %v7155, %v7253
  %v7255 = vpop.f32.mrb[0].mxu0
  %7256 = vmatprep.mubr.f32.mxu0 0.0
  %7257 = vmatmul.mubr.f32.gmra.mrb[0].mxu0 %v6975
  %v7258 = vpop.f32.mrb[0].mxu0
  %v7259 = vadd.f32 %v7155, %v7258
  %v7260 = vpop.f32.mrb[0].mxu0
  %7261 = vmatprep.mubr.f32.mxu0 0.0
  %7262 = vmatmul.mubr.f32.gmra.mrb[0].mxu0 %v6978
  %v7263 = vpop.f32.mrb[0].mxu0
  %v7264 = vadd.f32 %v7155, %v7263
  %v7265 = vpop.f32.mrb[0].mxu0
  %7266 = vmatprep.mubr.f32.mxu0 0.0
  %7267 = vmatmul.mubr.f32.gmra.mrb[0].mxu0 %v6981
  %v7268 = vpop.f32.mrb[0].mxu0
  %v7269 = vadd.f32 %v7155, %v7268
  %v7270 = vpop.f32.mrb[0].mxu0
  %7271 = vmatprep.mubr.f32.mxu0 0.0
  %7272 = vmatmul.mubr.f32.gmra.mrb[0].mxu0 %v6984
  %v7273 = vpop.f32.mrb[0].mxu0
  %v7274 = vadd.f32 %v7155, %v7273
  %v7275 = vpop.f32.mrb[0].mxu0
  %7276 = vmatprep.mubr.f32.mxu0 0.0
  %7277 = vmatmul.mubr.f32.gmra.mrb[0].mxu0 %v6987
  %v7278 = vpop.f32.mrb[0].mxu0
  %v7279 = vadd.f32 %v7155, %v7278
  %v7280 = vpop.f32.mrb[0].mxu0
  %7281 = vmatprep.mubr.f32.mxu0 0.0
  %7282 = vmatmul.mubr.f32.gmra.mrb[0].mxu0 %v6990
  %v7283 = vpop.f32.mrb[0].mxu0
  %v7284 = vadd.f32 %v7155, %v7283
  %v7285 = vpop.f32.mrb[0].mxu0
  %7286 = vmatprep.mubr.f32.mxu0 0.0
  %7287 = vmatmul.mubr.f32.gmra.mrb[0].mxu0 %v6993
  %v7288 = vpop.f32.mrb[0].mxu0
  %v7289 = vadd.f32 %v7155, %v7288
  %v7290 = vpop.f32.mrb[0].mxu0
  %7291 = vmatprep.mubr.f32.mxu0 0.0
  %7292 = vmatmul.mubr.f32.gmra.mrb[0].mxu0 %v6996
  %v7293 = vpop.f32.mrb[0].mxu0
  %v7294 = vadd.f32 %v7155, %v7293
  %v7295 = vpop.f32.mrb[0].mxu0
  %7296 = vmatprep.mubr.f32.mxu0 0.0
  %7297 = vmatmul.mubr.f32.gmra.mrb[0].mxu0 %v6999
  %v7298 = vpop.f32.mrb[0].mxu0
  %v7299 = vadd.f32 %v7155, %v7298
  %v7300 = vpop.f32.mrb[0].mxu0
  %7301 = vdwg.mxu0
  %v7302 = vld [vmem:[%s1924] sm:$0xff]
  %v7303 = vld [vmem:[%s1924 + $0x8] sm:$0xff]
  %v7304 = vld [vmem:[%s1924 + $0x10] sm:$0xff]
  %v7305 = vld [vmem:[%s1924 + $0x18] sm:$0xff]
  %v7306 = vld [vmem:[%s1929] sm:$0x1]
  %v7308 = vlaneseq
  %v7309 = vshrl.u32 %v7308, 7
  %v7310 = vsub.s32 0, %v7309
  %v7311 = vrot.slane %v7306, %v7310
  %v7314 = vsel %vm186, %v6910, 0
  %v7317 = vsel %vm186, %v6911, 0
  %v7320 = vsel %vm186, %v6912, 0
  %v7323 = vsel %vm186, %v6913, 0
  %v7326 = vsel %vm186, %v6914, 0
  %v7329 = vsel %vm186, %v6915, 0
  %v7332 = vsel %vm186, %v6916, 0
  %v7335 = vsel %vm186, %v6917, 0
  %v7338 = vsel %vm186, %v6918, 0
  %v7341 = vsel %vm186, %v6919, 0
  %v7344 = vsel %vm186, %v6920, 0
  %v7347 = vsel %vm186, %v6921, 0
  %v7350 = vsel %vm186, %v6922, 0
  %v7353 = vsel %vm186, %v6923, 0
  %v7356 = vsel %vm186, %v6924, 0
  %v7359 = vsel %vm186, %v6925, 0
  %7361 = vmatprep.subr.mxu0 0.0
  %7362 = vmatpush1.msra.mxu0 %v7302
  %7363 = vmatprep.subr.mxu0 0.0
  %7364 = vmatpush1.msra.mxu0 %v7303
  %7365 = vmatprep.subr.mxu0 0.0
  %7366 = vmatpush1.msra.mxu0 %v7304
  %7367 = vmatprep.subr.mxu0 0.0
  %7368 = vmatpush1.msra.mxu0 %v7305
  %7369 = vmatprep.subr.mxu0 0.0
  %7370 = vmatpush1.msra.mxu0 0.0
  %7371 = vmatprep.subr.mxu0 0.0
  %7372 = vmatpush1.msra.mxu0 0.0
  %7373 = vmatprep.subr.mxu0 0.0
  %7374 = vmatpush1.msra.mxu0 0.0
  %7375 = vmatprep.subr.mxu0 0.0
  %7376 = vmatpush1.msra.mxu0 0.0
  %7377 = vmatprep.subr.mxu0 0.0
  %7378 = vmatpush1.msra.mxu0 0.0
  %7379 = vmatprep.subr.mxu0 0.0
  %7380 = vmatpush1.msra.mxu0 0.0
  %7381 = vmatprep.subr.mxu0 0.0
  %7382 = vmatpush1.msra.mxu0 0.0
  %7383 = vmatprep.subr.mxu0 0.0
  %7384 = vmatpush1.msra.mxu0 0.0
  %7385 = vmatprep.subr.mxu0 0.0
  %7386 = vmatpush1.msra.mxu0 0.0
  %7387 = vmatprep.subr.mxu0 0.0
  %7388 = vmatpush1.msra.mxu0 0.0
  %7389 = vmatprep.subr.mxu0 0.0
  %7390 = vmatpush1.msra.mxu0 0.0
  %7391 = vmatprep.subr.mxu0 0.0
  %7392 = vmatpush1.msra.mxu0 0.0
  %7393 = vmatprep.subr.mxu0 0.0
  %7394 = vmatpush1.msra.mxu0 0.0
  %7395 = vmatprep.subr.mxu0 0.0
  %7396 = vmatpush1.msra.mxu0 0.0
  %7397 = vmatprep.subr.mxu0 0.0
  %7398 = vmatpush1.msra.mxu0 0.0
  %7399 = vmatprep.subr.mxu0 0.0
  %7400 = vmatpush1.msra.mxu0 0.0
  %7401 = vmatprep.subr.mxu0 0.0
  %7402 = vmatpush1.msra.mxu0 0.0
  %7403 = vmatprep.subr.mxu0 0.0
  %7404 = vmatpush1.msra.mxu0 0.0
  %7405 = vmatprep.subr.mxu0 0.0
  %7406 = vmatpush1.msra.mxu0 0.0
  %7407 = vmatprep.subr.mxu0 0.0
  %7408 = vmatpush1.msra.mxu0 0.0
  %7409 = vmatprep.subr.mxu0 0.0
  %7410 = vmatpush1.msra.mxu0 0.0
  %7411 = vmatprep.subr.mxu0 0.0
  %7412 = vmatpush1.msra.mxu0 0.0
  %7413 = vmatprep.subr.mxu0 0.0
  %7414 = vmatpush1.msra.mxu0 0.0
  %7415 = vmatprep.subr.mxu0 0.0
  %7416 = vmatpush1.msra.mxu0 0.0
  %7417 = vmatprep.subr.mxu0 0.0
  %7418 = vmatpush1.msra.mxu0 0.0
  %7419 = vmatprep.subr.mxu0 0.0
  %7420 = vmatpush1.msra.mxu0 0.0
  %7421 = vmatprep.subr.mxu0 0.0
  %7422 = vmatpush1.msra.mxu0 0.0
  %7423 = vmatprep.subr.mxu0 0.0
  %7424 = vmatpush1.msra.mxu0 0.0
  %7425 = vmatprep.mubr.f32.mxu0 0.0
  %7426 = vmatmul.mubr.f32.gmra.mrb[0].mxu0 %v7314
  %v7427 = vpop.f32.mrb[0].mxu0
  %v7428 = vadd.f32 %v7311, %v7427
  %v7429 = vpop.f32.mrb[0].mxu0
  %7430 = vmatprep.mubr.f32.mxu0 0.0
  %7431 = vmatmul.mubr.f32.gmra.mrb[0].mxu0 %v7317
  %v7432 = vpop.f32.mrb[0].mxu0
  %v7433 = vadd.f32 %v7311, %v7432
  %v7434 = vpop.f32.mrb[0].mxu0
  %7435 = vmatprep.mubr.f32.mxu0 0.0
  %7436 = vmatmul.mubr.f32.gmra.mrb[0].mxu0 %v7320
  %v7437 = vpop.f32.mrb[0].mxu0
  %v7438 = vadd.f32 %v7311, %v7437
  %v7439 = vpop.f32.mrb[0].mxu0
  %7440 = vmatprep.mubr.f32.mxu0 0.0
  %7441 = vmatmul.mubr.f32.gmra.mrb[0].mxu0 %v7323
  %v7442 = vpop.f32.mrb[0].mxu0
  %v7443 = vadd.f32 %v7311, %v7442
  %v7444 = vpop.f32.mrb[0].mxu0
  %7445 = vmatprep.mubr.f32.mxu0 0.0
  %7446 = vmatmul.mubr.f32.gmra.mrb[0].mxu0 %v7326
  %v7447 = vpop.f32.mrb[0].mxu0
  %v7448 = vadd.f32 %v7311, %v7447
  %v7449 = vpop.f32.mrb[0].mxu0
  %7450 = vmatprep.mubr.f32.mxu0 0.0
  %7451 = vmatmul.mubr.f32.gmra.mrb[0].mxu0 %v7329
  %v7452 = vpop.f32.mrb[0].mxu0
  %v7453 = vadd.f32 %v7311, %v7452
  %v7454 = vpop.f32.mrb[0].mxu0
  %7455 = vmatprep.mubr.f32.mxu0 0.0
  %7456 = vmatmul.mubr.f32.gmra.mrb[0].mxu0 %v7332
  %v7457 = vpop.f32.mrb[0].mxu0
  %v7458 = vadd.f32 %v7311, %v7457
  %v7459 = vpop.f32.mrb[0].mxu0
  %7460 = vmatprep.mubr.f32.mxu0 0.0
  %7461 = vmatmul.mubr.f32.gmra.mrb[0].mxu0 %v7335
  %v7462 = vpop.f32.mrb[0].mxu0
  %v7463 = vadd.f32 %v7311, %v7462
  %v7464 = vpop.f32.mrb[0].mxu0
  %7465 = vmatprep.mubr.f32.mxu0 0.0
  %7466 = vmatmul.mubr.f32.gmra.mrb[0].mxu0 %v7338
  %v7467 = vpop.f32.mrb[0].mxu0
  %v7468 = vadd.f32 %v7311, %v7467
  %v7469 = vpop.f32.mrb[0].mxu0
  %7470 = vmatprep.mubr.f32.mxu0 0.0
  %7471 = vmatmul.mubr.f32.gmra.mrb[0].mxu0 %v7341
  %v7472 = vpop.f32.mrb[0].mxu0
  %v7473 = vadd.f32 %v7311, %v7472
  %v7474 = vpop.f32.mrb[0].mxu0
  %7475 = vmatprep.mubr.f32.mxu0 0.0
  %7476 = vmatmul.mubr.f32.gmra.mrb[0].mxu0 %v7344
  %v7477 = vpop.f32.mrb[0].mxu0
  %v7478 = vadd.f32 %v7311, %v7477
  %v7479 = vpop.f32.mrb[0].mxu0
  %7480 = vmatprep.mubr.f32.mxu0 0.0
  %7481 = vmatmul.mubr.f32.gmra.mrb[0].mxu0 %v7347
  %v7482 = vpop.f32.mrb[0].mxu0
  %v7483 = vadd.f32 %v7311, %v7482
  %v7484 = vpop.f32.mrb[0].mxu0
  %7485 = vmatprep.mubr.f32.mxu0 0.0
  %7486 = vmatmul.mubr.f32.gmra.mrb[0].mxu0 %v7350
  %v7487 = vpop.f32.mrb[0].mxu0
  %v7488 = vadd.f32 %v7311, %v7487
  %v7489 = vpop.f32.mrb[0].mxu0
  %7490 = vmatprep.mubr.f32.mxu0 0.0
  %7491 = vmatmul.mubr.f32.gmra.mrb[0].mxu0 %v7353
  %v7492 = vpop.f32.mrb[0].mxu0
  %v7493 = vadd.f32 %v7311, %v7492
  %v7494 = vpop.f32.mrb[0].mxu0
  %7495 = vmatprep.mubr.f32.mxu0 0.0
  %7496 = vmatmul.mubr.f32.gmra.mrb[0].mxu0 %v7356
  %v7497 = vpop.f32.mrb[0].mxu0
  %v7498 = vadd.f32 %v7311, %v7497
  %v7499 = vpop.f32.mrb[0].mxu0
  %7500 = vmatprep.mubr.f32.mxu0 0.0
  %7501 = vmatmul.mubr.f32.gmra.mrb[0].mxu0 %v7359
  %v7502 = vpop.f32.mrb[0].mxu0
  %v7503 = vadd.f32 %v7311, %v7502
  %v7504 = vpop.f32.mrb[0].mxu0
  %7505 = vdwg.mxu0
  %v7507 = vsel %vm186, %v7068, 0
  %v7510 = vsel %vm186, %v7073, 0
  %v7513 = vsel %vm186, %v7078, 0
  %v7516 = vsel %vm186, %v7083, 0
  %v7519 = vsel %vm186, %v7088, 0
  %v7522 = vsel %vm186, %v7093, 0
  %v7525 = vsel %vm186, %v7098, 0
  %v7528 = vsel %vm186, %v7103, 0
  %v7531 = vsel %vm186, %v7108, 0
  %v7534 = vsel %vm186, %v7113, 0
  %v7537 = vsel %vm186, %v7118, 0
  %v7540 = vsel %vm186, %v7123, 0
  %v7543 = vsel %vm186, %v7128, 0
  %v7546 = vsel %vm186, %v7133, 0
  %v7549 = vsel %vm186, %v7138, 0
  %v7552 = vsel %vm186, %v7143, 0
  %v7555 = vsel %vm186, %v7224, 0
  %v7558 = vsel %vm186, %v7229, 0
  %v7561 = vsel %vm186, %v7234, 0
  %v7564 = vsel %vm186, %v7239, 0
  %v7567 = vsel %vm186, %v7244, 0
  %v7570 = vsel %vm186, %v7249, 0
  %v7573 = vsel %vm186, %v7254, 0
  %v7576 = vsel %vm186, %v7259, 0
  %v7579 = vsel %vm186, %v7264, 0
  %v7582 = vsel %vm186, %v7269, 0
  %v7585 = vsel %vm186, %v7274, 0
  %v7588 = vsel %vm186, %v7279, 0
  %v7591 = vsel %vm186, %v7284, 0
  %v7594 = vsel %vm186, %v7289, 0
  %v7597 = vsel %vm186, %v7294, 0
  %v7600 = vsel %vm186, %v7299, 0
  %7602 = vmatprep.subr.mxu0 0.0
  %7603 = vmatpush1.xpose.msra.mxu0 %v7555
  %7604 = vmatprep.subr.mxu0 0.0
  %7605 = vmatpush1.xpose.msra.mxu0 %v7558
  %7606 = vmatprep.subr.mxu0 0.0
  %7607 = vmatpush1.xpose.msra.mxu0 %v7561
  %7608 = vmatprep.subr.mxu0 0.0
  %7609 = vmatpush1.xpose.msra.mxu0 %v7564
  %7610 = vmatprep.subr.mxu0 0.0
  %7611 = vmatpush1.xpose.msra.mxu0 %v7567
  %7612 = vmatprep.subr.mxu0 0.0
  %7613 = vmatpush1.xpose.msra.mxu0 %v7570
  %7614 = vmatprep.subr.mxu0 0.0
  %7615 = vmatpush1.xpose.msra.mxu0 %v7573
  %7616 = vmatprep.subr.mxu0 0.0
  %7617 = vmatpush1.xpose.msra.mxu0 %v7576
  %7618 = vmatprep.subr.mxu0 0.0
  %7619 = vmatpush1.xpose.msra.mxu0 %v7579
  %7620 = vmatprep.subr.mxu0 0.0
  %7621 = vmatpush1.xpose.msra.mxu0 %v7582
  %7622 = vmatprep.subr.mxu0 0.0
  %7623 = vmatpush1.xpose.msra.mxu0 %v7585
  %7624 = vmatprep.subr.mxu0 0.0
  %7625 = vmatpush1.xpose.msra.mxu0 %v7588
  %7626 = vmatprep.subr.mxu0 0.0
  %7627 = vmatpush1.xpose.msra.mxu0 %v7591
  %7628 = vmatprep.subr.mxu0 0.0
  %7629 = vmatpush1.xpose.msra.mxu0 %v7594
  %7630 = vmatprep.subr.mxu0 0.0
  %7631 = vmatpush1.xpose.msra.mxu0 %v7597
  %7632 = vmatprep.subr.mxu0 0.0
  %7633 = vmatpush1.xpose.msra.mxu0 %v7600
  %7634 = vmatprep.subr.mxu0 0.0
  %7635 = vmatpush1.xpose.msra.mxu0 0.0
  %7636 = vmatprep.subr.mxu0 0.0
  %7637 = vmatpush1.xpose.msra.mxu0 0.0
  %7638 = vmatprep.subr.mxu0 0.0
  %7639 = vmatpush1.xpose.msra.mxu0 0.0
  %7640 = vmatprep.subr.mxu0 0.0
  %7641 = vmatpush1.xpose.msra.mxu0 0.0
  %7642 = vmatprep.subr.mxu0 0.0
  %7643 = vmatpush1.xpose.msra.mxu0 0.0
  %7644 = vmatprep.subr.mxu0 0.0
  %7645 = vmatpush1.xpose.msra.mxu0 0.0
  %7646 = vmatprep.subr.mxu0 0.0
  %7647 = vmatpush1.xpose.msra.mxu0 0.0
  %7648 = vmatprep.subr.mxu0 0.0
  %7649 = vmatpush1.xpose.msra.mxu0 0.0
  %7650 = vmatprep.subr.mxu0 0.0
  %7651 = vmatpush1.xpose.msra.mxu0 0.0
  %7652 = vmatprep.subr.mxu0 0.0
  %7653 = vmatpush1.xpose.msra.mxu0 0.0
  %7654 = vmatprep.subr.mxu0 0.0
  %7655 = vmatpush1.xpose.msra.mxu0 0.0
  %7656 = vmatprep.subr.mxu0 0.0
  %7657 = vmatpush1.xpose.msra.mxu0 0.0
  %7658 = vmatprep.subr.mxu0 0.0
  %7659 = vmatpush1.xpose.msra.mxu0 0.0
  %7660 = vmatprep.subr.mxu0 0.0
  %7661 = vmatpush1.xpose.msra.mxu0 0.0
  %7662 = vmatprep.subr.mxu0 0.0
  %7663 = vmatpush1.xpose.msra.mxu0 0.0
  %7664 = vmatprep.subr.mxu0 0.0
  %7665 = vmatpush1.xpose.msra.mxu0 0.0
  %7666 = vmatprep.mubr.f32.mxu0 0.0
  %7667 = vmatmul.mubr.f32.gmra.mrb[0].mxu0 %v7507
  %v7668 = vpop.f32.mrb[0].mxu0
  %v7669 = vadd.f32 0.0, %v7668
  %v7670 = vpop.f32.mrb[0].mxu0
  %7671 = vmatprep.mubr.f32.mxu0 0.0
  %7672 = vmatmul.mubr.f32.gmra.mrb[0].mxu0 %v7510
  %v7673 = vpop.f32.mrb[0].mxu0
  %v7674 = vadd.f32 0.0, %v7673
  %v7675 = vpop.f32.mrb[0].mxu0
  %7676 = vmatprep.mubr.f32.mxu0 0.0
  %7677 = vmatmul.mubr.f32.gmra.mrb[0].mxu0 %v7513
  %v7678 = vpop.f32.mrb[0].mxu0
  %v7679 = vadd.f32 0.0, %v7678
  %v7680 = vpop.f32.mrb[0].mxu0
  %7681 = vmatprep.mubr.f32.mxu0 0.0
  %7682 = vmatmul.mubr.f32.gmra.mrb[0].mxu0 %v7516
  %v7683 = vpop.f32.mrb[0].mxu0
  %v7684 = vadd.f32 0.0, %v7683
  %v7685 = vpop.f32.mrb[0].mxu0
  %7686 = vmatprep.mubr.f32.mxu0 0.0
  %7687 = vmatmul.mubr.f32.gmra.mrb[0].mxu0 %v7519
  %v7688 = vpop.f32.mrb[0].mxu0
  %v7689 = vadd.f32 0.0, %v7688
  %v7690 = vpop.f32.mrb[0].mxu0
  %7691 = vmatprep.mubr.f32.mxu0 0.0
  %7692 = vmatmul.mubr.f32.gmra.mrb[0].mxu0 %v7522
  %v7693 = vpop.f32.mrb[0].mxu0
  %v7694 = vadd.f32 0.0, %v7693
  %v7695 = vpop.f32.mrb[0].mxu0
  %7696 = vmatprep.mubr.f32.mxu0 0.0
  %7697 = vmatmul.mubr.f32.gmra.mrb[0].mxu0 %v7525
  %v7698 = vpop.f32.mrb[0].mxu0
  %v7699 = vadd.f32 0.0, %v7698
  %v7700 = vpop.f32.mrb[0].mxu0
  %7701 = vmatprep.mubr.f32.mxu0 0.0
  %7702 = vmatmul.mubr.f32.gmra.mrb[0].mxu0 %v7528
  %v7703 = vpop.f32.mrb[0].mxu0
  %v7704 = vadd.f32 0.0, %v7703
  %v7705 = vpop.f32.mrb[0].mxu0
  %7706 = vmatprep.mubr.f32.mxu0 0.0
  %7707 = vmatmul.mubr.f32.gmra.mrb[0].mxu0 %v7531
  %v7708 = vpop.f32.mrb[0].mxu0
  %v7709 = vadd.f32 0.0, %v7708
  %v7710 = vpop.f32.mrb[0].mxu0
  %7711 = vmatprep.mubr.f32.mxu0 0.0
  %7712 = vmatmul.mubr.f32.gmra.mrb[0].mxu0 %v7534
  %v7713 = vpop.f32.mrb[0].mxu0
  %v7714 = vadd.f32 0.0, %v7713
  %v7715 = vpop.f32.mrb[0].mxu0
  %7716 = vmatprep.mubr.f32.mxu0 0.0
  %7717 = vmatmul.mubr.f32.gmra.mrb[0].mxu0 %v7537
  %v7718 = vpop.f32.mrb[0].mxu0
  %v7719 = vadd.f32 0.0, %v7718
  %v7720 = vpop.f32.mrb[0].mxu0
  %7721 = vmatprep.mubr.f32.mxu0 0.0
  %7722 = vmatmul.mubr.f32.gmra.mrb[0].mxu0 %v7540
  %v7723 = vpop.f32.mrb[0].mxu0
  %v7724 = vadd.f32 0.0, %v7723
  %v7725 = vpop.f32.mrb[0].mxu0
  %7726 = vmatprep.mubr.f32.mxu0 0.0
  %7727 = vmatmul.mubr.f32.gmra.mrb[0].mxu0 %v7543
  %v7728 = vpop.f32.mrb[0].mxu0
  %v7729 = vadd.f32 0.0, %v7728
  %v7730 = vpop.f32.mrb[0].mxu0
  %7731 = vmatprep.mubr.f32.mxu0 0.0
  %7732 = vmatmul.mubr.f32.gmra.mrb[0].mxu0 %v7546
  %v7733 = vpop.f32.mrb[0].mxu0
  %v7734 = vadd.f32 0.0, %v7733
  %v7735 = vpop.f32.mrb[0].mxu0
  %7736 = vmatprep.mubr.f32.mxu0 0.0
  %7737 = vmatmul.mubr.f32.gmra.mrb[0].mxu0 %v7549
  %v7738 = vpop.f32.mrb[0].mxu0
  %v7739 = vadd.f32 0.0, %v7738
  %v7740 = vpop.f32.mrb[0].mxu0
  %7741 = vmatprep.mubr.f32.mxu0 0.0
  %7742 = vmatmul.mubr.f32.gmra.mrb[0].mxu0 %v7552
  %v7743 = vpop.f32.mrb[0].mxu0
  %v7744 = vadd.f32 0.0, %v7743
  %v7745 = vpop.f32.mrb[0].mxu0
  %7746 = vdwg.mxu0
  %v7747 = vmul.f32 %v7669, 0.17677669
  %v7748 = vmul.f32 %v7674, 0.17677669
  %v7749 = vmul.f32 %v7679, 0.17677669
  %v7750 = vmul.f32 %v7684, 0.17677669
  %v7751 = vmul.f32 %v7689, 0.17677669
  %v7752 = vmul.f32 %v7694, 0.17677669
  %v7753 = vmul.f32 %v7699, 0.17677669
  %v7754 = vmul.f32 %v7704, 0.17677669
  %v7755 = vmul.f32 %v7709, 0.17677669
  %v7756 = vmul.f32 %v7714, 0.17677669
  %v7757 = vmul.f32 %v7719, 0.17677669
  %v7758 = vmul.f32 %v7724, 0.17677669
  %v7759 = vmul.f32 %v7729, 0.17677669
  %v7760 = vmul.f32 %v7734, 0.17677669
  %v7761 = vmul.f32 %v7739, 0.17677669
  %v7762 = vmul.f32 %v7744, 0.17677669
  %v7764 = vlaneseq
  %v7765 = vshrl.u32 %v7764, 7
  %v7766 = vsub.s32 0, %v7765
  %v7767 = vrot.slane %v6653, %v7766
  %v7769 = vadd.f32 %v7747, %v7767
  %v7770 = vadd.f32 %v7748, %v7767
  %v7771 = vadd.f32 %v7749, %v7767
  %v7772 = vadd.f32 %v7750, %v7767
  %v7773 = vadd.f32 %v7751, %v7767
  %v7774 = vadd.f32 %v7752, %v7767
  %v7775 = vadd.f32 %v7753, %v7767
  %v7776 = vadd.f32 %v7754, %v7767
  %v7777 = vadd.f32 %v7755, %v7767
  %v7778 = vadd.f32 %v7756, %v7767
  %v7779 = vadd.f32 %v7757, %v7767
  %v7780 = vadd.f32 %v7758, %v7767
  %v7781 = vadd.f32 %v7759, %v7767
  %v7782 = vadd.f32 %v7760, %v7767
  %v7783 = vadd.f32 %v7761, %v7767
  %v7784 = vadd.f32 %v7762, %v7767
  %7785 = vmax.xlane.f32.xlu0 %v7769
  %v7786 = vpop.xlane.xlu0 %7785
  %7787 = vmax.xlane.f32.xlu0 %v7770
  %v7788 = vpop.xlane.xlu0 %7787
  %7789 = vmax.xlane.f32.xlu0 %v7771
  %v7790 = vpop.xlane.xlu0 %7789
  %7791 = vmax.xlane.f32.xlu0 %v7772
  %v7792 = vpop.xlane.xlu0 %7791
  %7793 = vmax.xlane.f32.xlu0 %v7773
  %v7794 = vpop.xlane.xlu0 %7793
  %7795 = vmax.xlane.f32.xlu0 %v7774
  %v7796 = vpop.xlane.xlu0 %7795
  %7797 = vmax.xlane.f32.xlu0 %v7775
  %v7798 = vpop.xlane.xlu0 %7797
  %7799 = vmax.xlane.f32.xlu0 %v7776
  %v7800 = vpop.xlane.xlu0 %7799
  %7801 = vmax.xlane.f32.xlu0 %v7777
  %v7802 = vpop.xlane.xlu0 %7801
  %7803 = vmax.xlane.f32.xlu0 %v7778
  %v7804 = vpop.xlane.xlu0 %7803
  %7805 = vmax.xlane.f32.xlu0 %v7779
  %v7806 = vpop.xlane.xlu0 %7805
  %7807 = vmax.xlane.f32.xlu0 %v7780
  %v7808 = vpop.xlane.xlu0 %7807
  %7809 = vmax.xlane.f32.xlu0 %v7781
  %v7810 = vpop.xlane.xlu0 %7809
  %7811 = vmax.xlane.f32.xlu0 %v7782
  %v7812 = vpop.xlane.xlu0 %7811
  %7813 = vmax.xlane.f32.xlu0 %v7783
  %v7814 = vpop.xlane.xlu0 %7813
  %7815 = vmax.xlane.f32.xlu0 %v7784
  %v7816 = vpop.xlane.xlu0 %7815
  %v7817 = vsub.f32 %v7769, %v7786
  %v7818 = vsub.f32 %v7770, %v7788
  %v7819 = vsub.f32 %v7771, %v7790
  %v7820 = vsub.f32 %v7772, %v7792
  %v7821 = vsub.f32 %v7773, %v7794
  %v7822 = vsub.f32 %v7774, %v7796
  %v7823 = vsub.f32 %v7775, %v7798
  %v7824 = vsub.f32 %v7776, %v7800
  %v7825 = vsub.f32 %v7777, %v7802
  %v7826 = vsub.f32 %v7778, %v7804
  %v7827 = vsub.f32 %v7779, %v7806
  %v7828 = vsub.f32 %v7780, %v7808
  %v7829 = vsub.f32 %v7781, %v7810
  %v7830 = vsub.f32 %v7782, %v7812
  %v7831 = vsub.f32 %v7783, %v7814
  %v7832 = vsub.f32 %v7784, %v7816
  %v7833 = vmul.f32 %v7817, 1.442695
  %v7834 = vpow.pop %v7833
  %v7835 = vmul.f32 %v7818, 1.442695
  %v7836 = vpow.pop %v7835
  %v7837 = vmul.f32 %v7819, 1.442695
  %v7838 = vpow.pop %v7837
  %v7839 = vmul.f32 %v7820, 1.442695
  %v7840 = vpow.pop %v7839
  %v7841 = vmul.f32 %v7821, 1.442695
  %v7842 = vpow.pop %v7841
  %v7843 = vmul.f32 %v7822, 1.442695
  %v7844 = vpow.pop %v7843
  %v7845 = vmul.f32 %v7823, 1.442695
  %v7846 = vpow.pop %v7845
  %v7847 = vmul.f32 %v7824, 1.442695
  %v7848 = vpow.pop %v7847
  %v7849 = vmul.f32 %v7825, 1.442695
  %v7850 = vpow.pop %v7849
  %v7851 = vmul.f32 %v7826, 1.442695
  %v7852 = vpow.pop %v7851
  %v7853 = vmul.f32 %v7827, 1.442695
  %v7854 = vpow.pop %v7853
  %v7855 = vmul.f32 %v7828, 1.442695
  %v7856 = vpow.pop %v7855
  %v7857 = vmul.f32 %v7829, 1.442695
  %v7858 = vpow.pop %v7857
  %v7859 = vmul.f32 %v7830, 1.442695
  %v7860 = vpow.pop %v7859
  %v7861 = vmul.f32 %v7831, 1.442695
  %v7862 = vpow.pop %v7861
  %v7863 = vmul.f32 %v7832, 1.442695
  %v7864 = vpow.pop %v7863
  %7865 = vadd.xlane.f32.xlu0 %v7834
  %v7866 = vpop.xlane.xlu0 %7865
  %7867 = vadd.xlane.f32.xlu0 %v7836
  %v7868 = vpop.xlane.xlu0 %7867
  %7869 = vadd.xlane.f32.xlu0 %v7838
  %v7870 = vpop.xlane.xlu0 %7869
  %7871 = vadd.xlane.f32.xlu0 %v7840
  %v7872 = vpop.xlane.xlu0 %7871
  %7873 = vadd.xlane.f32.xlu0 %v7842
  %v7874 = vpop.xlane.xlu0 %7873
  %7875 = vadd.xlane.f32.xlu0 %v7844
  %v7876 = vpop.xlane.xlu0 %7875
  %7877 = vadd.xlane.f32.xlu0 %v7846
  %v7878 = vpop.xlane.xlu0 %7877
  %7879 = vadd.xlane.f32.xlu0 %v7848
  %v7880 = vpop.xlane.xlu0 %7879
  %7881 = vadd.xlane.f32.xlu0 %v7850
  %v7882 = vpop.xlane.xlu0 %7881
  %7883 = vadd.xlane.f32.xlu0 %v7852
  %v7884 = vpop.xlane.xlu0 %7883
  %7885 = vadd.xlane.f32.xlu0 %v7854
  %v7886 = vpop.xlane.xlu0 %7885
  %7887 = vadd.xlane.f32.xlu0 %v7856
  %v7888 = vpop.xlane.xlu0 %7887
  %7889 = vadd.xlane.f32.xlu0 %v7858
  %v7890 = vpop.xlane.xlu0 %7889
  %7891 = vadd.xlane.f32.xlu0 %v7860
  %v7892 = vpop.xlane.xlu0 %7891
  %7893 = vadd.xlane.f32.xlu0 %v7862
  %v7894 = vpop.xlane.xlu0 %7893
  %7895 = vadd.xlane.f32.xlu0 %v7864
  %v7896 = vpop.xlane.xlu0 %7895
  %v7897 = vrcp.pop %v7866
  %v7898 = vmul.f32 %v7834, %v7897
  %v7899 = vrcp.pop %v7868
  %v7900 = vmul.f32 %v7836, %v7899
  %v7901 = vrcp.pop %v7870
  %v7902 = vmul.f32 %v7838, %v7901
  %v7903 = vrcp.pop %v7872
  %v7904 = vmul.f32 %v7840, %v7903
  %v7905 = vrcp.pop %v7874
  %v7906 = vmul.f32 %v7842, %v7905
  %v7907 = vrcp.pop %v7876
  %v7908 = vmul.f32 %v7844, %v7907
  %v7909 = vrcp.pop %v7878
  %v7910 = vmul.f32 %v7846, %v7909
  %v7911 = vrcp.pop %v7880
  %v7912 = vmul.f32 %v7848, %v7911
  %v7913 = vrcp.pop %v7882
  %v7914 = vmul.f32 %v7850, %v7913
  %v7915 = vrcp.pop %v7884
  %v7916 = vmul.f32 %v7852, %v7915
  %v7917 = vrcp.pop %v7886
  %v7918 = vmul.f32 %v7854, %v7917
  %v7919 = vrcp.pop %v7888
  %v7920 = vmul.f32 %v7856, %v7919
  %v7921 = vrcp.pop %v7890
  %v7922 = vmul.f32 %v7858, %v7921
  %v7923 = vrcp.pop %v7892
  %v7924 = vmul.f32 %v7860, %v7923
  %v7925 = vrcp.pop %v7894
  %v7926 = vmul.f32 %v7862, %v7925
  %v7927 = vrcp.pop %v7896
  %v7928 = vmul.f32 %v7864, %v7927
  %7929 = vmatprep.subr.mxu0 0.0
  %7930 = vmatpush1.msra.mxu0 %v7428
  %7931 = vmatprep.subr.mxu0 0.0
  %7932 = vmatpush1.msra.mxu0 %v7433
  %7933 = vmatprep.subr.mxu0 0.0
  %7934 = vmatpush1.msra.mxu0 %v7438
  %7935 = vmatprep.subr.mxu0 0.0
  %7936 = vmatpush1.msra.mxu0 %v7443
  %7937 = vmatprep.subr.mxu0 0.0
  %7938 = vmatpush1.msra.mxu0 %v7448
  %7939 = vmatprep.subr.mxu0 0.0
  %7940 = vmatpush1.msra.mxu0 %v7453
  %7941 = vmatprep.subr.mxu0 0.0
  %7942 = vmatpush1.msra.mxu0 %v7458
  %7943 = vmatprep.subr.mxu0 0.0
  %7944 = vmatpush1.msra.mxu0 %v7463
  %7945 = vmatprep.subr.mxu0 0.0
  %7946 = vmatpush1.msra.mxu0 %v7468
  %7947 = vmatprep.subr.mxu0 0.0
  %7948 = vmatpush1.msra.mxu0 %v7473
  %7949 = vmatprep.subr.mxu0 0.0
  %7950 = vmatpush1.msra.mxu0 %v7478
  %7951 = vmatprep.subr.mxu0 0.0
  %7952 = vmatpush1.msra.mxu0 %v7483
  %7953 = vmatprep.subr.mxu0 0.0
  %7954 = vmatpush1.msra.mxu0 %v7488
  %7955 = vmatprep.subr.mxu0 0.0
  %7956 = vmatpush1.msra.mxu0 %v7493
  %7957 = vmatprep.subr.mxu0 0.0
  %7958 = vmatpush1.msra.mxu0 %v7498
  %7959 = vmatprep.subr.mxu0 0.0
  %7960 = vmatpush1.msra.mxu0 %v7503
  %7961 = vmatprep.subr.mxu0 0.0
  %7962 = vmatpush1.msra.mxu0 0.0
  %7963 = vmatprep.subr.mxu0 0.0
  %7964 = vmatpush1.msra.mxu0 0.0
  %7965 = vmatprep.subr.mxu0 0.0
  %7966 = vmatpush1.msra.mxu0 0.0
  %7967 = vmatprep.subr.mxu0 0.0
  %7968 = vmatpush1.msra.mxu0 0.0
  %7969 = vmatprep.subr.mxu0 0.0
  %7970 = vmatpush1.msra.mxu0 0.0
  %7971 = vmatprep.subr.mxu0 0.0
  %7972 = vmatpush1.msra.mxu0 0.0
  %7973 = vmatprep.subr.mxu0 0.0
  %7974 = vmatpush1.msra.mxu0 0.0
  %7975 = vmatprep.subr.mxu0 0.0
  %7976 = vmatpush1.msra.mxu0 0.0
  %7977 = vmatprep.subr.mxu0 0.0
  %7978 = vmatpush1.msra.mxu0 0.0
  %7979 = vmatprep.subr.mxu0 0.0
  %7980 = vmatpush1.msra.mxu0 0.0
  %7981 = vmatprep.subr.mxu0 0.0
  %7982 = vmatpush1.msra.mxu0 0.0
  %7983 = vmatprep.subr.mxu0 0.0
  %7984 = vmatpush1.msra.mxu0 0.0
  %7985 = vmatprep.subr.mxu0 0.0
  %7986 = vmatpush1.msra.mxu0 0.0
  %7987 = vmatprep.subr.mxu0 0.0
  %7988 = vmatpush1.msra.mxu0 0.0
  %7989 = vmatprep.subr.mxu0 0.0
  %7990 = vmatpush1.msra.mxu0 0.0
  %7991 = vmatprep.subr.mxu0 0.0
  %7992 = vmatpush1.msra.mxu0 0.0
  %7993 = vmatprep.mubr.f32.mxu0 0.0
  %7994 = vmatmul.mubr.f32.gmra.mrb[0].mxu0 %v7898
  %v7995 = vpop.f32.mrb[0].mxu0
  %v7996 = vadd.f32 0.0, %v7995
  %v7997 = vpop.f32.mrb[0].mxu0
  %7998 = vmatprep.mubr.f32.mxu0 0.0
  %7999 = vmatmul.mubr.f32.gmra.mrb[0].mxu0 %v7900
  %v8000 = vpop.f32.mrb[0].mxu0
  %v8001 = vadd.f32 0.0, %v8000
  %v8002 = vpop.f32.mrb[0].mxu0
  %8003 = vmatprep.mubr.f32.mxu0 0.0
  %8004 = vmatmul.mubr.f32.gmra.mrb[0].mxu0 %v7902
  %v8005 = vpop.f32.mrb[0].mxu0
  %v8006 = vadd.f32 0.0, %v8005
  %v8007 = vpop.f32.mrb[0].mxu0
  %8008 = vmatprep.mubr.f32.mxu0 0.0
  %8009 = vmatmul.mubr.f32.gmra.mrb[0].mxu0 %v7904
  %v8010 = vpop.f32.mrb[0].mxu0
  %v8011 = vadd.f32 0.0, %v8010
  %v8012 = vpop.f32.mrb[0].mxu0
  %8013 = vmatprep.mubr.f32.mxu0 0.0
  %8014 = vmatmul.mubr.f32.gmra.mrb[0].mxu0 %v7906
  %v8015 = vpop.f32.mrb[0].mxu0
  %v8016 = vadd.f32 0.0, %v8015
  %v8017 = vpop.f32.mrb[0].mxu0
  %8018 = vmatprep.mubr.f32.mxu0 0.0
  %8019 = vmatmul.mubr.f32.gmra.mrb[0].mxu0 %v7908
  %v8020 = vpop.f32.mrb[0].mxu0
  %v8021 = vadd.f32 0.0, %v8020
  %v8022 = vpop.f32.mrb[0].mxu0
  %8023 = vmatprep.mubr.f32.mxu0 0.0
  %8024 = vmatmul.mubr.f32.gmra.mrb[0].mxu0 %v7910
  %v8025 = vpop.f32.mrb[0].mxu0
  %v8026 = vadd.f32 0.0, %v8025
  %v8027 = vpop.f32.mrb[0].mxu0
  %8028 = vmatprep.mubr.f32.mxu0 0.0
  %8029 = vmatmul.mubr.f32.gmra.mrb[0].mxu0 %v7912
  %v8030 = vpop.f32.mrb[0].mxu0
  %v8031 = vadd.f32 0.0, %v8030
  %v8032 = vpop.f32.mrb[0].mxu0
  %8033 = vmatprep.mubr.f32.mxu0 0.0
  %8034 = vmatmul.mubr.f32.gmra.mrb[0].mxu0 %v7914
  %v8035 = vpop.f32.mrb[0].mxu0
  %v8036 = vadd.f32 0.0, %v8035
  %v8037 = vpop.f32.mrb[0].mxu0
  %8038 = vmatprep.mubr.f32.mxu0 0.0
  %8039 = vmatmul.mubr.f32.gmra.mrb[0].mxu0 %v7916
  %v8040 = vpop.f32.mrb[0].mxu0
  %v8041 = vadd.f32 0.0, %v8040
  %v8042 = vpop.f32.mrb[0].mxu0
  %8043 = vmatprep.mubr.f32.mxu0 0.0
  %8044 = vmatmul.mubr.f32.gmra.mrb[0].mxu0 %v7918
  %v8045 = vpop.f32.mrb[0].mxu0
  %v8046 = vadd.f32 0.0, %v8045
  %v8047 = vpop.f32.mrb[0].mxu0
  %8048 = vmatprep.mubr.f32.mxu0 0.0
  %8049 = vmatmul.mubr.f32.gmra.mrb[0].mxu0 %v7920
  %v8050 = vpop.f32.mrb[0].mxu0
  %v8051 = vadd.f32 0.0, %v8050
  %v8052 = vpop.f32.mrb[0].mxu0
  %8053 = vmatprep.mubr.f32.mxu0 0.0
  %8054 = vmatmul.mubr.f32.gmra.mrb[0].mxu0 %v7922
  %v8055 = vpop.f32.mrb[0].mxu0
  %v8056 = vadd.f32 0.0, %v8055
  %v8057 = vpop.f32.mrb[0].mxu0
  %8058 = vmatprep.mubr.f32.mxu0 0.0
  %8059 = vmatmul.mubr.f32.gmra.mrb[0].mxu0 %v7924
  %v8060 = vpop.f32.mrb[0].mxu0
  %v8061 = vadd.f32 0.0, %v8060
  %v8062 = vpop.f32.mrb[0].mxu0
  %8063 = vmatprep.mubr.f32.mxu0 0.0
  %8064 = vmatmul.mubr.f32.gmra.mrb[0].mxu0 %v7926
  %v8065 = vpop.f32.mrb[0].mxu0
  %v8066 = vadd.f32 0.0, %v8065
  %v8067 = vpop.f32.mrb[0].mxu0
  %8068 = vmatprep.mubr.f32.mxu0 0.0
  %8069 = vmatmul.mubr.f32.gmra.mrb[0].mxu0 %v7928
  %v8070 = vpop.f32.mrb[0].mxu0
  %v8071 = vadd.f32 0.0, %v8070
  %v8072 = vpop.f32.mrb[0].mxu0
  %8073 = vdwg.mxu0
  %v8074 = vld [vmem:[%s2698] sm:$0xff]
  %v8075 = vld [vmem:[%s2698 + $0x8] sm:$0xff]
  %v8076 = vld [vmem:[%s2698 + $0x10] sm:$0xff]
  %v8077 = vld [vmem:[%s2698 + $0x18] sm:$0xff]
  %v8078 = vld [vmem:[%s2703] sm:$0x1]
  %v8080 = vlaneseq
  %v8081 = vshrl.u32 %v8080, 7
  %v8082 = vsub.s32 0, %v8081
  %v8083 = vrot.slane %v8078, %v8082
  %v8086 = vsel %vm186, %v7996, 0
  %v8089 = vsel %vm186, %v8001, 0
  %v8092 = vsel %vm186, %v8006, 0
  %v8095 = vsel %vm186, %v8011, 0
  %v8098 = vsel %vm186, %v8016, 0
  %v8101 = vsel %vm186, %v8021, 0
  %v8104 = vsel %vm186, %v8026, 0
  %v8107 = vsel %vm186, %v8031, 0
  %v8110 = vsel %vm186, %v8036, 0
  %v8113 = vsel %vm186, %v8041, 0
  %v8116 = vsel %vm186, %v8046, 0
  %v8119 = vsel %vm186, %v8051, 0
  %v8122 = vsel %vm186, %v8056, 0
  %v8125 = vsel %vm186, %v8061, 0
  %v8128 = vsel %vm186, %v8066, 0
  %v8131 = vsel %vm186, %v8071, 0
  %8133 = vmatprep.subr.mxu0 0.0
  %8134 = vmatpush1.msra.mxu0 %v8074
  %8135 = vmatprep.subr.mxu0 0.0
  %8136 = vmatpush1.msra.mxu0 %v8075
  %8137 = vmatprep.subr.mxu0 0.0
  %8138 = vmatpush1.msra.mxu0 %v8076
  %8139 = vmatprep.subr.mxu0 0.0
  %8140 = vmatpush1.msra.mxu0 %v8077
  %8141 = vmatprep.subr.mxu0 0.0
  %8142 = vmatpush1.msra.mxu0 0.0
  %8143 = vmatprep.subr.mxu0 0.0
  %8144 = vmatpush1.msra.mxu0 0.0
  %8145 = vmatprep.subr.mxu0 0.0
  %8146 = vmatpush1.msra.mxu0 0.0
  %8147 = vmatprep.subr.mxu0 0.0
  %8148 = vmatpush1.msra.mxu0 0.0
  %8149 = vmatprep.subr.mxu0 0.0
  %8150 = vmatpush1.msra.mxu0 0.0
  %8151 = vmatprep.subr.mxu0 0.0
  %8152 = vmatpush1.msra.mxu0 0.0
  %8153 = vmatprep.subr.mxu0 0.0
  %8154 = vmatpush1.msra.mxu0 0.0
  %8155 = vmatprep.subr.mxu0 0.0
  %8156 = vmatpush1.msra.mxu0 0.0
  %8157 = vmatprep.subr.mxu0 0.0
  %8158 = vmatpush1.msra.mxu0 0.0
  %8159 = vmatprep.subr.mxu0 0.0
  %8160 = vmatpush1.msra.mxu0 0.0
  %8161 = vmatprep.subr.mxu0 0.0
  %8162 = vmatpush1.msra.mxu0 0.0
  %8163 = vmatprep.subr.mxu0 0.0
  %8164 = vmatpush1.msra.mxu0 0.0
  %8165 = vmatprep.subr.mxu0 0.0
  %8166 = vmatpush1.msra.mxu0 0.0
  %8167 = vmatprep.subr.mxu0 0.0
  %8168 = vmatpush1.msra.mxu0 0.0
  %8169 = vmatprep.subr.mxu0 0.0
  %8170 = vmatpush1.msra.mxu0 0.0
  %8171 = vmatprep.subr.mxu0 0.0
  %8172 = vmatpush1.msra.mxu0 0.0
  %8173 = vmatprep.subr.mxu0 0.0
  %8174 = vmatpush1.msra.mxu0 0.0
  %8175 = vmatprep.subr.mxu0 0.0
  %8176 = vmatpush1.msra.mxu0 0.0
  %8177 = vmatprep.subr.mxu0 0.0
  %8178 = vmatpush1.msra.mxu0 0.0
  %8179 = vmatprep.subr.mxu0 0.0
  %8180 = vmatpush1.msra.mxu0 0.0
  %8181 = vmatprep.subr.mxu0 0.0
  %8182 = vmatpush1.msra.mxu0 0.0
  %8183 = vmatprep.subr.mxu0 0.0
  %8184 = vmatpush1.msra.mxu0 0.0
  %8185 = vmatprep.subr.mxu0 0.0
  %8186 = vmatpush1.msra.mxu0 0.0
  %8187 = vmatprep.subr.mxu0 0.0
  %8188 = vmatpush1.msra.mxu0 0.0
  %8189 = vmatprep.subr.mxu0 0.0
  %8190 = vmatpush1.msra.mxu0 0.0
  %8191 = vmatprep.subr.mxu0 0.0
  %8192 = vmatpush1.msra.mxu0 0.0
  %8193 = vmatprep.subr.mxu0 0.0
  %8194 = vmatpush1.msra.mxu0 0.0
  %8195 = vmatprep.subr.mxu0 0.0
  %8196 = vmatpush1.msra.mxu0 0.0
  %8197 = vmatprep.mubr.f32.mxu0 0.0
  %8198 = vmatmul.mubr.f32.gmra.mrb[0].mxu0 %v8086
  %v8199 = vpop.f32.mrb[0].mxu0
  %v8200 = vadd.f32 %v8083, %v8199
  %v8201 = vpop.f32.mrb[0].mxu0
  %8202 = vmatprep.mubr.f32.mxu0 0.0
  %8203 = vmatmul.mubr.f32.gmra.mrb[0].mxu0 %v8089
  %v8204 = vpop.f32.mrb[0].mxu0
  %v8205 = vadd.f32 %v8083, %v8204
  %v8206 = vpop.f32.mrb[0].mxu0
  %8207 = vmatprep.mubr.f32.mxu0 0.0
  %8208 = vmatmul.mubr.f32.gmra.mrb[0].mxu0 %v8092
  %v8209 = vpop.f32.mrb[0].mxu0
  %v8210 = vadd.f32 %v8083, %v8209
  %v8211 = vpop.f32.mrb[0].mxu0
  %8212 = vmatprep.mubr.f32.mxu0 0.0
  %8213 = vmatmul.mubr.f32.gmra.mrb[0].mxu0 %v8095
  %v8214 = vpop.f32.mrb[0].mxu0
  %v8215 = vadd.f32 %v8083, %v8214
  %v8216 = vpop.f32.mrb[0].mxu0
  %8217 = vmatprep.mubr.f32.mxu0 0.0
  %8218 = vmatmul.mubr.f32.gmra.mrb[0].mxu0 %v8098
  %v8219 = vpop.f32.mrb[0].mxu0
  %v8220 = vadd.f32 %v8083, %v8219
  %v8221 = vpop.f32.mrb[0].mxu0
  %8222 = vmatprep.mubr.f32.mxu0 0.0
  %8223 = vmatmul.mubr.f32.gmra.mrb[0].mxu0 %v8101
  %v8224 = vpop.f32.mrb[0].mxu0
  %v8225 = vadd.f32 %v8083, %v8224
  %v8226 = vpop.f32.mrb[0].mxu0
  %8227 = vmatprep.mubr.f32.mxu0 0.0
  %8228 = vmatmul.mubr.f32.gmra.mrb[0].mxu0 %v8104
  %v8229 = vpop.f32.mrb[0].mxu0
  %v8230 = vadd.f32 %v8083, %v8229
  %v8231 = vpop.f32.mrb[0].mxu0
  %8232 = vmatprep.mubr.f32.mxu0 0.0
  %8233 = vmatmul.mubr.f32.gmra.mrb[0].mxu0 %v8107
  %v8234 = vpop.f32.mrb[0].mxu0
  %v8235 = vadd.f32 %v8083, %v8234
  %v8236 = vpop.f32.mrb[0].mxu0
  %8237 = vmatprep.mubr.f32.mxu0 0.0
  %8238 = vmatmul.mubr.f32.gmra.mrb[0].mxu0 %v8110
  %v8239 = vpop.f32.mrb[0].mxu0
  %v8240 = vadd.f32 %v8083, %v8239
  %v8241 = vpop.f32.mrb[0].mxu0
  %8242 = vmatprep.mubr.f32.mxu0 0.0
  %8243 = vmatmul.mubr.f32.gmra.mrb[0].mxu0 %v8113
  %v8244 = vpop.f32.mrb[0].mxu0
  %v8245 = vadd.f32 %v8083, %v8244
  %v8246 = vpop.f32.mrb[0].mxu0
  %8247 = vmatprep.mubr.f32.mxu0 0.0
  %8248 = vmatmul.mubr.f32.gmra.mrb[0].mxu0 %v8116
  %v8249 = vpop.f32.mrb[0].mxu0
  %v8250 = vadd.f32 %v8083, %v8249
  %v8251 = vpop.f32.mrb[0].mxu0
  %8252 = vmatprep.mubr.f32.mxu0 0.0
  %8253 = vmatmul.mubr.f32.gmra.mrb[0].mxu0 %v8119
  %v8254 = vpop.f32.mrb[0].mxu0
  %v8255 = vadd.f32 %v8083, %v8254
  %v8256 = vpop.f32.mrb[0].mxu0
  %8257 = vmatprep.mubr.f32.mxu0 0.0
  %8258 = vmatmul.mubr.f32.gmra.mrb[0].mxu0 %v8122
  %v8259 = vpop.f32.mrb[0].mxu0
  %v8260 = vadd.f32 %v8083, %v8259
  %v8261 = vpop.f32.mrb[0].mxu0
  %8262 = vmatprep.mubr.f32.mxu0 0.0
  %8263 = vmatmul.mubr.f32.gmra.mrb[0].mxu0 %v8125
  %v8264 = vpop.f32.mrb[0].mxu0
  %v8265 = vadd.f32 %v8083, %v8264
  %v8266 = vpop.f32.mrb[0].mxu0
  %8267 = vmatprep.mubr.f32.mxu0 0.0
  %8268 = vmatmul.mubr.f32.gmra.mrb[0].mxu0 %v8128
  %v8269 = vpop.f32.mrb[0].mxu0
  %v8270 = vadd.f32 %v8083, %v8269
  %v8271 = vpop.f32.mrb[0].mxu0
  %8272 = vmatprep.mubr.f32.mxu0 0.0
  %8273 = vmatmul.mubr.f32.gmra.mrb[0].mxu0 %v8131
  %v8274 = vpop.f32.mrb[0].mxu0
  %v8275 = vadd.f32 %v8083, %v8274
  %v8276 = vpop.f32.mrb[0].mxu0
  %8277 = vdwg.mxu0
  %v8278 = vadd.f32 %v6910, %v8200
  %v8279 = vadd.f32 %v6911, %v8205
  %v8280 = vadd.f32 %v6912, %v8210
  %v8281 = vadd.f32 %v6913, %v8215
  %v8282 = vadd.f32 %v6914, %v8220
  %v8283 = vadd.f32 %v6915, %v8225
  %v8284 = vadd.f32 %v6916, %v8230
  %v8285 = vadd.f32 %v6917, %v8235
  %v8286 = vadd.f32 %v6918, %v8240
  %v8287 = vadd.f32 %v6919, %v8245
  %v8288 = vadd.f32 %v6920, %v8250
  %v8289 = vadd.f32 %v6921, %v8255
  %v8290 = vadd.f32 %v6922, %v8260
  %v8291 = vadd.f32 %v6923, %v8265
  %v8292 = vadd.f32 %v6924, %v8270
  %v8293 = vadd.f32 %v6925, %v8275
  %v8294 = vld [vmem:[%s2920] sm:$0x1]
  %v8295 = vld [vmem:[%s2922] sm:$0x1]
  %v8296 = vsel %vm186, %v8278, 0.0
  %8297 = vadd.xlane.f32.xlu0 %v8296
  %v8298 = vpop.xlane.xlu0 %8297
  %v8299 = vsel %vm186, %v8279, 0.0
  %8300 = vadd.xlane.f32.xlu0 %v8299
  %v8301 = vpop.xlane.xlu0 %8300
  %v8302 = vsel %vm186, %v8280, 0.0
  %8303 = vadd.xlane.f32.xlu0 %v8302
  %v8304 = vpop.xlane.xlu0 %8303
  %v8305 = vsel %vm186, %v8281, 0.0
  %8306 = vadd.xlane.f32.xlu0 %v8305
  %v8307 = vpop.xlane.xlu0 %8306
  %v8308 = vsel %vm186, %v8282, 0.0
  %8309 = vadd.xlane.f32.xlu0 %v8308
  %v8310 = vpop.xlane.xlu0 %8309
  %v8311 = vsel %vm186, %v8283, 0.0
  %8312 = vadd.xlane.f32.xlu0 %v8311
  %v8313 = vpop.xlane.xlu0 %8312
  %v8314 = vsel %vm186, %v8284, 0.0
  %8315 = vadd.xlane.f32.xlu0 %v8314
  %v8316 = vpop.xlane.xlu0 %8315
  %v8317 = vsel %vm186, %v8285, 0.0
  %8318 = vadd.xlane.f32.xlu0 %v8317
  %v8319 = vpop.xlane.xlu0 %8318
  %v8320 = vsel %vm186, %v8286, 0.0
  %8321 = vadd.xlane.f32.xlu0 %v8320
  %v8322 = vpop.xlane.xlu0 %8321
  %v8323 = vsel %vm186, %v8287, 0.0
  %8324 = vadd.xlane.f32.xlu0 %v8323
  %v8325 = vpop.xlane.xlu0 %8324
  %v8326 = vsel %vm186, %v8288, 0.0
  %8327 = vadd.xlane.f32.xlu0 %v8326
  %v8328 = vpop.xlane.xlu0 %8327
  %v8329 = vsel %vm186, %v8289, 0.0
  %8330 = vadd.xlane.f32.xlu0 %v8329
  %v8331 = vpop.xlane.xlu0 %8330
  %v8332 = vsel %vm186, %v8290, 0.0
  %8333 = vadd.xlane.f32.xlu0 %v8332
  %v8334 = vpop.xlane.xlu0 %8333
  %v8335 = vsel %vm186, %v8291, 0.0
  %8336 = vadd.xlane.f32.xlu0 %v8335
  %v8337 = vpop.xlane.xlu0 %8336
  %v8338 = vsel %vm186, %v8292, 0.0
  %8339 = vadd.xlane.f32.xlu0 %v8338
  %v8340 = vpop.xlane.xlu0 %8339
  %v8341 = vsel %vm186, %v8293, 0.0
  %8342 = vadd.xlane.f32.xlu0 %v8341
  %v8343 = vpop.xlane.xlu0 %8342
  %v8344 = vmul.f32 %v8298, %v755
  %v8345 = vmul.f32 %v8301, %v755
  %v8346 = vmul.f32 %v8304, %v755
  %v8347 = vmul.f32 %v8307, %v755
  %v8348 = vmul.f32 %v8310, %v755
  %v8349 = vmul.f32 %v8313, %v755
  %v8350 = vmul.f32 %v8316, %v755
  %v8351 = vmul.f32 %v8319, %v755
  %v8352 = vmul.f32 %v8322, %v755
  %v8353 = vmul.f32 %v8325, %v755
  %v8354 = vmul.f32 %v8328, %v755
  %v8355 = vmul.f32 %v8331, %v755
  %v8356 = vmul.f32 %v8334, %v755
  %v8357 = vmul.f32 %v8337, %v755
  %v8358 = vmul.f32 %v8340, %v755
  %v8359 = vmul.f32 %v8343, %v755
  %v8360 = vsub.f32 %v8278, %v8344
  %v8361 = vsub.f32 %v8279, %v8345
  %v8362 = vsub.f32 %v8280, %v8346
  %v8363 = vsub.f32 %v8281, %v8347
  %v8364 = vsub.f32 %v8282, %v8348
  %v8365 = vsub.f32 %v8283, %v8349
  %v8366 = vsub.f32 %v8284, %v8350
  %v8367 = vsub.f32 %v8285, %v8351
  %v8368 = vsub.f32 %v8286, %v8352
  %v8369 = vsub.f32 %v8287, %v8353
  %v8370 = vsub.f32 %v8288, %v8354
  %v8371 = vsub.f32 %v8289, %v8355
  %v8372 = vsub.f32 %v8290, %v8356
  %v8373 = vsub.f32 %v8291, %v8357
  %v8374 = vsub.f32 %v8292, %v8358
  %v8375 = vsub.f32 %v8293, %v8359
  %v8376 = vmul.f32 %v8360, %v8360
  %v8377 = vmul.f32 %v8361, %v8361
  %v8378 = vmul.f32 %v8362, %v8362
  %v8379 = vmul.f32 %v8363, %v8363
  %v8380 = vmul.f32 %v8364, %v8364
  %v8381 = vmul.f32 %v8365, %v8365
  %v8382 = vmul.f32 %v8366, %v8366
  %v8383 = vmul.f32 %v8367, %v8367
  %v8384 = vmul.f32 %v8368, %v8368
  %v8385 = vmul.f32 %v8369, %v8369
  %v8386 = vmul.f32 %v8370, %v8370
  %v8387 = vmul.f32 %v8371, %v8371
  %v8388 = vmul.f32 %v8372, %v8372
  %v8389 = vmul.f32 %v8373, %v8373
  %v8390 = vmul.f32 %v8374, %v8374
  %v8391 = vmul.f32 %v8375, %v8375
  %v8392 = vsel %vm186, %v8376, 0.0
  %8393 = vadd.xlane.f32.xlu0 %v8392
  %v8394 = vpop.xlane.xlu0 %8393
  %v8395 = vsel %vm186, %v8377, 0.0
  %8396 = vadd.xlane.f32.xlu0 %v8395
  %v8397 = vpop.xlane.xlu0 %8396
  %v8398 = vsel %vm186, %v8378, 0.0
  %8399 = vadd.xlane.f32.xlu0 %v8398
  %v8400 = vpop.xlane.xlu0 %8399
  %v8401 = vsel %vm186, %v8379, 0.0
  %8402 = vadd.xlane.f32.xlu0 %v8401
  %v8403 = vpop.xlane.xlu0 %8402
  %v8404 = vsel %vm186, %v8380, 0.0
  %8405 = vadd.xlane.f32.xlu0 %v8404
  %v8406 = vpop.xlane.xlu0 %8405
  %v8407 = vsel %vm186, %v8381, 0.0
  %8408 = vadd.xlane.f32.xlu0 %v8407
  %v8409 = vpop.xlane.xlu0 %8408
  %v8410 = vsel %vm186, %v8382, 0.0
  %8411 = vadd.xlane.f32.xlu0 %v8410
  %v8412 = vpop.xlane.xlu0 %8411
  %v8413 = vsel %vm186, %v8383, 0.0
  %8414 = vadd.xlane.f32.xlu0 %v8413
  %v8415 = vpop.xlane.xlu0 %8414
  %v8416 = vsel %vm186, %v8384, 0.0
  %8417 = vadd.xlane.f32.xlu0 %v8416
  %v8418 = vpop.xlane.xlu0 %8417
  %v8419 = vsel %vm186, %v8385, 0.0
  %8420 = vadd.xlane.f32.xlu0 %v8419
  %v8421 = vpop.xlane.xlu0 %8420
  %v8422 = vsel %vm186, %v8386, 0.0
  %8423 = vadd.xlane.f32.xlu0 %v8422
  %v8424 = vpop.xlane.xlu0 %8423
  %v8425 = vsel %vm186, %v8387, 0.0
  %8426 = vadd.xlane.f32.xlu0 %v8425
  %v8427 = vpop.xlane.xlu0 %8426
  %v8428 = vsel %vm186, %v8388, 0.0
  %8429 = vadd.xlane.f32.xlu0 %v8428
  %v8430 = vpop.xlane.xlu0 %8429
  %v8431 = vsel %vm186, %v8389, 0.0
  %8432 = vadd.xlane.f32.xlu0 %v8431
  %v8433 = vpop.xlane.xlu0 %8432
  %v8434 = vsel %vm186, %v8390, 0.0
  %8435 = vadd.xlane.f32.xlu0 %v8434
  %v8436 = vpop.xlane.xlu0 %8435
  %v8437 = vsel %vm186, %v8391, 0.0
  %8438 = vadd.xlane.f32.xlu0 %v8437
  %v8439 = vpop.xlane.xlu0 %8438
  %v8440 = vmul.f32 %v8394, %v755
  %v8441 = vmul.f32 %v8397, %v755
  %v8442 = vmul.f32 %v8400, %v755
  %v8443 = vmul.f32 %v8403, %v755
  %v8444 = vmul.f32 %v8406, %v755
  %v8445 = vmul.f32 %v8409, %v755
  %v8446 = vmul.f32 %v8412, %v755
  %v8447 = vmul.f32 %v8415, %v755
  %v8448 = vmul.f32 %v8418, %v755
  %v8449 = vmul.f32 %v8421, %v755
  %v8450 = vmul.f32 %v8424, %v755
  %v8451 = vmul.f32 %v8427, %v755
  %v8452 = vmul.f32 %v8430, %v755
  %v8453 = vmul.f32 %v8433, %v755
  %v8454 = vmul.f32 %v8436, %v755
  %v8455 = vmul.f32 %v8439, %v755
  %v8456 = vadd.f32 %v8440, 1e-05
  %v8457 = vadd.f32 %v8441, 1e-05
  %v8458 = vadd.f32 %v8442, 1e-05
  %v8459 = vadd.f32 %v8443, 1e-05
  %v8460 = vadd.f32 %v8444, 1e-05
  %v8461 = vadd.f32 %v8445, 1e-05
  %v8462 = vadd.f32 %v8446, 1e-05
  %v8463 = vadd.f32 %v8447, 1e-05
  %v8464 = vadd.f32 %v8448, 1e-05
  %v8465 = vadd.f32 %v8449, 1e-05
  %v8466 = vadd.f32 %v8450, 1e-05
  %v8467 = vadd.f32 %v8451, 1e-05
  %v8468 = vadd.f32 %v8452, 1e-05
  %v8469 = vadd.f32 %v8453, 1e-05
  %v8470 = vadd.f32 %v8454, 1e-05
  %v8471 = vadd.f32 %v8455, 1e-05
  %v8472 = vrsqrt.pop %v8456
  %v8473 = vrsqrt.pop %v8457
  %v8474 = vrsqrt.pop %v8458
  %v8475 = vrsqrt.pop %v8459
  %v8476 = vrsqrt.pop %v8460
  %v8477 = vrsqrt.pop %v8461
  %v8478 = vrsqrt.pop %v8462
  %v8479 = vrsqrt.pop %v8463
  %v8480 = vrsqrt.pop %v8464
  %v8481 = vrsqrt.pop %v8465
  %v8482 = vrsqrt.pop %v8466
  %v8483 = vrsqrt.pop %v8467
  %v8484 = vrsqrt.pop %v8468
  %v8485 = vrsqrt.pop %v8469
  %v8486 = vrsqrt.pop %v8470
  %v8487 = vrsqrt.pop %v8471
  %v8488 = vmul.f32 %v8360, %v8472
  %v8489 = vmul.f32 %v8361, %v8473
  %v8490 = vmul.f32 %v8362, %v8474
  %v8491 = vmul.f32 %v8363, %v8475
  %v8492 = vmul.f32 %v8364, %v8476
  %v8493 = vmul.f32 %v8365, %v8477
  %v8494 = vmul.f32 %v8366, %v8478
  %v8495 = vmul.f32 %v8367, %v8479
  %v8496 = vmul.f32 %v8368, %v8480
  %v8497 = vmul.f32 %v8369, %v8481
  %v8498 = vmul.f32 %v8370, %v8482
  %v8499 = vmul.f32 %v8371, %v8483
  %v8500 = vmul.f32 %v8372, %v8484
  %v8501 = vmul.f32 %v8373, %v8485
  %v8502 = vmul.f32 %v8374, %v8486
  %v8503 = vmul.f32 %v8375, %v8487
  %v8505 = vlaneseq
  %v8506 = vshrl.u32 %v8505, 7
  %v8507 = vsub.s32 0, %v8506
  %v8508 = vrot.slane %v8294, %v8507
  %v8510 = vmul.f32 %v8488, %v8508
  %v8511 = vmul.f32 %v8489, %v8508
  %v8512 = vmul.f32 %v8490, %v8508
  %v8513 = vmul.f32 %v8491, %v8508
  %v8514 = vmul.f32 %v8492, %v8508
  %v8515 = vmul.f32 %v8493, %v8508
  %v8516 = vmul.f32 %v8494, %v8508
  %v8517 = vmul.f32 %v8495, %v8508
  %v8518 = vmul.f32 %v8496, %v8508
  %v8519 = vmul.f32 %v8497, %v8508
  %v8520 = vmul.f32 %v8498, %v8508
  %v8521 = vmul.f32 %v8499, %v8508
  %v8522 = vmul.f32 %v8500, %v8508
  %v8523 = vmul.f32 %v8501, %v8508
  %v8524 = vmul.f32 %v8502, %v8508
  %v8525 = vmul.f32 %v8503, %v8508
  %v8527 = vlaneseq
  %v8528 = vshrl.u32 %v8527, 7
  %v8529 = vsub.s32 0, %v8528
  %v8530 = vrot.slane %v8295, %v8529
  %v8532 = vadd.f32 %v8510, %v8530
  %v8533 = vadd.f32 %v8511, %v8530
  %v8534 = vadd.f32 %v8512, %v8530
  %v8535 = vadd.f32 %v8513, %v8530
  %v8536 = vadd.f32 %v8514, %v8530
  %v8537 = vadd.f32 %v8515, %v8530
  %v8538 = vadd.f32 %v8516, %v8530
  %v8539 = vadd.f32 %v8517, %v8530
  %v8540 = vadd.f32 %v8518, %v8530
  %v8541 = vadd.f32 %v8519, %v8530
  %v8542 = vadd.f32 %v8520, %v8530
  %v8543 = vadd.f32 %v8521, %v8530
  %v8544 = vadd.f32 %v8522, %v8530
  %v8545 = vadd.f32 %v8523, %v8530
  %v8546 = vadd.f32 %v8524, %v8530
  %v8547 = vadd.f32 %v8525, %v8530
  %v8548 = vld [vmem:[%s3176] sm:$0xff]
  %v8549 = vld [vmem:[%s3176 + $0x8] sm:$0xff]
  %v8550 = vld [vmem:[%s3176 + $0x10] sm:$0xff]
  %v8551 = vld [vmem:[%s3176 + $0x18] sm:$0xff]
  %v8552 = vld [vmem:[%s3181] sm:$0x1]
  %v8554 = vlaneseq
  %v8555 = vshrl.u32 %v8554, 7
  %v8556 = vsub.s32 0, %v8555
  %v8557 = vrot.slane %v8552, %v8556
  %v8560 = vsel %vm186, %v8532, 0
  %v8563 = vsel %vm186, %v8533, 0
  %v8566 = vsel %vm186, %v8534, 0
  %v8569 = vsel %vm186, %v8535, 0
  %v8572 = vsel %vm186, %v8536, 0
  %v8575 = vsel %vm186, %v8537, 0
  %v8578 = vsel %vm186, %v8538, 0
  %v8581 = vsel %vm186, %v8539, 0
  %v8584 = vsel %vm186, %v8540, 0
  %v8587 = vsel %vm186, %v8541, 0
  %v8590 = vsel %vm186, %v8542, 0
  %v8593 = vsel %vm186, %v8543, 0
  %v8596 = vsel %vm186, %v8544, 0
  %v8599 = vsel %vm186, %v8545, 0
  %v8602 = vsel %vm186, %v8546, 0
  %v8605 = vsel %vm186, %v8547, 0
  %8607 = vmatprep.subr.mxu0 0.0
  %8608 = vmatpush1.msra.mxu0 %v8548
  %8609 = vmatprep.subr.mxu0 0.0
  %8610 = vmatpush1.msra.mxu0 %v8549
  %8611 = vmatprep.subr.mxu0 0.0
  %8612 = vmatpush1.msra.mxu0 %v8550
  %8613 = vmatprep.subr.mxu0 0.0
  %8614 = vmatpush1.msra.mxu0 %v8551
  %8615 = vmatprep.subr.mxu0 0.0
  %8616 = vmatpush1.msra.mxu0 0.0
  %8617 = vmatprep.subr.mxu0 0.0
  %8618 = vmatpush1.msra.mxu0 0.0
  %8619 = vmatprep.subr.mxu0 0.0
  %8620 = vmatpush1.msra.mxu0 0.0
  %8621 = vmatprep.subr.mxu0 0.0
  %8622 = vmatpush1.msra.mxu0 0.0
  %8623 = vmatprep.subr.mxu0 0.0
  %8624 = vmatpush1.msra.mxu0 0.0
  %8625 = vmatprep.subr.mxu0 0.0
  %8626 = vmatpush1.msra.mxu0 0.0
  %8627 = vmatprep.subr.mxu0 0.0
  %8628 = vmatpush1.msra.mxu0 0.0
  %8629 = vmatprep.subr.mxu0 0.0
  %8630 = vmatpush1.msra.mxu0 0.0
  %8631 = vmatprep.subr.mxu0 0.0
  %8632 = vmatpush1.msra.mxu0 0.0
  %8633 = vmatprep.subr.mxu0 0.0
  %8634 = vmatpush1.msra.mxu0 0.0
  %8635 = vmatprep.subr.mxu0 0.0
  %8636 = vmatpush1.msra.mxu0 0.0
  %8637 = vmatprep.subr.mxu0 0.0
  %8638 = vmatpush1.msra.mxu0 0.0
  %8639 = vmatprep.subr.mxu0 0.0
  %8640 = vmatpush1.msra.mxu0 0.0
  %8641 = vmatprep.subr.mxu0 0.0
  %8642 = vmatpush1.msra.mxu0 0.0
  %8643 = vmatprep.subr.mxu0 0.0
  %8644 = vmatpush1.msra.mxu0 0.0
  %8645 = vmatprep.subr.mxu0 0.0
  %8646 = vmatpush1.msra.mxu0 0.0
  %8647 = vmatprep.subr.mxu0 0.0
  %8648 = vmatpush1.msra.mxu0 0.0
  %8649 = vmatprep.subr.mxu0 0.0
  %8650 = vmatpush1.msra.mxu0 0.0
  %8651 = vmatprep.subr.mxu0 0.0
  %8652 = vmatpush1.msra.mxu0 0.0
  %8653 = vmatprep.subr.mxu0 0.0
  %8654 = vmatpush1.msra.mxu0 0.0
  %8655 = vmatprep.subr.mxu0 0.0
  %8656 = vmatpush1.msra.mxu0 0.0
  %8657 = vmatprep.subr.mxu0 0.0
  %8658 = vmatpush1.msra.mxu0 0.0
  %8659 = vmatprep.subr.mxu0 0.0
  %8660 = vmatpush1.msra.mxu0 0.0
  %8661 = vmatprep.subr.mxu0 0.0
  %8662 = vmatpush1.msra.mxu0 0.0
  %8663 = vmatprep.subr.mxu0 0.0
  %8664 = vmatpush1.msra.mxu0 0.0
  %8665 = vmatprep.subr.mxu0 0.0
  %8666 = vmatpush1.msra.mxu0 0.0
  %8667 = vmatprep.subr.mxu0 0.0
  %8668 = vmatpush1.msra.mxu0 0.0
  %8669 = vmatprep.subr.mxu0 0.0
  %8670 = vmatpush1.msra.mxu0 0.0
  %8671 = vmatprep.mubr.f32.mxu0 0.0
  %8672 = vmatmul.mubr.f32.gmra.mrb[0].mxu0 %v8560
  %v8673 = vpop.f32.mrb[0].mxu0
  %v8674 = vadd.f32 %v8557, %v8673
  %v8675 = vpop.f32.mrb[0].mxu0
  %8676 = vmatprep.mubr.f32.mxu0 0.0
  %8677 = vmatmul.mubr.f32.gmra.mrb[0].mxu0 %v8563
  %v8678 = vpop.f32.mrb[0].mxu0
  %v8679 = vadd.f32 %v8557, %v8678
  %v8680 = vpop.f32.mrb[0].mxu0
  %8681 = vmatprep.mubr.f32.mxu0 0.0
  %8682 = vmatmul.mubr.f32.gmra.mrb[0].mxu0 %v8566
  %v8683 = vpop.f32.mrb[0].mxu0
  %v8684 = vadd.f32 %v8557, %v8683
  %v8685 = vpop.f32.mrb[0].mxu0
  %8686 = vmatprep.mubr.f32.mxu0 0.0
  %8687 = vmatmul.mubr.f32.gmra.mrb[0].mxu0 %v8569
  %v8688 = vpop.f32.mrb[0].mxu0
  %v8689 = vadd.f32 %v8557, %v8688
  %v8690 = vpop.f32.mrb[0].mxu0
  %8691 = vmatprep.mubr.f32.mxu0 0.0
  %8692 = vmatmul.mubr.f32.gmra.mrb[0].mxu0 %v8572
  %v8693 = vpop.f32.mrb[0].mxu0
  %v8694 = vadd.f32 %v8557, %v8693
  %v8695 = vpop.f32.mrb[0].mxu0
  %8696 = vmatprep.mubr.f32.mxu0 0.0
  %8697 = vmatmul.mubr.f32.gmra.mrb[0].mxu0 %v8575
  %v8698 = vpop.f32.mrb[0].mxu0
  %v8699 = vadd.f32 %v8557, %v8698
  %v8700 = vpop.f32.mrb[0].mxu0
  %8701 = vmatprep.mubr.f32.mxu0 0.0
  %8702 = vmatmul.mubr.f32.gmra.mrb[0].mxu0 %v8578
  %v8703 = vpop.f32.mrb[0].mxu0
  %v8704 = vadd.f32 %v8557, %v8703
  %v8705 = vpop.f32.mrb[0].mxu0
  %8706 = vmatprep.mubr.f32.mxu0 0.0
  %8707 = vmatmul.mubr.f32.gmra.mrb[0].mxu0 %v8581
  %v8708 = vpop.f32.mrb[0].mxu0
  %v8709 = vadd.f32 %v8557, %v8708
  %v8710 = vpop.f32.mrb[0].mxu0
  %8711 = vmatprep.mubr.f32.mxu0 0.0
  %8712 = vmatmul.mubr.f32.gmra.mrb[0].mxu0 %v8584
  %v8713 = vpop.f32.mrb[0].mxu0
  %v8714 = vadd.f32 %v8557, %v8713
  %v8715 = vpop.f32.mrb[0].mxu0
  %8716 = vmatprep.mubr.f32.mxu0 0.0
  %8717 = vmatmul.mubr.f32.gmra.mrb[0].mxu0 %v8587
  %v8718 = vpop.f32.mrb[0].mxu0
  %v8719 = vadd.f32 %v8557, %v8718
  %v8720 = vpop.f32.mrb[0].mxu0
  %8721 = vmatprep.mubr.f32.mxu0 0.0
  %8722 = vmatmul.mubr.f32.gmra.mrb[0].mxu0 %v8590
  %v8723 = vpop.f32.mrb[0].mxu0
  %v8724 = vadd.f32 %v8557, %v8723
  %v8725 = vpop.f32.mrb[0].mxu0
  %8726 = vmatprep.mubr.f32.mxu0 0.0
  %8727 = vmatmul.mubr.f32.gmra.mrb[0].mxu0 %v8593
  %v8728 = vpop.f32.mrb[0].mxu0
  %v8729 = vadd.f32 %v8557, %v8728
  %v8730 = vpop.f32.mrb[0].mxu0
  %8731 = vmatprep.mubr.f32.mxu0 0.0
  %8732 = vmatmul.mubr.f32.gmra.mrb[0].mxu0 %v8596
  %v8733 = vpop.f32.mrb[0].mxu0
  %v8734 = vadd.f32 %v8557, %v8733
  %v8735 = vpop.f32.mrb[0].mxu0
  %8736 = vmatprep.mubr.f32.mxu0 0.0
  %8737 = vmatmul.mubr.f32.gmra.mrb[0].mxu0 %v8599
  %v8738 = vpop.f32.mrb[0].mxu0
  %v8739 = vadd.f32 %v8557, %v8738
  %v8740 = vpop.f32.mrb[0].mxu0
  %8741 = vmatprep.mubr.f32.mxu0 0.0
  %8742 = vmatmul.mubr.f32.gmra.mrb[0].mxu0 %v8602
  %v8743 = vpop.f32.mrb[0].mxu0
  %v8744 = vadd.f32 %v8557, %v8743
  %v8745 = vpop.f32.mrb[0].mxu0
  %8746 = vmatprep.mubr.f32.mxu0 0.0
  %8747 = vmatmul.mubr.f32.gmra.mrb[0].mxu0 %v8605
  %v8748 = vpop.f32.mrb[0].mxu0
  %v8749 = vadd.f32 %v8557, %v8748
  %v8750 = vpop.f32.mrb[0].mxu0
  %8751 = vdwg.mxu0
  %v8752 = vmax.f32 %v8674, 0.0
  %v8753 = vmax.f32 %v8679, 0.0
  %v8754 = vmax.f32 %v8684, 0.0
  %v8755 = vmax.f32 %v8689, 0.0
  %v8756 = vmax.f32 %v8694, 0.0
  %v8757 = vmax.f32 %v8699, 0.0
  %v8758 = vmax.f32 %v8704, 0.0
  %v8759 = vmax.f32 %v8709, 0.0
  %v8760 = vmax.f32 %v8714, 0.0
  %v8761 = vmax.f32 %v8719, 0.0
  %v8762 = vmax.f32 %v8724, 0.0
  %v8763 = vmax.f32 %v8729, 0.0
  %v8764 = vmax.f32 %v8734, 0.0
  %v8765 = vmax.f32 %v8739, 0.0
  %v8766 = vmax.f32 %v8744, 0.0
  %v8767 = vmax.f32 %v8749, 0.0
  %v8768 = vld [vmem:[%s3398] sm:$0xff]
  %v8769 = vld [vmem:[%s3398 + $0x8] sm:$0xff]
  %v8770 = vld [vmem:[%s3398 + $0x10] sm:$0xff]
  %v8771 = vld [vmem:[%s3398 + $0x18] sm:$0xff]
  %v8772 = vld [vmem:[%s3398 + $0x20] sm:$0xff]
  %v8773 = vld [vmem:[%s3398 + $0x28] sm:$0xff]
  %v8774 = vld [vmem:[%s3398 + $0x30] sm:$0xff]
  %v8775 = vld [vmem:[%s3398 + $0x38] sm:$0xff]
  %v8776 = vld [vmem:[%s3407] sm:$0x1]
  %v8778 = vlaneseq
  %v8779 = vshrl.u32 %v8778, 7
  %v8780 = vsub.s32 0, %v8779
  %v8781 = vrot.slane %v8776, %v8780
  %v8784 = vsel %vm901, %v8752, 0
  %v8787 = vsel %vm901, %v8753, 0
  %v8790 = vsel %vm901, %v8754, 0
  %v8793 = vsel %vm901, %v8755, 0
  %v8796 = vsel %vm901, %v8756, 0
  %v8799 = vsel %vm901, %v8757, 0
  %v8802 = vsel %vm901, %v8758, 0
  %v8805 = vsel %vm901, %v8759, 0
  %v8808 = vsel %vm901, %v8760, 0
  %v8811 = vsel %vm901, %v8761, 0
  %v8814 = vsel %vm901, %v8762, 0
  %v8817 = vsel %vm901, %v8763, 0
  %v8820 = vsel %vm901, %v8764, 0
  %v8823 = vsel %vm901, %v8765, 0
  %v8826 = vsel %vm901, %v8766, 0
  %v8829 = vsel %vm901, %v8767, 0
  %8831 = vmatprep.subr.mxu0 0.0
  %8832 = vmatpush1.msra.mxu0 %v8768
  %8833 = vmatprep.subr.mxu0 0.0
  %8834 = vmatpush1.msra.mxu0 %v8769
  %8835 = vmatprep.subr.mxu0 0.0
  %8836 = vmatpush1.msra.mxu0 %v8770
  %8837 = vmatprep.subr.mxu0 0.0
  %8838 = vmatpush1.msra.mxu0 %v8771
  %8839 = vmatprep.subr.mxu0 0.0
  %8840 = vmatpush1.msra.mxu0 %v8772
  %8841 = vmatprep.subr.mxu0 0.0
  %8842 = vmatpush1.msra.mxu0 %v8773
  %8843 = vmatprep.subr.mxu0 0.0
  %8844 = vmatpush1.msra.mxu0 %v8774
  %8845 = vmatprep.subr.mxu0 0.0
  %8846 = vmatpush1.msra.mxu0 %v8775
  %8847 = vmatprep.subr.mxu0 0.0
  %8848 = vmatpush1.msra.mxu0 0.0
  %8849 = vmatprep.subr.mxu0 0.0
  %8850 = vmatpush1.msra.mxu0 0.0
  %8851 = vmatprep.subr.mxu0 0.0
  %8852 = vmatpush1.msra.mxu0 0.0
  %8853 = vmatprep.subr.mxu0 0.0
  %8854 = vmatpush1.msra.mxu0 0.0
  %8855 = vmatprep.subr.mxu0 0.0
  %8856 = vmatpush1.msra.mxu0 0.0
  %8857 = vmatprep.subr.mxu0 0.0
  %8858 = vmatpush1.msra.mxu0 0.0
  %8859 = vmatprep.subr.mxu0 0.0
  %8860 = vmatpush1.msra.mxu0 0.0
  %8861 = vmatprep.subr.mxu0 0.0
  %8862 = vmatpush1.msra.mxu0 0.0
  %8863 = vmatprep.subr.mxu0 0.0
  %8864 = vmatpush1.msra.mxu0 0.0
  %8865 = vmatprep.subr.mxu0 0.0
  %8866 = vmatpush1.msra.mxu0 0.0
  %8867 = vmatprep.subr.mxu0 0.0
  %8868 = vmatpush1.msra.mxu0 0.0
  %8869 = vmatprep.subr.mxu0 0.0
  %8870 = vmatpush1.msra.mxu0 0.0
  %8871 = vmatprep.subr.mxu0 0.0
  %8872 = vmatpush1.msra.mxu0 0.0
  %8873 = vmatprep.subr.mxu0 0.0
  %8874 = vmatpush1.msra.mxu0 0.0
  %8875 = vmatprep.subr.mxu0 0.0
  %8876 = vmatpush1.msra.mxu0 0.0
  %8877 = vmatprep.subr.mxu0 0.0
  %8878 = vmatpush1.msra.mxu0 0.0
  %8879 = vmatprep.subr.mxu0 0.0
  %8880 = vmatpush1.msra.mxu0 0.0
  %8881 = vmatprep.subr.mxu0 0.0
  %8882 = vmatpush1.msra.mxu0 0.0
  %8883 = vmatprep.subr.mxu0 0.0
  %8884 = vmatpush1.msra.mxu0 0.0
  %8885 = vmatprep.subr.mxu0 0.0
  %8886 = vmatpush1.msra.mxu0 0.0
  %8887 = vmatprep.subr.mxu0 0.0
  %8888 = vmatpush1.msra.mxu0 0.0
  %8889 = vmatprep.subr.mxu0 0.0
  %8890 = vmatpush1.msra.mxu0 0.0
  %8891 = vmatprep.subr.mxu0 0.0
  %8892 = vmatpush1.msra.mxu0 0.0
  %8893 = vmatprep.subr.mxu0 0.0
  %8894 = vmatpush1.msra.mxu0 0.0
  %8895 = vmatprep.mubr.f32.mxu0 0.0
  %8896 = vmatmul.mubr.f32.gmra.mrb[0].mxu0 %v8784
  %v8897 = vpop.f32.mrb[0].mxu0
  %v8898 = vadd.f32 %v8781, %v8897
  %v8899 = vpop.f32.mrb[0].mxu0
  %8900 = vmatprep.mubr.f32.mxu0 0.0
  %8901 = vmatmul.mubr.f32.gmra.mrb[0].mxu0 %v8787
  %v8902 = vpop.f32.mrb[0].mxu0
  %v8903 = vadd.f32 %v8781, %v8902
  %v8904 = vpop.f32.mrb[0].mxu0
  %8905 = vmatprep.mubr.f32.mxu0 0.0
  %8906 = vmatmul.mubr.f32.gmra.mrb[0].mxu0 %v8790
  %v8907 = vpop.f32.mrb[0].mxu0
  %v8908 = vadd.f32 %v8781, %v8907
  %v8909 = vpop.f32.mrb[0].mxu0
  %8910 = vmatprep.mubr.f32.mxu0 0.0
  %8911 = vmatmul.mubr.f32.gmra.mrb[0].mxu0 %v8793
  %v8912 = vpop.f32.mrb[0].mxu0
  %v8913 = vadd.f32 %v8781, %v8912
  %v8914 = vpop.f32.mrb[0].mxu0
  %8915 = vmatprep.mubr.f32.mxu0 0.0
  %8916 = vmatmul.mubr.f32.gmra.mrb[0].mxu0 %v8796
  %v8917 = vpop.f32.mrb[0].mxu0
  %v8918 = vadd.f32 %v8781, %v8917
  %v8919 = vpop.f32.mrb[0].mxu0
  %8920 = vmatprep.mubr.f32.mxu0 0.0
  %8921 = vmatmul.mubr.f32.gmra.mrb[0].mxu0 %v8799
  %v8922 = vpop.f32.mrb[0].mxu0
  %v8923 = vadd.f32 %v8781, %v8922
  %v8924 = vpop.f32.mrb[0].mxu0
  %8925 = vmatprep.mubr.f32.mxu0 0.0
  %8926 = vmatmul.mubr.f32.gmra.mrb[0].mxu0 %v8802
  %v8927 = vpop.f32.mrb[0].mxu0
  %v8928 = vadd.f32 %v8781, %v8927
  %v8929 = vpop.f32.mrb[0].mxu0
  %8930 = vmatprep.mubr.f32.mxu0 0.0
  %8931 = vmatmul.mubr.f32.gmra.mrb[0].mxu0 %v8805
  %v8932 = vpop.f32.mrb[0].mxu0
  %v8933 = vadd.f32 %v8781, %v8932
  %v8934 = vpop.f32.mrb[0].mxu0
  %8935 = vmatprep.mubr.f32.mxu0 0.0
  %8936 = vmatmul.mubr.f32.gmra.mrb[0].mxu0 %v8808
  %v8937 = vpop.f32.mrb[0].mxu0
  %v8938 = vadd.f32 %v8781, %v8937
  %v8939 = vpop.f32.mrb[0].mxu0
  %8940 = vmatprep.mubr.f32.mxu0 0.0
  %8941 = vmatmul.mubr.f32.gmra.mrb[0].mxu0 %v8811
  %v8942 = vpop.f32.mrb[0].mxu0
  %v8943 = vadd.f32 %v8781, %v8942
  %v8944 = vpop.f32.mrb[0].mxu0
  %8945 = vmatprep.mubr.f32.mxu0 0.0
  %8946 = vmatmul.mubr.f32.gmra.mrb[0].mxu0 %v8814
  %v8947 = vpop.f32.mrb[0].mxu0
  %v8948 = vadd.f32 %v8781, %v8947
  %v8949 = vpop.f32.mrb[0].mxu0
  %8950 = vmatprep.mubr.f32.mxu0 0.0
  %8951 = vmatmul.mubr.f32.gmra.mrb[0].mxu0 %v8817
  %v8952 = vpop.f32.mrb[0].mxu0
  %v8953 = vadd.f32 %v8781, %v8952
  %v8954 = vpop.f32.mrb[0].mxu0
  %8955 = vmatprep.mubr.f32.mxu0 0.0
  %8956 = vmatmul.mubr.f32.gmra.mrb[0].mxu0 %v8820
  %v8957 = vpop.f32.mrb[0].mxu0
  %v8958 = vadd.f32 %v8781, %v8957
  %v8959 = vpop.f32.mrb[0].mxu0
  %8960 = vmatprep.mubr.f32.mxu0 0.0
  %8961 = vmatmul.mubr.f32.gmra.mrb[0].mxu0 %v8823
  %v8962 = vpop.f32.mrb[0].mxu0
  %v8963 = vadd.f32 %v8781, %v8962
  %v8964 = vpop.f32.mrb[0].mxu0
  %8965 = vmatprep.mubr.f32.mxu0 0.0
  %8966 = vmatmul.mubr.f32.gmra.mrb[0].mxu0 %v8826
  %v8967 = vpop.f32.mrb[0].mxu0
  %v8968 = vadd.f32 %v8781, %v8967
  %v8969 = vpop.f32.mrb[0].mxu0
  %8970 = vmatprep.mubr.f32.mxu0 0.0
  %8971 = vmatmul.mubr.f32.gmra.mrb[0].mxu0 %v8829
  %v8972 = vpop.f32.mrb[0].mxu0
  %v8973 = vadd.f32 %v8781, %v8972
  %v8974 = vpop.f32.mrb[0].mxu0
  %8975 = vdwg.mxu0
  %v8976 = vadd.f32 %v8532, %v8898
  %v8977 = vadd.f32 %v8533, %v8903
  %v8978 = vadd.f32 %v8534, %v8908
  %v8979 = vadd.f32 %v8535, %v8913
  %v8980 = vadd.f32 %v8536, %v8918
  %v8981 = vadd.f32 %v8537, %v8923
  %v8982 = vadd.f32 %v8538, %v8928
  %v8983 = vadd.f32 %v8539, %v8933
  %v8984 = vadd.f32 %v8540, %v8938
  %v8985 = vadd.f32 %v8541, %v8943
  %v8986 = vadd.f32 %v8542, %v8948
  %v8987 = vadd.f32 %v8543, %v8953
  %v8988 = vadd.f32 %v8544, %v8958
  %v8989 = vadd.f32 %v8545, %v8963
  %v8990 = vadd.f32 %v8546, %v8968
  %v8991 = vadd.f32 %v8547, %v8973
  %v8992 = vld [vmem:[%s3624] sm:$0x1]
  %v8993 = vld [vmem:[%s3626] sm:$0x1]
  %v8994 = vsel %vm186, %v8976, 0.0
  %8995 = vadd.xlane.f32.xlu0 %v8994
  %v8996 = vpop.xlane.xlu0 %8995
  %v8997 = vsel %vm186, %v8977, 0.0
  %8998 = vadd.xlane.f32.xlu0 %v8997
  %v8999 = vpop.xlane.xlu0 %8998
  %v9000 = vsel %vm186, %v8978, 0.0
  %9001 = vadd.xlane.f32.xlu0 %v9000
  %v9002 = vpop.xlane.xlu0 %9001
  %v9003 = vsel %vm186, %v8979, 0.0
  %9004 = vadd.xlane.f32.xlu0 %v9003
  %v9005 = vpop.xlane.xlu0 %9004
  %v9006 = vsel %vm186, %v8980, 0.0
  %9007 = vadd.xlane.f32.xlu0 %v9006
  %v9008 = vpop.xlane.xlu0 %9007
  %v9009 = vsel %vm186, %v8981, 0.0
  %9010 = vadd.xlane.f32.xlu0 %v9009
  %v9011 = vpop.xlane.xlu0 %9010
  %v9012 = vsel %vm186, %v8982, 0.0
  %9013 = vadd.xlane.f32.xlu0 %v9012
  %v9014 = vpop.xlane.xlu0 %9013
  %v9015 = vsel %vm186, %v8983, 0.0
  %9016 = vadd.xlane.f32.xlu0 %v9015
  %v9017 = vpop.xlane.xlu0 %9016
  %v9018 = vsel %vm186, %v8984, 0.0
  %9019 = vadd.xlane.f32.xlu0 %v9018
  %v9020 = vpop.xlane.xlu0 %9019
  %v9021 = vsel %vm186, %v8985, 0.0
  %9022 = vadd.xlane.f32.xlu0 %v9021
  %v9023 = vpop.xlane.xlu0 %9022
  %v9024 = vsel %vm186, %v8986, 0.0
  %9025 = vadd.xlane.f32.xlu0 %v9024
  %v9026 = vpop.xlane.xlu0 %9025
  %v9027 = vsel %vm186, %v8987, 0.0
  %9028 = vadd.xlane.f32.xlu0 %v9027
  %v9029 = vpop.xlane.xlu0 %9028
  %v9030 = vsel %vm186, %v8988, 0.0
  %9031 = vadd.xlane.f32.xlu0 %v9030
  %v9032 = vpop.xlane.xlu0 %9031
  %v9033 = vsel %vm186, %v8989, 0.0
  %9034 = vadd.xlane.f32.xlu0 %v9033
  %v9035 = vpop.xlane.xlu0 %9034
  %v9036 = vsel %vm186, %v8990, 0.0
  %9037 = vadd.xlane.f32.xlu0 %v9036
  %v9038 = vpop.xlane.xlu0 %9037
  %v9039 = vsel %vm186, %v8991, 0.0
  %9040 = vadd.xlane.f32.xlu0 %v9039
  %v9041 = vpop.xlane.xlu0 %9040
  %v9042 = vmul.f32 %v8996, %v755
  %v9043 = vmul.f32 %v8999, %v755
  %v9044 = vmul.f32 %v9002, %v755
  %v9045 = vmul.f32 %v9005, %v755
  %v9046 = vmul.f32 %v9008, %v755
  %v9047 = vmul.f32 %v9011, %v755
  %v9048 = vmul.f32 %v9014, %v755
  %v9049 = vmul.f32 %v9017, %v755
  %v9050 = vmul.f32 %v9020, %v755
  %v9051 = vmul.f32 %v9023, %v755
  %v9052 = vmul.f32 %v9026, %v755
  %v9053 = vmul.f32 %v9029, %v755
  %v9054 = vmul.f32 %v9032, %v755
  %v9055 = vmul.f32 %v9035, %v755
  %v9056 = vmul.f32 %v9038, %v755
  %v9057 = vmul.f32 %v9041, %v755
  %v9058 = vsub.f32 %v8976, %v9042
  %v9059 = vsub.f32 %v8977, %v9043
  %v9060 = vsub.f32 %v8978, %v9044
  %v9061 = vsub.f32 %v8979, %v9045
  %v9062 = vsub.f32 %v8980, %v9046
  %v9063 = vsub.f32 %v8981, %v9047
  %v9064 = vsub.f32 %v8982, %v9048
  %v9065 = vsub.f32 %v8983, %v9049
  %v9066 = vsub.f32 %v8984, %v9050
  %v9067 = vsub.f32 %v8985, %v9051
  %v9068 = vsub.f32 %v8986, %v9052
  %v9069 = vsub.f32 %v8987, %v9053
  %v9070 = vsub.f32 %v8988, %v9054
  %v9071 = vsub.f32 %v8989, %v9055
  %v9072 = vsub.f32 %v8990, %v9056
  %v9073 = vsub.f32 %v8991, %v9057
  %v9074 = vmul.f32 %v9058, %v9058
  %v9075 = vmul.f32 %v9059, %v9059
  %v9076 = vmul.f32 %v9060, %v9060
  %v9077 = vmul.f32 %v9061, %v9061
  %v9078 = vmul.f32 %v9062, %v9062
  %v9079 = vmul.f32 %v9063, %v9063
  %v9080 = vmul.f32 %v9064, %v9064
  %v9081 = vmul.f32 %v9065, %v9065
  %v9082 = vmul.f32 %v9066, %v9066
  %v9083 = vmul.f32 %v9067, %v9067
  %v9084 = vmul.f32 %v9068, %v9068
  %v9085 = vmul.f32 %v9069, %v9069
  %v9086 = vmul.f32 %v9070, %v9070
  %v9087 = vmul.f32 %v9071, %v9071
  %v9088 = vmul.f32 %v9072, %v9072
  %v9089 = vmul.f32 %v9073, %v9073
  %v9090 = vsel %vm186, %v9074, 0.0
  %9091 = vadd.xlane.f32.xlu0 %v9090
  %v9092 = vpop.xlane.xlu0 %9091
  %v9093 = vsel %vm186, %v9075, 0.0
  %9094 = vadd.xlane.f32.xlu0 %v9093
  %v9095 = vpop.xlane.xlu0 %9094
  %v9096 = vsel %vm186, %v9076, 0.0
  %9097 = vadd.xlane.f32.xlu0 %v9096
  %v9098 = vpop.xlane.xlu0 %9097
  %v9099 = vsel %vm186, %v9077, 0.0
  %9100 = vadd.xlane.f32.xlu0 %v9099
  %v9101 = vpop.xlane.xlu0 %9100
  %v9102 = vsel %vm186, %v9078, 0.0
  %9103 = vadd.xlane.f32.xlu0 %v9102
  %v9104 = vpop.xlane.xlu0 %9103
  %v9105 = vsel %vm186, %v9079, 0.0
  %9106 = vadd.xlane.f32.xlu0 %v9105
  %v9107 = vpop.xlane.xlu0 %9106
  %v9108 = vsel %vm186, %v9080, 0.0
  %9109 = vadd.xlane.f32.xlu0 %v9108
  %v9110 = vpop.xlane.xlu0 %9109
  %v9111 = vsel %vm186, %v9081, 0.0
  %9112 = vadd.xlane.f32.xlu0 %v9111
  %v9113 = vpop.xlane.xlu0 %9112
  %v9114 = vsel %vm186, %v9082, 0.0
  %9115 = vadd.xlane.f32.xlu0 %v9114
  %v9116 = vpop.xlane.xlu0 %9115
  %v9117 = vsel %vm186, %v9083, 0.0
  %9118 = vadd.xlane.f32.xlu0 %v9117
  %v9119 = vpop.xlane.xlu0 %9118
  %v9120 = vsel %vm186, %v9084, 0.0
  %9121 = vadd.xlane.f32.xlu0 %v9120
  %v9122 = vpop.xlane.xlu0 %9121
  %v9123 = vsel %vm186, %v9085, 0.0
  %9124 = vadd.xlane.f32.xlu0 %v9123
  %v9125 = vpop.xlane.xlu0 %9124
  %v9126 = vsel %vm186, %v9086, 0.0
  %9127 = vadd.xlane.f32.xlu0 %v9126
  %v9128 = vpop.xlane.xlu0 %9127
  %v9129 = vsel %vm186, %v9087, 0.0
  %9130 = vadd.xlane.f32.xlu0 %v9129
  %v9131 = vpop.xlane.xlu0 %9130
  %v9132 = vsel %vm186, %v9088, 0.0
  %9133 = vadd.xlane.f32.xlu0 %v9132
  %v9134 = vpop.xlane.xlu0 %9133
  %v9135 = vsel %vm186, %v9089, 0.0
  %9136 = vadd.xlane.f32.xlu0 %v9135
  %v9137 = vpop.xlane.xlu0 %9136
  %v9138 = vmul.f32 %v9092, %v755
  %v9139 = vmul.f32 %v9095, %v755
  %v9140 = vmul.f32 %v9098, %v755
  %v9141 = vmul.f32 %v9101, %v755
  %v9142 = vmul.f32 %v9104, %v755
  %v9143 = vmul.f32 %v9107, %v755
  %v9144 = vmul.f32 %v9110, %v755
  %v9145 = vmul.f32 %v9113, %v755
  %v9146 = vmul.f32 %v9116, %v755
  %v9147 = vmul.f32 %v9119, %v755
  %v9148 = vmul.f32 %v9122, %v755
  %v9149 = vmul.f32 %v9125, %v755
  %v9150 = vmul.f32 %v9128, %v755
  %v9151 = vmul.f32 %v9131, %v755
  %v9152 = vmul.f32 %v9134, %v755
  %v9153 = vmul.f32 %v9137, %v755
  %v9154 = vadd.f32 %v9138, 1e-05
  %v9155 = vadd.f32 %v9139, 1e-05
  %v9156 = vadd.f32 %v9140, 1e-05
  %v9157 = vadd.f32 %v9141, 1e-05
  %v9158 = vadd.f32 %v9142, 1e-05
  %v9159 = vadd.f32 %v9143, 1e-05
  %v9160 = vadd.f32 %v9144, 1e-05
  %v9161 = vadd.f32 %v9145, 1e-05
  %v9162 = vadd.f32 %v9146, 1e-05
  %v9163 = vadd.f32 %v9147, 1e-05
  %v9164 = vadd.f32 %v9148, 1e-05
  %v9165 = vadd.f32 %v9149, 1e-05
  %v9166 = vadd.f32 %v9150, 1e-05
  %v9167 = vadd.f32 %v9151, 1e-05
  %v9168 = vadd.f32 %v9152, 1e-05
  %v9169 = vadd.f32 %v9153, 1e-05
  %v9170 = vrsqrt.pop %v9154
  %v9171 = vrsqrt.pop %v9155
  %v9172 = vrsqrt.pop %v9156
  %v9173 = vrsqrt.pop %v9157
  %v9174 = vrsqrt.pop %v9158
  %v9175 = vrsqrt.pop %v9159
  %v9176 = vrsqrt.pop %v9160
  %v9177 = vrsqrt.pop %v9161
  %v9178 = vrsqrt.pop %v9162
  %v9179 = vrsqrt.pop %v9163
  %v9180 = vrsqrt.pop %v9164
  %v9181 = vrsqrt.pop %v9165
  %v9182 = vrsqrt.pop %v9166
  %v9183 = vrsqrt.pop %v9167
  %v9184 = vrsqrt.pop %v9168
  %v9185 = vrsqrt.pop %v9169
  %v9186 = vmul.f32 %v9058, %v9170
  %v9187 = vmul.f32 %v9059, %v9171
  %v9188 = vmul.f32 %v9060, %v9172
  %v9189 = vmul.f32 %v9061, %v9173
  %v9190 = vmul.f32 %v9062, %v9174
  %v9191 = vmul.f32 %v9063, %v9175
  %v9192 = vmul.f32 %v9064, %v9176
  %v9193 = vmul.f32 %v9065, %v9177
  %v9194 = vmul.f32 %v9066, %v9178
  %v9195 = vmul.f32 %v9067, %v9179
  %v9196 = vmul.f32 %v9068, %v9180
  %v9197 = vmul.f32 %v9069, %v9181
  %v9198 = vmul.f32 %v9070, %v9182
  %v9199 = vmul.f32 %v9071, %v9183
  %v9200 = vmul.f32 %v9072, %v9184
  %v9201 = vmul.f32 %v9073, %v9185
  %v9203 = vlaneseq
  %v9204 = vshrl.u32 %v9203, 7
  %v9205 = vsub.s32 0, %v9204
  %v9206 = vrot.slane %v8992, %v9205
  %v9208 = vmul.f32 %v9186, %v9206
  %v9209 = vmul.f32 %v9187, %v9206
  %v9210 = vmul.f32 %v9188, %v9206
  %v9211 = vmul.f32 %v9189, %v9206
  %v9212 = vmul.f32 %v9190, %v9206
  %v9213 = vmul.f32 %v9191, %v9206
  %v9214 = vmul.f32 %v9192, %v9206
  %v9215 = vmul.f32 %v9193, %v9206
  %v9216 = vmul.f32 %v9194, %v9206
  %v9217 = vmul.f32 %v9195, %v9206
  %v9218 = vmul.f32 %v9196, %v9206
  %v9219 = vmul.f32 %v9197, %v9206
  %v9220 = vmul.f32 %v9198, %v9206
  %v9221 = vmul.f32 %v9199, %v9206
  %v9222 = vmul.f32 %v9200, %v9206
  %v9223 = vmul.f32 %v9201, %v9206
  %v9225 = vlaneseq
  %v9226 = vshrl.u32 %v9225, 7
  %v9227 = vsub.s32 0, %v9226
  %v9228 = vrot.slane %v8993, %v9227
  %v9230 = vadd.f32 %v9208, %v9228
  %v9231 = vadd.f32 %v9209, %v9228
  %v9232 = vadd.f32 %v9210, %v9228
  %v9233 = vadd.f32 %v9211, %v9228
  %v9234 = vadd.f32 %v9212, %v9228
  %v9235 = vadd.f32 %v9213, %v9228
  %v9236 = vadd.f32 %v9214, %v9228
  %v9237 = vadd.f32 %v9215, %v9228
  %v9238 = vadd.f32 %v9216, %v9228
  %v9239 = vadd.f32 %v9217, %v9228
  %v9240 = vadd.f32 %v9218, %v9228
  %v9241 = vadd.f32 %v9219, %v9228
  %v9242 = vadd.f32 %v9220, %v9228
  %v9243 = vadd.f32 %v9221, %v9228
  %v9244 = vadd.f32 %v9222, %v9228
  %v9245 = vadd.f32 %v9223, %v9228
  %v9246 = vadd.f32 %v6688, 0.0
  %v9247 = vld [vmem:[%s3881] sm:$0xff]
  %v9248 = vld [vmem:[%s3881 + $0x8] sm:$0xff]
  %v9249 = vld [vmem:[%s3881 + $0x10] sm:$0xff]
  %v9250 = vld [vmem:[%s3881 + $0x18] sm:$0xff]
  %v9251 = vld [vmem:[%s3886] sm:$0x1]
  %v9253 = vlaneseq
  %v9254 = vshrl.u32 %v9253, 7
  %v9255 = vsub.s32 0, %v9254
  %v9256 = vrot.slane %v9251, %v9255
  %v9259 = vsel %vm186, %v9246, 0
  %9261 = vmatprep.subr.mxu0 0.0
  %9262 = vmatpush1.msra.mxu0 %v9247
  %9263 = vmatprep.subr.mxu0 0.0
  %9264 = vmatpush1.msra.mxu0 %v9248
  %9265 = vmatprep.subr.mxu0 0.0
  %9266 = vmatpush1.msra.mxu0 %v9249
  %9267 = vmatprep.subr.mxu0 0.0
  %9268 = vmatpush1.msra.mxu0 %v9250
  %9269 = vmatprep.subr.mxu0 0.0
  %9270 = vmatpush1.msra.mxu0 0.0
  %9271 = vmatprep.subr.mxu0 0.0
  %9272 = vmatpush1.msra.mxu0 0.0
  %9273 = vmatprep.subr.mxu0 0.0
  %9274 = vmatpush1.msra.mxu0 0.0
  %9275 = vmatprep.subr.mxu0 0.0
  %9276 = vmatpush1.msra.mxu0 0.0
  %9277 = vmatprep.subr.mxu0 0.0
  %9278 = vmatpush1.msra.mxu0 0.0
  %9279 = vmatprep.subr.mxu0 0.0
  %9280 = vmatpush1.msra.mxu0 0.0
  %9281 = vmatprep.subr.mxu0 0.0
  %9282 = vmatpush1.msra.mxu0 0.0
  %9283 = vmatprep.subr.mxu0 0.0
  %9284 = vmatpush1.msra.mxu0 0.0
  %9285 = vmatprep.subr.mxu0 0.0
  %9286 = vmatpush1.msra.mxu0 0.0
  %9287 = vmatprep.subr.mxu0 0.0
  %9288 = vmatpush1.msra.mxu0 0.0
  %9289 = vmatprep.subr.mxu0 0.0
  %9290 = vmatpush1.msra.mxu0 0.0
  %9291 = vmatprep.subr.mxu0 0.0
  %9292 = vmatpush1.msra.mxu0 0.0
  %9293 = vmatprep.subr.mxu0 0.0
  %9294 = vmatpush1.msra.mxu0 0.0
  %9295 = vmatprep.subr.mxu0 0.0
  %9296 = vmatpush1.msra.mxu0 0.0
  %9297 = vmatprep.subr.mxu0 0.0
  %9298 = vmatpush1.msra.mxu0 0.0
  %9299 = vmatprep.subr.mxu0 0.0
  %9300 = vmatpush1.msra.mxu0 0.0
  %9301 = vmatprep.subr.mxu0 0.0
  %9302 = vmatpush1.msra.mxu0 0.0
  %9303 = vmatprep.subr.mxu0 0.0
  %9304 = vmatpush1.msra.mxu0 0.0
  %9305 = vmatprep.subr.mxu0 0.0
  %9306 = vmatpush1.msra.mxu0 0.0
  %9307 = vmatprep.subr.mxu0 0.0
  %9308 = vmatpush1.msra.mxu0 0.0
  %9309 = vmatprep.subr.mxu0 0.0
  %9310 = vmatpush1.msra.mxu0 0.0
  %9311 = vmatprep.subr.mxu0 0.0
  %9312 = vmatpush1.msra.mxu0 0.0
  %9313 = vmatprep.subr.mxu0 0.0
  %9314 = vmatpush1.msra.mxu0 0.0
  %9315 = vmatprep.subr.mxu0 0.0
  %9316 = vmatpush1.msra.mxu0 0.0
  %9317 = vmatprep.subr.mxu0 0.0
  %9318 = vmatpush1.msra.mxu0 0.0
  %9319 = vmatprep.subr.mxu0 0.0
  %9320 = vmatpush1.msra.mxu0 0.0
  %9321 = vmatprep.subr.mxu0 0.0
  %9322 = vmatpush1.msra.mxu0 0.0
  %9323 = vmatprep.subr.mxu0 0.0
  %9324 = vmatpush1.msra.mxu0 0.0
  %9325 = vmatprep.mubr.f32.mxu0 0.0
  %9326 = vmatmul.mubr.f32.gmra.mrb[0].mxu0 %v9259
  %v9327 = vpop.f32.mrb[0].mxu0
  %v9328 = vadd.f32 %v9256, %v9327
  %v9329 = vpop.f32.mrb[0].mxu0
  %9330 = vdwg.mxu0
  %v9331 = vld [vmem:[%s3967] sm:$0xff]
  %v9332 = vld [vmem:[%s3967 + $0x8] sm:$0xff]
  %v9333 = vld [vmem:[%s3967 + $0x10] sm:$0xff]
  %v9334 = vld [vmem:[%s3967 + $0x18] sm:$0xff]
  %v9335 = vld [vmem:[%s3972] sm:$0x1]
  %v9337 = vlaneseq
  %v9338 = vshrl.u32 %v9337, 7
  %v9339 = vsub.s32 0, %v9338
  %v9340 = vrot.slane %v9335, %v9339
  %9342 = vmatprep.subr.mxu0 0.0
  %9343 = vmatpush1.msra.mxu0 %v9331
  %9344 = vmatprep.subr.mxu0 0.0
  %9345 = vmatpush1.msra.mxu0 %v9332
  %9346 = vmatprep.subr.mxu0 0.0
  %9347 = vmatpush1.msra.mxu0 %v9333
  %9348 = vmatprep.subr.mxu0 0.0
  %9349 = vmatpush1.msra.mxu0 %v9334
  %9350 = vmatprep.subr.mxu0 0.0
  %9351 = vmatpush1.msra.mxu0 0.0
  %9352 = vmatprep.subr.mxu0 0.0
  %9353 = vmatpush1.msra.mxu0 0.0
  %9354 = vmatprep.subr.mxu0 0.0
  %9355 = vmatpush1.msra.mxu0 0.0
  %9356 = vmatprep.subr.mxu0 0.0
  %9357 = vmatpush1.msra.mxu0 0.0
  %9358 = vmatprep.subr.mxu0 0.0
  %9359 = vmatpush1.msra.mxu0 0.0
  %9360 = vmatprep.subr.mxu0 0.0
  %9361 = vmatpush1.msra.mxu0 0.0
  %9362 = vmatprep.subr.mxu0 0.0
  %9363 = vmatpush1.msra.mxu0 0.0
  %9364 = vmatprep.subr.mxu0 0.0
  %9365 = vmatpush1.msra.mxu0 0.0
  %9366 = vmatprep.subr.mxu0 0.0
  %9367 = vmatpush1.msra.mxu0 0.0
  %9368 = vmatprep.subr.mxu0 0.0
  %9369 = vmatpush1.msra.mxu0 0.0
  %9370 = vmatprep.subr.mxu0 0.0
  %9371 = vmatpush1.msra.mxu0 0.0
  %9372 = vmatprep.subr.mxu0 0.0
  %9373 = vmatpush1.msra.mxu0 0.0
  %9374 = vmatprep.subr.mxu0 0.0
  %9375 = vmatpush1.msra.mxu0 0.0
  %9376 = vmatprep.subr.mxu0 0.0
  %9377 = vmatpush1.msra.mxu0 0.0
  %9378 = vmatprep.subr.mxu0 0.0
  %9379 = vmatpush1.msra.mxu0 0.0
  %9380 = vmatprep.subr.mxu0 0.0
  %9381 = vmatpush1.msra.mxu0 0.0
  %9382 = vmatprep.subr.mxu0 0.0
  %9383 = vmatpush1.msra.mxu0 0.0
  %9384 = vmatprep.subr.mxu0 0.0
  %9385 = vmatpush1.msra.mxu0 0.0
  %9386 = vmatprep.subr.mxu0 0.0
  %9387 = vmatpush1.msra.mxu0 0.0
  %9388 = vmatprep.subr.mxu0 0.0
  %9389 = vmatpush1.msra.mxu0 0.0
  %9390 = vmatprep.subr.mxu0 0.0
  %9391 = vmatpush1.msra.mxu0 0.0
  %9392 = vmatprep.subr.mxu0 0.0
  %9393 = vmatpush1.msra.mxu0 0.0
  %9394 = vmatprep.subr.mxu0 0.0
  %9395 = vmatpush1.msra.mxu0 0.0
  %9396 = vmatprep.subr.mxu0 0.0
  %9397 = vmatpush1.msra.mxu0 0.0
  %9398 = vmatprep.subr.mxu0 0.0
  %9399 = vmatpush1.msra.mxu0 0.0
  %9400 = vmatprep.subr.mxu0 0.0
  %9401 = vmatpush1.msra.mxu0 0.0
  %9402 = vmatprep.subr.mxu0 0.0
  %9403 = vmatpush1.msra.mxu0 0.0
  %9404 = vmatprep.subr.mxu0 0.0
  %9405 = vmatpush1.msra.mxu0 0.0
  %9406 = vmatprep.mubr.f32.mxu0 0.0
  %9407 = vmatmul.mubr.f32.gmra.mrb[0].mxu0 %v9259
  %v9408 = vpop.f32.mrb[0].mxu0
  %v9409 = vadd.f32 %v9340, %v9408
  %v9410 = vpop.f32.mrb[0].mxu0
  %9411 = vdwg.mxu0
  %v9412 = vld [vmem:[%s4050] sm:$0xff]
  %v9413 = vld [vmem:[%s4050 + $0x8] sm:$0xff]
  %v9414 = vld [vmem:[%s4050 + $0x10] sm:$0xff]
  %v9415 = vld [vmem:[%s4050 + $0x18] sm:$0xff]
  %v9416 = vld [vmem:[%s4055] sm:$0x1]
  %v9418 = vlaneseq
  %v9419 = vshrl.u32 %v9418, 7
  %v9420 = vsub.s32 0, %v9419
  %v9421 = vrot.slane %v9416, %v9420
  %9423 = vmatprep.subr.mxu0 0.0
  %9424 = vmatpush1.msra.mxu0 %v9412
  %9425 = vmatprep.subr.mxu0 0.0
  %9426 = vmatpush1.msra.mxu0 %v9413
  %9427 = vmatprep.subr.mxu0 0.0
  %9428 = vmatpush1.msra.mxu0 %v9414
  %9429 = vmatprep.subr.mxu0 0.0
  %9430 = vmatpush1.msra.mxu0 %v9415
  %9431 = vmatprep.subr.mxu0 0.0
  %9432 = vmatpush1.msra.mxu0 0.0
  %9433 = vmatprep.subr.mxu0 0.0
  %9434 = vmatpush1.msra.mxu0 0.0
  %9435 = vmatprep.subr.mxu0 0.0
  %9436 = vmatpush1.msra.mxu0 0.0
  %9437 = vmatprep.subr.mxu0 0.0
  %9438 = vmatpush1.msra.mxu0 0.0
  %9439 = vmatprep.subr.mxu0 0.0
  %9440 = vmatpush1.msra.mxu0 0.0
  %9441 = vmatprep.subr.mxu0 0.0
  %9442 = vmatpush1.msra.mxu0 0.0
  %9443 = vmatprep.subr.mxu0 0.0
  %9444 = vmatpush1.msra.mxu0 0.0
  %9445 = vmatprep.subr.mxu0 0.0
  %9446 = vmatpush1.msra.mxu0 0.0
  %9447 = vmatprep.subr.mxu0 0.0
  %9448 = vmatpush1.msra.mxu0 0.0
  %9449 = vmatprep.subr.mxu0 0.0
  %9450 = vmatpush1.msra.mxu0 0.0
  %9451 = vmatprep.subr.mxu0 0.0
  %9452 = vmatpush1.msra.mxu0 0.0
  %9453 = vmatprep.subr.mxu0 0.0
  %9454 = vmatpush1.msra.mxu0 0.0
  %9455 = vmatprep.subr.mxu0 0.0
  %9456 = vmatpush1.msra.mxu0 0.0
  %9457 = vmatprep.subr.mxu0 0.0
  %9458 = vmatpush1.msra.mxu0 0.0
  %9459 = vmatprep.subr.mxu0 0.0
  %9460 = vmatpush1.msra.mxu0 0.0
  %9461 = vmatprep.subr.mxu0 0.0
  %9462 = vmatpush1.msra.mxu0 0.0
  %9463 = vmatprep.subr.mxu0 0.0
  %9464 = vmatpush1.msra.mxu0 0.0
  %9465 = vmatprep.subr.mxu0 0.0
  %9466 = vmatpush1.msra.mxu0 0.0
  %9467 = vmatprep.subr.mxu0 0.0
  %9468 = vmatpush1.msra.mxu0 0.0
  %9469 = vmatprep.subr.mxu0 0.0
  %9470 = vmatpush1.msra.mxu0 0.0
  %9471 = vmatprep.subr.mxu0 0.0
  %9472 = vmatpush1.msra.mxu0 0.0
  %9473 = vmatprep.subr.mxu0 0.0
  %9474 = vmatpush1.msra.mxu0 0.0
  %9475 = vmatprep.subr.mxu0 0.0
  %9476 = vmatpush1.msra.mxu0 0.0
  %9477 = vmatprep.subr.mxu0 0.0
  %9478 = vmatpush1.msra.mxu0 0.0
  %9479 = vmatprep.subr.mxu0 0.0
  %9480 = vmatpush1.msra.mxu0 0.0
  %9481 = vmatprep.subr.mxu0 0.0
  %9482 = vmatpush1.msra.mxu0 0.0
  %9483 = vmatprep.subr.mxu0 0.0
  %9484 = vmatpush1.msra.mxu0 0.0
  %9485 = vmatprep.subr.mxu0 0.0
  %9486 = vmatpush1.msra.mxu0 0.0
  %9487 = vmatprep.mubr.f32.mxu0 0.0
  %9488 = vmatmul.mubr.f32.gmra.mrb[0].mxu0 %v4064
  %v9489 = vpop.f32.mrb[0].mxu0
  %v9490 = vadd.f32 %v9421, %v9489
  %v9491 = vpop.f32.mrb[0].mxu0
  %9492 = vdwg.mxu0
  %v9494 = vsel %vm186, %v9328, 0
  %v9497 = vsel %vm186, %v9409, 0
  %9499 = vmatprep.subr.mxu0 0.0
  %9500 = vmatpush1.xpose.msra.mxu0 %v9497
  %9501 = vmatprep.subr.mxu0 0.0
  %9502 = vmatpush1.xpose.msra.mxu0 0.0
  %9503 = vmatprep.subr.mxu0 0.0
  %9504 = vmatpush1.xpose.msra.mxu0 0.0
  %9505 = vmatprep.subr.mxu0 0.0
  %9506 = vmatpush1.xpose.msra.mxu0 0.0
  %9507 = vmatprep.subr.mxu0 0.0
  %9508 = vmatpush1.xpose.msra.mxu0 0.0
  %9509 = vmatprep.subr.mxu0 0.0
  %9510 = vmatpush1.xpose.msra.mxu0 0.0
  %9511 = vmatprep.subr.mxu0 0.0
  %9512 = vmatpush1.xpose.msra.mxu0 0.0
  %9513 = vmatprep.subr.mxu0 0.0
  %9514 = vmatpush1.xpose.msra.mxu0 0.0
  %9515 = vmatprep.subr.mxu0 0.0
  %9516 = vmatpush1.xpose.msra.mxu0 0.0
  %9517 = vmatprep.subr.mxu0 0.0
  %9518 = vmatpush1.xpose.msra.mxu0 0.0
  %9519 = vmatprep.subr.mxu0 0.0
  %9520 = vmatpush1.xpose.msra.mxu0 0.0
  %9521 = vmatprep.subr.mxu0 0.0
  %9522 = vmatpush1.xpose.msra.mxu0 0.0
  %9523 = vmatprep.subr.mxu0 0.0
  %9524 = vmatpush1.xpose.msra.mxu0 0.0
  %9525 = vmatprep.subr.mxu0 0.0
  %9526 = vmatpush1.xpose.msra.mxu0 0.0
  %9527 = vmatprep.subr.mxu0 0.0
  %9528 = vmatpush1.xpose.msra.mxu0 0.0
  %9529 = vmatprep.subr.mxu0 0.0
  %9530 = vmatpush1.xpose.msra.mxu0 0.0
  %9531 = vmatprep.subr.mxu0 0.0
  %9532 = vmatpush1.xpose.msra.mxu0 0.0
  %9533 = vmatprep.subr.mxu0 0.0
  %9534 = vmatpush1.xpose.msra.mxu0 0.0
  %9535 = vmatprep.subr.mxu0 0.0
  %9536 = vmatpush1.xpose.msra.mxu0 0.0
  %9537 = vmatprep.subr.mxu0 0.0
  %9538 = vmatpush1.xpose.msra.mxu0 0.0
  %9539 = vmatprep.subr.mxu0 0.0
  %9540 = vmatpush1.xpose.msra.mxu0 0.0
  %9541 = vmatprep.subr.mxu0 0.0
  %9542 = vmatpush1.xpose.msra.mxu0 0.0
  %9543 = vmatprep.subr.mxu0 0.0
  %9544 = vmatpush1.xpose.msra.mxu0 0.0
  %9545 = vmatprep.subr.mxu0 0.0
  %9546 = vmatpush1.xpose.msra.mxu0 0.0
  %9547 = vmatprep.subr.mxu0 0.0
  %9548 = vmatpush1.xpose.msra.mxu0 0.0
  %9549 = vmatprep.subr.mxu0 0.0
  %9550 = vmatpush1.xpose.msra.mxu0 0.0
  %9551 = vmatprep.subr.mxu0 0.0
  %9552 = vmatpush1.xpose.msra.mxu0 0.0
  %9553 = vmatprep.subr.mxu0 0.0
  %9554 = vmatpush1.xpose.msra.mxu0 0.0
  %9555 = vmatprep.subr.mxu0 0.0
  %9556 = vmatpush1.xpose.msra.mxu0 0.0
  %9557 = vmatprep.subr.mxu0 0.0
  %9558 = vmatpush1.xpose.msra.mxu0 0.0
  %9559 = vmatprep.subr.mxu0 0.0
  %9560 = vmatpush1.xpose.msra.mxu0 0.0
  %9561 = vmatprep.subr.mxu0 0.0
  %9562 = vmatpush1.xpose.msra.mxu0 0.0
  %9563 = vmatprep.mubr.f32.mxu0 0.0
  %9564 = vmatmul.mubr.f32.gmra.mrb[0].mxu0 %v9494
  %v9565 = vpop.f32.mrb[0].mxu0
  %v9566 = vadd.f32 0.0, %v9565
  %v9567 = vpop.f32.mrb[0].mxu0
  %9568 = vdwg.mxu0
  %v9569 = vmul.f32 %v9566, 0.17677669
  %v9570 = vadd.f32 %v9569, 0.0
  %v9571 = vsel %vm1112, %v9570, -inf
  %9572 = vmax.xlane.f32.xlu0 %v9571
  %v9573 = vpop.xlane.xlu0 %9572
  %v9574 = vsub.f32 %v9570, %v9573
  %v9575 = vmul.f32 %v9574, 1.442695
  %v9576 = vpow.pop %v9575
  %v9577 = vsel %vm1112, %v9576, 0.0
  %9578 = vadd.xlane.f32.xlu0 %v9577
  %v9579 = vpop.xlane.xlu0 %9578
  %v9580 = vrcp.pop %v9579
  %v9581 = vmul.f32 %v9576, %v9580
  %v9583 = vsel %vm1112, %v9581, 0
  %9585 = vmatprep.subr.mxu0 0.0
  %9586 = vmatpush1.msra.mxu0 %v9490
  %9587 = vmatprep.subr.mxu0 0.0
  %9588 = vmatpush1.msra.mxu0 0.0
  %9589 = vmatprep.subr.mxu0 0.0
  %9590 = vmatpush1.msra.mxu0 0.0
  %9591 = vmatprep.subr.mxu0 0.0
  %9592 = vmatpush1.msra.mxu0 0.0
  %9593 = vmatprep.subr.mxu0 0.0
  %9594 = vmatpush1.msra.mxu0 0.0
  %9595 = vmatprep.subr.mxu0 0.0
  %9596 = vmatpush1.msra.mxu0 0.0
  %9597 = vmatprep.subr.mxu0 0.0
  %9598 = vmatpush1.msra.mxu0 0.0
  %9599 = vmatprep.subr.mxu0 0.0
  %9600 = vmatpush1.msra.mxu0 0.0
  %9601 = vmatprep.subr.mxu0 0.0
  %9602 = vmatpush1.msra.mxu0 0.0
  %9603 = vmatprep.subr.mxu0 0.0
  %9604 = vmatpush1.msra.mxu0 0.0
  %9605 = vmatprep.subr.mxu0 0.0
  %9606 = vmatpush1.msra.mxu0 0.0
  %9607 = vmatprep.subr.mxu0 0.0
  %9608 = vmatpush1.msra.mxu0 0.0
  %9609 = vmatprep.subr.mxu0 0.0
  %9610 = vmatpush1.msra.mxu0 0.0
  %9611 = vmatprep.subr.mxu0 0.0
  %9612 = vmatpush1.msra.mxu0 0.0
  %9613 = vmatprep.subr.mxu0 0.0
  %9614 = vmatpush1.msra.mxu0 0.0
  %9615 = vmatprep.subr.mxu0 0.0
  %9616 = vmatpush1.msra.mxu0 0.0
  %9617 = vmatprep.subr.mxu0 0.0
  %9618 = vmatpush1.msra.mxu0 0.0
  %9619 = vmatprep.subr.mxu0 0.0
  %9620 = vmatpush1.msra.mxu0 0.0
  %9621 = vmatprep.subr.mxu0 0.0
  %9622 = vmatpush1.msra.mxu0 0.0
  %9623 = vmatprep.subr.mxu0 0.0
  %9624 = vmatpush1.msra.mxu0 0.0
  %9625 = vmatprep.subr.mxu0 0.0
  %9626 = vmatpush1.msra.mxu0 0.0
  %9627 = vmatprep.subr.mxu0 0.0
  %9628 = vmatpush1.msra.mxu0 0.0
  %9629 = vmatprep.subr.mxu0 0.0
  %9630 = vmatpush1.msra.mxu0 0.0
  %9631 = vmatprep.subr.mxu0 0.0
  %9632 = vmatpush1.msra.mxu0 0.0
  %9633 = vmatprep.subr.mxu0 0.0
  %9634 = vmatpush1.msra.mxu0 0.0
  %9635 = vmatprep.subr.mxu0 0.0
  %9636 = vmatpush1.msra.mxu0 0.0
  %9637 = vmatprep.subr.mxu0 0.0
  %9638 = vmatpush1.msra.mxu0 0.0
  %9639 = vmatprep.subr.mxu0 0.0
  %9640 = vmatpush1.msra.mxu0 0.0
  %9641 = vmatprep.subr.mxu0 0.0
  %9642 = vmatpush1.msra.mxu0 0.0
  %9643 = vmatprep.subr.mxu0 0.0
  %9644 = vmatpush1.msra.mxu0 0.0
  %9645 = vmatprep.subr.mxu0 0.0
  %9646 = vmatpush1.msra.mxu0 0.0
  %9647 = vmatprep.subr.mxu0 0.0
  %9648 = vmatpush1.msra.mxu0 0.0
  %9649 = vmatprep.mubr.f32.mxu0 0.0
  %9650 = vmatmul.mubr.f32.gmra.mrb[0].mxu0 %v9583
  %v9651 = vpop.f32.mrb[0].mxu0
  %v9652 = vadd.f32 0.0, %v9651
  %v9653 = vpop.f32.mrb[0].mxu0
  %9654 = vdwg.mxu0
  %v9655 = vld [vmem:[%s4298] sm:$0xff]
  %v9656 = vld [vmem:[%s4298 + $0x8] sm:$0xff]
  %v9657 = vld [vmem:[%s4298 + $0x10] sm:$0xff]
  %v9658 = vld [vmem:[%s4298 + $0x18] sm:$0xff]
  %v9659 = vld [vmem:[%s4303] sm:$0x1]
  %v9661 = vlaneseq
  %v9662 = vshrl.u32 %v9661, 7
  %v9663 = vsub.s32 0, %v9662
  %v9664 = vrot.slane %v9659, %v9663
  %v9667 = vsel %vm186, %v9652, 0
  %9669 = vmatprep.subr.mxu0 0.0
  %9670 = vmatpush1.msra.mxu0 %v9655
  %9671 = vmatprep.subr.mxu0 0.0
  %9672 = vmatpush1.msra.mxu0 %v9656
  %9673 = vmatprep.subr.mxu0 0.0
  %9674 = vmatpush1.msra.mxu0 %v9657
  %9675 = vmatprep.subr.mxu0 0.0
  %9676 = vmatpush1.msra.mxu0 %v9658
  %9677 = vmatprep.subr.mxu0 0.0
  %9678 = vmatpush1.msra.mxu0 0.0
  %9679 = vmatprep.subr.mxu0 0.0
  %9680 = vmatpush1.msra.mxu0 0.0
  %9681 = vmatprep.subr.mxu0 0.0
  %9682 = vmatpush1.msra.mxu0 0.0
  %9683 = vmatprep.subr.mxu0 0.0
  %9684 = vmatpush1.msra.mxu0 0.0
  %9685 = vmatprep.subr.mxu0 0.0
  %9686 = vmatpush1.msra.mxu0 0.0
  %9687 = vmatprep.subr.mxu0 0.0
  %9688 = vmatpush1.msra.mxu0 0.0
  %9689 = vmatprep.subr.mxu0 0.0
  %9690 = vmatpush1.msra.mxu0 0.0
  %9691 = vmatprep.subr.mxu0 0.0
  %9692 = vmatpush1.msra.mxu0 0.0
  %9693 = vmatprep.subr.mxu0 0.0
  %9694 = vmatpush1.msra.mxu0 0.0
  %9695 = vmatprep.subr.mxu0 0.0
  %9696 = vmatpush1.msra.mxu0 0.0
  %9697 = vmatprep.subr.mxu0 0.0
  %9698 = vmatpush1.msra.mxu0 0.0
  %9699 = vmatprep.subr.mxu0 0.0
  %9700 = vmatpush1.msra.mxu0 0.0
  %9701 = vmatprep.subr.mxu0 0.0
  %9702 = vmatpush1.msra.mxu0 0.0
  %9703 = vmatprep.subr.mxu0 0.0
  %9704 = vmatpush1.msra.mxu0 0.0
  %9705 = vmatprep.subr.mxu0 0.0
  %9706 = vmatpush1.msra.mxu0 0.0
  %9707 = vmatprep.subr.mxu0 0.0
  %9708 = vmatpush1.msra.mxu0 0.0
  %9709 = vmatprep.subr.mxu0 0.0
  %9710 = vmatpush1.msra.mxu0 0.0
  %9711 = vmatprep.subr.mxu0 0.0
  %9712 = vmatpush1.msra.mxu0 0.0
  %9713 = vmatprep.subr.mxu0 0.0
  %9714 = vmatpush1.msra.mxu0 0.0
  %9715 = vmatprep.subr.mxu0 0.0
  %9716 = vmatpush1.msra.mxu0 0.0
  %9717 = vmatprep.subr.mxu0 0.0
  %9718 = vmatpush1.msra.mxu0 0.0
  %9719 = vmatprep.subr.mxu0 0.0
  %9720 = vmatpush1.msra.mxu0 0.0
  %9721 = vmatprep.subr.mxu0 0.0
  %9722 = vmatpush1.msra.mxu0 0.0
  %9723 = vmatprep.subr.mxu0 0.0
  %9724 = vmatpush1.msra.mxu0 0.0
  %9725 = vmatprep.subr.mxu0 0.0
  %9726 = vmatpush1.msra.mxu0 0.0
  %9727 = vmatprep.subr.mxu0 0.0
  %9728 = vmatpush1.msra.mxu0 0.0
  %9729 = vmatprep.subr.mxu0 0.0
  %9730 = vmatpush1.msra.mxu0 0.0
  %9731 = vmatprep.subr.mxu0 0.0
  %9732 = vmatpush1.msra.mxu0 0.0
  %9733 = vmatprep.mubr.f32.mxu0 0.0
  %9734 = vmatmul.mubr.f32.gmra.mrb[0].mxu0 %v9667
  %v9735 = vpop.f32.mrb[0].mxu0
  %v9736 = vadd.f32 %v9664, %v9735
  %v9737 = vpop.f32.mrb[0].mxu0
  %9738 = vdwg.mxu0
  %v9739 = vadd.f32 %v9736, 0.0
  %v9740 = vld [vmem:[%s4385] sm:$0x1]
  %v9741 = vld [vmem:[%s4387] sm:$0x1]
  %v9742 = vsel %vm186, %v9739, 0.0
  %9743 = vadd.xlane.f32.xlu0 %v9742
  %v9744 = vpop.xlane.xlu0 %9743
  %v9745 = vmul.f32 %v9744, %v755
  %v9746 = vsub.f32 %v9739, %v9745
  %v9747 = vmul.f32 %v9746, %v9746
  %v9748 = vsel %vm186, %v9747, 0.0
  %9749 = vadd.xlane.f32.xlu0 %v9748
  %v9750 = vpop.xlane.xlu0 %9749
  %v9751 = vmul.f32 %v9750, %v755
  %v9752 = vadd.f32 %v9751, 1e-05
  %v9753 = vrsqrt.pop %v9752
  %v9754 = vmul.f32 %v9746, %v9753
  %v9756 = vlaneseq
  %v9757 = vshrl.u32 %v9756, 7
  %v9758 = vsub.s32 0, %v9757
  %v9759 = vrot.slane %v9740, %v9758
  %v9761 = vmul.f32 %v9754, %v9759
  %v9763 = vlaneseq
  %v9764 = vshrl.u32 %v9763, 7
  %v9765 = vsub.s32 0, %v9764
  %v9766 = vrot.slane %v9741, %v9765
  %v9768 = vadd.f32 %v9761, %v9766
  %v9769 = vadd.f32 %v9768, %v6688
  %v9770 = vadd.f32 %v9230, %v6672
  %v9771 = vadd.f32 %v9231, %v6673
  %v9772 = vadd.f32 %v9232, %v6674
  %v9773 = vadd.f32 %v9233, %v6675
  %v9774 = vadd.f32 %v9234, %v6676
  %v9775 = vadd.f32 %v9235, %v6677
  %v9776 = vadd.f32 %v9236, %v6678
  %v9777 = vadd.f32 %v9237, %v6679
  %v9778 = vadd.f32 %v9238, %v6680
  %v9779 = vadd.f32 %v9239, %v6681
  %v9780 = vadd.f32 %v9240, %v6682
  %v9781 = vadd.f32 %v9241, %v6683
  %v9782 = vadd.f32 %v9242, %v6684
  %v9783 = vadd.f32 %v9243, %v6685
  %v9784 = vadd.f32 %v9244, %v6686
  %v9785 = vadd.f32 %v9245, %v6687
  %v9786 = vld [vmem:[%s4433] sm:$0xff]
  %v9787 = vld [vmem:[%s4433 + $0x8] sm:$0xff]
  %v9788 = vld [vmem:[%s4433 + $0x10] sm:$0xff]
  %v9789 = vld [vmem:[%s4433 + $0x18] sm:$0xff]
  %v9790 = vld [vmem:[%s4438] sm:$0x1]
  %v9792 = vlaneseq
  %v9793 = vshrl.u32 %v9792, 7
  %v9794 = vsub.s32 0, %v9793
  %v9795 = vrot.slane %v9790, %v9794
  %v9798 = vsel %vm186, %v9769, 0
  %9800 = vmatprep.subr.mxu0 0.0
  %9801 = vmatpush1.msra.mxu0 %v9786
  %9802 = vmatprep.subr.mxu0 0.0
  %9803 = vmatpush1.msra.mxu0 %v9787
  %9804 = vmatprep.subr.mxu0 0.0
  %9805 = vmatpush1.msra.mxu0 %v9788
  %9806 = vmatprep.subr.mxu0 0.0
  %9807 = vmatpush1.msra.mxu0 %v9789
  %9808 = vmatprep.subr.mxu0 0.0
  %9809 = vmatpush1.msra.mxu0 0.0
  %9810 = vmatprep.subr.mxu0 0.0
  %9811 = vmatpush1.msra.mxu0 0.0
  %9812 = vmatprep.subr.mxu0 0.0
  %9813 = vmatpush1.msra.mxu0 0.0
  %9814 = vmatprep.subr.mxu0 0.0
  %9815 = vmatpush1.msra.mxu0 0.0
  %9816 = vmatprep.subr.mxu0 0.0
  %9817 = vmatpush1.msra.mxu0 0.0
  %9818 = vmatprep.subr.mxu0 0.0
  %9819 = vmatpush1.msra.mxu0 0.0
  %9820 = vmatprep.subr.mxu0 0.0
  %9821 = vmatpush1.msra.mxu0 0.0
  %9822 = vmatprep.subr.mxu0 0.0
  %9823 = vmatpush1.msra.mxu0 0.0
  %9824 = vmatprep.subr.mxu0 0.0
  %9825 = vmatpush1.msra.mxu0 0.0
  %9826 = vmatprep.subr.mxu0 0.0
  %9827 = vmatpush1.msra.mxu0 0.0
  %9828 = vmatprep.subr.mxu0 0.0
  %9829 = vmatpush1.msra.mxu0 0.0
  %9830 = vmatprep.subr.mxu0 0.0
  %9831 = vmatpush1.msra.mxu0 0.0
  %9832 = vmatprep.subr.mxu0 0.0
  %9833 = vmatpush1.msra.mxu0 0.0
  %9834 = vmatprep.subr.mxu0 0.0
  %9835 = vmatpush1.msra.mxu0 0.0
  %9836 = vmatprep.subr.mxu0 0.0
  %9837 = vmatpush1.msra.mxu0 0.0
  %9838 = vmatprep.subr.mxu0 0.0
  %9839 = vmatpush1.msra.mxu0 0.0
  %9840 = vmatprep.subr.mxu0 0.0
  %9841 = vmatpush1.msra.mxu0 0.0
  %9842 = vmatprep.subr.mxu0 0.0
  %9843 = vmatpush1.msra.mxu0 0.0
  %9844 = vmatprep.subr.mxu0 0.0
  %9845 = vmatpush1.msra.mxu0 0.0
  %9846 = vmatprep.subr.mxu0 0.0
  %9847 = vmatpush1.msra.mxu0 0.0
  %9848 = vmatprep.subr.mxu0 0.0
  %9849 = vmatpush1.msra.mxu0 0.0
  %9850 = vmatprep.subr.mxu0 0.0
  %9851 = vmatpush1.msra.mxu0 0.0
  %9852 = vmatprep.subr.mxu0 0.0
  %9853 = vmatpush1.msra.mxu0 0.0
  %9854 = vmatprep.subr.mxu0 0.0
  %9855 = vmatpush1.msra.mxu0 0.0
  %9856 = vmatprep.subr.mxu0 0.0
  %9857 = vmatpush1.msra.mxu0 0.0
  %9858 = vmatprep.subr.mxu0 0.0
  %9859 = vmatpush1.msra.mxu0 0.0
  %9860 = vmatprep.subr.mxu0 0.0
  %9861 = vmatpush1.msra.mxu0 0.0
  %9862 = vmatprep.subr.mxu0 0.0
  %9863 = vmatpush1.msra.mxu0 0.0
  %9864 = vmatprep.mubr.f32.mxu0 0.0
  %9865 = vmatmul.mubr.f32.gmra.mrb[0].mxu0 %v9798
  %v9866 = vpop.f32.mrb[0].mxu0
  %v9867 = vadd.f32 %v9795, %v9866
  %v9868 = vpop.f32.mrb[0].mxu0
  %9869 = vdwg.mxu0
  %v9870 = vld [vmem:[%s4519] sm:$0xff]
  %v9871 = vld [vmem:[%s4519 + $0x8] sm:$0xff]
  %v9872 = vld [vmem:[%s4519 + $0x10] sm:$0xff]
  %v9873 = vld [vmem:[%s4519 + $0x18] sm:$0xff]
  %v9874 = vld [vmem:[%s4524] sm:$0x1]
  %v9876 = vlaneseq
  %v9877 = vshrl.u32 %v9876, 7
  %v9878 = vsub.s32 0, %v9877
  %v9879 = vrot.slane %v9874, %v9878
  %v9882 = vsel %vm186, %v9770, 0
  %v9885 = vsel %vm186, %v9771, 0
  %v9888 = vsel %vm186, %v9772, 0
  %v9891 = vsel %vm186, %v9773, 0
  %v9894 = vsel %vm186, %v9774, 0
  %v9897 = vsel %vm186, %v9775, 0
  %v9900 = vsel %vm186, %v9776, 0
  %v9903 = vsel %vm186, %v9777, 0
  %v9906 = vsel %vm186, %v9778, 0
  %v9909 = vsel %vm186, %v9779, 0
  %v9912 = vsel %vm186, %v9780, 0
  %v9915 = vsel %vm186, %v9781, 0
  %v9918 = vsel %vm186, %v9782, 0
  %v9921 = vsel %vm186, %v9783, 0
  %v9924 = vsel %vm186, %v9784, 0
  %v9927 = vsel %vm186, %v9785, 0
  %9929 = vmatprep.subr.mxu0 0.0
  %9930 = vmatpush1.msra.mxu0 %v9870
  %9931 = vmatprep.subr.mxu0 0.0
  %9932 = vmatpush1.msra.mxu0 %v9871
  %9933 = vmatprep.subr.mxu0 0.0
  %9934 = vmatpush1.msra.mxu0 %v9872
  %9935 = vmatprep.subr.mxu0 0.0
  %9936 = vmatpush1.msra.mxu0 %v9873
  %9937 = vmatprep.subr.mxu0 0.0
  %9938 = vmatpush1.msra.mxu0 0.0
  %9939 = vmatprep.subr.mxu0 0.0
  %9940 = vmatpush1.msra.mxu0 0.0
  %9941 = vmatprep.subr.mxu0 0.0
  %9942 = vmatpush1.msra.mxu0 0.0
  %9943 = vmatprep.subr.mxu0 0.0
  %9944 = vmatpush1.msra.mxu0 0.0
  %9945 = vmatprep.subr.mxu0 0.0
  %9946 = vmatpush1.msra.mxu0 0.0
  %9947 = vmatprep.subr.mxu0 0.0
  %9948 = vmatpush1.msra.mxu0 0.0
  %9949 = vmatprep.subr.mxu0 0.0
  %9950 = vmatpush1.msra.mxu0 0.0
  %9951 = vmatprep.subr.mxu0 0.0
  %9952 = vmatpush1.msra.mxu0 0.0
  %9953 = vmatprep.subr.mxu0 0.0
  %9954 = vmatpush1.msra.mxu0 0.0
  %9955 = vmatprep.subr.mxu0 0.0
  %9956 = vmatpush1.msra.mxu0 0.0
  %9957 = vmatprep.subr.mxu0 0.0
  %9958 = vmatpush1.msra.mxu0 0.0
  %9959 = vmatprep.subr.mxu0 0.0
  %9960 = vmatpush1.msra.mxu0 0.0
  %9961 = vmatprep.subr.mxu0 0.0
  %9962 = vmatpush1.msra.mxu0 0.0
  %9963 = vmatprep.subr.mxu0 0.0
  %9964 = vmatpush1.msra.mxu0 0.0
  %9965 = vmatprep.subr.mxu0 0.0
  %9966 = vmatpush1.msra.mxu0 0.0
  %9967 = vmatprep.subr.mxu0 0.0
  %9968 = vmatpush1.msra.mxu0 0.0
  %9969 = vmatprep.subr.mxu0 0.0
  %9970 = vmatpush1.msra.mxu0 0.0
  %9971 = vmatprep.subr.mxu0 0.0
  %9972 = vmatpush1.msra.mxu0 0.0
  %9973 = vmatprep.subr.mxu0 0.0
  %9974 = vmatpush1.msra.mxu0 0.0
  %9975 = vmatprep.subr.mxu0 0.0
  %9976 = vmatpush1.msra.mxu0 0.0
  %9977 = vmatprep.subr.mxu0 0.0
  %9978 = vmatpush1.msra.mxu0 0.0
  %9979 = vmatprep.subr.mxu0 0.0
  %9980 = vmatpush1.msra.mxu0 0.0
  %9981 = vmatprep.subr.mxu0 0.0
  %9982 = vmatpush1.msra.mxu0 0.0
  %9983 = vmatprep.subr.mxu0 0.0
  %9984 = vmatpush1.msra.mxu0 0.0
  %9985 = vmatprep.subr.mxu0 0.0
  %9986 = vmatpush1.msra.mxu0 0.0
  %9987 = vmatprep.subr.mxu0 0.0
  %9988 = vmatpush1.msra.mxu0 0.0
  %9989 = vmatprep.subr.mxu0 0.0
  %9990 = vmatpush1.msra.mxu0 0.0
  %9991 = vmatprep.subr.mxu0 0.0
  %9992 = vmatpush1.msra.mxu0 0.0
  %9993 = vmatprep.mubr.f32.mxu0 0.0
  %9994 = vmatmul.mubr.f32.gmra.mrb[0].mxu0 %v9882
  %v9995 = vpop.f32.mrb[0].mxu0
  %v9996 = vadd.f32 %v9879, %v9995
  %v9997 = vpop.f32.mrb[0].mxu0
  %9998 = vmatprep.mubr.f32.mxu0 0.0
  %9999 = vmatmul.mubr.f32.gmra.mrb[0].mxu0 %v9885
  %v10000 = vpop.f32.mrb[0].mxu0
  %v10001 = vadd.f32 %v9879, %v10000
  %v10002 = vpop.f32.mrb[0].mxu0
  %10003 = vmatprep.mubr.f32.mxu0 0.0
  %10004 = vmatmul.mubr.f32.gmra.mrb[0].mxu0 %v9888
  %v10005 = vpop.f32.mrb[0].mxu0
  %v10006 = vadd.f32 %v9879, %v10005
  %v10007 = vpop.f32.mrb[0].mxu0
  %10008 = vmatprep.mubr.f32.mxu0 0.0
  %10009 = vmatmul.mubr.f32.gmra.mrb[0].mxu0 %v9891
  %v10010 = vpop.f32.mrb[0].mxu0
  %v10011 = vadd.f32 %v9879, %v10010
  %v10012 = vpop.f32.mrb[0].mxu0
  %10013 = vmatprep.mubr.f32.mxu0 0.0
  %10014 = vmatmul.mubr.f32.gmra.mrb[0].mxu0 %v9894
  %v10015 = vpop.f32.mrb[0].mxu0
  %v10016 = vadd.f32 %v9879, %v10015
  %v10017 = vpop.f32.mrb[0].mxu0
  %10018 = vmatprep.mubr.f32.mxu0 0.0
  %10019 = vmatmul.mubr.f32.gmra.mrb[0].mxu0 %v9897
  %v10020 = vpop.f32.mrb[0].mxu0
  %v10021 = vadd.f32 %v9879, %v10020
  %v10022 = vpop.f32.mrb[0].mxu0
  %10023 = vmatprep.mubr.f32.mxu0 0.0
  %10024 = vmatmul.mubr.f32.gmra.mrb[0].mxu0 %v9900
  %v10025 = vpop.f32.mrb[0].mxu0
  %v10026 = vadd.f32 %v9879, %v10025
  %v10027 = vpop.f32.mrb[0].mxu0
  %10028 = vmatprep.mubr.f32.mxu0 0.0
  %10029 = vmatmul.mubr.f32.gmra.mrb[0].mxu0 %v9903
  %v10030 = vpop.f32.mrb[0].mxu0
  %v10031 = vadd.f32 %v9879, %v10030
  %v10032 = vpop.f32.mrb[0].mxu0
  %10033 = vmatprep.mubr.f32.mxu0 0.0
  %10034 = vmatmul.mubr.f32.gmra.mrb[0].mxu0 %v9906
  %v10035 = vpop.f32.mrb[0].mxu0
  %v10036 = vadd.f32 %v9879, %v10035
  %v10037 = vpop.f32.mrb[0].mxu0
  %10038 = vmatprep.mubr.f32.mxu0 0.0
  %10039 = vmatmul.mubr.f32.gmra.mrb[0].mxu0 %v9909
  %v10040 = vpop.f32.mrb[0].mxu0
  %v10041 = vadd.f32 %v9879, %v10040
  %v10042 = vpop.f32.mrb[0].mxu0
  %10043 = vmatprep.mubr.f32.mxu0 0.0
  %10044 = vmatmul.mubr.f32.gmra.mrb[0].mxu0 %v9912
  %v10045 = vpop.f32.mrb[0].mxu0
  %v10046 = vadd.f32 %v9879, %v10045
  %v10047 = vpop.f32.mrb[0].mxu0
  %10048 = vmatprep.mubr.f32.mxu0 0.0
  %10049 = vmatmul.mubr.f32.gmra.mrb[0].mxu0 %v9915
  %v10050 = vpop.f32.mrb[0].mxu0
  %v10051 = vadd.f32 %v9879, %v10050
  %v10052 = vpop.f32.mrb[0].mxu0
  %10053 = vmatprep.mubr.f32.mxu0 0.0
  %10054 = vmatmul.mubr.f32.gmra.mrb[0].mxu0 %v9918
  %v10055 = vpop.f32.mrb[0].mxu0
  %v10056 = vadd.f32 %v9879, %v10055
  %v10057 = vpop.f32.mrb[0].mxu0
  %10058 = vmatprep.mubr.f32.mxu0 0.0
  %10059 = vmatmul.mubr.f32.gmra.mrb[0].mxu0 %v9921
  %v10060 = vpop.f32.mrb[0].mxu0
  %v10061 = vadd.f32 %v9879, %v10060
  %v10062 = vpop.f32.mrb[0].mxu0
  %10063 = vmatprep.mubr.f32.mxu0 0.0
  %10064 = vmatmul.mubr.f32.gmra.mrb[0].mxu0 %v9924
  %v10065 = vpop.f32.mrb[0].mxu0
  %v10066 = vadd.f32 %v9879, %v10065
  %v10067 = vpop.f32.mrb[0].mxu0
  %10068 = vmatprep.mubr.f32.mxu0 0.0
  %10069 = vmatmul.mubr.f32.gmra.mrb[0].mxu0 %v9927
  %v10070 = vpop.f32.mrb[0].mxu0
  %v10071 = vadd.f32 %v9879, %v10070
  %v10072 = vpop.f32.mrb[0].mxu0
  %10073 = vdwg.mxu0
  %v10074 = vld [vmem:[%s4725] sm:$0xff]
  %v10075 = vld [vmem:[%s4725 + $0x8] sm:$0xff]
  %v10076 = vld [vmem:[%s4725 + $0x10] sm:$0xff]
  %v10077 = vld [vmem:[%s4725 + $0x18] sm:$0xff]
  %v10078 = vld [vmem:[%s4730] sm:$0x1]
  %v10080 = vlaneseq
  %v10081 = vshrl.u32 %v10080, 7
  %v10082 = vsub.s32 0, %v10081
  %v10083 = vrot.slane %v10078, %v10082
  %v10086 = vsel %vm186, %v9230, 0
  %v10089 = vsel %vm186, %v9231, 0
  %v10092 = vsel %vm186, %v9232, 0
  %v10095 = vsel %vm186, %v9233, 0
  %v10098 = vsel %vm186, %v9234, 0
  %v10101 = vsel %vm186, %v9235, 0
  %v10104 = vsel %vm186, %v9236, 0
  %v10107 = vsel %vm186, %v9237, 0
  %v10110 = vsel %vm186, %v9238, 0
  %v10113 = vsel %vm186, %v9239, 0
  %v10116 = vsel %vm186, %v9240, 0
  %v10119 = vsel %vm186, %v9241, 0
  %v10122 = vsel %vm186, %v9242, 0
  %v10125 = vsel %vm186, %v9243, 0
  %v10128 = vsel %vm186, %v9244, 0
  %v10131 = vsel %vm186, %v9245, 0
  %10133 = vmatprep.subr.mxu0 0.0
  %10134 = vmatpush1.msra.mxu0 %v10074
  %10135 = vmatprep.subr.mxu0 0.0
  %10136 = vmatpush1.msra.mxu0 %v10075
  %10137 = vmatprep.subr.mxu0 0.0
  %10138 = vmatpush1.msra.mxu0 %v10076
  %10139 = vmatprep.subr.mxu0 0.0
  %10140 = vmatpush1.msra.mxu0 %v10077
  %10141 = vmatprep.subr.mxu0 0.0
  %10142 = vmatpush1.msra.mxu0 0.0
  %10143 = vmatprep.subr.mxu0 0.0
  %10144 = vmatpush1.msra.mxu0 0.0
  %10145 = vmatprep.subr.mxu0 0.0
  %10146 = vmatpush1.msra.mxu0 0.0
  %10147 = vmatprep.subr.mxu0 0.0
  %10148 = vmatpush1.msra.mxu0 0.0
  %10149 = vmatprep.subr.mxu0 0.0
  %10150 = vmatpush1.msra.mxu0 0.0
  %10151 = vmatprep.subr.mxu0 0.0
  %10152 = vmatpush1.msra.mxu0 0.0
  %10153 = vmatprep.subr.mxu0 0.0
  %10154 = vmatpush1.msra.mxu0 0.0
  %10155 = vmatprep.subr.mxu0 0.0
  %10156 = vmatpush1.msra.mxu0 0.0
  %10157 = vmatprep.subr.mxu0 0.0
  %10158 = vmatpush1.msra.mxu0 0.0
  %10159 = vmatprep.subr.mxu0 0.0
  %10160 = vmatpush1.msra.mxu0 0.0
  %10161 = vmatprep.subr.mxu0 0.0
  %10162 = vmatpush1.msra.mxu0 0.0
  %10163 = vmatprep.subr.mxu0 0.0
  %10164 = vmatpush1.msra.mxu0 0.0
  %10165 = vmatprep.subr.mxu0 0.0
  %10166 = vmatpush1.msra.mxu0 0.0
  %10167 = vmatprep.subr.mxu0 0.0
  %10168 = vmatpush1.msra.mxu0 0.0
  %10169 = vmatprep.subr.mxu0 0.0
  %10170 = vmatpush1.msra.mxu0 0.0
  %10171 = vmatprep.subr.mxu0 0.0
  %10172 = vmatpush1.msra.mxu0 0.0
  %10173 = vmatprep.subr.mxu0 0.0
  %10174 = vmatpush1.msra.mxu0 0.0
  %10175 = vmatprep.subr.mxu0 0.0
  %10176 = vmatpush1.msra.mxu0 0.0
  %10177 = vmatprep.subr.mxu0 0.0
  %10178 = vmatpush1.msra.mxu0 0.0
  %10179 = vmatprep.subr.mxu0 0.0
  %10180 = vmatpush1.msra.mxu0 0.0
  %10181 = vmatprep.subr.mxu0 0.0
  %10182 = vmatpush1.msra.mxu0 0.0
  %10183 = vmatprep.subr.mxu0 0.0
  %10184 = vmatpush1.msra.mxu0 0.0
  %10185 = vmatprep.subr.mxu0 0.0
  %10186 = vmatpush1.msra.mxu0 0.0
  %10187 = vmatprep.subr.mxu0 0.0
  %10188 = vmatpush1.msra.mxu0 0.0
  %10189 = vmatprep.subr.mxu0 0.0
  %10190 = vmatpush1.msra.mxu0 0.0
  %10191 = vmatprep.subr.mxu0 0.0
  %10192 = vmatpush1.msra.mxu0 0.0
  %10193 = vmatprep.subr.mxu0 0.0
  %10194 = vmatpush1.msra.mxu0 0.0
  %10195 = vmatprep.subr.mxu0 0.0
  %10196 = vmatpush1.msra.mxu0 0.0
  %10197 = vmatprep.mubr.f32.mxu0 0.0
  %10198 = vmatmul.mubr.f32.gmra.mrb[0].mxu0 %v10086
  %v10199 = vpop.f32.mrb[0].mxu0
  %v10200 = vadd.f32 %v10083, %v10199
  %v10201 = vpop.f32.mrb[0].mxu0
  %10202 = vmatprep.mubr.f32.mxu0 0.0
  %10203 = vmatmul.mubr.f32.gmra.mrb[0].mxu0 %v10089
  %v10204 = vpop.f32.mrb[0].mxu0
  %v10205 = vadd.f32 %v10083, %v10204
  %v10206 = vpop.f32.mrb[0].mxu0
  %10207 = vmatprep.mubr.f32.mxu0 0.0
  %10208 = vmatmul.mubr.f32.gmra.mrb[0].mxu0 %v10092
  %v10209 = vpop.f32.mrb[0].mxu0
  %v10210 = vadd.f32 %v10083, %v10209
  %v10211 = vpop.f32.mrb[0].mxu0
  %10212 = vmatprep.mubr.f32.mxu0 0.0
  %10213 = vmatmul.mubr.f32.gmra.mrb[0].mxu0 %v10095
  %v10214 = vpop.f32.mrb[0].mxu0
  %v10215 = vadd.f32 %v10083, %v10214
  %v10216 = vpop.f32.mrb[0].mxu0
  %10217 = vmatprep.mubr.f32.mxu0 0.0
  %10218 = vmatmul.mubr.f32.gmra.mrb[0].mxu0 %v10098
  %v10219 = vpop.f32.mrb[0].mxu0
  %v10220 = vadd.f32 %v10083, %v10219
  %v10221 = vpop.f32.mrb[0].mxu0
  %10222 = vmatprep.mubr.f32.mxu0 0.0
  %10223 = vmatmul.mubr.f32.gmra.mrb[0].mxu0 %v10101
  %v10224 = vpop.f32.mrb[0].mxu0
  %v10225 = vadd.f32 %v10083, %v10224
  %v10226 = vpop.f32.mrb[0].mxu0
  %10227 = vmatprep.mubr.f32.mxu0 0.0
  %10228 = vmatmul.mubr.f32.gmra.mrb[0].mxu0 %v10104
  %v10229 = vpop.f32.mrb[0].mxu0
  %v10230 = vadd.f32 %v10083, %v10229
  %v10231 = vpop.f32.mrb[0].mxu0
  %10232 = vmatprep.mubr.f32.mxu0 0.0
  %10233 = vmatmul.mubr.f32.gmra.mrb[0].mxu0 %v10107
  %v10234 = vpop.f32.mrb[0].mxu0
  %v10235 = vadd.f32 %v10083, %v10234
  %v10236 = vpop.f32.mrb[0].mxu0
  %10237 = vmatprep.mubr.f32.mxu0 0.0
  %10238 = vmatmul.mubr.f32.gmra.mrb[0].mxu0 %v10110
  %v10239 = vpop.f32.mrb[0].mxu0
  %v10240 = vadd.f32 %v10083, %v10239
  %v10241 = vpop.f32.mrb[0].mxu0
  %10242 = vmatprep.mubr.f32.mxu0 0.0
  %10243 = vmatmul.mubr.f32.gmra.mrb[0].mxu0 %v10113
  %v10244 = vpop.f32.mrb[0].mxu0
  %v10245 = vadd.f32 %v10083, %v10244
  %v10246 = vpop.f32.mrb[0].mxu0
  %10247 = vmatprep.mubr.f32.mxu0 0.0
  %10248 = vmatmul.mubr.f32.gmra.mrb[0].mxu0 %v10116
  %v10249 = vpop.f32.mrb[0].mxu0
  %v10250 = vadd.f32 %v10083, %v10249
  %v10251 = vpop.f32.mrb[0].mxu0
  %10252 = vmatprep.mubr.f32.mxu0 0.0
  %10253 = vmatmul.mubr.f32.gmra.mrb[0].mxu0 %v10119
  %v10254 = vpop.f32.mrb[0].mxu0
  %v10255 = vadd.f32 %v10083, %v10254
  %v10256 = vpop.f32.mrb[0].mxu0
  %10257 = vmatprep.mubr.f32.mxu0 0.0
  %10258 = vmatmul.mubr.f32.gmra.mrb[0].mxu0 %v10122
  %v10259 = vpop.f32.mrb[0].mxu0
  %v10260 = vadd.f32 %v10083, %v10259
  %v10261 = vpop.f32.mrb[0].mxu0
  %10262 = vmatprep.mubr.f32.mxu0 0.0
  %10263 = vmatmul.mubr.f32.gmra.mrb[0].mxu0 %v10125
  %v10264 = vpop.f32.mrb[0].mxu0
  %v10265 = vadd.f32 %v10083, %v10264
  %v10266 = vpop.f32.mrb[0].mxu0
  %10267 = vmatprep.mubr.f32.mxu0 0.0
  %10268 = vmatmul.mubr.f32.gmra.mrb[0].mxu0 %v10128
  %v10269 = vpop.f32.mrb[0].mxu0
  %v10270 = vadd.f32 %v10083, %v10269
  %v10271 = vpop.f32.mrb[0].mxu0
  %10272 = vmatprep.mubr.f32.mxu0 0.0
  %10273 = vmatmul.mubr.f32.gmra.mrb[0].mxu0 %v10131
  %v10274 = vpop.f32.mrb[0].mxu0
  %v10275 = vadd.f32 %v10083, %v10274
  %v10276 = vpop.f32.mrb[0].mxu0
  %10277 = vdwg.mxu0
  %v10279 = vsel %vm186, %v9867, 0
  %v10282 = vsel %vm186, %v9996, 0
  %v10285 = vsel %vm186, %v10001, 0
  %v10288 = vsel %vm186, %v10006, 0
  %v10291 = vsel %vm186, %v10011, 0
  %v10294 = vsel %vm186, %v10016, 0
  %v10297 = vsel %vm186, %v10021, 0
  %v10300 = vsel %vm186, %v10026, 0
  %v10303 = vsel %vm186, %v10031, 0
  %v10306 = vsel %vm186, %v10036, 0
  %v10309 = vsel %vm186, %v10041, 0
  %v10312 = vsel %vm186, %v10046, 0
  %v10315 = vsel %vm186, %v10051, 0
  %v10318 = vsel %vm186, %v10056, 0
  %v10321 = vsel %vm186, %v10061, 0
  %v10324 = vsel %vm186, %v10066, 0
  %v10327 = vsel %vm186, %v10071, 0
  %10329 = vmatprep.subr.mxu0 0.0
  %10330 = vmatpush1.xpose.msra.mxu0 %v10282
  %10331 = vmatprep.subr.mxu0 0.0
  %10332 = vmatpush1.xpose.msra.mxu0 %v10285
  %10333 = vmatprep.subr.mxu0 0.0
  %10334 = vmatpush1.xpose.msra.mxu0 %v10288
  %10335 = vmatprep.subr.mxu0 0.0
  %10336 = vmatpush1.xpose.msra.mxu0 %v10291
  %10337 = vmatprep.subr.mxu0 0.0
  %10338 = vmatpush1.xpose.msra.mxu0 %v10294
  %10339 = vmatprep.subr.mxu0 0.0
  %10340 = vmatpush1.xpose.msra.mxu0 %v10297
  %10341 = vmatprep.subr.mxu0 0.0
  %10342 = vmatpush1.xpose.msra.mxu0 %v10300
  %10343 = vmatprep.subr.mxu0 0.0
  %10344 = vmatpush1.xpose.msra.mxu0 %v10303
  %10345 = vmatprep.subr.mxu0 0.0
  %10346 = vmatpush1.xpose.msra.mxu0 %v10306
  %10347 = vmatprep.subr.mxu0 0.0
  %10348 = vmatpush1.xpose.msra.mxu0 %v10309
  %10349 = vmatprep.subr.mxu0 0.0
  %10350 = vmatpush1.xpose.msra.mxu0 %v10312
  %10351 = vmatprep.subr.mxu0 0.0
  %10352 = vmatpush1.xpose.msra.mxu0 %v10315
  %10353 = vmatprep.subr.mxu0 0.0
  %10354 = vmatpush1.xpose.msra.mxu0 %v10318
  %10355 = vmatprep.subr.mxu0 0.0
  %10356 = vmatpush1.xpose.msra.mxu0 %v10321
  %10357 = vmatprep.subr.mxu0 0.0
  %10358 = vmatpush1.xpose.msra.mxu0 %v10324
  %10359 = vmatprep.subr.mxu0 0.0
  %10360 = vmatpush1.xpose.msra.mxu0 %v10327
  %10361 = vmatprep.subr.mxu0 0.0
  %10362 = vmatpush1.xpose.msra.mxu0 0.0
  %10363 = vmatprep.subr.mxu0 0.0
  %10364 = vmatpush1.xpose.msra.mxu0 0.0
  %10365 = vmatprep.subr.mxu0 0.0
  %10366 = vmatpush1.xpose.msra.mxu0 0.0
  %10367 = vmatprep.subr.mxu0 0.0
  %10368 = vmatpush1.xpose.msra.mxu0 0.0
  %10369 = vmatprep.subr.mxu0 0.0
  %10370 = vmatpush1.xpose.msra.mxu0 0.0
  %10371 = vmatprep.subr.mxu0 0.0
  %10372 = vmatpush1.xpose.msra.mxu0 0.0
  %10373 = vmatprep.subr.mxu0 0.0
  %10374 = vmatpush1.xpose.msra.mxu0 0.0
  %10375 = vmatprep.subr.mxu0 0.0
  %10376 = vmatpush1.xpose.msra.mxu0 0.0
  %10377 = vmatprep.subr.mxu0 0.0
  %10378 = vmatpush1.xpose.msra.mxu0 0.0
  %10379 = vmatprep.subr.mxu0 0.0
  %10380 = vmatpush1.xpose.msra.mxu0 0.0
  %10381 = vmatprep.subr.mxu0 0.0
  %10382 = vmatpush1.xpose.msra.mxu0 0.0
  %10383 = vmatprep.subr.mxu0 0.0
  %10384 = vmatpush1.xpose.msra.mxu0 0.0
  %10385 = vmatprep.subr.mxu0 0.0
  %10386 = vmatpush1.xpose.msra.mxu0 0.0
  %10387 = vmatprep.subr.mxu0 0.0
  %10388 = vmatpush1.xpose.msra.mxu0 0.0
  %10389 = vmatprep.subr.mxu0 0.0
  %10390 = vmatpush1.xpose.msra.mxu0 0.0
  %10391 = vmatprep.subr.mxu0 0.0
  %10392 = vmatpush1.xpose.msra.mxu0 0.0
  %10393 = vmatprep.mubr.f32.mxu0 0.0
  %10394 = vmatmul.mubr.f32.gmra.mrb[0].mxu0 %v10279
  %v10395 = vpop.f32.mrb[0].mxu0
  %v10396 = vadd.f32 0.0, %v10395
  %v10397 = vpop.f32.mrb[0].mxu0
  %10398 = vdwg.mxu0
  %v10399 = vmul.f32 %v10396, 0.17677669
  %v10400 = vadd.f32 %v10399, %v7767
  %10401 = vmax.xlane.f32.xlu0 %v10400
  %v10402 = vpop.xlane.xlu0 %10401
  %v10403 = vsub.f32 %v10400, %v10402
  %v10404 = vmul.f32 %v10403, 1.442695
  %v10405 = vpow.pop %v10404
  %10406 = vadd.xlane.f32.xlu0 %v10405
  %v10407 = vpop.xlane.xlu0 %10406
  %v10408 = vrcp.pop %v10407
  %v10409 = vmul.f32 %v10405, %v10408
  %10410 = vmatprep.subr.mxu0 0.0
  %10411 = vmatpush1.msra.mxu0 %v10200
  %10412 = vmatprep.subr.mxu0 0.0
  %10413 = vmatpush1.msra.mxu0 %v10205
  %10414 = vmatprep.subr.mxu0 0.0
  %10415 = vmatpush1.msra.mxu0 %v10210
  %10416 = vmatprep.subr.mxu0 0.0
  %10417 = vmatpush1.msra.mxu0 %v10215
  %10418 = vmatprep.subr.mxu0 0.0
  %10419 = vmatpush1.msra.mxu0 %v10220
  %10420 = vmatprep.subr.mxu0 0.0
  %10421 = vmatpush1.msra.mxu0 %v10225
  %10422 = vmatprep.subr.mxu0 0.0
  %10423 = vmatpush1.msra.mxu0 %v10230
  %10424 = vmatprep.subr.mxu0 0.0
  %10425 = vmatpush1.msra.mxu0 %v10235
  %10426 = vmatprep.subr.mxu0 0.0
  %10427 = vmatpush1.msra.mxu0 %v10240
  %10428 = vmatprep.subr.mxu0 0.0
  %10429 = vmatpush1.msra.mxu0 %v10245
  %10430 = vmatprep.subr.mxu0 0.0
  %10431 = vmatpush1.msra.mxu0 %v10250
  %10432 = vmatprep.subr.mxu0 0.0
  %10433 = vmatpush1.msra.mxu0 %v10255
  %10434 = vmatprep.subr.mxu0 0.0
  %10435 = vmatpush1.msra.mxu0 %v10260
  %10436 = vmatprep.subr.mxu0 0.0
  %10437 = vmatpush1.msra.mxu0 %v10265
  %10438 = vmatprep.subr.mxu0 0.0
  %10439 = vmatpush1.msra.mxu0 %v10270
  %10440 = vmatprep.subr.mxu0 0.0
  %10441 = vmatpush1.msra.mxu0 %v10275
  %10442 = vmatprep.subr.mxu0 0.0
  %10443 = vmatpush1.msra.mxu0 0.0
  %10444 = vmatprep.subr.mxu0 0.0
  %10445 = vmatpush1.msra.mxu0 0.0
  %10446 = vmatprep.subr.mxu0 0.0
  %10447 = vmatpush1.msra.mxu0 0.0
  %10448 = vmatprep.subr.mxu0 0.0
  %10449 = vmatpush1.msra.mxu0 0.0
  %10450 = vmatprep.subr.mxu0 0.0
  %10451 = vmatpush1.msra.mxu0 0.0
  %10452 = vmatprep.subr.mxu0 0.0
  %10453 = vmatpush1.msra.mxu0 0.0
  %10454 = vmatprep.subr.mxu0 0.0
  %10455 = vmatpush1.msra.mxu0 0.0
  %10456 = vmatprep.subr.mxu0 0.0
  %10457 = vmatpush1.msra.mxu0 0.0
  %10458 = vmatprep.subr.mxu0 0.0
  %10459 = vmatpush1.msra.mxu0 0.0
  %10460 = vmatprep.subr.mxu0 0.0
  %10461 = vmatpush1.msra.mxu0 0.0
  %10462 = vmatprep.subr.mxu0 0.0
  %10463 = vmatpush1.msra.mxu0 0.0
  %10464 = vmatprep.subr.mxu0 0.0
  %10465 = vmatpush1.msra.mxu0 0.0
  %10466 = vmatprep.subr.mxu0 0.0
  %10467 = vmatpush1.msra.mxu0 0.0
  %10468 = vmatprep.subr.mxu0 0.0
  %10469 = vmatpush1.msra.mxu0 0.0
  %10470 = vmatprep.subr.mxu0 0.0
  %10471 = vmatpush1.msra.mxu0 0.0
  %10472 = vmatprep.subr.mxu0 0.0
  %10473 = vmatpush1.msra.mxu0 0.0
  %10474 = vmatprep.mubr.f32.mxu0 0.0
  %10475 = vmatmul.mubr.f32.gmra.mrb[0].mxu0 %v10409
  %v10476 = vpop.f32.mrb[0].mxu0
  %v10477 = vadd.f32 0.0, %v10476
  %v10478 = vpop.f32.mrb[0].mxu0
  %10479 = vdwg.mxu0
  %v10480 = vld [vmem:[%s5133] sm:$0xff]
  %v10481 = vld [vmem:[%s5133 + $0x8] sm:$0xff]
  %v10482 = vld [vmem:[%s5133 + $0x10] sm:$0xff]
  %v10483 = vld [vmem:[%s5133 + $0x18] sm:$0xff]
  %v10484 = vld [vmem:[%s5138] sm:$0x1]
  %v10486 = vlaneseq
  %v10487 = vshrl.u32 %v10486, 7
  %v10488 = vsub.s32 0, %v10487
  %v10489 = vrot.slane %v10484, %v10488
  %v10492 = vsel %vm186, %v10477, 0
  %10494 = vmatprep.subr.mxu0 0.0
  %10495 = vmatpush1.msra.mxu0 %v10480
  %10496 = vmatprep.subr.mxu0 0.0
  %10497 = vmatpush1.msra.mxu0 %v10481
  %10498 = vmatprep.subr.mxu0 0.0
  %10499 = vmatpush1.msra.mxu0 %v10482
  %10500 = vmatprep.subr.mxu0 0.0
  %10501 = vmatpush1.msra.mxu0 %v10483
  %10502 = vmatprep.subr.mxu0 0.0
  %10503 = vmatpush1.msra.mxu0 0.0
  %10504 = vmatprep.subr.mxu0 0.0
  %10505 = vmatpush1.msra.mxu0 0.0
  %10506 = vmatprep.subr.mxu0 0.0
  %10507 = vmatpush1.msra.mxu0 0.0
  %10508 = vmatprep.subr.mxu0 0.0
  %10509 = vmatpush1.msra.mxu0 0.0
  %10510 = vmatprep.subr.mxu0 0.0
  %10511 = vmatpush1.msra.mxu0 0.0
  %10512 = vmatprep.subr.mxu0 0.0
  %10513 = vmatpush1.msra.mxu0 0.0
  %10514 = vmatprep.subr.mxu0 0.0
  %10515 = vmatpush1.msra.mxu0 0.0
  %10516 = vmatprep.subr.mxu0 0.0
  %10517 = vmatpush1.msra.mxu0 0.0
  %10518 = vmatprep.subr.mxu0 0.0
  %10519 = vmatpush1.msra.mxu0 0.0
  %10520 = vmatprep.subr.mxu0 0.0
  %10521 = vmatpush1.msra.mxu0 0.0
  %10522 = vmatprep.subr.mxu0 0.0
  %10523 = vmatpush1.msra.mxu0 0.0
  %10524 = vmatprep.subr.mxu0 0.0
  %10525 = vmatpush1.msra.mxu0 0.0
  %10526 = vmatprep.subr.mxu0 0.0
  %10527 = vmatpush1.msra.mxu0 0.0
  %10528 = vmatprep.subr.mxu0 0.0
  %10529 = vmatpush1.msra.mxu0 0.0
  %10530 = vmatprep.subr.mxu0 0.0
  %10531 = vmatpush1.msra.mxu0 0.0
  %10532 = vmatprep.subr.mxu0 0.0
  %10533 = vmatpush1.msra.mxu0 0.0
  %10534 = vmatprep.subr.mxu0 0.0
  %10535 = vmatpush1.msra.mxu0 0.0
  %10536 = vmatprep.subr.mxu0 0.0
  %10537 = vmatpush1.msra.mxu0 0.0
  %10538 = vmatprep.subr.mxu0 0.0
  %10539 = vmatpush1.msra.mxu0 0.0
  %10540 = vmatprep.subr.mxu0 0.0
  %10541 = vmatpush1.msra.mxu0 0.0
  %10542 = vmatprep.subr.mxu0 0.0
  %10543 = vmatpush1.msra.mxu0 0.0
  %10544 = vmatprep.subr.mxu0 0.0
  %10545 = vmatpush1.msra.mxu0 0.0
  %10546 = vmatprep.subr.mxu0 0.0
  %10547 = vmatpush1.msra.mxu0 0.0
  %10548 = vmatprep.subr.mxu0 0.0
  %10549 = vmatpush1.msra.mxu0 0.0
  %10550 = vmatprep.subr.mxu0 0.0
  %10551 = vmatpush1.msra.mxu0 0.0
  %10552 = vmatprep.subr.mxu0 0.0
  %10553 = vmatpush1.msra.mxu0 0.0
  %10554 = vmatprep.subr.mxu0 0.0
  %10555 = vmatpush1.msra.mxu0 0.0
  %10556 = vmatprep.subr.mxu0 0.0
  %10557 = vmatpush1.msra.mxu0 0.0
  %10558 = vmatprep.mubr.f32.mxu0 0.0
  %10559 = vmatmul.mubr.f32.gmra.mrb[0].mxu0 %v10492
  %v10560 = vpop.f32.mrb[0].mxu0
  %v10561 = vadd.f32 %v10489, %v10560
  %v10562 = vpop.f32.mrb[0].mxu0
  %10563 = vdwg.mxu0
  %v10564 = vadd.f32 %v9768, %v10561
  %v10565 = vld [vmem:[%s5220] sm:$0x1]
  %v10566 = vld [vmem:[%s5222] sm:$0x1]
  %v10567 = vsel %vm186, %v10564, 0.0
  %10568 = vadd.xlane.f32.xlu0 %v10567
  %v10569 = vpop.xlane.xlu0 %10568
  %v10570 = vmul.f32 %v10569, %v755
  %v10571 = vsub.f32 %v10564, %v10570
  %v10572 = vmul.f32 %v10571, %v10571
  %v10573 = vsel %vm186, %v10572, 0.0
  %10574 = vadd.xlane.f32.xlu0 %v10573
  %v10575 = vpop.xlane.xlu0 %10574
  %v10576 = vmul.f32 %v10575, %v755
  %v10577 = vadd.f32 %v10576, 1e-05
  %v10578 = vrsqrt.pop %v10577
  %v10579 = vmul.f32 %v10571, %v10578
  %v10581 = vlaneseq
  %v10582 = vshrl.u32 %v10581, 7
  %v10583 = vsub.s32 0, %v10582
  %v10584 = vrot.slane %v10565, %v10583
  %v10586 = vmul.f32 %v10579, %v10584
  %v10588 = vlaneseq
  %v10589 = vshrl.u32 %v10588, 7
  %v10590 = vsub.s32 0, %v10589
  %v10591 = vrot.slane %v10566, %v10590
  %v10593 = vadd.f32 %v10586, %v10591
  %v10594 = vld [vmem:[%s5251] sm:$0xff]
  %v10595 = vld [vmem:[%s5251 + $0x8] sm:$0xff]
  %v10596 = vld [vmem:[%s5251 + $0x10] sm:$0xff]
  %v10597 = vld [vmem:[%s5251 + $0x18] sm:$0xff]
  %v10598 = vld [vmem:[%s5256] sm:$0x1]
  %v10600 = vlaneseq
  %v10601 = vshrl.u32 %v10600, 7
  %v10602 = vsub.s32 0, %v10601
  %v10603 = vrot.slane %v10598, %v10602
  %v10606 = vsel %vm186, %v10593, 0
  %10608 = vmatprep.subr.mxu0 0.0
  %10609 = vmatpush1.msra.mxu0 %v10594
  %10610 = vmatprep.subr.mxu0 0.0
  %10611 = vmatpush1.msra.mxu0 %v10595
  %10612 = vmatprep.subr.mxu0 0.0
  %10613 = vmatpush1.msra.mxu0 %v10596
  %10614 = vmatprep.subr.mxu0 0.0
  %10615 = vmatpush1.msra.mxu0 %v10597
  %10616 = vmatprep.subr.mxu0 0.0
  %10617 = vmatpush1.msra.mxu0 0.0
  %10618 = vmatprep.subr.mxu0 0.0
  %10619 = vmatpush1.msra.mxu0 0.0
  %10620 = vmatprep.subr.mxu0 0.0
  %10621 = vmatpush1.msra.mxu0 0.0
  %10622 = vmatprep.subr.mxu0 0.0
  %10623 = vmatpush1.msra.mxu0 0.0
  %10624 = vmatprep.subr.mxu0 0.0
  %10625 = vmatpush1.msra.mxu0 0.0
  %10626 = vmatprep.subr.mxu0 0.0
  %10627 = vmatpush1.msra.mxu0 0.0
  %10628 = vmatprep.subr.mxu0 0.0
  %10629 = vmatpush1.msra.mxu0 0.0
  %10630 = vmatprep.subr.mxu0 0.0
  %10631 = vmatpush1.msra.mxu0 0.0
  %10632 = vmatprep.subr.mxu0 0.0
  %10633 = vmatpush1.msra.mxu0 0.0
  %10634 = vmatprep.subr.mxu0 0.0
  %10635 = vmatpush1.msra.mxu0 0.0
  %10636 = vmatprep.subr.mxu0 0.0
  %10637 = vmatpush1.msra.mxu0 0.0
  %10638 = vmatprep.subr.mxu0 0.0
  %10639 = vmatpush1.msra.mxu0 0.0
  %10640 = vmatprep.subr.mxu0 0.0
  %10641 = vmatpush1.msra.mxu0 0.0
  %10642 = vmatprep.subr.mxu0 0.0
  %10643 = vmatpush1.msra.mxu0 0.0
  %10644 = vmatprep.subr.mxu0 0.0
  %10645 = vmatpush1.msra.mxu0 0.0
  %10646 = vmatprep.subr.mxu0 0.0
  %10647 = vmatpush1.msra.mxu0 0.0
  %10648 = vmatprep.subr.mxu0 0.0
  %10649 = vmatpush1.msra.mxu0 0.0
  %10650 = vmatprep.subr.mxu0 0.0
  %10651 = vmatpush1.msra.mxu0 0.0
  %10652 = vmatprep.subr.mxu0 0.0
  %10653 = vmatpush1.msra.mxu0 0.0
  %10654 = vmatprep.subr.mxu0 0.0
  %10655 = vmatpush1.msra.mxu0 0.0
  %10656 = vmatprep.subr.mxu0 0.0
  %10657 = vmatpush1.msra.mxu0 0.0
  %10658 = vmatprep.subr.mxu0 0.0
  %10659 = vmatpush1.msra.mxu0 0.0
  %10660 = vmatprep.subr.mxu0 0.0
  %10661 = vmatpush1.msra.mxu0 0.0
  %10662 = vmatprep.subr.mxu0 0.0
  %10663 = vmatpush1.msra.mxu0 0.0
  %10664 = vmatprep.subr.mxu0 0.0
  %10665 = vmatpush1.msra.mxu0 0.0
  %10666 = vmatprep.subr.mxu0 0.0
  %10667 = vmatpush1.msra.mxu0 0.0
  %10668 = vmatprep.subr.mxu0 0.0
  %10669 = vmatpush1.msra.mxu0 0.0
  %10670 = vmatprep.subr.mxu0 0.0
  %10671 = vmatpush1.msra.mxu0 0.0
  %10672 = vmatprep.mubr.f32.mxu0 0.0
  %10673 = vmatmul.mubr.f32.gmra.mrb[0].mxu0 %v10606
  %v10674 = vpop.f32.mrb[0].mxu0
  %v10675 = vadd.f32 %v10603, %v10674
  %v10676 = vpop.f32.mrb[0].mxu0
  %10677 = vdwg.mxu0
  %v10678 = vmax.f32 %v10675, 0.0
  %v10679 = vld [vmem:[%s5338] sm:$0xff]
  %v10680 = vld [vmem:[%s5338 + $0x8] sm:$0xff]
  %v10681 = vld [vmem:[%s5338 + $0x10] sm:$0xff]
  %v10682 = vld [vmem:[%s5338 + $0x18] sm:$0xff]
  %v10683 = vld [vmem:[%s5338 + $0x20] sm:$0xff]
  %v10684 = vld [vmem:[%s5338 + $0x28] sm:$0xff]
  %v10685 = vld [vmem:[%s5338 + $0x30] sm:$0xff]
  %v10686 = vld [vmem:[%s5338 + $0x38] sm:$0xff]
  %v10687 = vld [vmem:[%s5347] sm:$0x1]
  %v10689 = vlaneseq
  %v10690 = vshrl.u32 %v10689, 7
  %v10691 = vsub.s32 0, %v10690
  %v10692 = vrot.slane %v10687, %v10691
  %v10695 = vsel %vm901, %v10678, 0
  %10697 = vmatprep.subr.mxu0 0.0
  %10698 = vmatpush1.msra.mxu0 %v10679
  %10699 = vmatprep.subr.mxu0 0.0
  %10700 = vmatpush1.msra.mxu0 %v10680
  %10701 = vmatprep.subr.mxu0 0.0
  %10702 = vmatpush1.msra.mxu0 %v10681
  %10703 = vmatprep.subr.mxu0 0.0
  %10704 = vmatpush1.msra.mxu0 %v10682
  %10705 = vmatprep.subr.mxu0 0.0
  %10706 = vmatpush1.msra.mxu0 %v10683
  %10707 = vmatprep.subr.mxu0 0.0
  %10708 = vmatpush1.msra.mxu0 %v10684
  %10709 = vmatprep.subr.mxu0 0.0
  %10710 = vmatpush1.msra.mxu0 %v10685
  %10711 = vmatprep.subr.mxu0 0.0
  %10712 = vmatpush1.msra.mxu0 %v10686
  %10713 = vmatprep.subr.mxu0 0.0
  %10714 = vmatpush1.msra.mxu0 0.0
  %10715 = vmatprep.subr.mxu0 0.0
  %10716 = vmatpush1.msra.mxu0 0.0
  %10717 = vmatprep.subr.mxu0 0.0
  %10718 = vmatpush1.msra.mxu0 0.0
  %10719 = vmatprep.subr.mxu0 0.0
  %10720 = vmatpush1.msra.mxu0 0.0
  %10721 = vmatprep.subr.mxu0 0.0
  %10722 = vmatpush1.msra.mxu0 0.0
  %10723 = vmatprep.subr.mxu0 0.0
  %10724 = vmatpush1.msra.mxu0 0.0
  %10725 = vmatprep.subr.mxu0 0.0
  %10726 = vmatpush1.msra.mxu0 0.0
  %10727 = vmatprep.subr.mxu0 0.0
  %10728 = vmatpush1.msra.mxu0 0.0
  %10729 = vmatprep.subr.mxu0 0.0
  %10730 = vmatpush1.msra.mxu0 0.0
  %10731 = vmatprep.subr.mxu0 0.0
  %10732 = vmatpush1.msra.mxu0 0.0
  %10733 = vmatprep.subr.mxu0 0.0
  %10734 = vmatpush1.msra.mxu0 0.0
  %10735 = vmatprep.subr.mxu0 0.0
  %10736 = vmatpush1.msra.mxu0 0.0
  %10737 = vmatprep.subr.mxu0 0.0
  %10738 = vmatpush1.msra.mxu0 0.0
  %10739 = vmatprep.subr.mxu0 0.0
  %10740 = vmatpush1.msra.mxu0 0.0
  %10741 = vmatprep.subr.mxu0 0.0
  %10742 = vmatpush1.msra.mxu0 0.0
  %10743 = vmatprep.subr.mxu0 0.0
  %10744 = vmatpush1.msra.mxu0 0.0
  %10745 = vmatprep.subr.mxu0 0.0
  %10746 = vmatpush1.msra.mxu0 0.0
  %10747 = vmatprep.subr.mxu0 0.0
  %10748 = vmatpush1.msra.mxu0 0.0
  %10749 = vmatprep.subr.mxu0 0.0
  %10750 = vmatpush1.msra.mxu0 0.0
  %10751 = vmatprep.subr.mxu0 0.0
  %10752 = vmatpush1.msra.mxu0 0.0
  %10753 = vmatprep.subr.mxu0 0.0
  %10754 = vmatpush1.msra.mxu0 0.0
  %10755 = vmatprep.subr.mxu0 0.0
  %10756 = vmatpush1.msra.mxu0 0.0
  %10757 = vmatprep.subr.mxu0 0.0
  %10758 = vmatpush1.msra.mxu0 0.0
  %10759 = vmatprep.subr.mxu0 0.0
  %10760 = vmatpush1.msra.mxu0 0.0
  %10761 = vmatprep.mubr.f32.mxu0 0.0
  %10762 = vmatmul.mubr.f32.gmra.mrb[0].mxu0 %v10695
  %v10763 = vpop.f32.mrb[0].mxu0
  %v10764 = vadd.f32 %v10692, %v10763
  %v10765 = vpop.f32.mrb[0].mxu0
  %10766 = vdwg.mxu0
  %v10767 = vadd.f32 %v10593, %v10764
  %v10768 = vld [vmem:[%s5429] sm:$0x1]
  %v10769 = vld [vmem:[%s5431] sm:$0x1]
  %v10770 = vsel %vm186, %v10767, 0.0
  %10771 = vadd.xlane.f32.xlu0 %v10770
  %v10772 = vpop.xlane.xlu0 %10771
  %v10773 = vmul.f32 %v10772, %v755
  %v10774 = vsub.f32 %v10767, %v10773
  %v10775 = vmul.f32 %v10774, %v10774
  %v10776 = vsel %vm186, %v10775, 0.0
  %10777 = vadd.xlane.f32.xlu0 %v10776
  %v10778 = vpop.xlane.xlu0 %10777
  %v10779 = vmul.f32 %v10778, %v755
  %v10780 = vadd.f32 %v10779, 1e-05
  %v10781 = vrsqrt.pop %v10780
  %v10782 = vmul.f32 %v10774, %v10781
  %v10784 = vlaneseq
  %v10785 = vshrl.u32 %v10784, 7
  %v10786 = vsub.s32 0, %v10785
  %v10787 = vrot.slane %v10768, %v10786
  %v10789 = vmul.f32 %v10782, %v10787
  %v10791 = vlaneseq
  %v10792 = vshrl.u32 %v10791, 7
  %v10793 = vsub.s32 0, %v10792
  %v10794 = vrot.slane %v10769, %v10793
  %v10796 = vadd.f32 %v10789, %v10794
  %v10798 = vlaneseq
  %v10799 = vshrl.u32 %v10798, 7
  %v10800 = vsub.s32 0, %v10799
  %v10801 = vrot.slane %v6693, %v10800
  %v10804 = vsel %vm186, %v10796, 0
  %10806 = vmatprep.subr.mxu0 0.0
  %10807 = vmatpush1.msra.mxu0 %v6689
  %10808 = vmatprep.subr.mxu0 0.0
  %10809 = vmatpush1.msra.mxu0 %v6690
  %10810 = vmatprep.subr.mxu0 0.0
  %10811 = vmatpush1.msra.mxu0 %v6691
  %10812 = vmatprep.subr.mxu0 0.0
  %10813 = vmatpush1.msra.mxu0 %v6692
  %10814 = vmatprep.subr.mxu0 0.0
  %10815 = vmatpush1.msra.mxu0 0.0
  %10816 = vmatprep.subr.mxu0 0.0
  %10817 = vmatpush1.msra.mxu0 0.0
  %10818 = vmatprep.subr.mxu0 0.0
  %10819 = vmatpush1.msra.mxu0 0.0
  %10820 = vmatprep.subr.mxu0 0.0
  %10821 = vmatpush1.msra.mxu0 0.0
  %10822 = vmatprep.subr.mxu0 0.0
  %10823 = vmatpush1.msra.mxu0 0.0
  %10824 = vmatprep.subr.mxu0 0.0
  %10825 = vmatpush1.msra.mxu0 0.0
  %10826 = vmatprep.subr.mxu0 0.0
  %10827 = vmatpush1.msra.mxu0 0.0
  %10828 = vmatprep.subr.mxu0 0.0
  %10829 = vmatpush1.msra.mxu0 0.0
  %10830 = vmatprep.subr.mxu0 0.0
  %10831 = vmatpush1.msra.mxu0 0.0
  %10832 = vmatprep.subr.mxu0 0.0
  %10833 = vmatpush1.msra.mxu0 0.0
  %10834 = vmatprep.subr.mxu0 0.0
  %10835 = vmatpush1.msra.mxu0 0.0
  %10836 = vmatprep.subr.mxu0 0.0
  %10837 = vmatpush1.msra.mxu0 0.0
  %10838 = vmatprep.subr.mxu0 0.0
  %10839 = vmatpush1.msra.mxu0 0.0
  %10840 = vmatprep.subr.mxu0 0.0
  %10841 = vmatpush1.msra.mxu0 0.0
  %10842 = vmatprep.subr.mxu0 0.0
  %10843 = vmatpush1.msra.mxu0 0.0
  %10844 = vmatprep.subr.mxu0 0.0
  %10845 = vmatpush1.msra.mxu0 0.0
  %10846 = vmatprep.subr.mxu0 0.0
  %10847 = vmatpush1.msra.mxu0 0.0
  %10848 = vmatprep.subr.mxu0 0.0
  %10849 = vmatpush1.msra.mxu0 0.0
  %10850 = vmatprep.subr.mxu0 0.0
  %10851 = vmatpush1.msra.mxu0 0.0
  %10852 = vmatprep.subr.mxu0 0.0
  %10853 = vmatpush1.msra.mxu0 0.0
  %10854 = vmatprep.subr.mxu0 0.0
  %10855 = vmatpush1.msra.mxu0 0.0
  %10856 = vmatprep.subr.mxu0 0.0
  %10857 = vmatpush1.msra.mxu0 0.0
  %10858 = vmatprep.subr.mxu0 0.0
  %10859 = vmatpush1.msra.mxu0 0.0
  %10860 = vmatprep.subr.mxu0 0.0
  %10861 = vmatpush1.msra.mxu0 0.0
  %10862 = vmatprep.subr.mxu0 0.0
  %10863 = vmatpush1.msra.mxu0 0.0
  %10864 = vmatprep.subr.mxu0 0.0
  %10865 = vmatpush1.msra.mxu0 0.0
  %10866 = vmatprep.subr.mxu0 0.0
  %10867 = vmatpush1.msra.mxu0 0.0
  %10868 = vmatprep.subr.mxu0 0.0
  %10869 = vmatpush1.msra.mxu0 0.0
  %10870 = vmatprep.mubr.f32.mxu0 0.0
  %10871 = vmatmul.mubr.f32.gmra.mrb[0].mxu0 %v10804
  %v10872 = vpop.f32.mrb[0].mxu0
  %v10873 = vadd.f32 %v10801, %v10872
  %v10874 = vpop.f32.mrb[0].mxu0
  %10875 = vdwg.mxu0
  %s10876 = scalar_lea.vmem %s26, 8
  %10877 = vst.msk [vmem:[%s10876] sm:$0xff] %vm5539, %v10873
  // Predicated region
  $region102: #{detrvae_forward.1} parent=0 // pred_check
    _
  $region103: #{detrvae_forward.1} parent=0 // pred_check_branch
    %10879 = sbr.rel (0) target = $region105
  $region104: #{detrvae_forward.1} parent=0 // pred_region
    _
  $region105: #{detrvae_forward.1} parent=0 // pred_fallthru
    _
  // Predicated region
  $region106: #{detrvae_forward.1} parent=0 // pred_check
    _
  $region107: #{detrvae_forward.1} parent=0 // pred_check_branch
    %10881 = sbr.rel (0) target = $region109
  $region108: #{detrvae_forward.1} parent=0 // pred_region
    _
  $region109: #{detrvae_forward.1} parent=0 // pred_fallthru
    _
  // Predicated region
  $region110: #{detrvae_forward.1} parent=0 // pred_check
    _
  $region111: #{detrvae_forward.1} parent=0 // pred_check_branch
    %10883 = sbr.rel (0) target = $region113
  $region112: #{detrvae_forward.1} parent=0 // pred_region
    _
  $region113: #{detrvae_forward.1} parent=0 // pred_fallthru
    _
  // Predicated region
  $region114: #{detrvae_forward.1} parent=0 // pred_check
    _
  $region115: #{detrvae_forward.1} parent=0 // pred_check_branch
    %10885 = sbr.rel (0) target = $region117
  $region116: #{detrvae_forward.1} parent=0 // pred_region
    _
  $region117: #{detrvae_forward.1} parent=0 // pred_fallthru
    _

</llo_original>
